<compile_context>
chip_gen: v5e
topology: v5e:2x2
jax: 0.10.0
libtpu: 0.0.40
codegen_flags: <defaults>
</compile_context>

<pallas_src>
import functools

import numpy as np
import jax
import jax.numpy as jnp
from jax.experimental import pallas as pl
from jax.experimental.pallas import tpu as pltpu


NODE_ALIGN = 512     # node / edge axis padding (lets >=512-wide tiles divide)
FEAT_ALIGN = 128     # feature axis padding (lane width); 256 can help v6e/v7x if hidden > 128
TILES = (2048, 1024, 512, 256, 128)   # candidate tile sizes (largest first)


def _vmem_capacity_bytes():
    try:
        info = pltpu.get_tpu_info()
        cap = getattr(info, "vmem_capacity_bytes", None)
        if cap:
            return int(cap)
    except Exception:
        pass
    return 64 * 1024 * 1024   # conservative fallback == v7x per-TensorCore VMEM


# <= 48 MiB on v7x (64 MiB/TC), ~96 MiB on v5e/v6e (128 MiB/TC).
_VMEM_LIMIT = int(min(_vmem_capacity_bytes() * 3 // 4, 100 * 1024 * 1024))
_TILE_BUDGET = int(_VMEM_LIMIT * 0.8)


def _round_up(x, m):
    return ((x + m - 1) // m) * m


def _largest_tile(dim, cap):
    """Largest tile in TILES that divides `dim` (dims are 128-aligned) and is <= cap."""
    for t in TILES:
        if t <= cap and dim % t == 0:
            return t
    return 128


def _pad2(x, rows, cols, dtype=jnp.float32):
    x = jnp.asarray(x, jnp.float32)
    r, c = x.shape
    return jnp.pad(x, ((0, rows - r), (0, cols - c))).astype(dtype)


def _pad1(b, n):
    b = jnp.asarray(b, jnp.float32)
    return jnp.pad(b, (0, n - b.shape[0]))


def _i8_to_bf16(x):
    # int8 -> f32 -> bf16 (exact for 0/1 incidence entries).
    return x.astype(jnp.float32).astype(jnp.bfloat16)


def _prop_tiles(M, K, Dh, *, with_x0):
    """Pick (tm, tk, b_resident) for an int8[M,K] @ bf16[K,Dh] propagation matmul."""
    budget = _TILE_BUDGET
    # Keep the small feature operand fully VMEM-resident when its double-buffered
    # footprint uses at most ~1/3 of the budget; removes its nm-fold HBM re-read.
    b_resident = 2 * K * Dh * 2 <= budget // 3

    def cost(tm, tk):
        c = 2 * tm * tk                                  # double-buffered int8 A tiles
        c += 6 * tm * tk                                 # worst-case in-kernel upcast temps
        c += 2 * (K if b_resident else tk) * Dh * 2      # bf16 feature operand
        c += 2 * tm * Dh * 2                             # bf16 output tiles
        c += tm * Dh * 4                                 # f32 accumulator scratch
        if with_x0:
            c += 2 * tm * Dh * 4                         # f32 x0 residual tiles
        c += 2 * Dh * Dh * 2                             # resident W_l (node-update fusion)
        c += 8 * tm * 4 + (64 << 10)                     # row-scale vectors / bias / slack
        return c

    tm = _largest_tile(M, min(max(M // 2, 128), 1024))   # nm >= 2 keeps both TCs busy (v7x)
    tk = _largest_tile(K, 2048)                          # grow K (not N): v5e MXU is 128 wide
    while cost(tm, tk) > budget:
        if tk > 128 and tk >= tm:
            tk = _largest_tile(K, tk // 2)
        elif tm > 128:
            tm = _largest_tile(M, tm // 2)
        elif tk > 128:
            tk = _largest_tile(K, tk // 2)
        else:
            break
    return tm, tk, b_resident


# ---------------------------------------------------------------------------
# Dense linear (fc_in / fc_out):  out = a @ w + bias  (+ optional row-scaled bf16 copy)
# ---------------------------------------------------------------------------

def _linear_kernel(*refs, nk, has_rs):
    it = iter(refs)
    a_ref, w_ref, bias_ref = next(it), next(it), next(it)
    rs_ref = next(it) if has_rs else None
    out_ref = next(it)
    out_rs_ref = next(it) if has_rs else None
    acc_ref = next(it) if nk > 1 else None

    part = jnp.dot(a_ref[...], w_ref[...], preferred_element_type=jnp.float32)

    def _finish(acc):
        # NOTE: bias also lands on padded rows; those rows are either multiplied by
        # isdv == 0 downstream or dropped by the final slice, so this is harmless.
        y = acc + bias_ref[...]
        out_ref[...] = y.astype(out_ref.dtype)
        if has_rs:
            out_rs_ref[...] = (rs_ref[...] * y).astype(out_rs_ref.dtype)

    if nk == 1:
        _finish(part)
    else:
        @pl.when(pl.program_id(2) == 0)
        def _():
            acc_ref[...] = jnp.zeros_like(acc_ref)

        acc_ref[...] += part

        @pl.when(pl.program_id(2) == nk - 1)
        def _():
            _finish(acc_ref[...])


def linear(a, w, bias, *, row_scale=None):
    """out = a @ w + bias (f32); optionally also emit row_scale * out in bf16."""
    M, K = a.shape
    _, N = w.shape
    tm = _largest_tile(M, min(max(M // 2, 128), 512))
    tn = _largest_tile(N, 256)
    tk = _largest_tile(K, 1024)
    nm, nn, nk = M // tm, N // tn, K // tk
    has_rs = row_scale is not None

    inputs = [a, w, bias.reshape(1, N)]
    in_specs = [
        pl.BlockSpec((tm, tk), lambda i, j, k: (i, k)),
        pl.BlockSpec((tk, tn), lambda i, j, k: (k, j)),
        pl.BlockSpec((1, tn), lambda i, j, k: (0, j)),
    ]
    if has_rs:
        inputs.append(row_scale)
        in_specs.append(pl.BlockSpec((tm, 1), lambda i, j, k: (i, 0)))

    out_shape = [jax.ShapeDtypeStruct((M, N), jnp.float32)]
    out_specs = [pl.BlockSpec((tm, tn), lambda i, j, k: (i, j))]
    if has_rs:
        out_shape.append(jax.ShapeDtypeStruct((M, N), jnp.bfloat16))
        out_specs.append(pl.BlockSpec((tm, tn), lambda i, j, k: (i, j)))

    scratch = [] if nk == 1 else [pltpu.VMEM((tm, tn), jnp.float32)]
    kernel = functools.partial(_linear_kernel, nk=nk, has_rs=has_rs)

    return pl.pallas_call(
        kernel,
        out_shape=tuple(out_shape) if has_rs else out_shape[0],
        grid_spec=pltpu.PrefetchScalarGridSpec(
            num_scalar_prefetch=0,
            grid=(nm, nn, nk),
            in_specs=in_specs,
            out_specs=tuple(out_specs) if has_rs else out_specs[0],
            scratch_shapes=scratch),
        compiler_params=pltpu.CompilerParams(
            dimension_semantics=("parallel", "parallel", "arbitrary"),
            vmem_limit_bytes=_VMEM_LIMIT),
    )(*inputs)


# ---------------------------------------------------------------------------
# Edge aggregation:  t = D_e^{-1} (H^T @ (D_v^{-1/2} x))  ->  bf16 [E, Dh]
# ---------------------------------------------------------------------------

def _edge_agg_kernel(a_ref, b_ref, rs_ref, out_ref, *scratch, nk, tk, b_resident):
    acc_ref = scratch[0] if nk > 1 else None

    if b_resident and nk > 1:
        off = pl.multiple_of(pl.program_id(1) * tk, tk)
        b = b_ref[pl.ds(off, tk), :]
    else:
        b = b_ref[...]
    part = jnp.dot(_i8_to_bf16(a_ref[...]), b, preferred_element_type=jnp.float32)

    def _finish(acc):
        out_ref[...] = (rs_ref[...] * acc).astype(out_ref.dtype)   # D_e^{-1} row scale

    if nk == 1:
        _finish(part)
    else:
        @pl.when(pl.program_id(1) == 0)
        def _():
            acc_ref[...] = jnp.zeros_like(acc_ref)

        acc_ref[...] += part

        @pl.when(pl.program_id(1) == nk - 1)
        def _():
            _finish(acc_ref[...])


def edge_aggregate(ht8, xs, ide):
    E, N = ht8.shape
    _, Dh = xs.shape
    tm, tk, b_res = _prop_tiles(E, N, Dh, with_x0=False)
    nm, nk = E // tm, N // tk

    b_spec = (pl.BlockSpec((N, Dh), lambda i, k: (0, 0)) if b_res
              else pl.BlockSpec((tk, Dh), lambda i, k: (k, 0)))
    scratch = [] if nk == 1 else [pltpu.VMEM((tm, Dh), jnp.float32)]
    kernel = functools.partial(_edge_agg_kernel, nk=nk, tk=tk, b_resident=b_res)

    return pl.pallas_call(
        kernel,
        out_shape=jax.ShapeDtypeStruct((E, Dh), jnp.bfloat16),
        grid_spec=pltpu.PrefetchScalarGridSpec(
            num_scalar_prefetch=0,
            grid=(nm, nk),
            in_specs=[pl.BlockSpec((tm, tk), lambda i, k: (i, k)),
                      b_spec,
                      pl.BlockSpec((tm, 1), lambda i, k: (i, 0))],
            out_specs=pl.BlockSpec((tm, Dh), lambda i, k: (i, 0)),
            scratch_shapes=scratch),
        compiler_params=pltpu.CompilerParams(
            dimension_semantics=("parallel", "arbitrary"),
            vmem_limit_bytes=_VMEM_LIMIT),
    )(ht8, xs, ide)


# ---------------------------------------------------------------------------
# Fused node update:
#   Px = D_v^{-1/2} (H @ t) ; s = (1-a) Px + a x0 ;
#   out = (1-b) s + b (s @ W_l + bias)   (+ ReLU, + optional D_v^{-1/2} pre-scale)
# ---------------------------------------------------------------------------

def _node_update_kernel(a_ref, b_ref, isdv_ref, x0_ref, w_ref, bias_ref, out_ref,
                        *scratch, nk, tk, b_resident, alpha, beta_l, relu, scale_out):
    acc_ref = scratch[0] if nk > 1 else None

    if b_resident and nk > 1:
        off = pl.multiple_of(pl.program_id(1) * tk, tk)
        b = b_ref[pl.ds(off, tk), :]
    else:
        b = b_ref[...]
    part = jnp.dot(_i8_to_bf16(a_ref[...]), b, preferred_element_type=jnp.float32)

    def _finish(acc):
        px = isdv_ref[...] * acc                          # D_v^{-1/2} H D_e^{-1} H^T D_v^{-1/2} x
        s = (1.0 - alpha) * px + alpha * x0_ref[...]      # GCNII initial residual
        z = jnp.dot(s.astype(jnp.bfloat16), w_ref[...],
                    preferred_element_type=jnp.float32) + bias_ref[...]
        y = (1.0 - beta_l) * s + beta_l * z               # identity-mapping update
        if relu:
            y = jnp.maximum(y, 0.0)
        if scale_out:
            y = isdv_ref[...] * y                         # pre-scale for next layer's H^T matmul
        out_ref[...] = y.astype(out_ref.dtype)

    if nk == 1:
        _finish(part)
    else:
        @pl.when(pl.program_id(1) == 0)
        def _():
            acc_ref[...] = jnp.zeros_like(acc_ref)

        acc_ref[...] += part

        @pl.when(pl.program_id(1) == nk - 1)
        def _():
            _finish(acc_ref[...])


def node_update(h8, t, isdv, x0, w, bias, *, alpha, beta_l, relu, scale_out):
    Np, E = h8.shape
    _, Dh = t.shape
    tm, tk, b_res = _prop_tiles(Np, E, Dh, with_x0=True)
    nm, nk = Np // tm, E // tk

    b_spec = (pl.BlockSpec((E, Dh), lambda i, k: (0, 0)) if b_res
              else pl.BlockSpec((tk, Dh), lambda i, k: (k, 0)))
    scratch = [] if nk == 1 else [pltpu.VMEM((tm, Dh), jnp.float32)]
    kernel = functools.partial(_node_update_kernel, nk=nk, tk=tk, b_resident=b_res,
                               alpha=float(alpha), beta_l=float(beta_l),
                               relu=bool(relu), scale_out=bool(scale_out))

    return pl.pallas_call(
        kernel,
        out_shape=jax.ShapeDtypeStruct((Np, Dh), jnp.bfloat16),
        grid_spec=pltpu.PrefetchScalarGridSpec(
            num_scalar_prefetch=0,
            grid=(nm, nk),
            in_specs=[pl.BlockSpec((tm, tk), lambda i, k: (i, k)),
                      b_spec,
                      pl.BlockSpec((tm, 1), lambda i, k: (i, 0)),
                      pl.BlockSpec((tm, Dh), lambda i, k: (i, 0)),
                      pl.BlockSpec((Dh, Dh), lambda i, k: (0, 0)),
                      pl.BlockSpec((1, Dh), lambda i, k: (0, 0))],
            out_specs=pl.BlockSpec((tm, Dh), lambda i, k: (i, 0)),
            scratch_shapes=scratch),
        compiler_params=pltpu.CompilerParams(
            dimension_semantics=("parallel", "arbitrary"),
            vmem_limit_bytes=_VMEM_LIMIT),
    )(h8, t, isdv, x0, w, bias.reshape(1, Dh))


# ---------------------------------------------------------------------------
# Model: parameters + forward
# ---------------------------------------------------------------------------

def init_params(key, input_dim, hidden_dim, output_dim, num_layers):
    keys = jax.random.split(key, 2 * (num_layers + 2))

    def linear_init(kw, kb, fan_in, fan_out):
        bound = 1.0 / np.sqrt(fan_in)
        w = jax.random.uniform(kw, (fan_in, fan_out), jnp.float32, -bound, bound)
        b = jax.random.uniform(kb, (fan_out,), jnp.float32, -bound, bound)
        return w, b

    w_in, b_in = linear_init(keys[0], keys[1], input_dim, hidden_dim)
    w_g, b_g = [], []
    for l in range(num_layers):
        w, b = linear_init(keys[2 + 2 * l], keys[3 + 2 * l], hidden_dim, hidden_dim)
        w_g.append(w)
        b_g.append(b)
    w_out, b_out = linear_init(keys[-2], keys[-1], hidden_dim, output_dim)
    return {"w_in": w_in, "b_in": b_in,
            "w_g": w_g, "b_g": b_g,
            "w_out": w_out, "b_out": b_out}


def hyper_resid_gcn_forward(x, H, params, *, alpha, beta, num_layers):
    """x: [num_nodes, input_dim], H: [num_nodes, num_edges] -> [num_nodes, output_dim]."""
    num_nodes, input_dim = x.shape
    _, num_edges = H.shape
    hidden_dim = params["w_in"].shape[1]
    output_dim = params["w_out"].shape[1]

    Np = _round_up(num_nodes, NODE_ALIGN)
    Ep = _round_up(num_edges, NODE_ALIGN)
    Din = _round_up(input_dim, FEAT_ALIGN)
    Dh = _round_up(hidden_dim, FEAT_ALIGN)
    Dout = _round_up(output_dim, FEAT_ALIGN)

    f32, bf16 = jnp.float32, jnp.bfloat16

    # Hypergraph degree normalization (cheap loop-invariant glue, computed once).
    H32 = H.astype(f32)
    deg_v = H32.sum(axis=1)
    deg_e = H32.sum(axis=0)
    inv_sqrt_dv = jnp.where(deg_v > 0, jax.lax.rsqrt(jnp.maximum(deg_v, 1e-12)), 0.0)
    inv_de = jnp.where(deg_e > 0, 1.0 / jnp.maximum(deg_e, 1e-12), 0.0)

    # Incidence stored once as raw 0/1 int8 (both orientations); the degree scalings
    # are folded into kernel epilogues.  Padded rows/cols are zero.
    # TODO(synk): assumes binary incidence (standard hypergraph H); a weighted H would
    # need a bf16 incidence path instead of int8 storage.
    H8 = _pad2(H32, Np, Ep, jnp.int8)        # [Np, Ep]
    HT8 = _pad2(H32.T, Ep, Np, jnp.int8)     # [Ep, Np]
    isdv = _pad1(inv_sqrt_dv, Np).reshape(Np, 1)   # D_v^{-1/2}, zero on padded rows
    ide = _pad1(inv_de, Ep).reshape(Ep, 1)         # D_e^{-1},  zero on padded rows

    x_bf = _pad2(x, Np, Din, bf16)
    w_in = _pad2(params["w_in"], Din, Dh, bf16)
    b_in = _pad1(params["b_in"], Dh)
    w_out = _pad2(params["w_out"], Dh, Dout, bf16)
    b_out = _pad1(params["b_out"], Dout)
    w_g = [_pad2(w, Dh, Dh, bf16) for w in params["w_g"]]
    b_g = [_pad1(b, Dh) for b in params["b_g"]]

    # fc_in: x0 (f32 GCNII residual) and xs = D_v^{-1/2} x0 (bf16, feeds the first
    # H^T matmul), both emitted from the same kernel epilogue.
    x0_f32, xs = linear(x_bf, w_in, b_in, row_scale=isdv)

    x_last = x0_f32.astype(bf16) if num_layers == 0 else None
    for l in range(num_layers):
        beta_l = float(np.log(beta / (l + 1) + 1.0))
        last = (l == num_layers - 1)
        # TODO(synk): dropout p=0 (module default) -> identity, omitted.
        t = edge_aggregate(HT8, xs, ide)                              # [Ep, Dh] bf16
        out = node_update(H8, t, isdv, x0_f32, w_g[l], b_g[l],
                          alpha=alpha, beta_l=beta_l,
                          relu=not last, scale_out=not last)          # [Np, Dh] bf16
        if last:
            x_last = out            # unscaled features for fc_out
        else:
            xs = out                # already D_v^{-1/2}-scaled for the next layer

    y = linear(x_last, w_out, b_out)                                  # [Np, Dout] f32
    # Single slice at the very end (everything above stays lane-dense / padded).
    return y[:num_nodes, :output_dim]


# ---------------------------------------------------------------------------
# Demo
# ---------------------------------------------------------------------------

if __name__ == "__main__":
    num_nodes, num_edges = 300, 200
    input_dim, hidden_dim, output_dim = 8, 32, 4
    num_layers = 2
    alpha, beta = 0.1, 0.5

    key = jax.random.PRNGKey(0)
    k_x, k_h, k_p = jax.random.split(key, 3)

    x = jax.random.normal(k_x, (num_nodes, input_dim), jnp.float32)
    # Random 0/1 incidence matrix; ensure every node is in at least one edge.
    H = (jax.random.uniform(k_h, (num_nodes, num_edges)) < 0.3).astype(jnp.float32)
    H = H.at[:, 0].set(1.0)

    params = init_params(k_p, input_dim, hidden_dim, output_dim, num_layers)

    fwd = jax.jit(functools.partial(hyper_resid_gcn_forward,
                                    alpha=alpha, beta=beta,
                                    num_layers=num_layers))
    y = fwd(x, H, params)
    y = jax.block_until_ready(y)
    assert y.shape == (num_nodes, output_dim)
    assert bool(jnp.all(jnp.isfinite(y)))
    print("KERNEL_OK")
</pallas_src>

<mosaic_0001>
module attributes {stable_mosaic.version = 11 : i64} {
  func.func @_linear_kernel(%arg0: i32, %arg1: i32, %arg2: i32, %arg3: memref<256x128xbf16, #tpu.memory_space<vmem>>, %arg4: memref<128x128xbf16, #tpu.memory_space<vmem>>, %arg5: memref<1x128xf32, #tpu.memory_space<vmem>>, %arg6: memref<256x1xf32, #tpu.memory_space<vmem>>, %arg7: memref<256x128xf32, #tpu.memory_space<vmem>>, %arg8: memref<256x128xbf16, #tpu.memory_space<vmem>>) attributes {dimension_semantics = [#tpu.dimension_semantics<parallel>, #tpu.dimension_semantics<parallel>, #tpu.dimension_semantics<arbitrary>], iteration_bounds = array<i64: 2, 1, 1>, scalar_prefetch = 0 : i64, scratch_operands = 0 : i64, tpu.core_type = #tpu.core_type<tc>, window_params = [{transform_indices = @transform_0, window_bounds = array<i64: 256, 128>}, {transform_indices = @transform_1, window_bounds = array<i64: 128, 128>}, {transform_indices = @transform_2, window_bounds = array<i64: 1, 128>}, {transform_indices = @transform_3, window_bounds = array<i64: 256, 1>}, {transform_indices = @transform_4, window_bounds = array<i64: 256, 128>}, {transform_indices = @transform_5, window_bounds = array<i64: 256, 128>}]} {
    %c0 = arith.constant 0 : index
    %c0_0 = arith.constant 0 : index
    %0 = vector.load %arg3[%c0, %c0_0] : memref<256x128xbf16, #tpu.memory_space<vmem>>, vector<256x128xbf16>
    %c0_1 = arith.constant 0 : index
    %c0_2 = arith.constant 0 : index
    %1 = vector.load %arg4[%c0_1, %c0_2] : memref<128x128xbf16, #tpu.memory_space<vmem>>, vector<128x128xbf16>
    %cst = arith.constant dense<0.000000e+00> : vector<256x128xf32>
    %2 = tpu.matmul %0, %1, %cst {dimension_numbers = #tpu.dot_dimension_numbers<[1], [0], [0], [1], [0, 0, 1, 1], [], []>} : vector<256x128xbf16>, vector<128x128xbf16>, vector<256x128xf32> -> vector<256x128xf32>
    %c0_3 = arith.constant 0 : index
    %c0_4 = arith.constant 0 : index
    %3 = vector.load %arg5[%c0_3, %c0_4] : memref<1x128xf32, #tpu.memory_space<vmem>>, vector<1x128xf32>
    %4 = vector.broadcast %3 : vector<1x128xf32> to vector<256x128xf32>
    %5 = arith.addf %2, %4 : vector<256x128xf32>
    %c0_5 = arith.constant 0 : index
    %c0_6 = arith.constant 0 : index
    %6 = vector.load %arg7[%c0_5, %c0_6] : memref<256x128xf32, #tpu.memory_space<vmem>>, vector<256x128xf32>
    tpu.vector_store %arg7[%c0_5, %c0_6], %5 {strides = array<i32>} : memref<256x128xf32, #tpu.memory_space<vmem>>, vector<256x128xf32>,
    %c0_7 = arith.constant 0 : index
    %c0_8 = arith.constant 0 : index
    %7 = vector.load %arg6[%c0_7, %c0_8] : memref<256x1xf32, #tpu.memory_space<vmem>>, vector<256x1xf32>
    %8 = vector.broadcast %7 : vector<256x1xf32> to vector<256x128xf32>
    %9 = arith.mulf %8, %5 : vector<256x128xf32>
    %10 = arith.truncf %9 : vector<256x128xf32> to vector<256x128xbf16>
    %c0_9 = arith.constant 0 : index
    %c0_10 = arith.constant 0 : index
    %11 = vector.load %arg8[%c0_9, %c0_10] : memref<256x128xbf16, #tpu.memory_space<vmem>>, vector<256x128xbf16>
    tpu.vector_store %arg8[%c0_9, %c0_10], %10 {strides = array<i32>} : memref<256x128xbf16, #tpu.memory_space<vmem>>, vector<256x128xbf16>,
    return
  }
  func.func @transform_0(%arg0: i32, %arg1: i32, %arg2: i32) -> (i32, i32) {
    %c0_i32 = arith.constant 0 : i32
    return %arg0, %arg2 : i32, i32
  }
  func.func @transform_1(%arg0: i32, %arg1: i32, %arg2: i32) -> (i32, i32) {
    %c0_i32 = arith.constant 0 : i32
    return %arg2, %arg1 : i32, i32
  }
  func.func @transform_2(%arg0: i32, %arg1: i32, %arg2: i32) -> (i32, i32) {
    %c0_i32 = arith.constant 0 : i32
    %c0_i32_0 = arith.constant 0 : i32
    return %c0_i32, %arg1 : i32, i32
  }
  func.func @transform_3(%arg0: i32, %arg1: i32, %arg2: i32) -> (i32, i32) {
    %c0_i32 = arith.constant 0 : i32
    %c0_i32_0 = arith.constant 0 : i32
    return %arg0, %c0_i32 : i32, i32
  }
  func.func @transform_4(%arg0: i32, %arg1: i32, %arg2: i32) -> (i32, i32) {
    %c0_i32 = arith.constant 0 : i32
    return %arg0, %arg1 : i32, i32
  }
  func.func @transform_5(%arg0: i32, %arg1: i32, %arg2: i32) -> (i32, i32) {
    %c0_i32 = arith.constant 0 : i32
    return %arg0, %arg1 : i32, i32
  }
}

module attributes {stable_mosaic.version = 11 : i64} {
  func.func @_edge_agg_kernel(%arg0: i32, %arg1: i32, %arg2: memref<256x512xi8, #tpu.memory_space<vmem>>, %arg3: memref<512x128xbf16, #tpu.memory_space<vmem>>, %arg4: memref<256x1xf32, #tpu.memory_space<vmem>>, %arg5: memref<256x128xbf16, #tpu.memory_space<vmem>>) attributes {dimension_semantics = [#tpu.dimension_semantics<parallel>, #tpu.dimension_semantics<arbitrary>], iteration_bounds = array<i64: 2, 1>, scalar_prefetch = 0 : i64, scratch_operands = 0 : i64, tpu.core_type = #tpu.core_type<tc>, window_params = [{transform_indices = @transform_0, window_bounds = array<i64: 256, 512>}, {pipeline_mode = #tpu.pipeline_mode<synchronous>, transform_indices = @transform_1, window_bounds = array<i64: 512, 128>}, {transform_indices = @transform_2, window_bounds = array<i64: 256, 1>}, {transform_indices = @transform_3, window_bounds = array<i64: 256, 128>}]} {
    %c0 = arith.constant 0 : index
    %c0_0 = arith.constant 0 : index
    %0 = vector.load %arg3[%c0, %c0_0] : memref<512x128xbf16, #tpu.memory_space<vmem>>, vector<512x128xbf16>
    %c0_1 = arith.constant 0 : index
    %c0_2 = arith.constant 0 : index
    %1 = vector.load %arg2[%c0_1, %c0_2] : memref<256x512xi8, #tpu.memory_space<vmem>>, vector<256x512xi8>
    %2 = arith.sitofp %1 : vector<256x512xi8> to vector<256x512xf32>
    %3 = arith.truncf %2 : vector<256x512xf32> to vector<256x512xbf16>
    %cst = arith.constant dense<0.000000e+00> : vector<256x128xf32>
    %4 = tpu.matmul %3, %0, %cst {dimension_numbers = #tpu.dot_dimension_numbers<[1], [0], [0], [1], [0, 0, 1, 1], [], []>} : vector<256x512xbf16>, vector<512x128xbf16>, vector<256x128xf32> -> vector<256x128xf32>
    %c0_3 = arith.constant 0 : index
    %c0_4 = arith.constant 0 : index
    %5 = vector.load %arg4[%c0_3, %c0_4] : memref<256x1xf32, #tpu.memory_space<vmem>>, vector<256x1xf32>
    %6 = vector.broadcast %5 : vector<256x1xf32> to vector<256x128xf32>
    %7 = arith.mulf %6, %4 : vector<256x128xf32>
    %8 = arith.truncf %7 : vector<256x128xf32> to vector<256x128xbf16>
    %c0_5 = arith.constant 0 : index
    %c0_6 = arith.constant 0 : index
    %9 = vector.load %arg5[%c0_5, %c0_6] : memref<256x128xbf16, #tpu.memory_space<vmem>>, vector<256x128xbf16>
    tpu.vector_store %arg5[%c0_5, %c0_6], %8 {strides = array<i32>} : memref<256x128xbf16, #tpu.memory_space<vmem>>, vector<256x128xbf16>,
    return
  }
  func.func @transform_0(%arg0: i32, %arg1: i32) -> (i32, i32) {
    %c0_i32 = arith.constant 0 : i32
    return %arg0, %arg1 : i32, i32
  }
  func.func @transform_1(%arg0: i32, %arg1: i32) -> (i32, i32) {
    %c0_i32 = arith.constant 0 : i32
    %c0_i32_0 = arith.constant 0 : i32
    %c0_i32_1 = arith.constant 0 : i32
    return %c0_i32, %c0_i32_0 : i32, i32
  }
  func.func @transform_2(%arg0: i32, %arg1: i32) -> (i32, i32) {
    %c0_i32 = arith.constant 0 : i32
    %c0_i32_0 = arith.constant 0 : i32
    return %arg0, %c0_i32 : i32, i32
  }
  func.func @transform_3(%arg0: i32, %arg1: i32) -> (i32, i32) {
    %c0_i32 = arith.constant 0 : i32
    %c0_i32_0 = arith.constant 0 : i32
    return %arg0, %c0_i32 : i32, i32
  }
}

module attributes {stable_mosaic.version = 11 : i64} {
  func.func @_node_update_kernel(%arg0: i32, %arg1: i32, %arg2: memref<256x512xi8, #tpu.memory_space<vmem>>, %arg3: memref<512x128xbf16, #tpu.memory_space<vmem>>, %arg4: memref<256x1xf32, #tpu.memory_space<vmem>>, %arg5: memref<256x128xf32, #tpu.memory_space<vmem>>, %arg6: memref<128x128xbf16, #tpu.memory_space<vmem>>, %arg7: memref<1x128xf32, #tpu.memory_space<vmem>>, %arg8: memref<256x128xbf16, #tpu.memory_space<vmem>>) attributes {dimension_semantics = [#tpu.dimension_semantics<parallel>, #tpu.dimension_semantics<arbitrary>], iteration_bounds = array<i64: 2, 1>, scalar_prefetch = 0 : i64, scratch_operands = 0 : i64, tpu.core_type = #tpu.core_type<tc>, window_params = [{transform_indices = @transform_0, window_bounds = array<i64: 256, 512>}, {pipeline_mode = #tpu.pipeline_mode<synchronous>, transform_indices = @transform_1, window_bounds = array<i64: 512, 128>}, {transform_indices = @transform_2, window_bounds = array<i64: 256, 1>}, {transform_indices = @transform_3, window_bounds = array<i64: 256, 128>}, {pipeline_mode = #tpu.pipeline_mode<synchronous>, transform_indices = @transform_4, window_bounds = array<i64: 128, 128>}, {pipeline_mode = #tpu.pipeline_mode<synchronous>, transform_indices = @transform_5, window_bounds = array<i64: 1, 128>}, {transform_indices = @transform_6, window_bounds = array<i64: 256, 128>}]} {
    %c0 = arith.constant 0 : index
    %c0_0 = arith.constant 0 : index
    %0 = vector.load %arg3[%c0, %c0_0] : memref<512x128xbf16, #tpu.memory_space<vmem>>, vector<512x128xbf16>
    %c0_1 = arith.constant 0 : index
    %c0_2 = arith.constant 0 : index
    %1 = vector.load %arg2[%c0_1, %c0_2] : memref<256x512xi8, #tpu.memory_space<vmem>>, vector<256x512xi8>
    %2 = arith.sitofp %1 : vector<256x512xi8> to vector<256x512xf32>
    %3 = arith.truncf %2 : vector<256x512xf32> to vector<256x512xbf16>
    %cst = arith.constant dense<0.000000e+00> : vector<256x128xf32>
    %4 = tpu.matmul %3, %0, %cst {dimension_numbers = #tpu.dot_dimension_numbers<[1], [0], [0], [1], [0, 0, 1, 1], [], []>} : vector<256x512xbf16>, vector<512x128xbf16>, vector<256x128xf32> -> vector<256x128xf32>
    %c0_3 = arith.constant 0 : index
    %c0_4 = arith.constant 0 : index
    %5 = vector.load %arg4[%c0_3, %c0_4] : memref<256x1xf32, #tpu.memory_space<vmem>>, vector<256x1xf32>
    %6 = vector.broadcast %5 : vector<256x1xf32> to vector<256x128xf32>
    %7 = arith.mulf %6, %4 : vector<256x128xf32>
    %cst_5 = arith.constant 0.899999976 : f32
    %8 = vector.broadcast %cst_5 : f32 to vector<256x128xf32>
    %9 = arith.mulf %8, %7 : vector<256x128xf32>
    %c0_6 = arith.constant 0 : index
    %c0_7 = arith.constant 0 : index
    %10 = vector.load %arg5[%c0_6, %c0_7] : memref<256x128xf32, #tpu.memory_space<vmem>>, vector<256x128xf32>
    %cst_8 = arith.constant 1.000000e-01 : f32
    %11 = vector.broadcast %cst_8 : f32 to vector<256x128xf32>
    %12 = arith.mulf %11, %10 : vector<256x128xf32>
    %13 = arith.addf %9, %12 : vector<256x128xf32>
    %14 = arith.truncf %13 : vector<256x128xf32> to vector<256x128xbf16>
    %c0_9 = arith.constant 0 : index
    %c0_10 = arith.constant 0 : index
    %15 = vector.load %arg6[%c0_9, %c0_10] : memref<128x128xbf16, #tpu.memory_space<vmem>>, vector<128x128xbf16>
    %cst_11 = arith.constant dense<0.000000e+00> : vector<256x128xf32>
    %16 = tpu.matmul %14, %15, %cst_11 {dimension_numbers = #tpu.dot_dimension_numbers<[1], [0], [0], [1], [0, 0, 1, 1], [], []>} : vector<256x128xbf16>, vector<128x128xbf16>, vector<256x128xf32> -> vector<256x128xf32>
    %c0_12 = arith.constant 0 : index
    %c0_13 = arith.constant 0 : index
    %17 = vector.load %arg7[%c0_12, %c0_13] : memref<1x128xf32, #tpu.memory_space<vmem>>, vector<1x128xf32>
    %18 = vector.broadcast %17 : vector<1x128xf32> to vector<256x128xf32>
    %19 = arith.addf %16, %18 : vector<256x128xf32>
    %cst_14 = arith.constant 0.776856422 : f32
    %20 = vector.broadcast %cst_14 : f32 to vector<256x128xf32>
    %21 = arith.mulf %20, %13 : vector<256x128xf32>
    %cst_15 = arith.constant 0.223143548 : f32
    %22 = vector.broadcast %cst_15 : f32 to vector<256x128xf32>
    %23 = arith.mulf %22, %19 : vector<256x128xf32>
    %24 = arith.addf %21, %23 : vector<256x128xf32>
    %25 = arith.truncf %24 : vector<256x128xf32> to vector<256x128xbf16>
    %c0_16 = arith.constant 0 : index
    %c0_17 = arith.constant 0 : index
    %26 = vector.load %arg8[%c0_16, %c0_17] : memref<256x128xbf16, #tpu.memory_space<vmem>>, vector<256x128xbf16>
    tpu.vector_store %arg8[%c0_16, %c0_17], %25 {strides = array<i32>} : memref<256x128xbf16, #tpu.memory_space<vmem>>, vector<256x128xbf16>,
    return
  }
  func.func @transform_0(%arg0: i32, %arg1: i32) -> (i32, i32) {
    %c0_i32 = arith.constant 0 : i32
    return %arg0, %arg1 : i32, i32
  }
  func.func @transform_1(%arg0: i32, %arg1: i32) -> (i32, i32) {
    %c0_i32 = arith.constant 0 : i32
    %c0_i32_0 = arith.constant 0 : i32
    %c0_i32_1 = arith.constant 0 : i32
    return %c0_i32, %c0_i32_0 : i32, i32
  }
  func.func @transform_2(%arg0: i32, %arg1: i32) -> (i32, i32) {
    %c0_i32 = arith.constant 0 : i32
    %c0_i32_0 = arith.constant 0 : i32
    return %arg0, %c0_i32 : i32, i32
  }
  func.func @transform_3(%arg0: i32, %arg1: i32) -> (i32, i32) {
    %c0_i32 = arith.constant 0 : i32
    %c0_i32_0 = arith.constant 0 : i32
    return %arg0, %c0_i32 : i32, i32
  }
  func.func @transform_4(%arg0: i32, %arg1: i32) -> (i32, i32) {
    %c0_i32 = arith.constant 0 : i32
    %c0_i32_0 = arith.constant 0 : i32
    %c0_i32_1 = arith.constant 0 : i32
    return %c0_i32, %c0_i32_0 : i32, i32
  }
  func.func @transform_5(%arg0: i32, %arg1: i32) -> (i32, i32) {
    %c0_i32 = arith.constant 0 : i32
    %c0_i32_0 = arith.constant 0 : i32
    %c0_i32_1 = arith.constant 0 : i32
    return %c0_i32, %c0_i32_0 : i32, i32
  }
  func.func @transform_6(%arg0: i32, %arg1: i32) -> (i32, i32) {
    %c0_i32 = arith.constant 0 : i32
    %c0_i32_0 = arith.constant 0 : i32
    return %arg0, %c0_i32 : i32, i32
  }
}

module attributes {stable_mosaic.version = 11 : i64} {
  func.func @_node_update_kernel(%arg0: i32, %arg1: i32, %arg2: memref<256x512xi8, #tpu.memory_space<vmem>>, %arg3: memref<512x128xbf16, #tpu.memory_space<vmem>>, %arg4: memref<256x1xf32, #tpu.memory_space<vmem>>, %arg5: memref<256x128xf32, #tpu.memory_space<vmem>>, %arg6: memref<128x128xbf16, #tpu.memory_space<vmem>>, %arg7: memref<1x128xf32, #tpu.memory_space<vmem>>, %arg8: memref<256x128xbf16, #tpu.memory_space<vmem>>) attributes {dimension_semantics = [#tpu.dimension_semantics<parallel>, #tpu.dimension_semantics<arbitrary>], iteration_bounds = array<i64: 2, 1>, scalar_prefetch = 0 : i64, scratch_operands = 0 : i64, tpu.core_type = #tpu.core_type<tc>, window_params = [{transform_indices = @transform_0, window_bounds = array<i64: 256, 512>}, {pipeline_mode = #tpu.pipeline_mode<synchronous>, transform_indices = @transform_1, window_bounds = array<i64: 512, 128>}, {transform_indices = @transform_2, window_bounds = array<i64: 256, 1>}, {transform_indices = @transform_3, window_bounds = array<i64: 256, 128>}, {pipeline_mode = #tpu.pipeline_mode<synchronous>, transform_indices = @transform_4, window_bounds = array<i64: 128, 128>}, {pipeline_mode = #tpu.pipeline_mode<synchronous>, transform_indices = @transform_5, window_bounds = array<i64: 1, 128>}, {transform_indices = @transform_6, window_bounds = array<i64: 256, 128>}]} {
    %c0 = arith.constant 0 : index
    %c0_0 = arith.constant 0 : index
    %0 = vector.load %arg3[%c0, %c0_0] : memref<512x128xbf16, #tpu.memory_space<vmem>>, vector<512x128xbf16>
    %c0_1 = arith.constant 0 : index
    %c0_2 = arith.constant 0 : index
    %1 = vector.load %arg2[%c0_1, %c0_2] : memref<256x512xi8, #tpu.memory_space<vmem>>, vector<256x512xi8>
    %2 = arith.sitofp %1 : vector<256x512xi8> to vector<256x512xf32>
    %3 = arith.truncf %2 : vector<256x512xf32> to vector<256x512xbf16>
    %cst = arith.constant dense<0.000000e+00> : vector<256x128xf32>
    %4 = tpu.matmul %3, %0, %cst {dimension_numbers = #tpu.dot_dimension_numbers<[1], [0], [0], [1], [0, 0, 1, 1], [], []>} : vector<256x512xbf16>, vector<512x128xbf16>, vector<256x128xf32> -> vector<256x128xf32>
    %c0_3 = arith.constant 0 : index
    %c0_4 = arith.constant 0 : index
    %5 = vector.load %arg4[%c0_3, %c0_4] : memref<256x1xf32, #tpu.memory_space<vmem>>, vector<256x1xf32>
    %6 = vector.broadcast %5 : vector<256x1xf32> to vector<256x128xf32>
    %7 = arith.mulf %6, %4 : vector<256x128xf32>
    %cst_5 = arith.constant 0.899999976 : f32
    %8 = vector.broadcast %cst_5 : f32 to vector<256x128xf32>
    %9 = arith.mulf %8, %7 : vector<256x128xf32>
    %c0_6 = arith.constant 0 : index
    %c0_7 = arith.constant 0 : index
    %10 = vector.load %arg5[%c0_6, %c0_7] : memref<256x128xf32, #tpu.memory_space<vmem>>, vector<256x128xf32>
    %cst_8 = arith.constant 1.000000e-01 : f32
    %11 = vector.broadcast %cst_8 : f32 to vector<256x128xf32>
    %12 = arith.mulf %11, %10 : vector<256x128xf32>
    %13 = arith.addf %9, %12 : vector<256x128xf32>
    %14 = arith.truncf %13 : vector<256x128xf32> to vector<256x128xbf16>
    %c0_9 = arith.constant 0 : index
    %c0_10 = arith.constant 0 : index
    %15 = vector.load %arg6[%c0_9, %c0_10] : memref<128x128xbf16, #tpu.memory_space<vmem>>, vector<128x128xbf16>
    %cst_11 = arith.constant dense<0.000000e+00> : vector<256x128xf32>
    %16 = tpu.matmul %14, %15, %cst_11 {dimension_numbers = #tpu.dot_dimension_numbers<[1], [0], [0], [1], [0, 0, 1, 1], [], []>} : vector<256x128xbf16>, vector<128x128xbf16>, vector<256x128xf32> -> vector<256x128xf32>
    %c0_12 = arith.constant 0 : index
    %c0_13 = arith.constant 0 : index
    %17 = vector.load %arg7[%c0_12, %c0_13] : memref<1x128xf32, #tpu.memory_space<vmem>>, vector<1x128xf32>
    %18 = vector.broadcast %17 : vector<1x128xf32> to vector<256x128xf32>
    %19 = arith.addf %16, %18 : vector<256x128xf32>
    %cst_14 = arith.constant 0.594534874 : f32
    %20 = vector.broadcast %cst_14 : f32 to vector<256x128xf32>
    %21 = arith.mulf %20, %13 : vector<256x128xf32>
    %cst_15 = arith.constant 0.405465096 : f32
    %22 = vector.broadcast %cst_15 : f32 to vector<256x128xf32>
    %23 = arith.mulf %22, %19 : vector<256x128xf32>
    %24 = arith.addf %21, %23 : vector<256x128xf32>
    %cst_16 = arith.constant 0.000000e+00 : f32
    %25 = vector.broadcast %cst_16 : f32 to vector<256x128xf32>
    %26 = arith.maximumf %24, %25 : vector<256x128xf32>
    %c0_17 = arith.constant 0 : index
    %c0_18 = arith.constant 0 : index
    %27 = vector.load %arg4[%c0_17, %c0_18] : memref<256x1xf32, #tpu.memory_space<vmem>>, vector<256x1xf32>
    %28 = vector.broadcast %27 : vector<256x1xf32> to vector<256x128xf32>
    %29 = arith.mulf %28, %26 : vector<256x128xf32>
    %30 = arith.truncf %29 : vector<256x128xf32> to vector<256x128xbf16>
    %c0_19 = arith.constant 0 : index
    %c0_20 = arith.constant 0 : index
    %31 = vector.load %arg8[%c0_19, %c0_20] : memref<256x128xbf16, #tpu.memory_space<vmem>>, vector<256x128xbf16>
    tpu.vector_store %arg8[%c0_19, %c0_20], %30 {strides = array<i32>} : memref<256x128xbf16, #tpu.memory_space<vmem>>, vector<256x128xbf16>,
    return
  }
  func.func @transform_0(%arg0: i32, %arg1: i32) -> (i32, i32) {
    %c0_i32 = arith.constant 0 : i32
    return %arg0, %arg1 : i32, i32
  }
  func.func @transform_1(%arg0: i32, %arg1: i32) -> (i32, i32) {
    %c0_i32 = arith.constant 0 : i32
    %c0_i32_0 = arith.constant 0 : i32
    %c0_i32_1 = arith.constant 0 : i32
    return %c0_i32, %c0_i32_0 : i32, i32
  }
  func.func @transform_2(%arg0: i32, %arg1: i32) -> (i32, i32) {
    %c0_i32 = arith.constant 0 : i32
    %c0_i32_0 = arith.constant 0 : i32
    return %arg0, %c0_i32 : i32, i32
  }
  func.func @transform_3(%arg0: i32, %arg1: i32) -> (i32, i32) {
    %c0_i32 = arith.constant 0 : i32
    %c0_i32_0 = arith.constant 0 : i32
    return %arg0, %c0_i32 : i32, i32
  }
  func.func @transform_4(%arg0: i32, %arg1: i32) -> (i32, i32) {
    %c0_i32 = arith.constant 0 : i32
    %c0_i32_0 = arith.constant 0 : i32
    %c0_i32_1 = arith.constant 0 : i32
    return %c0_i32, %c0_i32_0 : i32, i32
  }
  func.func @transform_5(%arg0: i32, %arg1: i32) -> (i32, i32) {
    %c0_i32 = arith.constant 0 : i32
    %c0_i32_0 = arith.constant 0 : i32
    %c0_i32_1 = arith.constant 0 : i32
    return %c0_i32, %c0_i32_0 : i32, i32
  }
  func.func @transform_6(%arg0: i32, %arg1: i32) -> (i32, i32) {
    %c0_i32 = arith.constant 0 : i32
    %c0_i32_0 = arith.constant 0 : i32
    return %arg0, %c0_i32 : i32, i32
  }
}

module attributes {stable_mosaic.version = 11 : i64} {
  func.func @_linear_kernel(%arg0: i32, %arg1: i32, %arg2: i32, %arg3: memref<256x128xbf16, #tpu.memory_space<vmem>>, %arg4: memref<128x128xbf16, #tpu.memory_space<vmem>>, %arg5: memref<1x128xf32, #tpu.memory_space<vmem>>, %arg6: memref<256x128xf32, #tpu.memory_space<vmem>>) attributes {dimension_semantics = [#tpu.dimension_semantics<parallel>, #tpu.dimension_semantics<parallel>, #tpu.dimension_semantics<arbitrary>], iteration_bounds = array<i64: 2, 1, 1>, scalar_prefetch = 0 : i64, scratch_operands = 0 : i64, tpu.core_type = #tpu.core_type<tc>, window_params = [{transform_indices = @transform_0, window_bounds = array<i64: 256, 128>}, {transform_indices = @transform_1, window_bounds = array<i64: 128, 128>}, {transform_indices = @transform_2, window_bounds = array<i64: 1, 128>}, {transform_indices = @transform_3, window_bounds = array<i64: 256, 128>}]} {
    %c0 = arith.constant 0 : index
    %c0_0 = arith.constant 0 : index
    %0 = vector.load %arg3[%c0, %c0_0] : memref<256x128xbf16, #tpu.memory_space<vmem>>, vector<256x128xbf16>
    %c0_1 = arith.constant 0 : index
    %c0_2 = arith.constant 0 : index
    %1 = vector.load %arg4[%c0_1, %c0_2] : memref<128x128xbf16, #tpu.memory_space<vmem>>, vector<128x128xbf16>
    %cst = arith.constant dense<0.000000e+00> : vector<256x128xf32>
    %2 = tpu.matmul %0, %1, %cst {dimension_numbers = #tpu.dot_dimension_numbers<[1], [0], [0], [1], [0, 0, 1, 1], [], []>} : vector<256x128xbf16>, vector<128x128xbf16>, vector<256x128xf32> -> vector<256x128xf32>
    %c0_3 = arith.constant 0 : index
    %c0_4 = arith.constant 0 : index
    %3 = vector.load %arg5[%c0_3, %c0_4] : memref<1x128xf32, #tpu.memory_space<vmem>>, vector<1x128xf32>
    %4 = vector.broadcast %3 : vector<1x128xf32> to vector<256x128xf32>
    %5 = arith.addf %2, %4 : vector<256x128xf32>
    %c0_5 = arith.constant 0 : index
    %c0_6 = arith.constant 0 : index
    %6 = vector.load %arg6[%c0_5, %c0_6] : memref<256x128xf32, #tpu.memory_space<vmem>>, vector<256x128xf32>
    tpu.vector_store %arg6[%c0_5, %c0_6], %5 {strides = array<i32>} : memref<256x128xf32, #tpu.memory_space<vmem>>, vector<256x128xf32>,
    return
  }
  func.func @transform_0(%arg0: i32, %arg1: i32, %arg2: i32) -> (i32, i32) {
    %c0_i32 = arith.constant 0 : i32
    return %arg0, %arg2 : i32, i32
  }
  func.func @transform_1(%arg0: i32, %arg1: i32, %arg2: i32) -> (i32, i32) {
    %c0_i32 = arith.constant 0 : i32
    return %arg2, %arg1 : i32, i32
  }
  func.func @transform_2(%arg0: i32, %arg1: i32, %arg2: i32) -> (i32, i32) {
    %c0_i32 = arith.constant 0 : i32
    %c0_i32_0 = arith.constant 0 : i32
    return %c0_i32, %arg1 : i32, i32
  }
  func.func @transform_3(%arg0: i32, %arg1: i32, %arg2: i32) -> (i32, i32) {
    %c0_i32 = arith.constant 0 : i32
    return %arg0, %arg1 : i32, i32
  }
}

</mosaic_0001>

<llo_original>
// kernel: hyper_resid_gcn_forward.6
$region0: #{hyper_resid_gcn_forward.6}
  #allocation0 [shape = 'u32[]', space=smem, size = 0x4, offset = 0x4, fixed_abs, tag = 'smem constant byte address 0x4 - core index']
  #allocation1 [shape = 'u32[72,128]{1,0:T(1,128)}', space=vmem, size = 0x9000, scoped, tag = 'internal scratch']
  %s0 = inlined_call_operand.vmem [shape: bf16[512,128], index: 0, kind: input, shape index: {}]
  %s1 = inlined_call_operand.vmem [shape: bf16[128,128], index: 1, kind: input, shape index: {}]
  %s2 = inlined_call_operand.vmem [shape: f32[1,128], index: 2, kind: input, shape index: {}]
  %s3 = inlined_call_operand.vmem [shape: f32[512,1], index: 3, kind: input, shape index: {}]
  %s4 = inlined_call_operand.vmem [shape: f32[512,128], index: 4, kind: output, shape index: {0}]
  %s5 = inlined_call_operand.vmem [shape: bf16[512,128], index: 5, kind: output, shape index: {1}]
  %6 = xla_tuple %s4, %s5
  %s7 = sld [smem:[#allocation0]]
  $region57: #{hyper_resid_gcn_forward.6} parent=0
    _
  %s9 = ssub.s32 1, %s7
  %s10 = scalar_select 0, %s9, %s7
  loop: start=0, step=1, limit=4
  $region2: #{hyper_resid_gcn_forward.6} parent=0 // loop_pre_header
    _
  $region3: #{hyper_resid_gcn_forward.6} parent=0 // loop_header
    %s12 = sphi 0, %s16
    %p13 = scmp.ge.s32.totalorder %s12, 4
    %s19 = sphi 0, %s38
    %s20 = sphi 0, %s34
    %s21 = sphi 0, %s30
    %s22 = sphi 0, %s19
    %s23 = sphi 0, %s20
    %s24 = sphi 0, %s21
    %s25 = sphi 0, %s22
    %s26 = sphi 0, %s23
    %s27 = sphi 0, %s24
    %s43 = sphi 0, %s45
    %s46 = sphi 0, %s43
    %s47 = sphi 0, %s46
    %s63 = sphi 0, %s47
    %s71 = sphi 0, %s73
    %s74 = sphi 0, %s71
    %s75 = sphi 0, %s74
    %s91 = sphi 0, %s75
    %s97 = sphi 0, %s99
    %s100 = sphi 0, %s97
    %s101 = sphi 0, %s100
    %s117 = sphi 0, %s101
    %s123 = sphi 0, %s125
    %s126 = sphi 0, %s123
    %s127 = sphi 0, %s126
    %s143 = sphi 0, %s127
    %s151 = sphi 0, %s153
    %s154 = sphi 0, %s151
    %s155 = sphi 0, %s154
    %s171 = sphi 0, %s155
    %s179 = sphi 0, %s181
    %s182 = sphi 0, %s179
    %s183 = sphi 0, %s182
    %s199 = sphi 0, %s183
  $region4: #{hyper_resid_gcn_forward.6} parent=0 // loop_header_branch
    %15 = sbr.rel (%p13) target = $region8
  $region5: #{hyper_resid_gcn_forward.6} parent=0 // loop_body
    %s17 = ssub.s32 %s12, 1
    %s18 = ssub.s32 %s12, 2
    %s28 = sadd.s32 1, %s21
    %p29 = scmp.ge.s32.totalorder %s28, 1
    %s30 = scalar_select %p29, 0, %s28
    %s31 = sadd.s32 1, %s20
    %s32 = scalar_select %p29, %s31, %s20
    %p33 = scmp.ge.s32.totalorder %s32, 1
    %s34 = scalar_select %p33, 0, %s32
    %s35 = sadd.s32 1, %s19
    %s36 = scalar_select %p33, %s35, %s19
    %p37 = scmp.ge.s32.totalorder %s36, 2
    %s38 = scalar_select %p37, 0, %s36
    %s39 = ssub.s32 %s19, %s38
    %s40 = ssub.s32 %s21, %s30
    %s41 = sor.u32 %s39, %s40
    %p42 = scmp.eq.s32.totalorder %s41, 0
    %s44 = sadd.s32 %s43, 1
    %s45 = scalar_select %p42, %s43, %s44
    %p48 = pneg %p42
    %p49 = scmp.eq.s32.totalorder %s12, 1
    %p50 = por %p48, %p49
    %p51 = scmp.ne.s32.totalorder %s43, %s46
    %p52 = scmp.eq.s32.totalorder %s12, 0
    %p53 = por %p51, %p52
    %p54 = scmp.ne.s32.totalorder %s43, %s46
    %p55 = scmp.eq.s32.totalorder %s17, 1
    %p56 = por %p54, %p55
    %p57 = scmp.ne.s32.totalorder %s46, %s47
    %p58 = scmp.eq.s32.totalorder %s17, 0
    %p59 = por %p57, %p58
    %p60 = scmp.ne.s32.totalorder %s46, %s47
    %p61 = scmp.eq.s32.totalorder %s18, 1
    %p62 = por %p60, %p61
    %p64 = scmp.ne.s32.totalorder %s47, %s63
    %p65 = scmp.eq.s32.totalorder %s18, 0
    %p66 = por %p64, %p65
    %s67 = ssub.s32 %s21, %s30
    %s68 = ssub.s32 %s20, %s34
    %s69 = sor.u32 %s67, %s68
    %p70 = scmp.eq.s32.totalorder %s69, 0
    %s72 = sadd.s32 %s71, 1
    %s73 = scalar_select %p70, %s71, %s72
    %p76 = pneg %p70
    %p77 = scmp.eq.s32.totalorder %s12, 1
    %p78 = por %p76, %p77
    %p79 = scmp.ne.s32.totalorder %s71, %s74
    %p80 = scmp.eq.s32.totalorder %s12, 0
    %p81 = por %p79, %p80
    %p82 = scmp.ne.s32.totalorder %s71, %s74
    %p83 = scmp.eq.s32.totalorder %s17, 1
    %p84 = por %p82, %p83
    %p85 = scmp.ne.s32.totalorder %s74, %s75
    %p86 = scmp.eq.s32.totalorder %s17, 0
    %p87 = por %p85, %p86
    %p88 = scmp.ne.s32.totalorder %s74, %s75
    %p89 = scmp.eq.s32.totalorder %s18, 1
    %p90 = por %p88, %p89
    %p92 = scmp.ne.s32.totalorder %s75, %s91
    %p93 = scmp.eq.s32.totalorder %s18, 0
    %p94 = por %p92, %p93
    %s95 = ssub.s32 %s20, %s34
    %p96 = scmp.eq.s32.totalorder %s95, 0
    %s98 = sadd.s32 %s97, 1
    %s99 = scalar_select %p96, %s97, %s98
    %p102 = pneg %p96
    %p103 = scmp.eq.s32.totalorder %s12, 1
    %p104 = por %p102, %p103
    %p105 = scmp.ne.s32.totalorder %s97, %s100
    %p106 = scmp.eq.s32.totalorder %s12, 0
    %p107 = por %p105, %p106
    %p108 = scmp.ne.s32.totalorder %s97, %s100
    %p109 = scmp.eq.s32.totalorder %s17, 1
    %p110 = por %p108, %p109
    %p111 = scmp.ne.s32.totalorder %s100, %s101
    %p112 = scmp.eq.s32.totalorder %s17, 0
    %p113 = por %p111, %p112
    %p114 = scmp.ne.s32.totalorder %s100, %s101
    %p115 = scmp.eq.s32.totalorder %s18, 1
    %p116 = por %p114, %p115
    %p118 = scmp.ne.s32.totalorder %s101, %s117
    %p119 = scmp.eq.s32.totalorder %s18, 0
    %p120 = por %p118, %p119
    %s121 = ssub.s32 %s19, %s38
    %p122 = scmp.eq.s32.totalorder %s121, 0
    %s124 = sadd.s32 %s123, 1
    %s125 = scalar_select %p122, %s123, %s124
    %p128 = pneg %p122
    %p129 = scmp.eq.s32.totalorder %s12, 1
    %p130 = por %p128, %p129
    %p131 = scmp.ne.s32.totalorder %s123, %s126
    %p132 = scmp.eq.s32.totalorder %s12, 0
    %p133 = por %p131, %p132
    %p134 = scmp.ne.s32.totalorder %s123, %s126
    %p135 = scmp.eq.s32.totalorder %s17, 1
    %p136 = por %p134, %p135
    %p137 = scmp.ne.s32.totalorder %s126, %s127
    %p138 = scmp.eq.s32.totalorder %s17, 0
    %p139 = por %p137, %p138
    %p140 = scmp.ne.s32.totalorder %s126, %s127
    %p141 = scmp.eq.s32.totalorder %s18, 1
    %p142 = por %p140, %p141
    %p144 = scmp.ne.s32.totalorder %s127, %s143
    %p145 = scmp.eq.s32.totalorder %s18, 0
    %p146 = por %p144, %p145
    %s147 = ssub.s32 %s19, %s38
    %s148 = ssub.s32 %s20, %s34
    %s149 = sor.u32 %s147, %s148
    %p150 = scmp.eq.s32.totalorder %s149, 0
    %s152 = sadd.s32 %s151, 1
    %s153 = scalar_select %p150, %s151, %s152
    %p156 = pneg %p150
    %p157 = scmp.eq.s32.totalorder %s12, 1
    %p158 = por %p156, %p157
    %p159 = scmp.ne.s32.totalorder %s151, %s154
    %p160 = scmp.eq.s32.totalorder %s12, 0
    %p161 = por %p159, %p160
    %p162 = scmp.ne.s32.totalorder %s151, %s154
    %p163 = scmp.eq.s32.totalorder %s17, 1
    %p164 = por %p162, %p163
    %p165 = scmp.ne.s32.totalorder %s154, %s155
    %p166 = scmp.eq.s32.totalorder %s17, 0
    %p167 = por %p165, %p166
    %p168 = scmp.ne.s32.totalorder %s154, %s155
    %p169 = scmp.eq.s32.totalorder %s18, 1
    %p170 = por %p168, %p169
    %p172 = scmp.ne.s32.totalorder %s155, %s171
    %p173 = scmp.eq.s32.totalorder %s18, 0
    %p174 = por %p172, %p173
    %s175 = ssub.s32 %s19, %s38
    %s176 = ssub.s32 %s20, %s34
    %s177 = sor.u32 %s175, %s176
    %p178 = scmp.eq.s32.totalorder %s177, 0
    %s180 = sadd.s32 %s179, 1
    %s181 = scalar_select %p178, %s179, %s180
    %p184 = pneg %p178
    %p185 = scmp.eq.s32.totalorder %s12, 1
    %p186 = por %p184, %p185
    %p187 = scmp.ne.s32.totalorder %s179, %s182
    %p188 = scmp.eq.s32.totalorder %s12, 0
    %p189 = por %p187, %p188
    %p190 = scmp.ne.s32.totalorder %s179, %s182
    %p191 = scmp.eq.s32.totalorder %s17, 1
    %p192 = por %p190, %p191
    %p193 = scmp.ne.s32.totalorder %s182, %s183
    %p194 = scmp.eq.s32.totalorder %s17, 0
    %p195 = por %p193, %p194
    %p196 = scmp.ne.s32.totalorder %s182, %s183
    %p197 = scmp.eq.s32.totalorder %s18, 1
    %p198 = por %p196, %p197
    %p200 = scmp.ne.s32.totalorder %s183, %s199
    %p201 = scmp.eq.s32.totalorder %s18, 0
    %p202 = por %p200, %p201
    %p203 = scmp.le.s32.totalorder 1, %s12
    %p204 = scmp.lt.s32.totalorder %s12, 3
    %p205 = pnand %p203, %p204
    %p206 = pneg %p205
    // Predicated region
    $region9: #{hyper_resid_gcn_forward.6} parent=5 // pred_check
      _
    $region10: #{hyper_resid_gcn_forward.6} parent=5 // pred_check_branch
      %208 = sbr.rel (%p205) target = $region12
    $region11: #{hyper_resid_gcn_forward.6} parent=5 // pred_region
      %s209 = ssub.s32 %s12, 1
      // Predicated region
      $region13: #{hyper_resid_gcn_forward.6} parent=11 // pred_check
        %p210 = pneg %p87
      $region14: #{hyper_resid_gcn_forward.6} parent=11 // pred_check_branch
        %212 = sbr.rel (%p210) target = $region16
      $region15: #{hyper_resid_gcn_forward.6} parent=11 // pred_region
        %s213 = smul.u32 16, %s24
        %p214 = scmp.lt.s32.totalorder %s213, 15
        %s215 = scalar_select %p214, %s213, 15
        %p216 = scmp.lt.s32.totalorder %s23, 0
        %s217 = scalar_select %p216, %s23, 0
        %s218 = sadd.s32 %s217, %s215
        %s219 = smul.addr %s218, 4
        %s220 = scalar_lea.vmem %s1, %s219
        %s221 = smul.u32 16, %s24
      $region16: #{hyper_resid_gcn_forward.6} parent=11 // pred_fallthru
        _
      // Predicated region
      $region17: #{hyper_resid_gcn_forward.6} parent=11 // pred_check
        %p222 = pneg %p113
      $region18: #{hyper_resid_gcn_forward.6} parent=11 // pred_check_branch
        %224 = sbr.rel (%p222) target = $region20
      $region19: #{hyper_resid_gcn_forward.6} parent=11 // pred_region
        %p225 = scmp.lt.s32.totalorder %s23, 0
        %s226 = scalar_select %p225, %s23, 0
        %s227 = scalar_lea.vmem %s2, %s226
      $region20: #{hyper_resid_gcn_forward.6} parent=11 // pred_fallthru
        _
    $region12: #{hyper_resid_gcn_forward.6} parent=5 // pred_fallthru
      _
    %p228 = scmp.lt.s32.totalorder %s12, 2
    // Predicated region
    $region21: #{hyper_resid_gcn_forward.6} parent=5 // pred_check
      %p229 = pneg %p228
    $region22: #{hyper_resid_gcn_forward.6} parent=5 // pred_check_branch
      %231 = sbr.rel (%p229) target = $region24
    $region23: #{hyper_resid_gcn_forward.6} parent=5 // pred_region
      // Predicated region
      $region25: #{hyper_resid_gcn_forward.6} parent=23 // pred_check
        %p232 = pneg %p53
      $region26: #{hyper_resid_gcn_forward.6} parent=23 // pred_check_branch
        %234 = sbr.rel (%p232) target = $region28
      $region27: #{hyper_resid_gcn_forward.6} parent=23 // pred_region
        %s235 = smul.u32 32, %s19
        %p236 = scmp.lt.s32.totalorder %s235, 63
        %s237 = scalar_select %p236, %s235, 63
        %p238 = scmp.lt.s32.totalorder %s21, 0
        %s239 = scalar_select %p238, %s21, 0
        %s240 = sadd.s32 %s239, %s237
        %s241 = smul.addr %s240, 4
        %s242 = scalar_lea.vmem %s0, %s241
        %s243 = smul.u32 32, %s19
      $region28: #{hyper_resid_gcn_forward.6} parent=23 // pred_fallthru
        _
      // Predicated region
      $region29: #{hyper_resid_gcn_forward.6} parent=23 // pred_check
        %p244 = pneg %p133
      $region30: #{hyper_resid_gcn_forward.6} parent=23 // pred_check_branch
        %246 = sbr.rel (%p244) target = $region32
      $region31: #{hyper_resid_gcn_forward.6} parent=23 // pred_region
        %s247 = smul.u32 32, %s19
        %p248 = scmp.lt.s32.totalorder %s247, 63
        %s249 = scalar_select %p248, %s247, 63
        %s250 = smul.addr %s249, 8
        %s251 = scalar_lea.vmem %s3, %s250
        %s252 = smul.u32 32, %s19
      $region32: #{hyper_resid_gcn_forward.6} parent=23 // pred_fallthru
        _
    $region24: #{hyper_resid_gcn_forward.6} parent=5 // pred_fallthru
      _
    %p253 = scmp.le.s32.totalorder 1, %s12
    %p254 = scmp.lt.s32.totalorder %s12, 3
    %p255 = pnand %p253, %p254
    %p256 = pneg %p255
    // Predicated region
    $region33: #{hyper_resid_gcn_forward.6} parent=5 // pred_check
      _
    $region34: #{hyper_resid_gcn_forward.6} parent=5 // pred_check_branch
      %258 = sbr.rel (%p255) target = $region36
    $region35: #{hyper_resid_gcn_forward.6} parent=5 // pred_region
      %s259 = ssub.s32 %s12, 1
      %s260 = smul.u32 32, %s22
      %p261 = scmp.lt.s32.totalorder %s260, 63
      %s262 = scalar_select %p261, %s260, 63
      %p263 = scmp.lt.s32.totalorder %s24, 0
      %s264 = scalar_select %p263, %s24, 0
      %s265 = sadd.s32 %s264, %s262
      %s266 = smul.addr %s265, 4
      %s267 = scalar_lea.vmem %s0, %s266
      %p268 = pneg %p59
      %p269 = pneg %p56
      %s270 = smul.u32 16, %s24
      %p271 = scmp.lt.s32.totalorder %s270, 15
      %s272 = scalar_select %p271, %s270, 15
      %p273 = scmp.lt.s32.totalorder %s23, 0
      %s274 = scalar_select %p273, %s23, 0
      %s275 = sadd.s32 %s274, %s272
      %s276 = smul.addr %s275, 4
      %s277 = scalar_lea.vmem %s1, %s276
      %p278 = pneg %p87
      %p279 = pneg %p84
      %p280 = scmp.lt.s32.totalorder %s23, 0
      %s281 = scalar_select %p280, %s23, 0
      %s282 = scalar_lea.vmem %s2, %s281
      %p283 = pneg %p113
      %p284 = pneg %p110
      %s285 = smul.u32 32, %s22
      %p286 = scmp.lt.s32.totalorder %s285, 63
      %s287 = scalar_select %p286, %s285, 63
      %s288 = smul.addr %s287, 8
      %s289 = scalar_lea.vmem %s3, %s288
      %p290 = pneg %p139
      %p291 = pneg %p136
      %p292 = pneg %p167
      %p293 = pneg %p164
      %s294 = smul.u32 32, %s22
      %p295 = scmp.lt.s32.totalorder %s294, 63
      %s296 = scalar_select %p295, %s294, 63
      %p297 = scmp.lt.s32.totalorder %s23, 0
      %s298 = scalar_select %p297, %s23, 0
      %s299 = sadd.s32 %s298, %s296
      %s300 = smul.addr %s299, 8
      %s301 = scalar_lea.vmem %s4, %s300
      %p302 = pneg %p195
      %p303 = pneg %p192
      %s304 = smul.u32 32, %s22
      %p305 = scmp.lt.s32.totalorder %s304, 63
      %s306 = scalar_select %p305, %s304, 63
      %p307 = scmp.lt.s32.totalorder %s23, 0
      %s308 = scalar_select %p307, %s23, 0
      %s309 = sadd.s32 %s308, %s306
      %s310 = smul.addr %s309, 4
      %s311 = scalar_lea.vmem %s5, %s310
      %s312 = smul.u32 32, %s22
      %p313 = scmp.lt.s32.totalorder %s312, 63
      %s314 = scalar_select %p313, %s312, 63
      %p315 = scmp.lt.s32.totalorder %s24, 0
      %s316 = scalar_select %p315, %s24, 0
      %s317 = sadd.s32 %s316, %s314
      %s318 = smul.addr %s317, 4
      %s319 = scalar_lea.vmem %s0, %s318
      %s320 = smul.u32 32, %s22
      %s321 = smul.u32 16, %s24
      %p322 = scmp.lt.s32.totalorder %s321, 15
      %s323 = scalar_select %p322, %s321, 15
      %p324 = scmp.lt.s32.totalorder %s23, 0
      %s325 = scalar_select %p324, %s23, 0
      %s326 = sadd.s32 %s325, %s323
      %s327 = smul.addr %s326, 4
      %s328 = scalar_lea.vmem %s1, %s327
      %s329 = smul.u32 16, %s24
      %p330 = scmp.lt.s32.totalorder %s23, 0
      %s331 = scalar_select %p330, %s23, 0
      %s332 = scalar_lea.vmem %s2, %s331
      %s333 = smul.u32 32, %s22
      %p334 = scmp.lt.s32.totalorder %s333, 63
      %s335 = scalar_select %p334, %s333, 63
      %s336 = smul.addr %s335, 8
      %s337 = scalar_lea.vmem %s3, %s336
      %s338 = smul.u32 32, %s22
      %s339 = smul.u32 32, %s22
      %p340 = scmp.lt.s32.totalorder %s339, 63
      %s341 = scalar_select %p340, %s339, 63
      %p342 = scmp.lt.s32.totalorder %s23, 0
      %s343 = scalar_select %p342, %s23, 0
      %s344 = sadd.s32 %s343, %s341
      %s345 = smul.addr %s344, 8
      %s346 = scalar_lea.vmem %s4, %s345
      %s347 = smul.u32 32, %s22
      %s348 = smul.u32 32, %s22
      %p349 = scmp.lt.s32.totalorder %s348, 63
      %s350 = scalar_select %p349, %s348, 63
      %p351 = scmp.lt.s32.totalorder %s23, 0
      %s352 = scalar_select %p351, %s23, 0
      %s353 = sadd.s32 %s352, %s350
      %s354 = smul.addr %s353, 4
      %s355 = scalar_lea.vmem %s5, %s354
      %s356 = smul.u32 32, %s22
      %v357 = vld [vmem:[%s319] sm:$0xf]
      %v358 = vld [vmem:[%s319 + $0x4] sm:$0xf]
      %v359 = vld [vmem:[%s319 + $0x8] sm:$0xf]
      %v360 = vld [vmem:[%s319 + $0xc] sm:$0xf]
      %v361 = vld [vmem:[%s319 + $0x10] sm:$0xf]
      %v362 = vld [vmem:[%s319 + $0x14] sm:$0xf]
      %v363 = vld [vmem:[%s319 + $0x18] sm:$0xf]
      %v364 = vld [vmem:[%s319 + $0x1c] sm:$0xf]
      %v365 = vld [vmem:[%s319 + $0x20] sm:$0xf]
      %v366 = vld [vmem:[%s319 + $0x24] sm:$0xf]
      %v367 = vld [vmem:[%s319 + $0x28] sm:$0xf]
      %v368 = vld [vmem:[%s319 + $0x2c] sm:$0xf]
      %v369 = vld [vmem:[%s319 + $0x30] sm:$0xf]
      %v370 = vld [vmem:[%s319 + $0x34] sm:$0xf]
      %v371 = vld [vmem:[%s319 + $0x38] sm:$0xf]
      %v372 = vld [vmem:[%s319 + $0x3c] sm:$0xf]
      %v373 = vld [vmem:[%s319 + $0x40] sm:$0xf]
      %v374 = vld [vmem:[%s319 + $0x44] sm:$0xf]
      %v375 = vld [vmem:[%s319 + $0x48] sm:$0xf]
      %v376 = vld [vmem:[%s319 + $0x4c] sm:$0xf]
      %v377 = vld [vmem:[%s319 + $0x50] sm:$0xf]
      %v378 = vld [vmem:[%s319 + $0x54] sm:$0xf]
      %v379 = vld [vmem:[%s319 + $0x58] sm:$0xf]
      %v380 = vld [vmem:[%s319 + $0x5c] sm:$0xf]
      %v381 = vld [vmem:[%s319 + $0x60] sm:$0xf]
      %v382 = vld [vmem:[%s319 + $0x64] sm:$0xf]
      %v383 = vld [vmem:[%s319 + $0x68] sm:$0xf]
      %v384 = vld [vmem:[%s319 + $0x6c] sm:$0xf]
      %v385 = vld [vmem:[%s319 + $0x70] sm:$0xf]
      %v386 = vld [vmem:[%s319 + $0x74] sm:$0xf]
      %v387 = vld [vmem:[%s319 + $0x78] sm:$0xf]
      %v388 = vld [vmem:[%s319 + $0x7c] sm:$0xf]
      %v389 = vld [vmem:[%s328] sm:$0xf]
      %v390 = vld [vmem:[%s328 + $0x4] sm:$0xf]
      %v391 = vld [vmem:[%s328 + $0x8] sm:$0xf]
      %v392 = vld [vmem:[%s328 + $0xc] sm:$0xf]
      %v393 = vld [vmem:[%s328 + $0x10] sm:$0xf]
      %v394 = vld [vmem:[%s328 + $0x14] sm:$0xf]
      %v395 = vld [vmem:[%s328 + $0x18] sm:$0xf]
      %v396 = vld [vmem:[%s328 + $0x1c] sm:$0xf]
      %v397 = vld [vmem:[%s328 + $0x20] sm:$0xf]
      %v398 = vld [vmem:[%s328 + $0x24] sm:$0xf]
      %v399 = vld [vmem:[%s328 + $0x28] sm:$0xf]
      %v400 = vld [vmem:[%s328 + $0x2c] sm:$0xf]
      %v401 = vld [vmem:[%s328 + $0x30] sm:$0xf]
      %v402 = vld [vmem:[%s328 + $0x34] sm:$0xf]
      %v403 = vld [vmem:[%s328 + $0x38] sm:$0xf]
      %v404 = vld [vmem:[%s328 + $0x3c] sm:$0xf]
      %v405 = vld [vmem:[%s332] sm:$0x1]
      %v407 = vperm.slane %v405, 0
      %v441 = vunpack.c.l.b16 %v357
      %v442 = vunpack.c.l.b16 %v358
      %v443 = vunpack.c.l.b16 %v359
      %v444 = vunpack.c.l.b16 %v360
      %v445 = vunpack.c.l.b16 %v361
      %v446 = vunpack.c.l.b16 %v362
      %v447 = vunpack.c.l.b16 %v363
      %v448 = vunpack.c.l.b16 %v364
      %v449 = vunpack.c.l.b16 %v365
      %v450 = vunpack.c.l.b16 %v366
      %v451 = vunpack.c.l.b16 %v367
      %v452 = vunpack.c.l.b16 %v368
      %v453 = vunpack.c.l.b16 %v369
      %v454 = vunpack.c.l.b16 %v370
      %v455 = vunpack.c.l.b16 %v371
      %v456 = vunpack.c.l.b16 %v372
      %v457 = vunpack.c.l.b16 %v373
      %v458 = vunpack.c.l.b16 %v374
      %v459 = vunpack.c.l.b16 %v375
      %v460 = vunpack.c.l.b16 %v376
      %v461 = vunpack.c.l.b16 %v377
      %v462 = vunpack.c.l.b16 %v378
      %v463 = vunpack.c.l.b16 %v379
      %v464 = vunpack.c.l.b16 %v380
      %v465 = vunpack.c.l.b16 %v381
      %v466 = vunpack.c.l.b16 %v382
      %v467 = vunpack.c.l.b16 %v383
      %v468 = vunpack.c.l.b16 %v384
      %v469 = vunpack.c.l.b16 %v385
      %v470 = vunpack.c.l.b16 %v386
      %v471 = vunpack.c.l.b16 %v387
      %v472 = vunpack.c.l.b16 %v388
      %v473 = vpack.c.b16 %v442, %v441
      %v474 = vpack.c.b16 %v444, %v443
      %v475 = vpack.c.b16 %v446, %v445
      %v476 = vpack.c.b16 %v448, %v447
      %v477 = vpack.c.b16 %v450, %v449
      %v478 = vpack.c.b16 %v452, %v451
      %v479 = vpack.c.b16 %v454, %v453
      %v480 = vpack.c.b16 %v456, %v455
      %v481 = vpack.c.b16 %v458, %v457
      %v482 = vpack.c.b16 %v460, %v459
      %v483 = vpack.c.b16 %v462, %v461
      %v484 = vpack.c.b16 %v464, %v463
      %v485 = vpack.c.b16 %v466, %v465
      %v486 = vpack.c.b16 %v468, %v467
      %v487 = vpack.c.b16 %v470, %v469
      %v488 = vpack.c.b16 %v472, %v471
      %v521 = vunpack.c.l.b16 %v389
      %v522 = vunpack.c.l.b16 %v390
      %v523 = vunpack.c.l.b16 %v391
      %v524 = vunpack.c.l.b16 %v392
      %v525 = vunpack.c.l.b16 %v393
      %v526 = vunpack.c.l.b16 %v394
      %v527 = vunpack.c.l.b16 %v395
      %v528 = vunpack.c.l.b16 %v396
      %v529 = vunpack.c.l.b16 %v397
      %v530 = vunpack.c.l.b16 %v398
      %v531 = vunpack.c.l.b16 %v399
      %v532 = vunpack.c.l.b16 %v400
      %v533 = vunpack.c.l.b16 %v401
      %v534 = vunpack.c.l.b16 %v402
      %v535 = vunpack.c.l.b16 %v403
      %v536 = vunpack.c.l.b16 %v404
      %v537 = vpack.c.b16 %v522, %v521
      %v538 = vpack.c.b16 %v524, %v523
      %v539 = vpack.c.b16 %v526, %v525
      %v540 = vpack.c.b16 %v528, %v527
      %v541 = vpack.c.b16 %v530, %v529
      %v542 = vpack.c.b16 %v532, %v531
      %v543 = vpack.c.b16 %v534, %v533
      %v544 = vpack.c.b16 %v536, %v535
      %553 = vmatpush.bf16.msra.mxu0 %v544
      %554 = vmatpush.bf16.msra.mxu0 %v543
      %555 = vmatpush.bf16.msra.mxu0 %v542
      %556 = vmatpush.bf16.msra.mxu0 %v541
      %557 = vmatpush.bf16.msra.mxu0 %v540
      %558 = vmatpush.bf16.msra.mxu0 %v539
      %559 = vmatpush.bf16.msra.mxu0 %v538
      %560 = vmatpush.bf16.msra.mxu0 %v537
      %561 = vmatmul.bf16.gmra.mxu0 %v473
      %v562 = vpop.f32.mrf.mxu0
      %v563 = vadd.f32 %v407, %v562
      %v564 = vpop.f32.mrf.mxu0
      %v565 = vadd.f32 %v407, %v564
      %566 = vmatmul.bf16.gmra.mxu0 %v474
      %v567 = vpop.f32.mrf.mxu0
      %v568 = vadd.f32 %v407, %v567
      %v569 = vpop.f32.mrf.mxu0
      %v570 = vadd.f32 %v407, %v569
      %571 = vmatmul.bf16.gmra.mxu0 %v475
      %v572 = vpop.f32.mrf.mxu0
      %v573 = vadd.f32 %v407, %v572
      %v574 = vpop.f32.mrf.mxu0
      %v575 = vadd.f32 %v407, %v574
      %576 = vmatmul.bf16.gmra.mxu0 %v476
      %v577 = vpop.f32.mrf.mxu0
      %v578 = vadd.f32 %v407, %v577
      %v579 = vpop.f32.mrf.mxu0
      %v580 = vadd.f32 %v407, %v579
      %581 = vmatmul.bf16.gmra.mxu0 %v477
      %v582 = vpop.f32.mrf.mxu0
      %v583 = vadd.f32 %v407, %v582
      %v584 = vpop.f32.mrf.mxu0
      %v585 = vadd.f32 %v407, %v584
      %586 = vmatmul.bf16.gmra.mxu0 %v478
      %v587 = vpop.f32.mrf.mxu0
      %v588 = vadd.f32 %v407, %v587
      %v589 = vpop.f32.mrf.mxu0
      %v590 = vadd.f32 %v407, %v589
      %591 = vmatmul.bf16.gmra.mxu0 %v479
      %v592 = vpop.f32.mrf.mxu0
      %v593 = vadd.f32 %v407, %v592
      %v594 = vpop.f32.mrf.mxu0
      %v595 = vadd.f32 %v407, %v594
      %596 = vmatmul.bf16.gmra.mxu0 %v480
      %v597 = vpop.f32.mrf.mxu0
      %v598 = vadd.f32 %v407, %v597
      %v599 = vpop.f32.mrf.mxu0
      %v600 = vadd.f32 %v407, %v599
      %601 = vmatmul.bf16.gmra.mxu0 %v481
      %v602 = vpop.f32.mrf.mxu0
      %v603 = vadd.f32 %v407, %v602
      %v604 = vpop.f32.mrf.mxu0
      %v605 = vadd.f32 %v407, %v604
      %606 = vmatmul.bf16.gmra.mxu0 %v482
      %v607 = vpop.f32.mrf.mxu0
      %v608 = vadd.f32 %v407, %v607
      %v609 = vpop.f32.mrf.mxu0
      %v610 = vadd.f32 %v407, %v609
      %611 = vmatmul.bf16.gmra.mxu0 %v483
      %v612 = vpop.f32.mrf.mxu0
      %v613 = vadd.f32 %v407, %v612
      %v614 = vpop.f32.mrf.mxu0
      %v615 = vadd.f32 %v407, %v614
      %616 = vmatmul.bf16.gmra.mxu0 %v484
      %v617 = vpop.f32.mrf.mxu0
      %v618 = vadd.f32 %v407, %v617
      %v619 = vpop.f32.mrf.mxu0
      %v620 = vadd.f32 %v407, %v619
      %621 = vmatmul.bf16.gmra.mxu0 %v485
      %v622 = vpop.f32.mrf.mxu0
      %v623 = vadd.f32 %v407, %v622
      %v624 = vpop.f32.mrf.mxu0
      %v625 = vadd.f32 %v407, %v624
      %626 = vmatmul.bf16.gmra.mxu0 %v486
      %v627 = vpop.f32.mrf.mxu0
      %v628 = vadd.f32 %v407, %v627
      %v629 = vpop.f32.mrf.mxu0
      %v630 = vadd.f32 %v407, %v629
      %631 = vmatmul.bf16.gmra.mxu0 %v487
      %v632 = vpop.f32.mrf.mxu0
      %v633 = vadd.f32 %v407, %v632
      %v634 = vpop.f32.mrf.mxu0
      %v635 = vadd.f32 %v407, %v634
      %636 = vmatmul.bf16.gmra.mxu0 %v488
      %v637 = vpop.f32.mrf.mxu0
      %v638 = vadd.f32 %v407, %v637
      %v639 = vpop.f32.mrf.mxu0
      %v640 = vadd.f32 %v407, %v639
      %641 = vdwg.mxu0
      %642 = vst [vmem:[%s346] sm:$0xff] %v563
      %643 = vst [vmem:[%s346 + $0x8] sm:$0xff] %v565
      %644 = vst [vmem:[%s346 + $0x10] sm:$0xff] %v568
      %645 = vst [vmem:[%s346 + $0x18] sm:$0xff] %v570
      %646 = vst [vmem:[%s346 + $0x20] sm:$0xff] %v573
      %647 = vst [vmem:[%s346 + $0x28] sm:$0xff] %v575
      %648 = vst [vmem:[%s346 + $0x30] sm:$0xff] %v578
      %649 = vst [vmem:[%s346 + $0x38] sm:$0xff] %v580
      %650 = vst [vmem:[%s346 + $0x40] sm:$0xff] %v583
      %651 = vst [vmem:[%s346 + $0x48] sm:$0xff] %v585
      %652 = vst [vmem:[%s346 + $0x50] sm:$0xff] %v588
      %653 = vst [vmem:[%s346 + $0x58] sm:$0xff] %v590
      %654 = vst [vmem:[%s346 + $0x60] sm:$0xff] %v593
      %655 = vst [vmem:[%s346 + $0x68] sm:$0xff] %v595
      %656 = vst [vmem:[%s346 + $0x70] sm:$0xff] %v598
      %657 = vst [vmem:[%s346 + $0x78] sm:$0xff] %v600
      %658 = vst [vmem:[%s346 + $0x80] sm:$0xff] %v603
      %659 = vst [vmem:[%s346 + $0x88] sm:$0xff] %v605
      %660 = vst [vmem:[%s346 + $0x90] sm:$0xff] %v608
      %661 = vst [vmem:[%s346 + $0x98] sm:$0xff] %v610
      %662 = vst [vmem:[%s346 + $0xa0] sm:$0xff] %v613
      %663 = vst [vmem:[%s346 + $0xa8] sm:$0xff] %v615
      %664 = vst [vmem:[%s346 + $0xb0] sm:$0xff] %v618
      %665 = vst [vmem:[%s346 + $0xb8] sm:$0xff] %v620
      %666 = vst [vmem:[%s346 + $0xc0] sm:$0xff] %v623
      %667 = vst [vmem:[%s346 + $0xc8] sm:$0xff] %v625
      %668 = vst [vmem:[%s346 + $0xd0] sm:$0xff] %v628
      %669 = vst [vmem:[%s346 + $0xd8] sm:$0xff] %v630
      %670 = vst [vmem:[%s346 + $0xe0] sm:$0xff] %v633
      %671 = vst [vmem:[%s346 + $0xe8] sm:$0xff] %v635
      %672 = vst [vmem:[%s346 + $0xf0] sm:$0xff] %v638
      %673 = vst [vmem:[%s346 + $0xf8] sm:$0xff] %v640
      %v674 = vld [vmem:[%s337] sm:$0xff]
      %v675 = vld [vmem:[%s337 + $0x8] sm:$0xff]
      %v676 = vld [vmem:[%s337 + $0x10] sm:$0xff]
      %v677 = vld [vmem:[%s337 + $0x18] sm:$0xff]
      %v678 = vld [vmem:[%s337 + $0x20] sm:$0xff]
      %v679 = vld [vmem:[%s337 + $0x28] sm:$0xff]
      %v680 = vld [vmem:[%s337 + $0x30] sm:$0xff]
      %v681 = vld [vmem:[%s337 + $0x38] sm:$0xff]
      %v682 = vld [vmem:[%s337 + $0x40] sm:$0xff]
      %v683 = vld [vmem:[%s337 + $0x48] sm:$0xff]
      %v684 = vld [vmem:[%s337 + $0x50] sm:$0xff]
      %v685 = vld [vmem:[%s337 + $0x58] sm:$0xff]
      %v686 = vld [vmem:[%s337 + $0x60] sm:$0xff]
      %v687 = vld [vmem:[%s337 + $0x68] sm:$0xff]
      %v688 = vld [vmem:[%s337 + $0x70] sm:$0xff]
      %v689 = vld [vmem:[%s337 + $0x78] sm:$0xff]
      %v690 = vld [vmem:[%s337 + $0x80] sm:$0xff]
      %v691 = vld [vmem:[%s337 + $0x88] sm:$0xff]
      %v692 = vld [vmem:[%s337 + $0x90] sm:$0xff]
      %v693 = vld [vmem:[%s337 + $0x98] sm:$0xff]
      %v694 = vld [vmem:[%s337 + $0xa0] sm:$0xff]
      %v695 = vld [vmem:[%s337 + $0xa8] sm:$0xff]
      %v696 = vld [vmem:[%s337 + $0xb0] sm:$0xff]
      %v697 = vld [vmem:[%s337 + $0xb8] sm:$0xff]
      %v698 = vld [vmem:[%s337 + $0xc0] sm:$0xff]
      %v699 = vld [vmem:[%s337 + $0xc8] sm:$0xff]
      %v700 = vld [vmem:[%s337 + $0xd0] sm:$0xff]
      %v701 = vld [vmem:[%s337 + $0xd8] sm:$0xff]
      %v702 = vld [vmem:[%s337 + $0xe0] sm:$0xff]
      %v703 = vld [vmem:[%s337 + $0xe8] sm:$0xff]
      %v704 = vld [vmem:[%s337 + $0xf0] sm:$0xff]
      %v705 = vld [vmem:[%s337 + $0xf8] sm:$0xff]
      %707 = vset.pattern.permute.xlu0 0
      %708 = vperm.xlu0 %707, %v674
      %v709 = vpop.permute.xlu0 %708
      %712 = vset.pattern.permute.xlu0 0
      %713 = vperm.xlu0 %712, %v675
      %v714 = vpop.permute.xlu0 %713
      %717 = vset.pattern.permute.xlu0 0
      %718 = vperm.xlu0 %717, %v676
      %v719 = vpop.permute.xlu0 %718
      %722 = vset.pattern.permute.xlu0 0
      %723 = vperm.xlu0 %722, %v677
      %v724 = vpop.permute.xlu0 %723
      %727 = vset.pattern.permute.xlu0 0
      %728 = vperm.xlu0 %727, %v678
      %v729 = vpop.permute.xlu0 %728
      %732 = vset.pattern.permute.xlu0 0
      %733 = vperm.xlu0 %732, %v679
      %v734 = vpop.permute.xlu0 %733
      %737 = vset.pattern.permute.xlu0 0
      %738 = vperm.xlu0 %737, %v680
      %v739 = vpop.permute.xlu0 %738
      %742 = vset.pattern.permute.xlu0 0
      %743 = vperm.xlu0 %742, %v681
      %v744 = vpop.permute.xlu0 %743
      %747 = vset.pattern.permute.xlu0 0
      %748 = vperm.xlu0 %747, %v682
      %v749 = vpop.permute.xlu0 %748
      %752 = vset.pattern.permute.xlu0 0
      %753 = vperm.xlu0 %752, %v683
      %v754 = vpop.permute.xlu0 %753
      %757 = vset.pattern.permute.xlu0 0
      %758 = vperm.xlu0 %757, %v684
      %v759 = vpop.permute.xlu0 %758
      %762 = vset.pattern.permute.xlu0 0
      %763 = vperm.xlu0 %762, %v685
      %v764 = vpop.permute.xlu0 %763
      %767 = vset.pattern.permute.xlu0 0
      %768 = vperm.xlu0 %767, %v686
      %v769 = vpop.permute.xlu0 %768
      %772 = vset.pattern.permute.xlu0 0
      %773 = vperm.xlu0 %772, %v687
      %v774 = vpop.permute.xlu0 %773
      %777 = vset.pattern.permute.xlu0 0
      %778 = vperm.xlu0 %777, %v688
      %v779 = vpop.permute.xlu0 %778
      %782 = vset.pattern.permute.xlu0 0
      %783 = vperm.xlu0 %782, %v689
      %v784 = vpop.permute.xlu0 %783
      %787 = vset.pattern.permute.xlu0 0
      %788 = vperm.xlu0 %787, %v690
      %v789 = vpop.permute.xlu0 %788
      %792 = vset.pattern.permute.xlu0 0
      %793 = vperm.xlu0 %792, %v691
      %v794 = vpop.permute.xlu0 %793
      %797 = vset.pattern.permute.xlu0 0
      %798 = vperm.xlu0 %797, %v692
      %v799 = vpop.permute.xlu0 %798
      %802 = vset.pattern.permute.xlu0 0
      %803 = vperm.xlu0 %802, %v693
      %v804 = vpop.permute.xlu0 %803
      %807 = vset.pattern.permute.xlu0 0
      %808 = vperm.xlu0 %807, %v694
      %v809 = vpop.permute.xlu0 %808
      %812 = vset.pattern.permute.xlu0 0
      %813 = vperm.xlu0 %812, %v695
      %v814 = vpop.permute.xlu0 %813
      %817 = vset.pattern.permute.xlu0 0
      %818 = vperm.xlu0 %817, %v696
      %v819 = vpop.permute.xlu0 %818
      %822 = vset.pattern.permute.xlu0 0
      %823 = vperm.xlu0 %822, %v697
      %v824 = vpop.permute.xlu0 %823
      %827 = vset.pattern.permute.xlu0 0
      %828 = vperm.xlu0 %827, %v698
      %v829 = vpop.permute.xlu0 %828
      %832 = vset.pattern.permute.xlu0 0
      %833 = vperm.xlu0 %832, %v699
      %v834 = vpop.permute.xlu0 %833
      %837 = vset.pattern.permute.xlu0 0
      %838 = vperm.xlu0 %837, %v700
      %v839 = vpop.permute.xlu0 %838
      %842 = vset.pattern.permute.xlu0 0
      %843 = vperm.xlu0 %842, %v701
      %v844 = vpop.permute.xlu0 %843
      %847 = vset.pattern.permute.xlu0 0
      %848 = vperm.xlu0 %847, %v702
      %v849 = vpop.permute.xlu0 %848
      %852 = vset.pattern.permute.xlu0 0
      %853 = vperm.xlu0 %852, %v703
      %v854 = vpop.permute.xlu0 %853
      %857 = vset.pattern.permute.xlu0 0
      %858 = vperm.xlu0 %857, %v704
      %v859 = vpop.permute.xlu0 %858
      %862 = vset.pattern.permute.xlu0 0
      %863 = vperm.xlu0 %862, %v705
      %v864 = vpop.permute.xlu0 %863
      %v866 = vmul.f32 %v709, %v563
      %v867 = vmul.f32 %v714, %v565
      %v868 = vmul.f32 %v719, %v568
      %v869 = vmul.f32 %v724, %v570
      %v870 = vmul.f32 %v729, %v573
      %v871 = vmul.f32 %v734, %v575
      %v872 = vmul.f32 %v739, %v578
      %v873 = vmul.f32 %v744, %v580
      %v874 = vmul.f32 %v749, %v583
      %v875 = vmul.f32 %v754, %v585
      %v876 = vmul.f32 %v759, %v588
      %v877 = vmul.f32 %v764, %v590
      %v878 = vmul.f32 %v769, %v593
      %v879 = vmul.f32 %v774, %v595
      %v880 = vmul.f32 %v779, %v598
      %v881 = vmul.f32 %v784, %v600
      %v882 = vmul.f32 %v789, %v603
      %v883 = vmul.f32 %v794, %v605
      %v884 = vmul.f32 %v799, %v608
      %v885 = vmul.f32 %v804, %v610
      %v886 = vmul.f32 %v809, %v613
      %v887 = vmul.f32 %v814, %v615
      %v888 = vmul.f32 %v819, %v618
      %v889 = vmul.f32 %v824, %v620
      %v890 = vmul.f32 %v829, %v623
      %v891 = vmul.f32 %v834, %v625
      %v892 = vmul.f32 %v839, %v628
      %v893 = vmul.f32 %v844, %v630
      %v894 = vmul.f32 %v849, %v633
      %v895 = vmul.f32 %v854, %v635
      %v896 = vmul.f32 %v859, %v638
      %v897 = vmul.f32 %v864, %v640
      %v898 = vpack.c.bf16 %v866, %v866
      %v899 = vpack.c.bf16 %v867, %v867
      %v900 = vpack.c.bf16 %v868, %v868
      %v901 = vpack.c.bf16 %v869, %v869
      %v902 = vpack.c.bf16 %v870, %v870
      %v903 = vpack.c.bf16 %v871, %v871
      %v904 = vpack.c.bf16 %v872, %v872
      %v905 = vpack.c.bf16 %v873, %v873
      %v906 = vpack.c.bf16 %v874, %v874
      %v907 = vpack.c.bf16 %v875, %v875
      %v908 = vpack.c.bf16 %v876, %v876
      %v909 = vpack.c.bf16 %v877, %v877
      %v910 = vpack.c.bf16 %v878, %v878
      %v911 = vpack.c.bf16 %v879, %v879
      %v912 = vpack.c.bf16 %v880, %v880
      %v913 = vpack.c.bf16 %v881, %v881
      %v914 = vpack.c.bf16 %v882, %v882
      %v915 = vpack.c.bf16 %v883, %v883
      %v916 = vpack.c.bf16 %v884, %v884
      %v917 = vpack.c.bf16 %v885, %v885
      %v918 = vpack.c.bf16 %v886, %v886
      %v919 = vpack.c.bf16 %v887, %v887
      %v920 = vpack.c.bf16 %v888, %v888
      %v921 = vpack.c.bf16 %v889, %v889
      %v922 = vpack.c.bf16 %v890, %v890
      %v923 = vpack.c.bf16 %v891, %v891
      %v924 = vpack.c.bf16 %v892, %v892
      %v925 = vpack.c.bf16 %v893, %v893
      %v926 = vpack.c.bf16 %v894, %v894
      %v927 = vpack.c.bf16 %v895, %v895
      %v928 = vpack.c.bf16 %v896, %v896
      %v929 = vpack.c.bf16 %v897, %v897
      %930 = vst [vmem:[%s355] sm:$0xf] %v898
      %931 = vst [vmem:[%s355 + $0x4] sm:$0xf] %v899
      %932 = vst [vmem:[%s355 + $0x8] sm:$0xf] %v900
      %933 = vst [vmem:[%s355 + $0xc] sm:$0xf] %v901
      %934 = vst [vmem:[%s355 + $0x10] sm:$0xf] %v902
      %935 = vst [vmem:[%s355 + $0x14] sm:$0xf] %v903
      %936 = vst [vmem:[%s355 + $0x18] sm:$0xf] %v904
      %937 = vst [vmem:[%s355 + $0x1c] sm:$0xf] %v905
      %938 = vst [vmem:[%s355 + $0x20] sm:$0xf] %v906
      %939 = vst [vmem:[%s355 + $0x24] sm:$0xf] %v907
      %940 = vst [vmem:[%s355 + $0x28] sm:$0xf] %v908
      %941 = vst [vmem:[%s355 + $0x2c] sm:$0xf] %v909
      %942 = vst [vmem:[%s355 + $0x30] sm:$0xf] %v910
      %943 = vst [vmem:[%s355 + $0x34] sm:$0xf] %v911
      %944 = vst [vmem:[%s355 + $0x38] sm:$0xf] %v912
      %945 = vst [vmem:[%s355 + $0x3c] sm:$0xf] %v913
      %946 = vst [vmem:[%s355 + $0x40] sm:$0xf] %v914
      %947 = vst [vmem:[%s355 + $0x44] sm:$0xf] %v915
      %948 = vst [vmem:[%s355 + $0x48] sm:$0xf] %v916
      %949 = vst [vmem:[%s355 + $0x4c] sm:$0xf] %v917
      %950 = vst [vmem:[%s355 + $0x50] sm:$0xf] %v918
      %951 = vst [vmem:[%s355 + $0x54] sm:$0xf] %v919
      %952 = vst [vmem:[%s355 + $0x58] sm:$0xf] %v920
      %953 = vst [vmem:[%s355 + $0x5c] sm:$0xf] %v921
      %954 = vst [vmem:[%s355 + $0x60] sm:$0xf] %v922
      %955 = vst [vmem:[%s355 + $0x64] sm:$0xf] %v923
      %956 = vst [vmem:[%s355 + $0x68] sm:$0xf] %v924
      %957 = vst [vmem:[%s355 + $0x6c] sm:$0xf] %v925
      %958 = vst [vmem:[%s355 + $0x70] sm:$0xf] %v926
      %959 = vst [vmem:[%s355 + $0x74] sm:$0xf] %v927
      %960 = vst [vmem:[%s355 + $0x78] sm:$0xf] %v928
      %961 = vst [vmem:[%s355 + $0x7c] sm:$0xf] %v929
      %s962 = smul.u32 32, %s22
      %p963 = scmp.lt.s32.totalorder %s962, 63
      %s964 = scalar_select %p963, %s962, 63
      %p965 = scmp.lt.s32.totalorder %s23, 0
      %s966 = scalar_select %p965, %s23, 0
      %s967 = sadd.s32 %s966, %s964
      %s968 = smul.addr %s967, 8
      %s969 = scalar_lea.vmem %s4, %s968
      %s970 = smul.u32 32, %s22
      %p971 = scmp.lt.s32.totalorder %s970, 63
      %s972 = scalar_select %p971, %s970, 63
      %p973 = scmp.lt.s32.totalorder %s23, 0
      %s974 = scalar_select %p973, %s23, 0
      %s975 = sadd.s32 %s974, %s972
      %s976 = smul.addr %s975, 4
      %s977 = scalar_lea.vmem %s5, %s976
      // Predicated region
      $region37: #{hyper_resid_gcn_forward.6} parent=35 // pred_check
        %p978 = pneg %p164
      $region38: #{hyper_resid_gcn_forward.6} parent=35 // pred_check_branch
        %980 = sbr.rel (%p978) target = $region40
      $region39: #{hyper_resid_gcn_forward.6} parent=35 // pred_region
        %s981 = smul.u32 32, %s22
      $region40: #{hyper_resid_gcn_forward.6} parent=35 // pred_fallthru
        _
      // Predicated region
      $region41: #{hyper_resid_gcn_forward.6} parent=35 // pred_check
        %p982 = pneg %p192
      $region42: #{hyper_resid_gcn_forward.6} parent=35 // pred_check_branch
        %984 = sbr.rel (%p982) target = $region44
      $region43: #{hyper_resid_gcn_forward.6} parent=35 // pred_region
        %s985 = smul.u32 32, %s22
      $region44: #{hyper_resid_gcn_forward.6} parent=35 // pred_fallthru
        _
    $region36: #{hyper_resid_gcn_forward.6} parent=5 // pred_fallthru
      _
    %p986 = scmp.le.s32.totalorder 2, %s12
    // Predicated region
    $region45: #{hyper_resid_gcn_forward.6} parent=5 // pred_check
      %p987 = pneg %p986
    $region46: #{hyper_resid_gcn_forward.6} parent=5 // pred_check_branch
      %989 = sbr.rel (%p987) target = $region48
    $region47: #{hyper_resid_gcn_forward.6} parent=5 // pred_region
      %s990 = ssub.s32 %s12, 2
      // Predicated region
      $region49: #{hyper_resid_gcn_forward.6} parent=47 // pred_check
        %p991 = pneg %p170
      $region50: #{hyper_resid_gcn_forward.6} parent=47 // pred_check_branch
        %993 = sbr.rel (%p991) target = $region52
      $region51: #{hyper_resid_gcn_forward.6} parent=47 // pred_region
        %s994 = smul.u32 32, %s25
        %p995 = scmp.lt.s32.totalorder %s994, 63
        %s996 = scalar_select %p995, %s994, 63
        %p997 = scmp.lt.s32.totalorder %s26, 0
        %s998 = scalar_select %p997, %s26, 0
        %s999 = sadd.s32 %s998, %s996
        %s1000 = smul.addr %s999, 8
        %s1001 = scalar_lea.vmem %s4, %s1000
      $region52: #{hyper_resid_gcn_forward.6} parent=47 // pred_fallthru
        _
      // Predicated region
      $region53: #{hyper_resid_gcn_forward.6} parent=47 // pred_check
        %p1002 = pneg %p198
      $region54: #{hyper_resid_gcn_forward.6} parent=47 // pred_check_branch
        %1004 = sbr.rel (%p1002) target = $region56
      $region55: #{hyper_resid_gcn_forward.6} parent=47 // pred_region
        %s1005 = smul.u32 32, %s25
        %p1006 = scmp.lt.s32.totalorder %s1005, 63
        %s1007 = scalar_select %p1006, %s1005, 63
        %p1008 = scmp.lt.s32.totalorder %s26, 0
        %s1009 = scalar_select %p1008, %s26, 0
        %s1010 = sadd.s32 %s1009, %s1007
        %s1011 = smul.addr %s1010, 4
        %s1012 = scalar_lea.vmem %s5, %s1011
      $region56: #{hyper_resid_gcn_forward.6} parent=47 // pred_fallthru
        _
    $region48: #{hyper_resid_gcn_forward.6} parent=5 // pred_fallthru
      _
  $region6: #{hyper_resid_gcn_forward.6} parent=0 // loop_footer
    %s16 = sadd.s32 1, %s12
  $region7: #{hyper_resid_gcn_forward.6} parent=0 // loop_footer_branch
    %11 = sbr.rel target = $region3
  $region8: #{hyper_resid_gcn_forward.6} parent=0 // loop_exit
    _

// kernel: hyper_resid_gcn_forward.7
$region0: #{hyper_resid_gcn_forward.7}
  #allocation0 [shape = 'u32[]', space=smem, size = 0x4, offset = 0x4, fixed_abs, tag = 'smem constant byte address 0x4 - core index']
  #allocation1 [shape = 'u32[72,128]{1,0:T(1,128)}', space=vmem, size = 0x9000, scoped, tag = 'internal scratch']
  %s0 = inlined_call_operand.vmem [shape: s8[512,512], index: 0, kind: input, shape index: {}]
  %s1 = inlined_call_operand.vmem [shape: bf16[512,128], index: 1, kind: input, shape index: {}]
  %s2 = inlined_call_operand.vmem [shape: f32[512,1], index: 2, kind: input, shape index: {}]
  %s3 = inlined_call_operand.vmem [shape: bf16[512,128], index: 3, kind: output, shape index: {}]
  %s4 = sld [smem:[#allocation0]]
  $region45: #{hyper_resid_gcn_forward.7} parent=0
    _
  %s6 = ssub.s32 1, %s4
  %s7 = scalar_select 0, %s6, %s4
  loop: start=0, step=1, limit=4
  $region2: #{hyper_resid_gcn_forward.7} parent=0 // loop_pre_header
    _
  $region3: #{hyper_resid_gcn_forward.7} parent=0 // loop_header
    %s9 = sphi 0, %s13
    %p10 = scmp.ge.s32.totalorder %s9, 4
    %s16 = sphi 0, %s28
    %s17 = sphi 0, %s24
    %s18 = sphi 0, %s16
    %s19 = sphi 0, %s17
    %s20 = sphi 0, %s18
    %s21 = sphi 0, %s19
    %s33 = sphi 0, %s35
    %s36 = sphi 0, %s33
    %s37 = sphi 0, %s36
    %s53 = sphi 0, %s37
    %s57 = sphi 0, %s57
    %s59 = sphi 0, %s57
    %s60 = sphi 0, %s59
    %s74 = sphi 0, %s60
    %s80 = sphi 0, %s82
    %s83 = sphi 0, %s80
    %s84 = sphi 0, %s83
    %s100 = sphi 0, %s84
    %s106 = sphi 0, %s108
    %s109 = sphi 0, %s106
    %s110 = sphi 0, %s109
    %s126 = sphi 0, %s110
  $region4: #{hyper_resid_gcn_forward.7} parent=0 // loop_header_branch
    %12 = sbr.rel (%p10) target = $region8
  $region5: #{hyper_resid_gcn_forward.7} parent=0 // loop_body
    %s14 = ssub.s32 %s9, 1
    %s15 = ssub.s32 %s9, 2
    %s22 = sadd.s32 1, %s17
    %p23 = scmp.ge.s32.totalorder %s22, 1
    %s24 = scalar_select %p23, 0, %s22
    %s25 = sadd.s32 1, %s16
    %s26 = scalar_select %p23, %s25, %s16
    %p27 = scmp.ge.s32.totalorder %s26, 2
    %s28 = scalar_select %p27, 0, %s26
    %s29 = ssub.s32 %s16, %s28
    %s30 = ssub.s32 %s17, %s24
    %s31 = sor.u32 %s29, %s30
    %p32 = scmp.eq.s32.totalorder %s31, 0
    %s34 = sadd.s32 %s33, 1
    %s35 = scalar_select %p32, %s33, %s34
    %p38 = pneg %p32
    %p39 = scmp.eq.s32.totalorder %s9, 1
    %p40 = por %p38, %p39
    %p41 = scmp.ne.s32.totalorder %s33, %s36
    %p42 = scmp.eq.s32.totalorder %s9, 0
    %p43 = por %p41, %p42
    %p44 = scmp.ne.s32.totalorder %s33, %s36
    %p45 = scmp.eq.s32.totalorder %s14, 1
    %p46 = por %p44, %p45
    %p47 = scmp.ne.s32.totalorder %s36, %s37
    %p48 = scmp.eq.s32.totalorder %s14, 0
    %p49 = por %p47, %p48
    %p50 = scmp.ne.s32.totalorder %s36, %s37
    %p51 = scmp.eq.s32.totalorder %s15, 1
    %p52 = por %p50, %p51
    %p54 = scmp.ne.s32.totalorder %s37, %s53
    %p55 = scmp.eq.s32.totalorder %s15, 0
    %p56 = por %p54, %p55
    %s58 = sadd.s32 %s57, 1
    %p61 = scmp.eq.s32.totalorder %s9, 1
    %p62 = scmp.ne.s32.totalorder %s57, %s59
    %p63 = scmp.eq.s32.totalorder %s9, 0
    %p64 = por %p62, %p63
    %p65 = scmp.ne.s32.totalorder %s57, %s59
    %p66 = scmp.eq.s32.totalorder %s14, 1
    %p67 = por %p65, %p66
    %p68 = scmp.ne.s32.totalorder %s59, %s60
    %p69 = scmp.eq.s32.totalorder %s14, 0
    %p70 = por %p68, %p69
    %p71 = scmp.ne.s32.totalorder %s59, %s60
    %p72 = scmp.eq.s32.totalorder %s15, 1
    %p73 = por %p71, %p72
    %p75 = scmp.ne.s32.totalorder %s60, %s74
    %p76 = scmp.eq.s32.totalorder %s15, 0
    %p77 = por %p75, %p76
    %s78 = ssub.s32 %s16, %s28
    %p79 = scmp.eq.s32.totalorder %s78, 0
    %s81 = sadd.s32 %s80, 1
    %s82 = scalar_select %p79, %s80, %s81
    %p85 = pneg %p79
    %p86 = scmp.eq.s32.totalorder %s9, 1
    %p87 = por %p85, %p86
    %p88 = scmp.ne.s32.totalorder %s80, %s83
    %p89 = scmp.eq.s32.totalorder %s9, 0
    %p90 = por %p88, %p89
    %p91 = scmp.ne.s32.totalorder %s80, %s83
    %p92 = scmp.eq.s32.totalorder %s14, 1
    %p93 = por %p91, %p92
    %p94 = scmp.ne.s32.totalorder %s83, %s84
    %p95 = scmp.eq.s32.totalorder %s14, 0
    %p96 = por %p94, %p95
    %p97 = scmp.ne.s32.totalorder %s83, %s84
    %p98 = scmp.eq.s32.totalorder %s15, 1
    %p99 = por %p97, %p98
    %p101 = scmp.ne.s32.totalorder %s84, %s100
    %p102 = scmp.eq.s32.totalorder %s15, 0
    %p103 = por %p101, %p102
    %s104 = ssub.s32 %s16, %s28
    %p105 = scmp.eq.s32.totalorder %s104, 0
    %s107 = sadd.s32 %s106, 1
    %s108 = scalar_select %p105, %s106, %s107
    %p111 = pneg %p105
    %p112 = scmp.eq.s32.totalorder %s9, 1
    %p113 = por %p111, %p112
    %p114 = scmp.ne.s32.totalorder %s106, %s109
    %p115 = scmp.eq.s32.totalorder %s9, 0
    %p116 = por %p114, %p115
    %p117 = scmp.ne.s32.totalorder %s106, %s109
    %p118 = scmp.eq.s32.totalorder %s14, 1
    %p119 = por %p117, %p118
    %p120 = scmp.ne.s32.totalorder %s109, %s110
    %p121 = scmp.eq.s32.totalorder %s14, 0
    %p122 = por %p120, %p121
    %p123 = scmp.ne.s32.totalorder %s109, %s110
    %p124 = scmp.eq.s32.totalorder %s15, 1
    %p125 = por %p123, %p124
    %p127 = scmp.ne.s32.totalorder %s110, %s126
    %p128 = scmp.eq.s32.totalorder %s15, 0
    %p129 = por %p127, %p128
    %p130 = scmp.le.s32.totalorder 1, %s9
    %p131 = scmp.lt.s32.totalorder %s9, 3
    %p132 = pnand %p130, %p131
    %p133 = pneg %p132
    // Predicated region
    $region9: #{hyper_resid_gcn_forward.7} parent=5 // pred_check
      _
    $region10: #{hyper_resid_gcn_forward.7} parent=5 // pred_check_branch
      %135 = sbr.rel (%p132) target = $region12
    $region11: #{hyper_resid_gcn_forward.7} parent=5 // pred_region
      %s136 = ssub.s32 %s9, 1
      // Predicated region
      $region13: #{hyper_resid_gcn_forward.7} parent=11 // pred_check
        %p137 = pneg %p70
      $region14: #{hyper_resid_gcn_forward.7} parent=11 // pred_check_branch
        %139 = sbr.rel (%p137) target = $region16
      $region15: #{hyper_resid_gcn_forward.7} parent=11 // pred_region
        _
      $region16: #{hyper_resid_gcn_forward.7} parent=11 // pred_fallthru
        _
    $region12: #{hyper_resid_gcn_forward.7} parent=5 // pred_fallthru
      _
    %p140 = scmp.lt.s32.totalorder %s9, 2
    // Predicated region
    $region17: #{hyper_resid_gcn_forward.7} parent=5 // pred_check
      %p141 = pneg %p140
    $region18: #{hyper_resid_gcn_forward.7} parent=5 // pred_check_branch
      %143 = sbr.rel (%p141) target = $region20
    $region19: #{hyper_resid_gcn_forward.7} parent=5 // pred_region
      // Predicated region
      $region21: #{hyper_resid_gcn_forward.7} parent=19 // pred_check
        %p144 = pneg %p43
      $region22: #{hyper_resid_gcn_forward.7} parent=19 // pred_check_branch
        %146 = sbr.rel (%p144) target = $region24
      $region23: #{hyper_resid_gcn_forward.7} parent=19 // pred_region
        %s147 = smul.u32 8, %s16
        %s148 = smul.u32 4, %s17
        %p149 = scmp.lt.s32.totalorder %s147, 15
        %s150 = scalar_select %p149, %s147, 15
        %p151 = scmp.lt.s32.totalorder %s148, 3
        %s152 = scalar_select %p151, %s148, 3
        %s153 = smul.addr %s150, 4
        %s154 = sadd.s32 %s152, %s153
        %s155 = smul.addr %s154, 8
        %s156 = scalar_lea.vmem %s0, %s155
        %s157 = smul.u32 8, %s16
        %s158 = smul.u32 4, %s17
      $region24: #{hyper_resid_gcn_forward.7} parent=19 // pred_fallthru
        _
      // Predicated region
      $region25: #{hyper_resid_gcn_forward.7} parent=19 // pred_check
        %p159 = pneg %p90
      $region26: #{hyper_resid_gcn_forward.7} parent=19 // pred_check_branch
        %161 = sbr.rel (%p159) target = $region28
      $region27: #{hyper_resid_gcn_forward.7} parent=19 // pred_region
        %s162 = smul.u32 32, %s16
        %p163 = scmp.lt.s32.totalorder %s162, 63
        %s164 = scalar_select %p163, %s162, 63
        %s165 = smul.addr %s164, 8
        %s166 = scalar_lea.vmem %s2, %s165
        %s167 = smul.u32 32, %s16
      $region28: #{hyper_resid_gcn_forward.7} parent=19 // pred_fallthru
        _
    $region20: #{hyper_resid_gcn_forward.7} parent=5 // pred_fallthru
      _
    %p168 = scmp.le.s32.totalorder 1, %s9
    %p169 = scmp.lt.s32.totalorder %s9, 3
    %p170 = pnand %p168, %p169
    %p171 = pneg %p170
    // Predicated region
    $region29: #{hyper_resid_gcn_forward.7} parent=5 // pred_check
      _
    $region30: #{hyper_resid_gcn_forward.7} parent=5 // pred_check_branch
      %173 = sbr.rel (%p170) target = $region32
    $region31: #{hyper_resid_gcn_forward.7} parent=5 // pred_region
      %s174 = ssub.s32 %s9, 1
      %s175 = smul.u32 8, %s18
      %s176 = smul.u32 4, %s19
      %p177 = scmp.lt.s32.totalorder %s175, 15
      %s178 = scalar_select %p177, %s175, 15
      %p179 = scmp.lt.s32.totalorder %s176, 3
      %s180 = scalar_select %p179, %s176, 3
      %s181 = smul.addr %s178, 4
      %s182 = sadd.s32 %s180, %s181
      %s183 = smul.addr %s182, 8
      %s184 = scalar_lea.vmem %s0, %s183
      %p185 = pneg %p49
      %p186 = pneg %p46
      %p187 = pneg %p70
      %p188 = pneg %p67
      %s189 = smul.u32 32, %s18
      %p190 = scmp.lt.s32.totalorder %s189, 63
      %s191 = scalar_select %p190, %s189, 63
      %s192 = smul.addr %s191, 8
      %s193 = scalar_lea.vmem %s2, %s192
      %p194 = pneg %p96
      %p195 = pneg %p93
      %p196 = pneg %p122
      %p197 = pneg %p119
      %s198 = smul.u32 32, %s18
      %p199 = scmp.lt.s32.totalorder %s198, 63
      %s200 = scalar_select %p199, %s198, 63
      %s201 = smul.addr %s200, 4
      %s202 = scalar_lea.vmem %s3, %s201
      %s203 = smul.u32 8, %s18
      %s204 = smul.u32 4, %s19
      %p205 = scmp.lt.s32.totalorder %s203, 15
      %s206 = scalar_select %p205, %s203, 15
      %p207 = scmp.lt.s32.totalorder %s204, 3
      %s208 = scalar_select %p207, %s204, 3
      %s209 = smul.addr %s206, 4
      %s210 = sadd.s32 %s208, %s209
      %s211 = smul.addr %s210, 8
      %s212 = scalar_lea.vmem %s0, %s211
      %s213 = smul.u32 8, %s18
      %s214 = smul.u32 4, %s19
      %s215 = smul.u32 32, %s18
      %p216 = scmp.lt.s32.totalorder %s215, 63
      %s217 = scalar_select %p216, %s215, 63
      %s218 = smul.addr %s217, 8
      %s219 = scalar_lea.vmem %s2, %s218
      %s220 = smul.u32 32, %s18
      %s221 = smul.u32 32, %s18
      %p222 = scmp.lt.s32.totalorder %s221, 63
      %s223 = scalar_select %p222, %s221, 63
      %s224 = smul.addr %s223, 4
      %s225 = scalar_lea.vmem %s3, %s224
      %s226 = smul.u32 32, %s18
      %v227 = vld [vmem:[%s1] sm:$0xf]
      %v228 = vld [vmem:[%s1 + $0x4] sm:$0xf]
      %v229 = vld [vmem:[%s1 + $0x8] sm:$0xf]
      %v230 = vld [vmem:[%s1 + $0xc] sm:$0xf]
      %v231 = vld [vmem:[%s1 + $0x10] sm:$0xf]
      %v232 = vld [vmem:[%s1 + $0x14] sm:$0xf]
      %v233 = vld [vmem:[%s1 + $0x18] sm:$0xf]
      %v234 = vld [vmem:[%s1 + $0x1c] sm:$0xf]
      %v235 = vld [vmem:[%s1 + $0x20] sm:$0xf]
      %v236 = vld [vmem:[%s1 + $0x24] sm:$0xf]
      %v237 = vld [vmem:[%s1 + $0x28] sm:$0xf]
      %v238 = vld [vmem:[%s1 + $0x2c] sm:$0xf]
      %v239 = vld [vmem:[%s1 + $0x30] sm:$0xf]
      %v240 = vld [vmem:[%s1 + $0x34] sm:$0xf]
      %v241 = vld [vmem:[%s1 + $0x38] sm:$0xf]
      %v242 = vld [vmem:[%s1 + $0x3c] sm:$0xf]
      %v243 = vld [vmem:[%s1 + $0x40] sm:$0xf]
      %v244 = vld [vmem:[%s1 + $0x44] sm:$0xf]
      %v245 = vld [vmem:[%s1 + $0x48] sm:$0xf]
      %v246 = vld [vmem:[%s1 + $0x4c] sm:$0xf]
      %v247 = vld [vmem:[%s1 + $0x50] sm:$0xf]
      %v248 = vld [vmem:[%s1 + $0x54] sm:$0xf]
      %v249 = vld [vmem:[%s1 + $0x58] sm:$0xf]
      %v250 = vld [vmem:[%s1 + $0x5c] sm:$0xf]
      %v251 = vld [vmem:[%s1 + $0x60] sm:$0xf]
      %v252 = vld [vmem:[%s1 + $0x64] sm:$0xf]
      %v253 = vld [vmem:[%s1 + $0x68] sm:$0xf]
      %v254 = vld [vmem:[%s1 + $0x6c] sm:$0xf]
      %v255 = vld [vmem:[%s1 + $0x70] sm:$0xf]
      %v256 = vld [vmem:[%s1 + $0x74] sm:$0xf]
      %v257 = vld [vmem:[%s1 + $0x78] sm:$0xf]
      %v258 = vld [vmem:[%s1 + $0x7c] sm:$0xf]
      %v259 = vld [vmem:[%s1 + $0x80] sm:$0xf]
      %v260 = vld [vmem:[%s1 + $0x84] sm:$0xf]
      %v261 = vld [vmem:[%s1 + $0x88] sm:$0xf]
      %v262 = vld [vmem:[%s1 + $0x8c] sm:$0xf]
      %v263 = vld [vmem:[%s1 + $0x90] sm:$0xf]
      %v264 = vld [vmem:[%s1 + $0x94] sm:$0xf]
      %v265 = vld [vmem:[%s1 + $0x98] sm:$0xf]
      %v266 = vld [vmem:[%s1 + $0x9c] sm:$0xf]
      %v267 = vld [vmem:[%s1 + $0xa0] sm:$0xf]
      %v268 = vld [vmem:[%s1 + $0xa4] sm:$0xf]
      %v269 = vld [vmem:[%s1 + $0xa8] sm:$0xf]
      %v270 = vld [vmem:[%s1 + $0xac] sm:$0xf]
      %v271 = vld [vmem:[%s1 + $0xb0] sm:$0xf]
      %v272 = vld [vmem:[%s1 + $0xb4] sm:$0xf]
      %v273 = vld [vmem:[%s1 + $0xb8] sm:$0xf]
      %v274 = vld [vmem:[%s1 + $0xbc] sm:$0xf]
      %v275 = vld [vmem:[%s1 + $0xc0] sm:$0xf]
      %v276 = vld [vmem:[%s1 + $0xc4] sm:$0xf]
      %v277 = vld [vmem:[%s1 + $0xc8] sm:$0xf]
      %v278 = vld [vmem:[%s1 + $0xcc] sm:$0xf]
      %v279 = vld [vmem:[%s1 + $0xd0] sm:$0xf]
      %v280 = vld [vmem:[%s1 + $0xd4] sm:$0xf]
      %v281 = vld [vmem:[%s1 + $0xd8] sm:$0xf]
      %v282 = vld [vmem:[%s1 + $0xdc] sm:$0xf]
      %v283 = vld [vmem:[%s1 + $0xe0] sm:$0xf]
      %v284 = vld [vmem:[%s1 + $0xe4] sm:$0xf]
      %v285 = vld [vmem:[%s1 + $0xe8] sm:$0xf]
      %v286 = vld [vmem:[%s1 + $0xec] sm:$0xf]
      %v287 = vld [vmem:[%s1 + $0xf0] sm:$0xf]
      %v288 = vld [vmem:[%s1 + $0xf4] sm:$0xf]
      %v289 = vld [vmem:[%s1 + $0xf8] sm:$0xf]
      %v290 = vld [vmem:[%s1 + $0xfc] sm:$0xf]
      %v291 = vld [vmem:[%s212] sm:$0xff]
      %v292 = vld [vmem:[%s212 + $0x8] sm:$0xff]
      %v293 = vld [vmem:[%s212 + $0x10] sm:$0xff]
      %v294 = vld [vmem:[%s212 + $0x18] sm:$0xff]
      %v295 = vld [vmem:[%s212 + $0x20] sm:$0xff]
      %v296 = vld [vmem:[%s212 + $0x28] sm:$0xff]
      %v297 = vld [vmem:[%s212 + $0x30] sm:$0xff]
      %v298 = vld [vmem:[%s212 + $0x38] sm:$0xff]
      %v299 = vld [vmem:[%s212 + $0x40] sm:$0xff]
      %v300 = vld [vmem:[%s212 + $0x48] sm:$0xff]
      %v301 = vld [vmem:[%s212 + $0x50] sm:$0xff]
      %v302 = vld [vmem:[%s212 + $0x58] sm:$0xff]
      %v303 = vld [vmem:[%s212 + $0x60] sm:$0xff]
      %v304 = vld [vmem:[%s212 + $0x68] sm:$0xff]
      %v305 = vld [vmem:[%s212 + $0x70] sm:$0xff]
      %v306 = vld [vmem:[%s212 + $0x78] sm:$0xff]
      %v307 = vld [vmem:[%s212 + $0x80] sm:$0xff]
      %v308 = vld [vmem:[%s212 + $0x88] sm:$0xff]
      %v309 = vld [vmem:[%s212 + $0x90] sm:$0xff]
      %v310 = vld [vmem:[%s212 + $0x98] sm:$0xff]
      %v311 = vld [vmem:[%s212 + $0xa0] sm:$0xff]
      %v312 = vld [vmem:[%s212 + $0xa8] sm:$0xff]
      %v313 = vld [vmem:[%s212 + $0xb0] sm:$0xff]
      %v314 = vld [vmem:[%s212 + $0xb8] sm:$0xff]
      %v315 = vld [vmem:[%s212 + $0xc0] sm:$0xff]
      %v316 = vld [vmem:[%s212 + $0xc8] sm:$0xff]
      %v317 = vld [vmem:[%s212 + $0xd0] sm:$0xff]
      %v318 = vld [vmem:[%s212 + $0xd8] sm:$0xff]
      %v319 = vld [vmem:[%s212 + $0xe0] sm:$0xff]
      %v320 = vld [vmem:[%s212 + $0xe8] sm:$0xff]
      %v321 = vld [vmem:[%s212 + $0xf0] sm:$0xff]
      %v322 = vld [vmem:[%s212 + $0xf8] sm:$0xff]
      %v323 = vunpack.c.0.s8 %v291
      %v324 = vunpack.c.0.s8 %v292
      %v325 = vunpack.c.0.s8 %v293
      %v326 = vunpack.c.0.s8 %v294
      %v327 = vunpack.c.1.s8 %v291
      %v328 = vunpack.c.1.s8 %v292
      %v329 = vunpack.c.1.s8 %v293
      %v330 = vunpack.c.1.s8 %v294
      %v331 = vunpack.c.2.s8 %v291
      %v332 = vunpack.c.2.s8 %v292
      %v333 = vunpack.c.2.s8 %v293
      %v334 = vunpack.c.2.s8 %v294
      %v335 = vunpack.c.3.s8 %v291
      %v336 = vunpack.c.3.s8 %v292
      %v337 = vunpack.c.3.s8 %v293
      %v338 = vunpack.c.3.s8 %v294
      %v339 = vunpack.c.0.s8 %v295
      %v340 = vunpack.c.0.s8 %v296
      %v341 = vunpack.c.0.s8 %v297
      %v342 = vunpack.c.0.s8 %v298
      %v343 = vunpack.c.1.s8 %v295
      %v344 = vunpack.c.1.s8 %v296
      %v345 = vunpack.c.1.s8 %v297
      %v346 = vunpack.c.1.s8 %v298
      %v347 = vunpack.c.2.s8 %v295
      %v348 = vunpack.c.2.s8 %v296
      %v349 = vunpack.c.2.s8 %v297
      %v350 = vunpack.c.2.s8 %v298
      %v351 = vunpack.c.3.s8 %v295
      %v352 = vunpack.c.3.s8 %v296
      %v353 = vunpack.c.3.s8 %v297
      %v354 = vunpack.c.3.s8 %v298
      %v355 = vunpack.c.0.s8 %v299
      %v356 = vunpack.c.0.s8 %v300
      %v357 = vunpack.c.0.s8 %v301
      %v358 = vunpack.c.0.s8 %v302
      %v359 = vunpack.c.1.s8 %v299
      %v360 = vunpack.c.1.s8 %v300
      %v361 = vunpack.c.1.s8 %v301
      %v362 = vunpack.c.1.s8 %v302
      %v363 = vunpack.c.2.s8 %v299
      %v364 = vunpack.c.2.s8 %v300
      %v365 = vunpack.c.2.s8 %v301
      %v366 = vunpack.c.2.s8 %v302
      %v367 = vunpack.c.3.s8 %v299
      %v368 = vunpack.c.3.s8 %v300
      %v369 = vunpack.c.3.s8 %v301
      %v370 = vunpack.c.3.s8 %v302
      %v371 = vunpack.c.0.s8 %v303
      %v372 = vunpack.c.0.s8 %v304
      %v373 = vunpack.c.0.s8 %v305
      %v374 = vunpack.c.0.s8 %v306
      %v375 = vunpack.c.1.s8 %v303
      %v376 = vunpack.c.1.s8 %v304
      %v377 = vunpack.c.1.s8 %v305
      %v378 = vunpack.c.1.s8 %v306
      %v379 = vunpack.c.2.s8 %v303
      %v380 = vunpack.c.2.s8 %v304
      %v381 = vunpack.c.2.s8 %v305
      %v382 = vunpack.c.2.s8 %v306
      %v383 = vunpack.c.3.s8 %v303
      %v384 = vunpack.c.3.s8 %v304
      %v385 = vunpack.c.3.s8 %v305
      %v386 = vunpack.c.3.s8 %v306
      %v387 = vunpack.c.0.s8 %v307
      %v388 = vunpack.c.0.s8 %v308
      %v389 = vunpack.c.0.s8 %v309
      %v390 = vunpack.c.0.s8 %v310
      %v391 = vunpack.c.1.s8 %v307
      %v392 = vunpack.c.1.s8 %v308
      %v393 = vunpack.c.1.s8 %v309
      %v394 = vunpack.c.1.s8 %v310
      %v395 = vunpack.c.2.s8 %v307
      %v396 = vunpack.c.2.s8 %v308
      %v397 = vunpack.c.2.s8 %v309
      %v398 = vunpack.c.2.s8 %v310
      %v399 = vunpack.c.3.s8 %v307
      %v400 = vunpack.c.3.s8 %v308
      %v401 = vunpack.c.3.s8 %v309
      %v402 = vunpack.c.3.s8 %v310
      %v403 = vunpack.c.0.s8 %v311
      %v404 = vunpack.c.0.s8 %v312
      %v405 = vunpack.c.0.s8 %v313
      %v406 = vunpack.c.0.s8 %v314
      %v407 = vunpack.c.1.s8 %v311
      %v408 = vunpack.c.1.s8 %v312
      %v409 = vunpack.c.1.s8 %v313
      %v410 = vunpack.c.1.s8 %v314
      %v411 = vunpack.c.2.s8 %v311
      %v412 = vunpack.c.2.s8 %v312
      %v413 = vunpack.c.2.s8 %v313
      %v414 = vunpack.c.2.s8 %v314
      %v415 = vunpack.c.3.s8 %v311
      %v416 = vunpack.c.3.s8 %v312
      %v417 = vunpack.c.3.s8 %v313
      %v418 = vunpack.c.3.s8 %v314
      %v419 = vunpack.c.0.s8 %v315
      %v420 = vunpack.c.0.s8 %v316
      %v421 = vunpack.c.0.s8 %v317
      %v422 = vunpack.c.0.s8 %v318
      %v423 = vunpack.c.1.s8 %v315
      %v424 = vunpack.c.1.s8 %v316
      %v425 = vunpack.c.1.s8 %v317
      %v426 = vunpack.c.1.s8 %v318
      %v427 = vunpack.c.2.s8 %v315
      %v428 = vunpack.c.2.s8 %v316
      %v429 = vunpack.c.2.s8 %v317
      %v430 = vunpack.c.2.s8 %v318
      %v431 = vunpack.c.3.s8 %v315
      %v432 = vunpack.c.3.s8 %v316
      %v433 = vunpack.c.3.s8 %v317
      %v434 = vunpack.c.3.s8 %v318
      %v435 = vunpack.c.0.s8 %v319
      %v436 = vunpack.c.0.s8 %v320
      %v437 = vunpack.c.0.s8 %v321
      %v438 = vunpack.c.0.s8 %v322
      %v439 = vunpack.c.1.s8 %v319
      %v440 = vunpack.c.1.s8 %v320
      %v441 = vunpack.c.1.s8 %v321
      %v442 = vunpack.c.1.s8 %v322
      %v443 = vunpack.c.2.s8 %v319
      %v444 = vunpack.c.2.s8 %v320
      %v445 = vunpack.c.2.s8 %v321
      %v446 = vunpack.c.2.s8 %v322
      %v447 = vunpack.c.3.s8 %v319
      %v448 = vunpack.c.3.s8 %v320
      %v449 = vunpack.c.3.s8 %v321
      %v450 = vunpack.c.3.s8 %v322
      %v451 = vcvt.s32.f32 %v323
      %v452 = vcvt.s32.f32 %v324
      %v453 = vcvt.s32.f32 %v325
      %v454 = vcvt.s32.f32 %v326
      %v455 = vcvt.s32.f32 %v327
      %v456 = vcvt.s32.f32 %v328
      %v457 = vcvt.s32.f32 %v329
      %v458 = vcvt.s32.f32 %v330
      %v459 = vcvt.s32.f32 %v331
      %v460 = vcvt.s32.f32 %v332
      %v461 = vcvt.s32.f32 %v333
      %v462 = vcvt.s32.f32 %v334
      %v463 = vcvt.s32.f32 %v335
      %v464 = vcvt.s32.f32 %v336
      %v465 = vcvt.s32.f32 %v337
      %v466 = vcvt.s32.f32 %v338
      %v467 = vcvt.s32.f32 %v339
      %v468 = vcvt.s32.f32 %v340
      %v469 = vcvt.s32.f32 %v341
      %v470 = vcvt.s32.f32 %v342
      %v471 = vcvt.s32.f32 %v343
      %v472 = vcvt.s32.f32 %v344
      %v473 = vcvt.s32.f32 %v345
      %v474 = vcvt.s32.f32 %v346
      %v475 = vcvt.s32.f32 %v347
      %v476 = vcvt.s32.f32 %v348
      %v477 = vcvt.s32.f32 %v349
      %v478 = vcvt.s32.f32 %v350
      %v479 = vcvt.s32.f32 %v351
      %v480 = vcvt.s32.f32 %v352
      %v481 = vcvt.s32.f32 %v353
      %v482 = vcvt.s32.f32 %v354
      %v483 = vcvt.s32.f32 %v355
      %v484 = vcvt.s32.f32 %v356
      %v485 = vcvt.s32.f32 %v357
      %v486 = vcvt.s32.f32 %v358
      %v487 = vcvt.s32.f32 %v359
      %v488 = vcvt.s32.f32 %v360
      %v489 = vcvt.s32.f32 %v361
      %v490 = vcvt.s32.f32 %v362
      %v491 = vcvt.s32.f32 %v363
      %v492 = vcvt.s32.f32 %v364
      %v493 = vcvt.s32.f32 %v365
      %v494 = vcvt.s32.f32 %v366
      %v495 = vcvt.s32.f32 %v367
      %v496 = vcvt.s32.f32 %v368
      %v497 = vcvt.s32.f32 %v369
      %v498 = vcvt.s32.f32 %v370
      %v499 = vcvt.s32.f32 %v371
      %v500 = vcvt.s32.f32 %v372
      %v501 = vcvt.s32.f32 %v373
      %v502 = vcvt.s32.f32 %v374
      %v503 = vcvt.s32.f32 %v375
      %v504 = vcvt.s32.f32 %v376
      %v505 = vcvt.s32.f32 %v377
      %v506 = vcvt.s32.f32 %v378
      %v507 = vcvt.s32.f32 %v379
      %v508 = vcvt.s32.f32 %v380
      %v509 = vcvt.s32.f32 %v381
      %v510 = vcvt.s32.f32 %v382
      %v511 = vcvt.s32.f32 %v383
      %v512 = vcvt.s32.f32 %v384
      %v513 = vcvt.s32.f32 %v385
      %v514 = vcvt.s32.f32 %v386
      %v515 = vcvt.s32.f32 %v387
      %v516 = vcvt.s32.f32 %v388
      %v517 = vcvt.s32.f32 %v389
      %v518 = vcvt.s32.f32 %v390
      %v519 = vcvt.s32.f32 %v391
      %v520 = vcvt.s32.f32 %v392
      %v521 = vcvt.s32.f32 %v393
      %v522 = vcvt.s32.f32 %v394
      %v523 = vcvt.s32.f32 %v395
      %v524 = vcvt.s32.f32 %v396
      %v525 = vcvt.s32.f32 %v397
      %v526 = vcvt.s32.f32 %v398
      %v527 = vcvt.s32.f32 %v399
      %v528 = vcvt.s32.f32 %v400
      %v529 = vcvt.s32.f32 %v401
      %v530 = vcvt.s32.f32 %v402
      %v531 = vcvt.s32.f32 %v403
      %v532 = vcvt.s32.f32 %v404
      %v533 = vcvt.s32.f32 %v405
      %v534 = vcvt.s32.f32 %v406
      %v535 = vcvt.s32.f32 %v407
      %v536 = vcvt.s32.f32 %v408
      %v537 = vcvt.s32.f32 %v409
      %v538 = vcvt.s32.f32 %v410
      %v539 = vcvt.s32.f32 %v411
      %v540 = vcvt.s32.f32 %v412
      %v541 = vcvt.s32.f32 %v413
      %v542 = vcvt.s32.f32 %v414
      %v543 = vcvt.s32.f32 %v415
      %v544 = vcvt.s32.f32 %v416
      %v545 = vcvt.s32.f32 %v417
      %v546 = vcvt.s32.f32 %v418
      %v547 = vcvt.s32.f32 %v419
      %v548 = vcvt.s32.f32 %v420
      %v549 = vcvt.s32.f32 %v421
      %v550 = vcvt.s32.f32 %v422
      %v551 = vcvt.s32.f32 %v423
      %v552 = vcvt.s32.f32 %v424
      %v553 = vcvt.s32.f32 %v425
      %v554 = vcvt.s32.f32 %v426
      %v555 = vcvt.s32.f32 %v427
      %v556 = vcvt.s32.f32 %v428
      %v557 = vcvt.s32.f32 %v429
      %v558 = vcvt.s32.f32 %v430
      %v559 = vcvt.s32.f32 %v431
      %v560 = vcvt.s32.f32 %v432
      %v561 = vcvt.s32.f32 %v433
      %v562 = vcvt.s32.f32 %v434
      %v563 = vcvt.s32.f32 %v435
      %v564 = vcvt.s32.f32 %v436
      %v565 = vcvt.s32.f32 %v437
      %v566 = vcvt.s32.f32 %v438
      %v567 = vcvt.s32.f32 %v439
      %v568 = vcvt.s32.f32 %v440
      %v569 = vcvt.s32.f32 %v441
      %v570 = vcvt.s32.f32 %v442
      %v571 = vcvt.s32.f32 %v443
      %v572 = vcvt.s32.f32 %v444
      %v573 = vcvt.s32.f32 %v445
      %v574 = vcvt.s32.f32 %v446
      %v575 = vcvt.s32.f32 %v447
      %v576 = vcvt.s32.f32 %v448
      %v577 = vcvt.s32.f32 %v449
      %v578 = vcvt.s32.f32 %v450
      %v579 = vpack.c.bf16 %v455, %v451
      %v580 = vpack.c.bf16 %v456, %v452
      %v581 = vpack.c.bf16 %v457, %v453
      %v582 = vpack.c.bf16 %v458, %v454
      %v583 = vpack.c.bf16 %v463, %v459
      %v584 = vpack.c.bf16 %v464, %v460
      %v585 = vpack.c.bf16 %v465, %v461
      %v586 = vpack.c.bf16 %v466, %v462
      %v587 = vpack.c.bf16 %v471, %v467
      %v588 = vpack.c.bf16 %v472, %v468
      %v589 = vpack.c.bf16 %v473, %v469
      %v590 = vpack.c.bf16 %v474, %v470
      %v591 = vpack.c.bf16 %v479, %v475
      %v592 = vpack.c.bf16 %v480, %v476
      %v593 = vpack.c.bf16 %v481, %v477
      %v594 = vpack.c.bf16 %v482, %v478
      %v595 = vpack.c.bf16 %v487, %v483
      %v596 = vpack.c.bf16 %v488, %v484
      %v597 = vpack.c.bf16 %v489, %v485
      %v598 = vpack.c.bf16 %v490, %v486
      %v599 = vpack.c.bf16 %v495, %v491
      %v600 = vpack.c.bf16 %v496, %v492
      %v601 = vpack.c.bf16 %v497, %v493
      %v602 = vpack.c.bf16 %v498, %v494
      %v603 = vpack.c.bf16 %v503, %v499
      %v604 = vpack.c.bf16 %v504, %v500
      %v605 = vpack.c.bf16 %v505, %v501
      %v606 = vpack.c.bf16 %v506, %v502
      %v607 = vpack.c.bf16 %v511, %v507
      %v608 = vpack.c.bf16 %v512, %v508
      %v609 = vpack.c.bf16 %v513, %v509
      %v610 = vpack.c.bf16 %v514, %v510
      %v611 = vpack.c.bf16 %v519, %v515
      %v612 = vpack.c.bf16 %v520, %v516
      %v613 = vpack.c.bf16 %v521, %v517
      %v614 = vpack.c.bf16 %v522, %v518
      %v615 = vpack.c.bf16 %v527, %v523
      %v616 = vpack.c.bf16 %v528, %v524
      %v617 = vpack.c.bf16 %v529, %v525
      %v618 = vpack.c.bf16 %v530, %v526
      %v619 = vpack.c.bf16 %v535, %v531
      %v620 = vpack.c.bf16 %v536, %v532
      %v621 = vpack.c.bf16 %v537, %v533
      %v622 = vpack.c.bf16 %v538, %v534
      %v623 = vpack.c.bf16 %v543, %v539
      %v624 = vpack.c.bf16 %v544, %v540
      %v625 = vpack.c.bf16 %v545, %v541
      %v626 = vpack.c.bf16 %v546, %v542
      %v627 = vpack.c.bf16 %v551, %v547
      %v628 = vpack.c.bf16 %v552, %v548
      %v629 = vpack.c.bf16 %v553, %v549
      %v630 = vpack.c.bf16 %v554, %v550
      %v631 = vpack.c.bf16 %v559, %v555
      %v632 = vpack.c.bf16 %v560, %v556
      %v633 = vpack.c.bf16 %v561, %v557
      %v634 = vpack.c.bf16 %v562, %v558
      %v635 = vpack.c.bf16 %v567, %v563
      %v636 = vpack.c.bf16 %v568, %v564
      %v637 = vpack.c.bf16 %v569, %v565
      %v638 = vpack.c.bf16 %v570, %v566
      %v639 = vpack.c.bf16 %v575, %v571
      %v640 = vpack.c.bf16 %v576, %v572
      %v641 = vpack.c.bf16 %v577, %v573
      %v642 = vpack.c.bf16 %v578, %v574
      %v707 = vunpack.c.l.b16 %v227
      %v708 = vunpack.c.l.b16 %v228
      %v709 = vunpack.c.l.b16 %v229
      %v710 = vunpack.c.l.b16 %v230
      %v711 = vunpack.c.l.b16 %v231
      %v712 = vunpack.c.l.b16 %v232
      %v713 = vunpack.c.l.b16 %v233
      %v714 = vunpack.c.l.b16 %v234
      %v715 = vunpack.c.l.b16 %v235
      %v716 = vunpack.c.l.b16 %v236
      %v717 = vunpack.c.l.b16 %v237
      %v718 = vunpack.c.l.b16 %v238
      %v719 = vunpack.c.l.b16 %v239
      %v720 = vunpack.c.l.b16 %v240
      %v721 = vunpack.c.l.b16 %v241
      %v722 = vunpack.c.l.b16 %v242
      %v723 = vunpack.c.l.b16 %v243
      %v724 = vunpack.c.l.b16 %v244
      %v725 = vunpack.c.l.b16 %v245
      %v726 = vunpack.c.l.b16 %v246
      %v727 = vunpack.c.l.b16 %v247
      %v728 = vunpack.c.l.b16 %v248
      %v729 = vunpack.c.l.b16 %v249
      %v730 = vunpack.c.l.b16 %v250
      %v731 = vunpack.c.l.b16 %v251
      %v732 = vunpack.c.l.b16 %v252
      %v733 = vunpack.c.l.b16 %v253
      %v734 = vunpack.c.l.b16 %v254
      %v735 = vunpack.c.l.b16 %v255
      %v736 = vunpack.c.l.b16 %v256
      %v737 = vunpack.c.l.b16 %v257
      %v738 = vunpack.c.l.b16 %v258
      %v739 = vunpack.c.l.b16 %v259
      %v740 = vunpack.c.l.b16 %v260
      %v741 = vunpack.c.l.b16 %v261
      %v742 = vunpack.c.l.b16 %v262
      %v743 = vunpack.c.l.b16 %v263
      %v744 = vunpack.c.l.b16 %v264
      %v745 = vunpack.c.l.b16 %v265
      %v746 = vunpack.c.l.b16 %v266
      %v747 = vunpack.c.l.b16 %v267
      %v748 = vunpack.c.l.b16 %v268
      %v749 = vunpack.c.l.b16 %v269
      %v750 = vunpack.c.l.b16 %v270
      %v751 = vunpack.c.l.b16 %v271
      %v752 = vunpack.c.l.b16 %v272
      %v753 = vunpack.c.l.b16 %v273
      %v754 = vunpack.c.l.b16 %v274
      %v755 = vunpack.c.l.b16 %v275
      %v756 = vunpack.c.l.b16 %v276
      %v757 = vunpack.c.l.b16 %v277
      %v758 = vunpack.c.l.b16 %v278
      %v759 = vunpack.c.l.b16 %v279
      %v760 = vunpack.c.l.b16 %v280
      %v761 = vunpack.c.l.b16 %v281
      %v762 = vunpack.c.l.b16 %v282
      %v763 = vunpack.c.l.b16 %v283
      %v764 = vunpack.c.l.b16 %v284
      %v765 = vunpack.c.l.b16 %v285
      %v766 = vunpack.c.l.b16 %v286
      %v767 = vunpack.c.l.b16 %v287
      %v768 = vunpack.c.l.b16 %v288
      %v769 = vunpack.c.l.b16 %v289
      %v770 = vunpack.c.l.b16 %v290
      %v771 = vpack.c.b16 %v708, %v707
      %v772 = vpack.c.b16 %v710, %v709
      %v773 = vpack.c.b16 %v712, %v711
      %v774 = vpack.c.b16 %v714, %v713
      %v775 = vpack.c.b16 %v716, %v715
      %v776 = vpack.c.b16 %v718, %v717
      %v777 = vpack.c.b16 %v720, %v719
      %v778 = vpack.c.b16 %v722, %v721
      %v779 = vpack.c.b16 %v724, %v723
      %v780 = vpack.c.b16 %v726, %v725
      %v781 = vpack.c.b16 %v728, %v727
      %v782 = vpack.c.b16 %v730, %v729
      %v783 = vpack.c.b16 %v732, %v731
      %v784 = vpack.c.b16 %v734, %v733
      %v785 = vpack.c.b16 %v736, %v735
      %v786 = vpack.c.b16 %v738, %v737
      %v787 = vpack.c.b16 %v740, %v739
      %v788 = vpack.c.b16 %v742, %v741
      %v789 = vpack.c.b16 %v744, %v743
      %v790 = vpack.c.b16 %v746, %v745
      %v791 = vpack.c.b16 %v748, %v747
      %v792 = vpack.c.b16 %v750, %v749
      %v793 = vpack.c.b16 %v752, %v751
      %v794 = vpack.c.b16 %v754, %v753
      %v795 = vpack.c.b16 %v756, %v755
      %v796 = vpack.c.b16 %v758, %v757
      %v797 = vpack.c.b16 %v760, %v759
      %v798 = vpack.c.b16 %v762, %v761
      %v799 = vpack.c.b16 %v764, %v763
      %v800 = vpack.c.b16 %v766, %v765
      %v801 = vpack.c.b16 %v768, %v767
      %v802 = vpack.c.b16 %v770, %v769
      %835 = vmatpush.bf16.msra.mxu0 %v778
      %836 = vmatpush.bf16.msra.mxu0 %v777
      %837 = vmatpush.bf16.msra.mxu0 %v776
      %838 = vmatpush.bf16.msra.mxu0 %v775
      %839 = vmatpush.bf16.msra.mxu0 %v774
      %840 = vmatpush.bf16.msra.mxu0 %v773
      %841 = vmatpush.bf16.msra.mxu0 %v772
      %842 = vmatpush.bf16.msra.mxu0 %v771
      %843 = vmatmul.bf16.gmra.mxu0 %v579
      %v844 = vpop.f32.mrf.mxu0
      %v845 = vadd.f32 0.0, %v844
      %v846 = vpop.f32.mrf.mxu0
      %v847 = vadd.f32 0.0, %v846
      %848 = vmatmul.bf16.gmra.mxu0 %v583
      %v849 = vpop.f32.mrf.mxu0
      %v850 = vadd.f32 0.0, %v849
      %v851 = vpop.f32.mrf.mxu0
      %v852 = vadd.f32 0.0, %v851
      %853 = vmatmul.bf16.gmra.mxu0 %v587
      %v854 = vpop.f32.mrf.mxu0
      %v855 = vadd.f32 0.0, %v854
      %v856 = vpop.f32.mrf.mxu0
      %v857 = vadd.f32 0.0, %v856
      %858 = vmatmul.bf16.gmra.mxu0 %v591
      %v859 = vpop.f32.mrf.mxu0
      %v860 = vadd.f32 0.0, %v859
      %v861 = vpop.f32.mrf.mxu0
      %v862 = vadd.f32 0.0, %v861
      %863 = vmatmul.bf16.gmra.mxu0 %v595
      %v864 = vpop.f32.mrf.mxu0
      %v865 = vadd.f32 0.0, %v864
      %v866 = vpop.f32.mrf.mxu0
      %v867 = vadd.f32 0.0, %v866
      %868 = vmatmul.bf16.gmra.mxu0 %v599
      %v869 = vpop.f32.mrf.mxu0
      %v870 = vadd.f32 0.0, %v869
      %v871 = vpop.f32.mrf.mxu0
      %v872 = vadd.f32 0.0, %v871
      %873 = vmatmul.bf16.gmra.mxu0 %v603
      %v874 = vpop.f32.mrf.mxu0
      %v875 = vadd.f32 0.0, %v874
      %v876 = vpop.f32.mrf.mxu0
      %v877 = vadd.f32 0.0, %v876
      %878 = vmatmul.bf16.gmra.mxu0 %v607
      %v879 = vpop.f32.mrf.mxu0
      %v880 = vadd.f32 0.0, %v879
      %v881 = vpop.f32.mrf.mxu0
      %v882 = vadd.f32 0.0, %v881
      %883 = vmatmul.bf16.gmra.mxu0 %v611
      %v884 = vpop.f32.mrf.mxu0
      %v885 = vadd.f32 0.0, %v884
      %v886 = vpop.f32.mrf.mxu0
      %v887 = vadd.f32 0.0, %v886
      %888 = vmatmul.bf16.gmra.mxu0 %v615
      %v889 = vpop.f32.mrf.mxu0
      %v890 = vadd.f32 0.0, %v889
      %v891 = vpop.f32.mrf.mxu0
      %v892 = vadd.f32 0.0, %v891
      %893 = vmatmul.bf16.gmra.mxu0 %v619
      %v894 = vpop.f32.mrf.mxu0
      %v895 = vadd.f32 0.0, %v894
      %v896 = vpop.f32.mrf.mxu0
      %v897 = vadd.f32 0.0, %v896
      %898 = vmatmul.bf16.gmra.mxu0 %v623
      %v899 = vpop.f32.mrf.mxu0
      %v900 = vadd.f32 0.0, %v899
      %v901 = vpop.f32.mrf.mxu0
      %v902 = vadd.f32 0.0, %v901
      %903 = vmatmul.bf16.gmra.mxu0 %v627
      %v904 = vpop.f32.mrf.mxu0
      %v905 = vadd.f32 0.0, %v904
      %v906 = vpop.f32.mrf.mxu0
      %v907 = vadd.f32 0.0, %v906
      %908 = vmatmul.bf16.gmra.mxu0 %v631
      %v909 = vpop.f32.mrf.mxu0
      %v910 = vadd.f32 0.0, %v909
      %v911 = vpop.f32.mrf.mxu0
      %v912 = vadd.f32 0.0, %v911
      %913 = vmatmul.bf16.gmra.mxu0 %v635
      %v914 = vpop.f32.mrf.mxu0
      %v915 = vadd.f32 0.0, %v914
      %v916 = vpop.f32.mrf.mxu0
      %v917 = vadd.f32 0.0, %v916
      %918 = vmatmul.bf16.gmra.mxu0 %v639
      %v919 = vpop.f32.mrf.mxu0
      %v920 = vadd.f32 0.0, %v919
      %v921 = vpop.f32.mrf.mxu0
      %v922 = vadd.f32 0.0, %v921
      %923 = vdwg.mxu0
      %924 = vmatpush.bf16.msra.mxu0 %v786
      %925 = vmatpush.bf16.msra.mxu0 %v785
      %926 = vmatpush.bf16.msra.mxu0 %v784
      %927 = vmatpush.bf16.msra.mxu0 %v783
      %928 = vmatpush.bf16.msra.mxu0 %v782
      %929 = vmatpush.bf16.msra.mxu0 %v781
      %930 = vmatpush.bf16.msra.mxu0 %v780
      %931 = vmatpush.bf16.msra.mxu0 %v779
      %932 = vmatmul.bf16.gmra.mxu0 %v580
      %v933 = vpop.f32.mrf.mxu0
      %v934 = vadd.f32 %v845, %v933
      %v935 = vpop.f32.mrf.mxu0
      %v936 = vadd.f32 %v847, %v935
      %937 = vmatmul.bf16.gmra.mxu0 %v584
      %v938 = vpop.f32.mrf.mxu0
      %v939 = vadd.f32 %v850, %v938
      %v940 = vpop.f32.mrf.mxu0
      %v941 = vadd.f32 %v852, %v940
      %942 = vmatmul.bf16.gmra.mxu0 %v588
      %v943 = vpop.f32.mrf.mxu0
      %v944 = vadd.f32 %v855, %v943
      %v945 = vpop.f32.mrf.mxu0
      %v946 = vadd.f32 %v857, %v945
      %947 = vmatmul.bf16.gmra.mxu0 %v592
      %v948 = vpop.f32.mrf.mxu0
      %v949 = vadd.f32 %v860, %v948
      %v950 = vpop.f32.mrf.mxu0
      %v951 = vadd.f32 %v862, %v950
      %952 = vmatmul.bf16.gmra.mxu0 %v596
      %v953 = vpop.f32.mrf.mxu0
      %v954 = vadd.f32 %v865, %v953
      %v955 = vpop.f32.mrf.mxu0
      %v956 = vadd.f32 %v867, %v955
      %957 = vmatmul.bf16.gmra.mxu0 %v600
      %v958 = vpop.f32.mrf.mxu0
      %v959 = vadd.f32 %v870, %v958
      %v960 = vpop.f32.mrf.mxu0
      %v961 = vadd.f32 %v872, %v960
      %962 = vmatmul.bf16.gmra.mxu0 %v604
      %v963 = vpop.f32.mrf.mxu0
      %v964 = vadd.f32 %v875, %v963
      %v965 = vpop.f32.mrf.mxu0
      %v966 = vadd.f32 %v877, %v965
      %967 = vmatmul.bf16.gmra.mxu0 %v608
      %v968 = vpop.f32.mrf.mxu0
      %v969 = vadd.f32 %v880, %v968
      %v970 = vpop.f32.mrf.mxu0
      %v971 = vadd.f32 %v882, %v970
      %972 = vmatmul.bf16.gmra.mxu0 %v612
      %v973 = vpop.f32.mrf.mxu0
      %v974 = vadd.f32 %v885, %v973
      %v975 = vpop.f32.mrf.mxu0
      %v976 = vadd.f32 %v887, %v975
      %977 = vmatmul.bf16.gmra.mxu0 %v616
      %v978 = vpop.f32.mrf.mxu0
      %v979 = vadd.f32 %v890, %v978
      %v980 = vpop.f32.mrf.mxu0
      %v981 = vadd.f32 %v892, %v980
      %982 = vmatmul.bf16.gmra.mxu0 %v620
      %v983 = vpop.f32.mrf.mxu0
      %v984 = vadd.f32 %v895, %v983
      %v985 = vpop.f32.mrf.mxu0
      %v986 = vadd.f32 %v897, %v985
      %987 = vmatmul.bf16.gmra.mxu0 %v624
      %v988 = vpop.f32.mrf.mxu0
      %v989 = vadd.f32 %v900, %v988
      %v990 = vpop.f32.mrf.mxu0
      %v991 = vadd.f32 %v902, %v990
      %992 = vmatmul.bf16.gmra.mxu0 %v628
      %v993 = vpop.f32.mrf.mxu0
      %v994 = vadd.f32 %v905, %v993
      %v995 = vpop.f32.mrf.mxu0
      %v996 = vadd.f32 %v907, %v995
      %997 = vmatmul.bf16.gmra.mxu0 %v632
      %v998 = vpop.f32.mrf.mxu0
      %v999 = vadd.f32 %v910, %v998
      %v1000 = vpop.f32.mrf.mxu0
      %v1001 = vadd.f32 %v912, %v1000
      %1002 = vmatmul.bf16.gmra.mxu0 %v636
      %v1003 = vpop.f32.mrf.mxu0
      %v1004 = vadd.f32 %v915, %v1003
      %v1005 = vpop.f32.mrf.mxu0
      %v1006 = vadd.f32 %v917, %v1005
      %1007 = vmatmul.bf16.gmra.mxu0 %v640
      %v1008 = vpop.f32.mrf.mxu0
      %v1009 = vadd.f32 %v920, %v1008
      %v1010 = vpop.f32.mrf.mxu0
      %v1011 = vadd.f32 %v922, %v1010
      %1012 = vdwg.mxu0
      %1013 = vmatpush.bf16.msra.mxu0 %v794
      %1014 = vmatpush.bf16.msra.mxu0 %v793
      %1015 = vmatpush.bf16.msra.mxu0 %v792
      %1016 = vmatpush.bf16.msra.mxu0 %v791
      %1017 = vmatpush.bf16.msra.mxu0 %v790
      %1018 = vmatpush.bf16.msra.mxu0 %v789
      %1019 = vmatpush.bf16.msra.mxu0 %v788
      %1020 = vmatpush.bf16.msra.mxu0 %v787
      %1021 = vmatmul.bf16.gmra.mxu0 %v581
      %v1022 = vpop.f32.mrf.mxu0
      %v1023 = vadd.f32 %v934, %v1022
      %v1024 = vpop.f32.mrf.mxu0
      %v1025 = vadd.f32 %v936, %v1024
      %1026 = vmatmul.bf16.gmra.mxu0 %v585
      %v1027 = vpop.f32.mrf.mxu0
      %v1028 = vadd.f32 %v939, %v1027
      %v1029 = vpop.f32.mrf.mxu0
      %v1030 = vadd.f32 %v941, %v1029
      %1031 = vmatmul.bf16.gmra.mxu0 %v589
      %v1032 = vpop.f32.mrf.mxu0
      %v1033 = vadd.f32 %v944, %v1032
      %v1034 = vpop.f32.mrf.mxu0
      %v1035 = vadd.f32 %v946, %v1034
      %1036 = vmatmul.bf16.gmra.mxu0 %v593
      %v1037 = vpop.f32.mrf.mxu0
      %v1038 = vadd.f32 %v949, %v1037
      %v1039 = vpop.f32.mrf.mxu0
      %v1040 = vadd.f32 %v951, %v1039
      %1041 = vmatmul.bf16.gmra.mxu0 %v597
      %v1042 = vpop.f32.mrf.mxu0
      %v1043 = vadd.f32 %v954, %v1042
      %v1044 = vpop.f32.mrf.mxu0
      %v1045 = vadd.f32 %v956, %v1044
      %1046 = vmatmul.bf16.gmra.mxu0 %v601
      %v1047 = vpop.f32.mrf.mxu0
      %v1048 = vadd.f32 %v959, %v1047
      %v1049 = vpop.f32.mrf.mxu0
      %v1050 = vadd.f32 %v961, %v1049
      %1051 = vmatmul.bf16.gmra.mxu0 %v605
      %v1052 = vpop.f32.mrf.mxu0
      %v1053 = vadd.f32 %v964, %v1052
      %v1054 = vpop.f32.mrf.mxu0
      %v1055 = vadd.f32 %v966, %v1054
      %1056 = vmatmul.bf16.gmra.mxu0 %v609
      %v1057 = vpop.f32.mrf.mxu0
      %v1058 = vadd.f32 %v969, %v1057
      %v1059 = vpop.f32.mrf.mxu0
      %v1060 = vadd.f32 %v971, %v1059
      %1061 = vmatmul.bf16.gmra.mxu0 %v613
      %v1062 = vpop.f32.mrf.mxu0
      %v1063 = vadd.f32 %v974, %v1062
      %v1064 = vpop.f32.mrf.mxu0
      %v1065 = vadd.f32 %v976, %v1064
      %1066 = vmatmul.bf16.gmra.mxu0 %v617
      %v1067 = vpop.f32.mrf.mxu0
      %v1068 = vadd.f32 %v979, %v1067
      %v1069 = vpop.f32.mrf.mxu0
      %v1070 = vadd.f32 %v981, %v1069
      %1071 = vmatmul.bf16.gmra.mxu0 %v621
      %v1072 = vpop.f32.mrf.mxu0
      %v1073 = vadd.f32 %v984, %v1072
      %v1074 = vpop.f32.mrf.mxu0
      %v1075 = vadd.f32 %v986, %v1074
      %1076 = vmatmul.bf16.gmra.mxu0 %v625
      %v1077 = vpop.f32.mrf.mxu0
      %v1078 = vadd.f32 %v989, %v1077
      %v1079 = vpop.f32.mrf.mxu0
      %v1080 = vadd.f32 %v991, %v1079
      %1081 = vmatmul.bf16.gmra.mxu0 %v629
      %v1082 = vpop.f32.mrf.mxu0
      %v1083 = vadd.f32 %v994, %v1082
      %v1084 = vpop.f32.mrf.mxu0
      %v1085 = vadd.f32 %v996, %v1084
      %1086 = vmatmul.bf16.gmra.mxu0 %v633
      %v1087 = vpop.f32.mrf.mxu0
      %v1088 = vadd.f32 %v999, %v1087
      %v1089 = vpop.f32.mrf.mxu0
      %v1090 = vadd.f32 %v1001, %v1089
      %1091 = vmatmul.bf16.gmra.mxu0 %v637
      %v1092 = vpop.f32.mrf.mxu0
      %v1093 = vadd.f32 %v1004, %v1092
      %v1094 = vpop.f32.mrf.mxu0
      %v1095 = vadd.f32 %v1006, %v1094
      %1096 = vmatmul.bf16.gmra.mxu0 %v641
      %v1097 = vpop.f32.mrf.mxu0
      %v1098 = vadd.f32 %v1009, %v1097
      %v1099 = vpop.f32.mrf.mxu0
      %v1100 = vadd.f32 %v1011, %v1099
      %1101 = vdwg.mxu0
      %1102 = vmatpush.bf16.msra.mxu0 %v802
      %1103 = vmatpush.bf16.msra.mxu0 %v801
      %1104 = vmatpush.bf16.msra.mxu0 %v800
      %1105 = vmatpush.bf16.msra.mxu0 %v799
      %1106 = vmatpush.bf16.msra.mxu0 %v798
      %1107 = vmatpush.bf16.msra.mxu0 %v797
      %1108 = vmatpush.bf16.msra.mxu0 %v796
      %1109 = vmatpush.bf16.msra.mxu0 %v795
      %1110 = vmatmul.bf16.gmra.mxu0 %v582
      %v1111 = vpop.f32.mrf.mxu0
      %v1112 = vadd.f32 %v1023, %v1111
      %v1113 = vpop.f32.mrf.mxu0
      %v1114 = vadd.f32 %v1025, %v1113
      %1115 = vmatmul.bf16.gmra.mxu0 %v586
      %v1116 = vpop.f32.mrf.mxu0
      %v1117 = vadd.f32 %v1028, %v1116
      %v1118 = vpop.f32.mrf.mxu0
      %v1119 = vadd.f32 %v1030, %v1118
      %1120 = vmatmul.bf16.gmra.mxu0 %v590
      %v1121 = vpop.f32.mrf.mxu0
      %v1122 = vadd.f32 %v1033, %v1121
      %v1123 = vpop.f32.mrf.mxu0
      %v1124 = vadd.f32 %v1035, %v1123
      %1125 = vmatmul.bf16.gmra.mxu0 %v594
      %v1126 = vpop.f32.mrf.mxu0
      %v1127 = vadd.f32 %v1038, %v1126
      %v1128 = vpop.f32.mrf.mxu0
      %v1129 = vadd.f32 %v1040, %v1128
      %1130 = vmatmul.bf16.gmra.mxu0 %v598
      %v1131 = vpop.f32.mrf.mxu0
      %v1132 = vadd.f32 %v1043, %v1131
      %v1133 = vpop.f32.mrf.mxu0
      %v1134 = vadd.f32 %v1045, %v1133
      %1135 = vmatmul.bf16.gmra.mxu0 %v602
      %v1136 = vpop.f32.mrf.mxu0
      %v1137 = vadd.f32 %v1048, %v1136
      %v1138 = vpop.f32.mrf.mxu0
      %v1139 = vadd.f32 %v1050, %v1138
      %1140 = vmatmul.bf16.gmra.mxu0 %v606
      %v1141 = vpop.f32.mrf.mxu0
      %v1142 = vadd.f32 %v1053, %v1141
      %v1143 = vpop.f32.mrf.mxu0
      %v1144 = vadd.f32 %v1055, %v1143
      %1145 = vmatmul.bf16.gmra.mxu0 %v610
      %v1146 = vpop.f32.mrf.mxu0
      %v1147 = vadd.f32 %v1058, %v1146
      %v1148 = vpop.f32.mrf.mxu0
      %v1149 = vadd.f32 %v1060, %v1148
      %1150 = vmatmul.bf16.gmra.mxu0 %v614
      %v1151 = vpop.f32.mrf.mxu0
      %v1152 = vadd.f32 %v1063, %v1151
      %v1153 = vpop.f32.mrf.mxu0
      %v1154 = vadd.f32 %v1065, %v1153
      %1155 = vmatmul.bf16.gmra.mxu0 %v618
      %v1156 = vpop.f32.mrf.mxu0
      %v1157 = vadd.f32 %v1068, %v1156
      %v1158 = vpop.f32.mrf.mxu0
      %v1159 = vadd.f32 %v1070, %v1158
      %1160 = vmatmul.bf16.gmra.mxu0 %v622
      %v1161 = vpop.f32.mrf.mxu0
      %v1162 = vadd.f32 %v1073, %v1161
      %v1163 = vpop.f32.mrf.mxu0
      %v1164 = vadd.f32 %v1075, %v1163
      %1165 = vmatmul.bf16.gmra.mxu0 %v626
      %v1166 = vpop.f32.mrf.mxu0
      %v1167 = vadd.f32 %v1078, %v1166
      %v1168 = vpop.f32.mrf.mxu0
      %v1169 = vadd.f32 %v1080, %v1168
      %1170 = vmatmul.bf16.gmra.mxu0 %v630
      %v1171 = vpop.f32.mrf.mxu0
      %v1172 = vadd.f32 %v1083, %v1171
      %v1173 = vpop.f32.mrf.mxu0
      %v1174 = vadd.f32 %v1085, %v1173
      %1175 = vmatmul.bf16.gmra.mxu0 %v634
      %v1176 = vpop.f32.mrf.mxu0
      %v1177 = vadd.f32 %v1088, %v1176
      %v1178 = vpop.f32.mrf.mxu0
      %v1179 = vadd.f32 %v1090, %v1178
      %1180 = vmatmul.bf16.gmra.mxu0 %v638
      %v1181 = vpop.f32.mrf.mxu0
      %v1182 = vadd.f32 %v1093, %v1181
      %v1183 = vpop.f32.mrf.mxu0
      %v1184 = vadd.f32 %v1095, %v1183
      %1185 = vmatmul.bf16.gmra.mxu0 %v642
      %v1186 = vpop.f32.mrf.mxu0
      %v1187 = vadd.f32 %v1098, %v1186
      %v1188 = vpop.f32.mrf.mxu0
      %v1189 = vadd.f32 %v1100, %v1188
      %1190 = vdwg.mxu0
      %v1191 = vld [vmem:[%s219] sm:$0xff]
      %v1192 = vld [vmem:[%s219 + $0x8] sm:$0xff]
      %v1193 = vld [vmem:[%s219 + $0x10] sm:$0xff]
      %v1194 = vld [vmem:[%s219 + $0x18] sm:$0xff]
      %v1195 = vld [vmem:[%s219 + $0x20] sm:$0xff]
      %v1196 = vld [vmem:[%s219 + $0x28] sm:$0xff]
      %v1197 = vld [vmem:[%s219 + $0x30] sm:$0xff]
      %v1198 = vld [vmem:[%s219 + $0x38] sm:$0xff]
      %v1199 = vld [vmem:[%s219 + $0x40] sm:$0xff]
      %v1200 = vld [vmem:[%s219 + $0x48] sm:$0xff]
      %v1201 = vld [vmem:[%s219 + $0x50] sm:$0xff]
      %v1202 = vld [vmem:[%s219 + $0x58] sm:$0xff]
      %v1203 = vld [vmem:[%s219 + $0x60] sm:$0xff]
      %v1204 = vld [vmem:[%s219 + $0x68] sm:$0xff]
      %v1205 = vld [vmem:[%s219 + $0x70] sm:$0xff]
      %v1206 = vld [vmem:[%s219 + $0x78] sm:$0xff]
      %v1207 = vld [vmem:[%s219 + $0x80] sm:$0xff]
      %v1208 = vld [vmem:[%s219 + $0x88] sm:$0xff]
      %v1209 = vld [vmem:[%s219 + $0x90] sm:$0xff]
      %v1210 = vld [vmem:[%s219 + $0x98] sm:$0xff]
      %v1211 = vld [vmem:[%s219 + $0xa0] sm:$0xff]
      %v1212 = vld [vmem:[%s219 + $0xa8] sm:$0xff]
      %v1213 = vld [vmem:[%s219 + $0xb0] sm:$0xff]
      %v1214 = vld [vmem:[%s219 + $0xb8] sm:$0xff]
      %v1215 = vld [vmem:[%s219 + $0xc0] sm:$0xff]
      %v1216 = vld [vmem:[%s219 + $0xc8] sm:$0xff]
      %v1217 = vld [vmem:[%s219 + $0xd0] sm:$0xff]
      %v1218 = vld [vmem:[%s219 + $0xd8] sm:$0xff]
      %v1219 = vld [vmem:[%s219 + $0xe0] sm:$0xff]
      %v1220 = vld [vmem:[%s219 + $0xe8] sm:$0xff]
      %v1221 = vld [vmem:[%s219 + $0xf0] sm:$0xff]
      %v1222 = vld [vmem:[%s219 + $0xf8] sm:$0xff]
      %1224 = vset.pattern.permute.xlu0 0
      %1225 = vperm.xlu0 %1224, %v1191
      %v1226 = vpop.permute.xlu0 %1225
      %1229 = vset.pattern.permute.xlu0 0
      %1230 = vperm.xlu0 %1229, %v1192
      %v1231 = vpop.permute.xlu0 %1230
      %1234 = vset.pattern.permute.xlu0 0
      %1235 = vperm.xlu0 %1234, %v1193
      %v1236 = vpop.permute.xlu0 %1235
      %1239 = vset.pattern.permute.xlu0 0
      %1240 = vperm.xlu0 %1239, %v1194
      %v1241 = vpop.permute.xlu0 %1240
      %1244 = vset.pattern.permute.xlu0 0
      %1245 = vperm.xlu0 %1244, %v1195
      %v1246 = vpop.permute.xlu0 %1245
      %1249 = vset.pattern.permute.xlu0 0
      %1250 = vperm.xlu0 %1249, %v1196
      %v1251 = vpop.permute.xlu0 %1250
      %1254 = vset.pattern.permute.xlu0 0
      %1255 = vperm.xlu0 %1254, %v1197
      %v1256 = vpop.permute.xlu0 %1255
      %1259 = vset.pattern.permute.xlu0 0
      %1260 = vperm.xlu0 %1259, %v1198
      %v1261 = vpop.permute.xlu0 %1260
      %1264 = vset.pattern.permute.xlu0 0
      %1265 = vperm.xlu0 %1264, %v1199
      %v1266 = vpop.permute.xlu0 %1265
      %1269 = vset.pattern.permute.xlu0 0
      %1270 = vperm.xlu0 %1269, %v1200
      %v1271 = vpop.permute.xlu0 %1270
      %1274 = vset.pattern.permute.xlu0 0
      %1275 = vperm.xlu0 %1274, %v1201
      %v1276 = vpop.permute.xlu0 %1275
      %1279 = vset.pattern.permute.xlu0 0
      %1280 = vperm.xlu0 %1279, %v1202
      %v1281 = vpop.permute.xlu0 %1280
      %1284 = vset.pattern.permute.xlu0 0
      %1285 = vperm.xlu0 %1284, %v1203
      %v1286 = vpop.permute.xlu0 %1285
      %1289 = vset.pattern.permute.xlu0 0
      %1290 = vperm.xlu0 %1289, %v1204
      %v1291 = vpop.permute.xlu0 %1290
      %1294 = vset.pattern.permute.xlu0 0
      %1295 = vperm.xlu0 %1294, %v1205
      %v1296 = vpop.permute.xlu0 %1295
      %1299 = vset.pattern.permute.xlu0 0
      %1300 = vperm.xlu0 %1299, %v1206
      %v1301 = vpop.permute.xlu0 %1300
      %1304 = vset.pattern.permute.xlu0 0
      %1305 = vperm.xlu0 %1304, %v1207
      %v1306 = vpop.permute.xlu0 %1305
      %1309 = vset.pattern.permute.xlu0 0
      %1310 = vperm.xlu0 %1309, %v1208
      %v1311 = vpop.permute.xlu0 %1310
      %1314 = vset.pattern.permute.xlu0 0
      %1315 = vperm.xlu0 %1314, %v1209
      %v1316 = vpop.permute.xlu0 %1315
      %1319 = vset.pattern.permute.xlu0 0
      %1320 = vperm.xlu0 %1319, %v1210
      %v1321 = vpop.permute.xlu0 %1320
      %1324 = vset.pattern.permute.xlu0 0
      %1325 = vperm.xlu0 %1324, %v1211
      %v1326 = vpop.permute.xlu0 %1325
      %1329 = vset.pattern.permute.xlu0 0
      %1330 = vperm.xlu0 %1329, %v1212
      %v1331 = vpop.permute.xlu0 %1330
      %1334 = vset.pattern.permute.xlu0 0
      %1335 = vperm.xlu0 %1334, %v1213
      %v1336 = vpop.permute.xlu0 %1335
      %1339 = vset.pattern.permute.xlu0 0
      %1340 = vperm.xlu0 %1339, %v1214
      %v1341 = vpop.permute.xlu0 %1340
      %1344 = vset.pattern.permute.xlu0 0
      %1345 = vperm.xlu0 %1344, %v1215
      %v1346 = vpop.permute.xlu0 %1345
      %1349 = vset.pattern.permute.xlu0 0
      %1350 = vperm.xlu0 %1349, %v1216
      %v1351 = vpop.permute.xlu0 %1350
      %1354 = vset.pattern.permute.xlu0 0
      %1355 = vperm.xlu0 %1354, %v1217
      %v1356 = vpop.permute.xlu0 %1355
      %1359 = vset.pattern.permute.xlu0 0
      %1360 = vperm.xlu0 %1359, %v1218
      %v1361 = vpop.permute.xlu0 %1360
      %1364 = vset.pattern.permute.xlu0 0
      %1365 = vperm.xlu0 %1364, %v1219
      %v1366 = vpop.permute.xlu0 %1365
      %1369 = vset.pattern.permute.xlu0 0
      %1370 = vperm.xlu0 %1369, %v1220
      %v1371 = vpop.permute.xlu0 %1370
      %1374 = vset.pattern.permute.xlu0 0
      %1375 = vperm.xlu0 %1374, %v1221
      %v1376 = vpop.permute.xlu0 %1375
      %1379 = vset.pattern.permute.xlu0 0
      %1380 = vperm.xlu0 %1379, %v1222
      %v1381 = vpop.permute.xlu0 %1380
      %v1383 = vmul.f32 %v1226, %v1112
      %v1384 = vmul.f32 %v1231, %v1114
      %v1385 = vmul.f32 %v1236, %v1117
      %v1386 = vmul.f32 %v1241, %v1119
      %v1387 = vmul.f32 %v1246, %v1122
      %v1388 = vmul.f32 %v1251, %v1124
      %v1389 = vmul.f32 %v1256, %v1127
      %v1390 = vmul.f32 %v1261, %v1129
      %v1391 = vmul.f32 %v1266, %v1132
      %v1392 = vmul.f32 %v1271, %v1134
      %v1393 = vmul.f32 %v1276, %v1137
      %v1394 = vmul.f32 %v1281, %v1139
      %v1395 = vmul.f32 %v1286, %v1142
      %v1396 = vmul.f32 %v1291, %v1144
      %v1397 = vmul.f32 %v1296, %v1147
      %v1398 = vmul.f32 %v1301, %v1149
      %v1399 = vmul.f32 %v1306, %v1152
      %v1400 = vmul.f32 %v1311, %v1154
      %v1401 = vmul.f32 %v1316, %v1157
      %v1402 = vmul.f32 %v1321, %v1159
      %v1403 = vmul.f32 %v1326, %v1162
      %v1404 = vmul.f32 %v1331, %v1164
      %v1405 = vmul.f32 %v1336, %v1167
      %v1406 = vmul.f32 %v1341, %v1169
      %v1407 = vmul.f32 %v1346, %v1172
      %v1408 = vmul.f32 %v1351, %v1174
      %v1409 = vmul.f32 %v1356, %v1177
      %v1410 = vmul.f32 %v1361, %v1179
      %v1411 = vmul.f32 %v1366, %v1182
      %v1412 = vmul.f32 %v1371, %v1184
      %v1413 = vmul.f32 %v1376, %v1187
      %v1414 = vmul.f32 %v1381, %v1189
      %v1415 = vpack.c.bf16 %v1383, %v1383
      %v1416 = vpack.c.bf16 %v1384, %v1384
      %v1417 = vpack.c.bf16 %v1385, %v1385
      %v1418 = vpack.c.bf16 %v1386, %v1386
      %v1419 = vpack.c.bf16 %v1387, %v1387
      %v1420 = vpack.c.bf16 %v1388, %v1388
      %v1421 = vpack.c.bf16 %v1389, %v1389
      %v1422 = vpack.c.bf16 %v1390, %v1390
      %v1423 = vpack.c.bf16 %v1391, %v1391
      %v1424 = vpack.c.bf16 %v1392, %v1392
      %v1425 = vpack.c.bf16 %v1393, %v1393
      %v1426 = vpack.c.bf16 %v1394, %v1394
      %v1427 = vpack.c.bf16 %v1395, %v1395
      %v1428 = vpack.c.bf16 %v1396, %v1396
      %v1429 = vpack.c.bf16 %v1397, %v1397
      %v1430 = vpack.c.bf16 %v1398, %v1398
      %v1431 = vpack.c.bf16 %v1399, %v1399
      %v1432 = vpack.c.bf16 %v1400, %v1400
      %v1433 = vpack.c.bf16 %v1401, %v1401
      %v1434 = vpack.c.bf16 %v1402, %v1402
      %v1435 = vpack.c.bf16 %v1403, %v1403
      %v1436 = vpack.c.bf16 %v1404, %v1404
      %v1437 = vpack.c.bf16 %v1405, %v1405
      %v1438 = vpack.c.bf16 %v1406, %v1406
      %v1439 = vpack.c.bf16 %v1407, %v1407
      %v1440 = vpack.c.bf16 %v1408, %v1408
      %v1441 = vpack.c.bf16 %v1409, %v1409
      %v1442 = vpack.c.bf16 %v1410, %v1410
      %v1443 = vpack.c.bf16 %v1411, %v1411
      %v1444 = vpack.c.bf16 %v1412, %v1412
      %v1445 = vpack.c.bf16 %v1413, %v1413
      %v1446 = vpack.c.bf16 %v1414, %v1414
      %1447 = vst [vmem:[%s225] sm:$0xf] %v1415
      %1448 = vst [vmem:[%s225 + $0x4] sm:$0xf] %v1416
      %1449 = vst [vmem:[%s225 + $0x8] sm:$0xf] %v1417
      %1450 = vst [vmem:[%s225 + $0xc] sm:$0xf] %v1418
      %1451 = vst [vmem:[%s225 + $0x10] sm:$0xf] %v1419
      %1452 = vst [vmem:[%s225 + $0x14] sm:$0xf] %v1420
      %1453 = vst [vmem:[%s225 + $0x18] sm:$0xf] %v1421
      %1454 = vst [vmem:[%s225 + $0x1c] sm:$0xf] %v1422
      %1455 = vst [vmem:[%s225 + $0x20] sm:$0xf] %v1423
      %1456 = vst [vmem:[%s225 + $0x24] sm:$0xf] %v1424
      %1457 = vst [vmem:[%s225 + $0x28] sm:$0xf] %v1425
      %1458 = vst [vmem:[%s225 + $0x2c] sm:$0xf] %v1426
      %1459 = vst [vmem:[%s225 + $0x30] sm:$0xf] %v1427
      %1460 = vst [vmem:[%s225 + $0x34] sm:$0xf] %v1428
      %1461 = vst [vmem:[%s225 + $0x38] sm:$0xf] %v1429
      %1462 = vst [vmem:[%s225 + $0x3c] sm:$0xf] %v1430
      %1463 = vst [vmem:[%s225 + $0x40] sm:$0xf] %v1431
      %1464 = vst [vmem:[%s225 + $0x44] sm:$0xf] %v1432
      %1465 = vst [vmem:[%s225 + $0x48] sm:$0xf] %v1433
      %1466 = vst [vmem:[%s225 + $0x4c] sm:$0xf] %v1434
      %1467 = vst [vmem:[%s225 + $0x50] sm:$0xf] %v1435
      %1468 = vst [vmem:[%s225 + $0x54] sm:$0xf] %v1436
      %1469 = vst [vmem:[%s225 + $0x58] sm:$0xf] %v1437
      %1470 = vst [vmem:[%s225 + $0x5c] sm:$0xf] %v1438
      %1471 = vst [vmem:[%s225 + $0x60] sm:$0xf] %v1439
      %1472 = vst [vmem:[%s225 + $0x64] sm:$0xf] %v1440
      %1473 = vst [vmem:[%s225 + $0x68] sm:$0xf] %v1441
      %1474 = vst [vmem:[%s225 + $0x6c] sm:$0xf] %v1442
      %1475 = vst [vmem:[%s225 + $0x70] sm:$0xf] %v1443
      %1476 = vst [vmem:[%s225 + $0x74] sm:$0xf] %v1444
      %1477 = vst [vmem:[%s225 + $0x78] sm:$0xf] %v1445
      %1478 = vst [vmem:[%s225 + $0x7c] sm:$0xf] %v1446
      %s1479 = smul.u32 32, %s18
      %p1480 = scmp.lt.s32.totalorder %s1479, 63
      %s1481 = scalar_select %p1480, %s1479, 63
      %s1482 = smul.addr %s1481, 4
      %s1483 = scalar_lea.vmem %s3, %s1482
      // Predicated region
      $region33: #{hyper_resid_gcn_forward.7} parent=31 // pred_check
        %p1484 = pneg %p119
      $region34: #{hyper_resid_gcn_forward.7} parent=31 // pred_check_branch
        %1486 = sbr.rel (%p1484) target = $region36
      $region35: #{hyper_resid_gcn_forward.7} parent=31 // pred_region
        %s1487 = smul.u32 32, %s18
      $region36: #{hyper_resid_gcn_forward.7} parent=31 // pred_fallthru
        _
    $region32: #{hyper_resid_gcn_forward.7} parent=5 // pred_fallthru
      _
    %p1488 = scmp.le.s32.totalorder 2, %s9
    // Predicated region
    $region37: #{hyper_resid_gcn_forward.7} parent=5 // pred_check
      %p1489 = pneg %p1488
    $region38: #{hyper_resid_gcn_forward.7} parent=5 // pred_check_branch
      %1491 = sbr.rel (%p1489) target = $region40
    $region39: #{hyper_resid_gcn_forward.7} parent=5 // pred_region
      %s1492 = ssub.s32 %s9, 2
      // Predicated region
      $region41: #{hyper_resid_gcn_forward.7} parent=39 // pred_check
        %p1493 = pneg %p125
      $region42: #{hyper_resid_gcn_forward.7} parent=39 // pred_check_branch
        %1495 = sbr.rel (%p1493) target = $region44
      $region43: #{hyper_resid_gcn_forward.7} parent=39 // pred_region
        %s1496 = smul.u32 32, %s20
        %p1497 = scmp.lt.s32.totalorder %s1496, 63
        %s1498 = scalar_select %p1497, %s1496, 63
        %s1499 = smul.addr %s1498, 4
        %s1500 = scalar_lea.vmem %s3, %s1499
      $region44: #{hyper_resid_gcn_forward.7} parent=39 // pred_fallthru
        _
    $region40: #{hyper_resid_gcn_forward.7} parent=5 // pred_fallthru
      _
  $region6: #{hyper_resid_gcn_forward.7} parent=0 // loop_footer
    %s13 = sadd.s32 1, %s9
  $region7: #{hyper_resid_gcn_forward.7} parent=0 // loop_footer_branch
    %8 = sbr.rel target = $region3
  $region8: #{hyper_resid_gcn_forward.7} parent=0 // loop_exit
    _

// kernel: hyper_resid_gcn_forward.10
$region0: #{hyper_resid_gcn_forward.10}
  #allocation0 [shape = 'u32[]', space=smem, size = 0x4, offset = 0x4, fixed_abs, tag = 'smem constant byte address 0x4 - core index']
  #allocation1 [shape = 'u32[72,128]{1,0:T(1,128)}', space=vmem, size = 0x9000, scoped, tag = 'internal scratch']
  %s0 = inlined_call_operand.vmem [shape: s8[512,512], index: 0, kind: input, shape index: {}]
  %s1 = inlined_call_operand.vmem [shape: bf16[512,128], index: 1, kind: input, shape index: {}]
  %s2 = inlined_call_operand.vmem [shape: f32[512,1], index: 2, kind: input, shape index: {}]
  %s3 = inlined_call_operand.vmem [shape: f32[512,128], index: 3, kind: input, shape index: {}]
  %s4 = inlined_call_operand.vmem [shape: bf16[128,128], index: 4, kind: input, shape index: {}]
  %s5 = inlined_call_operand.vmem [shape: f32[1,128], index: 5, kind: input, shape index: {}]
  %s6 = inlined_call_operand.vmem [shape: bf16[512,128], index: 6, kind: output, shape index: {}]
  %s7 = sld [smem:[#allocation0]]
  $region57: #{hyper_resid_gcn_forward.10} parent=0
    _
  %s9 = ssub.s32 1, %s7
  %s10 = scalar_select 0, %s9, %s7
  loop: start=0, step=1, limit=4
  $region2: #{hyper_resid_gcn_forward.10} parent=0 // loop_pre_header
    _
  $region3: #{hyper_resid_gcn_forward.10} parent=0 // loop_header
    %s12 = sphi 0, %s16
    %p13 = scmp.ge.s32.totalorder %s12, 4
    %s19 = sphi 0, %s31
    %s20 = sphi 0, %s27
    %s21 = sphi 0, %s19
    %s22 = sphi 0, %s20
    %s23 = sphi 0, %s21
    %s24 = sphi 0, %s22
    %s36 = sphi 0, %s38
    %s39 = sphi 0, %s36
    %s40 = sphi 0, %s39
    %s56 = sphi 0, %s40
    %s60 = sphi 0, %s60
    %s62 = sphi 0, %s60
    %s63 = sphi 0, %s62
    %s77 = sphi 0, %s63
    %s83 = sphi 0, %s85
    %s86 = sphi 0, %s83
    %s87 = sphi 0, %s86
    %s103 = sphi 0, %s87
    %s109 = sphi 0, %s111
    %s112 = sphi 0, %s109
    %s113 = sphi 0, %s112
    %s129 = sphi 0, %s113
    %s133 = sphi 0, %s133
    %s135 = sphi 0, %s133
    %s136 = sphi 0, %s135
    %s150 = sphi 0, %s136
    %s154 = sphi 0, %s154
    %s156 = sphi 0, %s154
    %s157 = sphi 0, %s156
    %s171 = sphi 0, %s157
    %s177 = sphi 0, %s179
    %s180 = sphi 0, %s177
    %s181 = sphi 0, %s180
    %s197 = sphi 0, %s181
  $region4: #{hyper_resid_gcn_forward.10} parent=0 // loop_header_branch
    %15 = sbr.rel (%p13) target = $region8
  $region5: #{hyper_resid_gcn_forward.10} parent=0 // loop_body
    %s17 = ssub.s32 %s12, 1
    %s18 = ssub.s32 %s12, 2
    %s25 = sadd.s32 1, %s20
    %p26 = scmp.ge.s32.totalorder %s25, 1
    %s27 = scalar_select %p26, 0, %s25
    %s28 = sadd.s32 1, %s19
    %s29 = scalar_select %p26, %s28, %s19
    %p30 = scmp.ge.s32.totalorder %s29, 2
    %s31 = scalar_select %p30, 0, %s29
    %s32 = ssub.s32 %s19, %s31
    %s33 = ssub.s32 %s20, %s27
    %s34 = sor.u32 %s32, %s33
    %p35 = scmp.eq.s32.totalorder %s34, 0
    %s37 = sadd.s32 %s36, 1
    %s38 = scalar_select %p35, %s36, %s37
    %p41 = pneg %p35
    %p42 = scmp.eq.s32.totalorder %s12, 1
    %p43 = por %p41, %p42
    %p44 = scmp.ne.s32.totalorder %s36, %s39
    %p45 = scmp.eq.s32.totalorder %s12, 0
    %p46 = por %p44, %p45
    %p47 = scmp.ne.s32.totalorder %s36, %s39
    %p48 = scmp.eq.s32.totalorder %s17, 1
    %p49 = por %p47, %p48
    %p50 = scmp.ne.s32.totalorder %s39, %s40
    %p51 = scmp.eq.s32.totalorder %s17, 0
    %p52 = por %p50, %p51
    %p53 = scmp.ne.s32.totalorder %s39, %s40
    %p54 = scmp.eq.s32.totalorder %s18, 1
    %p55 = por %p53, %p54
    %p57 = scmp.ne.s32.totalorder %s40, %s56
    %p58 = scmp.eq.s32.totalorder %s18, 0
    %p59 = por %p57, %p58
    %s61 = sadd.s32 %s60, 1
    %p64 = scmp.eq.s32.totalorder %s12, 1
    %p65 = scmp.ne.s32.totalorder %s60, %s62
    %p66 = scmp.eq.s32.totalorder %s12, 0
    %p67 = por %p65, %p66
    %p68 = scmp.ne.s32.totalorder %s60, %s62
    %p69 = scmp.eq.s32.totalorder %s17, 1
    %p70 = por %p68, %p69
    %p71 = scmp.ne.s32.totalorder %s62, %s63
    %p72 = scmp.eq.s32.totalorder %s17, 0
    %p73 = por %p71, %p72
    %p74 = scmp.ne.s32.totalorder %s62, %s63
    %p75 = scmp.eq.s32.totalorder %s18, 1
    %p76 = por %p74, %p75
    %p78 = scmp.ne.s32.totalorder %s63, %s77
    %p79 = scmp.eq.s32.totalorder %s18, 0
    %p80 = por %p78, %p79
    %s81 = ssub.s32 %s19, %s31
    %p82 = scmp.eq.s32.totalorder %s81, 0
    %s84 = sadd.s32 %s83, 1
    %s85 = scalar_select %p82, %s83, %s84
    %p88 = pneg %p82
    %p89 = scmp.eq.s32.totalorder %s12, 1
    %p90 = por %p88, %p89
    %p91 = scmp.ne.s32.totalorder %s83, %s86
    %p92 = scmp.eq.s32.totalorder %s12, 0
    %p93 = por %p91, %p92
    %p94 = scmp.ne.s32.totalorder %s83, %s86
    %p95 = scmp.eq.s32.totalorder %s17, 1
    %p96 = por %p94, %p95
    %p97 = scmp.ne.s32.totalorder %s86, %s87
    %p98 = scmp.eq.s32.totalorder %s17, 0
    %p99 = por %p97, %p98
    %p100 = scmp.ne.s32.totalorder %s86, %s87
    %p101 = scmp.eq.s32.totalorder %s18, 1
    %p102 = por %p100, %p101
    %p104 = scmp.ne.s32.totalorder %s87, %s103
    %p105 = scmp.eq.s32.totalorder %s18, 0
    %p106 = por %p104, %p105
    %s107 = ssub.s32 %s19, %s31
    %p108 = scmp.eq.s32.totalorder %s107, 0
    %s110 = sadd.s32 %s109, 1
    %s111 = scalar_select %p108, %s109, %s110
    %p114 = pneg %p108
    %p115 = scmp.eq.s32.totalorder %s12, 1
    %p116 = por %p114, %p115
    %p117 = scmp.ne.s32.totalorder %s109, %s112
    %p118 = scmp.eq.s32.totalorder %s12, 0
    %p119 = por %p117, %p118
    %p120 = scmp.ne.s32.totalorder %s109, %s112
    %p121 = scmp.eq.s32.totalorder %s17, 1
    %p122 = por %p120, %p121
    %p123 = scmp.ne.s32.totalorder %s112, %s113
    %p124 = scmp.eq.s32.totalorder %s17, 0
    %p125 = por %p123, %p124
    %p126 = scmp.ne.s32.totalorder %s112, %s113
    %p127 = scmp.eq.s32.totalorder %s18, 1
    %p128 = por %p126, %p127
    %p130 = scmp.ne.s32.totalorder %s113, %s129
    %p131 = scmp.eq.s32.totalorder %s18, 0
    %p132 = por %p130, %p131
    %s134 = sadd.s32 %s133, 1
    %p137 = scmp.eq.s32.totalorder %s12, 1
    %p138 = scmp.ne.s32.totalorder %s133, %s135
    %p139 = scmp.eq.s32.totalorder %s12, 0
    %p140 = por %p138, %p139
    %p141 = scmp.ne.s32.totalorder %s133, %s135
    %p142 = scmp.eq.s32.totalorder %s17, 1
    %p143 = por %p141, %p142
    %p144 = scmp.ne.s32.totalorder %s135, %s136
    %p145 = scmp.eq.s32.totalorder %s17, 0
    %p146 = por %p144, %p145
    %p147 = scmp.ne.s32.totalorder %s135, %s136
    %p148 = scmp.eq.s32.totalorder %s18, 1
    %p149 = por %p147, %p148
    %p151 = scmp.ne.s32.totalorder %s136, %s150
    %p152 = scmp.eq.s32.totalorder %s18, 0
    %p153 = por %p151, %p152
    %s155 = sadd.s32 %s154, 1
    %p158 = scmp.eq.s32.totalorder %s12, 1
    %p159 = scmp.ne.s32.totalorder %s154, %s156
    %p160 = scmp.eq.s32.totalorder %s12, 0
    %p161 = por %p159, %p160
    %p162 = scmp.ne.s32.totalorder %s154, %s156
    %p163 = scmp.eq.s32.totalorder %s17, 1
    %p164 = por %p162, %p163
    %p165 = scmp.ne.s32.totalorder %s156, %s157
    %p166 = scmp.eq.s32.totalorder %s17, 0
    %p167 = por %p165, %p166
    %p168 = scmp.ne.s32.totalorder %s156, %s157
    %p169 = scmp.eq.s32.totalorder %s18, 1
    %p170 = por %p168, %p169
    %p172 = scmp.ne.s32.totalorder %s157, %s171
    %p173 = scmp.eq.s32.totalorder %s18, 0
    %p174 = por %p172, %p173
    %s175 = ssub.s32 %s19, %s31
    %p176 = scmp.eq.s32.totalorder %s175, 0
    %s178 = sadd.s32 %s177, 1
    %s179 = scalar_select %p176, %s177, %s178
    %p182 = pneg %p176
    %p183 = scmp.eq.s32.totalorder %s12, 1
    %p184 = por %p182, %p183
    %p185 = scmp.ne.s32.totalorder %s177, %s180
    %p186 = scmp.eq.s32.totalorder %s12, 0
    %p187 = por %p185, %p186
    %p188 = scmp.ne.s32.totalorder %s177, %s180
    %p189 = scmp.eq.s32.totalorder %s17, 1
    %p190 = por %p188, %p189
    %p191 = scmp.ne.s32.totalorder %s180, %s181
    %p192 = scmp.eq.s32.totalorder %s17, 0
    %p193 = por %p191, %p192
    %p194 = scmp.ne.s32.totalorder %s180, %s181
    %p195 = scmp.eq.s32.totalorder %s18, 1
    %p196 = por %p194, %p195
    %p198 = scmp.ne.s32.totalorder %s181, %s197
    %p199 = scmp.eq.s32.totalorder %s18, 0
    %p200 = por %p198, %p199
    %p201 = scmp.le.s32.totalorder 1, %s12
    %p202 = scmp.lt.s32.totalorder %s12, 3
    %p203 = pnand %p201, %p202
    %p204 = pneg %p203
    // Predicated region
    $region9: #{hyper_resid_gcn_forward.10} parent=5 // pred_check
      _
    $region10: #{hyper_resid_gcn_forward.10} parent=5 // pred_check_branch
      %206 = sbr.rel (%p203) target = $region12
    $region11: #{hyper_resid_gcn_forward.10} parent=5 // pred_region
      %s207 = ssub.s32 %s12, 1
      // Predicated region
      $region13: #{hyper_resid_gcn_forward.10} parent=11 // pred_check
        %p208 = pneg %p73
      $region14: #{hyper_resid_gcn_forward.10} parent=11 // pred_check_branch
        %210 = sbr.rel (%p208) target = $region16
      $region15: #{hyper_resid_gcn_forward.10} parent=11 // pred_region
        _
      $region16: #{hyper_resid_gcn_forward.10} parent=11 // pred_fallthru
        _
      // Predicated region
      $region17: #{hyper_resid_gcn_forward.10} parent=11 // pred_check
        %p211 = pneg %p146
      $region18: #{hyper_resid_gcn_forward.10} parent=11 // pred_check_branch
        %213 = sbr.rel (%p211) target = $region20
      $region19: #{hyper_resid_gcn_forward.10} parent=11 // pred_region
        _
      $region20: #{hyper_resid_gcn_forward.10} parent=11 // pred_fallthru
        _
      // Predicated region
      $region21: #{hyper_resid_gcn_forward.10} parent=11 // pred_check
        %p214 = pneg %p167
      $region22: #{hyper_resid_gcn_forward.10} parent=11 // pred_check_branch
        %216 = sbr.rel (%p214) target = $region24
      $region23: #{hyper_resid_gcn_forward.10} parent=11 // pred_region
        _
      $region24: #{hyper_resid_gcn_forward.10} parent=11 // pred_fallthru
        _
    $region12: #{hyper_resid_gcn_forward.10} parent=5 // pred_fallthru
      _
    %p217 = scmp.lt.s32.totalorder %s12, 2
    // Predicated region
    $region25: #{hyper_resid_gcn_forward.10} parent=5 // pred_check
      %p218 = pneg %p217
    $region26: #{hyper_resid_gcn_forward.10} parent=5 // pred_check_branch
      %220 = sbr.rel (%p218) target = $region28
    $region27: #{hyper_resid_gcn_forward.10} parent=5 // pred_region
      // Predicated region
      $region29: #{hyper_resid_gcn_forward.10} parent=27 // pred_check
        %p221 = pneg %p46
      $region30: #{hyper_resid_gcn_forward.10} parent=27 // pred_check_branch
        %223 = sbr.rel (%p221) target = $region32
      $region31: #{hyper_resid_gcn_forward.10} parent=27 // pred_region
        %s224 = smul.u32 8, %s19
        %s225 = smul.u32 4, %s20
        %p226 = scmp.lt.s32.totalorder %s224, 15
        %s227 = scalar_select %p226, %s224, 15
        %p228 = scmp.lt.s32.totalorder %s225, 3
        %s229 = scalar_select %p228, %s225, 3
        %s230 = smul.addr %s227, 4
        %s231 = sadd.s32 %s229, %s230
        %s232 = smul.addr %s231, 8
        %s233 = scalar_lea.vmem %s0, %s232
        %s234 = smul.u32 8, %s19
        %s235 = smul.u32 4, %s20
      $region32: #{hyper_resid_gcn_forward.10} parent=27 // pred_fallthru
        _
      // Predicated region
      $region33: #{hyper_resid_gcn_forward.10} parent=27 // pred_check
        %p236 = pneg %p93
      $region34: #{hyper_resid_gcn_forward.10} parent=27 // pred_check_branch
        %238 = sbr.rel (%p236) target = $region36
      $region35: #{hyper_resid_gcn_forward.10} parent=27 // pred_region
        %s239 = smul.u32 32, %s19
        %p240 = scmp.lt.s32.totalorder %s239, 63
        %s241 = scalar_select %p240, %s239, 63
        %s242 = smul.addr %s241, 8
        %s243 = scalar_lea.vmem %s2, %s242
        %s244 = smul.u32 32, %s19
      $region36: #{hyper_resid_gcn_forward.10} parent=27 // pred_fallthru
        _
      // Predicated region
      $region37: #{hyper_resid_gcn_forward.10} parent=27 // pred_check
        %p245 = pneg %p119
      $region38: #{hyper_resid_gcn_forward.10} parent=27 // pred_check_branch
        %247 = sbr.rel (%p245) target = $region40
      $region39: #{hyper_resid_gcn_forward.10} parent=27 // pred_region
        %s248 = smul.u32 32, %s19
        %p249 = scmp.lt.s32.totalorder %s248, 63
        %s250 = scalar_select %p249, %s248, 63
        %s251 = smul.addr %s250, 8
        %s252 = scalar_lea.vmem %s3, %s251
        %s253 = smul.u32 32, %s19
      $region40: #{hyper_resid_gcn_forward.10} parent=27 // pred_fallthru
        _
    $region28: #{hyper_resid_gcn_forward.10} parent=5 // pred_fallthru
      _
    %p254 = scmp.le.s32.totalorder 1, %s12
    %p255 = scmp.lt.s32.totalorder %s12, 3
    %p256 = pnand %p254, %p255
    %p257 = pneg %p256
    // Predicated region
    $region41: #{hyper_resid_gcn_forward.10} parent=5 // pred_check
      _
    $region42: #{hyper_resid_gcn_forward.10} parent=5 // pred_check_branch
      %259 = sbr.rel (%p256) target = $region44
    $region43: #{hyper_resid_gcn_forward.10} parent=5 // pred_region
      %s260 = ssub.s32 %s12, 1
      %s261 = smul.u32 8, %s21
      %s262 = smul.u32 4, %s22
      %p263 = scmp.lt.s32.totalorder %s261, 15
      %s264 = scalar_select %p263, %s261, 15
      %p265 = scmp.lt.s32.totalorder %s262, 3
      %s266 = scalar_select %p265, %s262, 3
      %s267 = smul.addr %s264, 4
      %s268 = sadd.s32 %s266, %s267
      %s269 = smul.addr %s268, 8
      %s270 = scalar_lea.vmem %s0, %s269
      %p271 = pneg %p52
      %p272 = pneg %p49
      %p273 = pneg %p73
      %p274 = pneg %p70
      %s275 = smul.u32 32, %s21
      %p276 = scmp.lt.s32.totalorder %s275, 63
      %s277 = scalar_select %p276, %s275, 63
      %s278 = smul.addr %s277, 8
      %s279 = scalar_lea.vmem %s2, %s278
      %p280 = pneg %p99
      %p281 = pneg %p96
      %s282 = smul.u32 32, %s21
      %p283 = scmp.lt.s32.totalorder %s282, 63
      %s284 = scalar_select %p283, %s282, 63
      %s285 = smul.addr %s284, 8
      %s286 = scalar_lea.vmem %s3, %s285
      %p287 = pneg %p125
      %p288 = pneg %p122
      %p289 = pneg %p146
      %p290 = pneg %p143
      %p291 = pneg %p167
      %p292 = pneg %p164
      %p293 = pneg %p193
      %p294 = pneg %p190
      %s295 = smul.u32 32, %s21
      %p296 = scmp.lt.s32.totalorder %s295, 63
      %s297 = scalar_select %p296, %s295, 63
      %s298 = smul.addr %s297, 4
      %s299 = scalar_lea.vmem %s6, %s298
      %s300 = smul.u32 8, %s21
      %s301 = smul.u32 4, %s22
      %p302 = scmp.lt.s32.totalorder %s300, 15
      %s303 = scalar_select %p302, %s300, 15
      %p304 = scmp.lt.s32.totalorder %s301, 3
      %s305 = scalar_select %p304, %s301, 3
      %s306 = smul.addr %s303, 4
      %s307 = sadd.s32 %s305, %s306
      %s308 = smul.addr %s307, 8
      %s309 = scalar_lea.vmem %s0, %s308
      %s310 = smul.u32 8, %s21
      %s311 = smul.u32 4, %s22
      %s312 = smul.u32 32, %s21
      %p313 = scmp.lt.s32.totalorder %s312, 63
      %s314 = scalar_select %p313, %s312, 63
      %s315 = smul.addr %s314, 8
      %s316 = scalar_lea.vmem %s2, %s315
      %s317 = smul.u32 32, %s21
      %s318 = smul.u32 32, %s21
      %p319 = scmp.lt.s32.totalorder %s318, 63
      %s320 = scalar_select %p319, %s318, 63
      %s321 = smul.addr %s320, 8
      %s322 = scalar_lea.vmem %s3, %s321
      %s323 = smul.u32 32, %s21
      %s324 = smul.u32 32, %s21
      %p325 = scmp.lt.s32.totalorder %s324, 63
      %s326 = scalar_select %p325, %s324, 63
      %s327 = smul.addr %s326, 4
      %s328 = scalar_lea.vmem %s6, %s327
      %s329 = smul.u32 32, %s21
      %v330 = vld [vmem:[%s1] sm:$0xf]
      %v331 = vld [vmem:[%s1 + $0x4] sm:$0xf]
      %v332 = vld [vmem:[%s1 + $0x8] sm:$0xf]
      %v333 = vld [vmem:[%s1 + $0xc] sm:$0xf]
      %v334 = vld [vmem:[%s1 + $0x10] sm:$0xf]
      %v335 = vld [vmem:[%s1 + $0x14] sm:$0xf]
      %v336 = vld [vmem:[%s1 + $0x18] sm:$0xf]
      %v337 = vld [vmem:[%s1 + $0x1c] sm:$0xf]
      %v338 = vld [vmem:[%s1 + $0x20] sm:$0xf]
      %v339 = vld [vmem:[%s1 + $0x24] sm:$0xf]
      %v340 = vld [vmem:[%s1 + $0x28] sm:$0xf]
      %v341 = vld [vmem:[%s1 + $0x2c] sm:$0xf]
      %v342 = vld [vmem:[%s1 + $0x30] sm:$0xf]
      %v343 = vld [vmem:[%s1 + $0x34] sm:$0xf]
      %v344 = vld [vmem:[%s1 + $0x38] sm:$0xf]
      %v345 = vld [vmem:[%s1 + $0x3c] sm:$0xf]
      %v346 = vld [vmem:[%s1 + $0x40] sm:$0xf]
      %v347 = vld [vmem:[%s1 + $0x44] sm:$0xf]
      %v348 = vld [vmem:[%s1 + $0x48] sm:$0xf]
      %v349 = vld [vmem:[%s1 + $0x4c] sm:$0xf]
      %v350 = vld [vmem:[%s1 + $0x50] sm:$0xf]
      %v351 = vld [vmem:[%s1 + $0x54] sm:$0xf]
      %v352 = vld [vmem:[%s1 + $0x58] sm:$0xf]
      %v353 = vld [vmem:[%s1 + $0x5c] sm:$0xf]
      %v354 = vld [vmem:[%s1 + $0x60] sm:$0xf]
      %v355 = vld [vmem:[%s1 + $0x64] sm:$0xf]
      %v356 = vld [vmem:[%s1 + $0x68] sm:$0xf]
      %v357 = vld [vmem:[%s1 + $0x6c] sm:$0xf]
      %v358 = vld [vmem:[%s1 + $0x70] sm:$0xf]
      %v359 = vld [vmem:[%s1 + $0x74] sm:$0xf]
      %v360 = vld [vmem:[%s1 + $0x78] sm:$0xf]
      %v361 = vld [vmem:[%s1 + $0x7c] sm:$0xf]
      %v362 = vld [vmem:[%s1 + $0x80] sm:$0xf]
      %v363 = vld [vmem:[%s1 + $0x84] sm:$0xf]
      %v364 = vld [vmem:[%s1 + $0x88] sm:$0xf]
      %v365 = vld [vmem:[%s1 + $0x8c] sm:$0xf]
      %v366 = vld [vmem:[%s1 + $0x90] sm:$0xf]
      %v367 = vld [vmem:[%s1 + $0x94] sm:$0xf]
      %v368 = vld [vmem:[%s1 + $0x98] sm:$0xf]
      %v369 = vld [vmem:[%s1 + $0x9c] sm:$0xf]
      %v370 = vld [vmem:[%s1 + $0xa0] sm:$0xf]
      %v371 = vld [vmem:[%s1 + $0xa4] sm:$0xf]
      %v372 = vld [vmem:[%s1 + $0xa8] sm:$0xf]
      %v373 = vld [vmem:[%s1 + $0xac] sm:$0xf]
      %v374 = vld [vmem:[%s1 + $0xb0] sm:$0xf]
      %v375 = vld [vmem:[%s1 + $0xb4] sm:$0xf]
      %v376 = vld [vmem:[%s1 + $0xb8] sm:$0xf]
      %v377 = vld [vmem:[%s1 + $0xbc] sm:$0xf]
      %v378 = vld [vmem:[%s1 + $0xc0] sm:$0xf]
      %v379 = vld [vmem:[%s1 + $0xc4] sm:$0xf]
      %v380 = vld [vmem:[%s1 + $0xc8] sm:$0xf]
      %v381 = vld [vmem:[%s1 + $0xcc] sm:$0xf]
      %v382 = vld [vmem:[%s1 + $0xd0] sm:$0xf]
      %v383 = vld [vmem:[%s1 + $0xd4] sm:$0xf]
      %v384 = vld [vmem:[%s1 + $0xd8] sm:$0xf]
      %v385 = vld [vmem:[%s1 + $0xdc] sm:$0xf]
      %v386 = vld [vmem:[%s1 + $0xe0] sm:$0xf]
      %v387 = vld [vmem:[%s1 + $0xe4] sm:$0xf]
      %v388 = vld [vmem:[%s1 + $0xe8] sm:$0xf]
      %v389 = vld [vmem:[%s1 + $0xec] sm:$0xf]
      %v390 = vld [vmem:[%s1 + $0xf0] sm:$0xf]
      %v391 = vld [vmem:[%s1 + $0xf4] sm:$0xf]
      %v392 = vld [vmem:[%s1 + $0xf8] sm:$0xf]
      %v393 = vld [vmem:[%s1 + $0xfc] sm:$0xf]
      %v394 = vld [vmem:[%s309] sm:$0xff]
      %v395 = vld [vmem:[%s309 + $0x8] sm:$0xff]
      %v396 = vld [vmem:[%s309 + $0x10] sm:$0xff]
      %v397 = vld [vmem:[%s309 + $0x18] sm:$0xff]
      %v398 = vld [vmem:[%s309 + $0x20] sm:$0xff]
      %v399 = vld [vmem:[%s309 + $0x28] sm:$0xff]
      %v400 = vld [vmem:[%s309 + $0x30] sm:$0xff]
      %v401 = vld [vmem:[%s309 + $0x38] sm:$0xff]
      %v402 = vld [vmem:[%s309 + $0x40] sm:$0xff]
      %v403 = vld [vmem:[%s309 + $0x48] sm:$0xff]
      %v404 = vld [vmem:[%s309 + $0x50] sm:$0xff]
      %v405 = vld [vmem:[%s309 + $0x58] sm:$0xff]
      %v406 = vld [vmem:[%s309 + $0x60] sm:$0xff]
      %v407 = vld [vmem:[%s309 + $0x68] sm:$0xff]
      %v408 = vld [vmem:[%s309 + $0x70] sm:$0xff]
      %v409 = vld [vmem:[%s309 + $0x78] sm:$0xff]
      %v410 = vld [vmem:[%s309 + $0x80] sm:$0xff]
      %v411 = vld [vmem:[%s309 + $0x88] sm:$0xff]
      %v412 = vld [vmem:[%s309 + $0x90] sm:$0xff]
      %v413 = vld [vmem:[%s309 + $0x98] sm:$0xff]
      %v414 = vld [vmem:[%s309 + $0xa0] sm:$0xff]
      %v415 = vld [vmem:[%s309 + $0xa8] sm:$0xff]
      %v416 = vld [vmem:[%s309 + $0xb0] sm:$0xff]
      %v417 = vld [vmem:[%s309 + $0xb8] sm:$0xff]
      %v418 = vld [vmem:[%s309 + $0xc0] sm:$0xff]
      %v419 = vld [vmem:[%s309 + $0xc8] sm:$0xff]
      %v420 = vld [vmem:[%s309 + $0xd0] sm:$0xff]
      %v421 = vld [vmem:[%s309 + $0xd8] sm:$0xff]
      %v422 = vld [vmem:[%s309 + $0xe0] sm:$0xff]
      %v423 = vld [vmem:[%s309 + $0xe8] sm:$0xff]
      %v424 = vld [vmem:[%s309 + $0xf0] sm:$0xff]
      %v425 = vld [vmem:[%s309 + $0xf8] sm:$0xff]
      %v426 = vunpack.c.0.s8 %v394
      %v427 = vunpack.c.0.s8 %v395
      %v428 = vunpack.c.0.s8 %v396
      %v429 = vunpack.c.0.s8 %v397
      %v430 = vunpack.c.1.s8 %v394
      %v431 = vunpack.c.1.s8 %v395
      %v432 = vunpack.c.1.s8 %v396
      %v433 = vunpack.c.1.s8 %v397
      %v434 = vunpack.c.2.s8 %v394
      %v435 = vunpack.c.2.s8 %v395
      %v436 = vunpack.c.2.s8 %v396
      %v437 = vunpack.c.2.s8 %v397
      %v438 = vunpack.c.3.s8 %v394
      %v439 = vunpack.c.3.s8 %v395
      %v440 = vunpack.c.3.s8 %v396
      %v441 = vunpack.c.3.s8 %v397
      %v442 = vunpack.c.0.s8 %v398
      %v443 = vunpack.c.0.s8 %v399
      %v444 = vunpack.c.0.s8 %v400
      %v445 = vunpack.c.0.s8 %v401
      %v446 = vunpack.c.1.s8 %v398
      %v447 = vunpack.c.1.s8 %v399
      %v448 = vunpack.c.1.s8 %v400
      %v449 = vunpack.c.1.s8 %v401
      %v450 = vunpack.c.2.s8 %v398
      %v451 = vunpack.c.2.s8 %v399
      %v452 = vunpack.c.2.s8 %v400
      %v453 = vunpack.c.2.s8 %v401
      %v454 = vunpack.c.3.s8 %v398
      %v455 = vunpack.c.3.s8 %v399
      %v456 = vunpack.c.3.s8 %v400
      %v457 = vunpack.c.3.s8 %v401
      %v458 = vunpack.c.0.s8 %v402
      %v459 = vunpack.c.0.s8 %v403
      %v460 = vunpack.c.0.s8 %v404
      %v461 = vunpack.c.0.s8 %v405
      %v462 = vunpack.c.1.s8 %v402
      %v463 = vunpack.c.1.s8 %v403
      %v464 = vunpack.c.1.s8 %v404
      %v465 = vunpack.c.1.s8 %v405
      %v466 = vunpack.c.2.s8 %v402
      %v467 = vunpack.c.2.s8 %v403
      %v468 = vunpack.c.2.s8 %v404
      %v469 = vunpack.c.2.s8 %v405
      %v470 = vunpack.c.3.s8 %v402
      %v471 = vunpack.c.3.s8 %v403
      %v472 = vunpack.c.3.s8 %v404
      %v473 = vunpack.c.3.s8 %v405
      %v474 = vunpack.c.0.s8 %v406
      %v475 = vunpack.c.0.s8 %v407
      %v476 = vunpack.c.0.s8 %v408
      %v477 = vunpack.c.0.s8 %v409
      %v478 = vunpack.c.1.s8 %v406
      %v479 = vunpack.c.1.s8 %v407
      %v480 = vunpack.c.1.s8 %v408
      %v481 = vunpack.c.1.s8 %v409
      %v482 = vunpack.c.2.s8 %v406
      %v483 = vunpack.c.2.s8 %v407
      %v484 = vunpack.c.2.s8 %v408
      %v485 = vunpack.c.2.s8 %v409
      %v486 = vunpack.c.3.s8 %v406
      %v487 = vunpack.c.3.s8 %v407
      %v488 = vunpack.c.3.s8 %v408
      %v489 = vunpack.c.3.s8 %v409
      %v490 = vunpack.c.0.s8 %v410
      %v491 = vunpack.c.0.s8 %v411
      %v492 = vunpack.c.0.s8 %v412
      %v493 = vunpack.c.0.s8 %v413
      %v494 = vunpack.c.1.s8 %v410
      %v495 = vunpack.c.1.s8 %v411
      %v496 = vunpack.c.1.s8 %v412
      %v497 = vunpack.c.1.s8 %v413
      %v498 = vunpack.c.2.s8 %v410
      %v499 = vunpack.c.2.s8 %v411
      %v500 = vunpack.c.2.s8 %v412
      %v501 = vunpack.c.2.s8 %v413
      %v502 = vunpack.c.3.s8 %v410
      %v503 = vunpack.c.3.s8 %v411
      %v504 = vunpack.c.3.s8 %v412
      %v505 = vunpack.c.3.s8 %v413
      %v506 = vunpack.c.0.s8 %v414
      %v507 = vunpack.c.0.s8 %v415
      %v508 = vunpack.c.0.s8 %v416
      %v509 = vunpack.c.0.s8 %v417
      %v510 = vunpack.c.1.s8 %v414
      %v511 = vunpack.c.1.s8 %v415
      %v512 = vunpack.c.1.s8 %v416
      %v513 = vunpack.c.1.s8 %v417
      %v514 = vunpack.c.2.s8 %v414
      %v515 = vunpack.c.2.s8 %v415
      %v516 = vunpack.c.2.s8 %v416
      %v517 = vunpack.c.2.s8 %v417
      %v518 = vunpack.c.3.s8 %v414
      %v519 = vunpack.c.3.s8 %v415
      %v520 = vunpack.c.3.s8 %v416
      %v521 = vunpack.c.3.s8 %v417
      %v522 = vunpack.c.0.s8 %v418
      %v523 = vunpack.c.0.s8 %v419
      %v524 = vunpack.c.0.s8 %v420
      %v525 = vunpack.c.0.s8 %v421
      %v526 = vunpack.c.1.s8 %v418
      %v527 = vunpack.c.1.s8 %v419
      %v528 = vunpack.c.1.s8 %v420
      %v529 = vunpack.c.1.s8 %v421
      %v530 = vunpack.c.2.s8 %v418
      %v531 = vunpack.c.2.s8 %v419
      %v532 = vunpack.c.2.s8 %v420
      %v533 = vunpack.c.2.s8 %v421
      %v534 = vunpack.c.3.s8 %v418
      %v535 = vunpack.c.3.s8 %v419
      %v536 = vunpack.c.3.s8 %v420
      %v537 = vunpack.c.3.s8 %v421
      %v538 = vunpack.c.0.s8 %v422
      %v539 = vunpack.c.0.s8 %v423
      %v540 = vunpack.c.0.s8 %v424
      %v541 = vunpack.c.0.s8 %v425
      %v542 = vunpack.c.1.s8 %v422
      %v543 = vunpack.c.1.s8 %v423
      %v544 = vunpack.c.1.s8 %v424
      %v545 = vunpack.c.1.s8 %v425
      %v546 = vunpack.c.2.s8 %v422
      %v547 = vunpack.c.2.s8 %v423
      %v548 = vunpack.c.2.s8 %v424
      %v549 = vunpack.c.2.s8 %v425
      %v550 = vunpack.c.3.s8 %v422
      %v551 = vunpack.c.3.s8 %v423
      %v552 = vunpack.c.3.s8 %v424
      %v553 = vunpack.c.3.s8 %v425
      %v554 = vcvt.s32.f32 %v426
      %v555 = vcvt.s32.f32 %v427
      %v556 = vcvt.s32.f32 %v428
      %v557 = vcvt.s32.f32 %v429
      %v558 = vcvt.s32.f32 %v430
      %v559 = vcvt.s32.f32 %v431
      %v560 = vcvt.s32.f32 %v432
      %v561 = vcvt.s32.f32 %v433
      %v562 = vcvt.s32.f32 %v434
      %v563 = vcvt.s32.f32 %v435
      %v564 = vcvt.s32.f32 %v436
      %v565 = vcvt.s32.f32 %v437
      %v566 = vcvt.s32.f32 %v438
      %v567 = vcvt.s32.f32 %v439
      %v568 = vcvt.s32.f32 %v440
      %v569 = vcvt.s32.f32 %v441
      %v570 = vcvt.s32.f32 %v442
      %v571 = vcvt.s32.f32 %v443
      %v572 = vcvt.s32.f32 %v444
      %v573 = vcvt.s32.f32 %v445
      %v574 = vcvt.s32.f32 %v446
      %v575 = vcvt.s32.f32 %v447
      %v576 = vcvt.s32.f32 %v448
      %v577 = vcvt.s32.f32 %v449
      %v578 = vcvt.s32.f32 %v450
      %v579 = vcvt.s32.f32 %v451
      %v580 = vcvt.s32.f32 %v452
      %v581 = vcvt.s32.f32 %v453
      %v582 = vcvt.s32.f32 %v454
      %v583 = vcvt.s32.f32 %v455
      %v584 = vcvt.s32.f32 %v456
      %v585 = vcvt.s32.f32 %v457
      %v586 = vcvt.s32.f32 %v458
      %v587 = vcvt.s32.f32 %v459
      %v588 = vcvt.s32.f32 %v460
      %v589 = vcvt.s32.f32 %v461
      %v590 = vcvt.s32.f32 %v462
      %v591 = vcvt.s32.f32 %v463
      %v592 = vcvt.s32.f32 %v464
      %v593 = vcvt.s32.f32 %v465
      %v594 = vcvt.s32.f32 %v466
      %v595 = vcvt.s32.f32 %v467
      %v596 = vcvt.s32.f32 %v468
      %v597 = vcvt.s32.f32 %v469
      %v598 = vcvt.s32.f32 %v470
      %v599 = vcvt.s32.f32 %v471
      %v600 = vcvt.s32.f32 %v472
      %v601 = vcvt.s32.f32 %v473
      %v602 = vcvt.s32.f32 %v474
      %v603 = vcvt.s32.f32 %v475
      %v604 = vcvt.s32.f32 %v476
      %v605 = vcvt.s32.f32 %v477
      %v606 = vcvt.s32.f32 %v478
      %v607 = vcvt.s32.f32 %v479
      %v608 = vcvt.s32.f32 %v480
      %v609 = vcvt.s32.f32 %v481
      %v610 = vcvt.s32.f32 %v482
      %v611 = vcvt.s32.f32 %v483
      %v612 = vcvt.s32.f32 %v484
      %v613 = vcvt.s32.f32 %v485
      %v614 = vcvt.s32.f32 %v486
      %v615 = vcvt.s32.f32 %v487
      %v616 = vcvt.s32.f32 %v488
      %v617 = vcvt.s32.f32 %v489
      %v618 = vcvt.s32.f32 %v490
      %v619 = vcvt.s32.f32 %v491
      %v620 = vcvt.s32.f32 %v492
      %v621 = vcvt.s32.f32 %v493
      %v622 = vcvt.s32.f32 %v494
      %v623 = vcvt.s32.f32 %v495
      %v624 = vcvt.s32.f32 %v496
      %v625 = vcvt.s32.f32 %v497
      %v626 = vcvt.s32.f32 %v498
      %v627 = vcvt.s32.f32 %v499
      %v628 = vcvt.s32.f32 %v500
      %v629 = vcvt.s32.f32 %v501
      %v630 = vcvt.s32.f32 %v502
      %v631 = vcvt.s32.f32 %v503
      %v632 = vcvt.s32.f32 %v504
      %v633 = vcvt.s32.f32 %v505
      %v634 = vcvt.s32.f32 %v506
      %v635 = vcvt.s32.f32 %v507
      %v636 = vcvt.s32.f32 %v508
      %v637 = vcvt.s32.f32 %v509
      %v638 = vcvt.s32.f32 %v510
      %v639 = vcvt.s32.f32 %v511
      %v640 = vcvt.s32.f32 %v512
      %v641 = vcvt.s32.f32 %v513
      %v642 = vcvt.s32.f32 %v514
      %v643 = vcvt.s32.f32 %v515
      %v644 = vcvt.s32.f32 %v516
      %v645 = vcvt.s32.f32 %v517
      %v646 = vcvt.s32.f32 %v518
      %v647 = vcvt.s32.f32 %v519
      %v648 = vcvt.s32.f32 %v520
      %v649 = vcvt.s32.f32 %v521
      %v650 = vcvt.s32.f32 %v522
      %v651 = vcvt.s32.f32 %v523
      %v652 = vcvt.s32.f32 %v524
      %v653 = vcvt.s32.f32 %v525
      %v654 = vcvt.s32.f32 %v526
      %v655 = vcvt.s32.f32 %v527
      %v656 = vcvt.s32.f32 %v528
      %v657 = vcvt.s32.f32 %v529
      %v658 = vcvt.s32.f32 %v530
      %v659 = vcvt.s32.f32 %v531
      %v660 = vcvt.s32.f32 %v532
      %v661 = vcvt.s32.f32 %v533
      %v662 = vcvt.s32.f32 %v534
      %v663 = vcvt.s32.f32 %v535
      %v664 = vcvt.s32.f32 %v536
      %v665 = vcvt.s32.f32 %v537
      %v666 = vcvt.s32.f32 %v538
      %v667 = vcvt.s32.f32 %v539
      %v668 = vcvt.s32.f32 %v540
      %v669 = vcvt.s32.f32 %v541
      %v670 = vcvt.s32.f32 %v542
      %v671 = vcvt.s32.f32 %v543
      %v672 = vcvt.s32.f32 %v544
      %v673 = vcvt.s32.f32 %v545
      %v674 = vcvt.s32.f32 %v546
      %v675 = vcvt.s32.f32 %v547
      %v676 = vcvt.s32.f32 %v548
      %v677 = vcvt.s32.f32 %v549
      %v678 = vcvt.s32.f32 %v550
      %v679 = vcvt.s32.f32 %v551
      %v680 = vcvt.s32.f32 %v552
      %v681 = vcvt.s32.f32 %v553
      %v682 = vpack.c.bf16 %v558, %v554
      %v683 = vpack.c.bf16 %v559, %v555
      %v684 = vpack.c.bf16 %v560, %v556
      %v685 = vpack.c.bf16 %v561, %v557
      %v686 = vpack.c.bf16 %v566, %v562
      %v687 = vpack.c.bf16 %v567, %v563
      %v688 = vpack.c.bf16 %v568, %v564
      %v689 = vpack.c.bf16 %v569, %v565
      %v690 = vpack.c.bf16 %v574, %v570
      %v691 = vpack.c.bf16 %v575, %v571
      %v692 = vpack.c.bf16 %v576, %v572
      %v693 = vpack.c.bf16 %v577, %v573
      %v694 = vpack.c.bf16 %v582, %v578
      %v695 = vpack.c.bf16 %v583, %v579
      %v696 = vpack.c.bf16 %v584, %v580
      %v697 = vpack.c.bf16 %v585, %v581
      %v698 = vpack.c.bf16 %v590, %v586
      %v699 = vpack.c.bf16 %v591, %v587
      %v700 = vpack.c.bf16 %v592, %v588
      %v701 = vpack.c.bf16 %v593, %v589
      %v702 = vpack.c.bf16 %v598, %v594
      %v703 = vpack.c.bf16 %v599, %v595
      %v704 = vpack.c.bf16 %v600, %v596
      %v705 = vpack.c.bf16 %v601, %v597
      %v706 = vpack.c.bf16 %v606, %v602
      %v707 = vpack.c.bf16 %v607, %v603
      %v708 = vpack.c.bf16 %v608, %v604
      %v709 = vpack.c.bf16 %v609, %v605
      %v710 = vpack.c.bf16 %v614, %v610
      %v711 = vpack.c.bf16 %v615, %v611
      %v712 = vpack.c.bf16 %v616, %v612
      %v713 = vpack.c.bf16 %v617, %v613
      %v714 = vpack.c.bf16 %v622, %v618
      %v715 = vpack.c.bf16 %v623, %v619
      %v716 = vpack.c.bf16 %v624, %v620
      %v717 = vpack.c.bf16 %v625, %v621
      %v718 = vpack.c.bf16 %v630, %v626
      %v719 = vpack.c.bf16 %v631, %v627
      %v720 = vpack.c.bf16 %v632, %v628
      %v721 = vpack.c.bf16 %v633, %v629
      %v722 = vpack.c.bf16 %v638, %v634
      %v723 = vpack.c.bf16 %v639, %v635
      %v724 = vpack.c.bf16 %v640, %v636
      %v725 = vpack.c.bf16 %v641, %v637
      %v726 = vpack.c.bf16 %v646, %v642
      %v727 = vpack.c.bf16 %v647, %v643
      %v728 = vpack.c.bf16 %v648, %v644
      %v729 = vpack.c.bf16 %v649, %v645
      %v730 = vpack.c.bf16 %v654, %v650
      %v731 = vpack.c.bf16 %v655, %v651
      %v732 = vpack.c.bf16 %v656, %v652
      %v733 = vpack.c.bf16 %v657, %v653
      %v734 = vpack.c.bf16 %v662, %v658
      %v735 = vpack.c.bf16 %v663, %v659
      %v736 = vpack.c.bf16 %v664, %v660
      %v737 = vpack.c.bf16 %v665, %v661
      %v738 = vpack.c.bf16 %v670, %v666
      %v739 = vpack.c.bf16 %v671, %v667
      %v740 = vpack.c.bf16 %v672, %v668
      %v741 = vpack.c.bf16 %v673, %v669
      %v742 = vpack.c.bf16 %v678, %v674
      %v743 = vpack.c.bf16 %v679, %v675
      %v744 = vpack.c.bf16 %v680, %v676
      %v745 = vpack.c.bf16 %v681, %v677
      %v810 = vunpack.c.l.b16 %v330
      %v811 = vunpack.c.l.b16 %v331
      %v812 = vunpack.c.l.b16 %v332
      %v813 = vunpack.c.l.b16 %v333
      %v814 = vunpack.c.l.b16 %v334
      %v815 = vunpack.c.l.b16 %v335
      %v816 = vunpack.c.l.b16 %v336
      %v817 = vunpack.c.l.b16 %v337
      %v818 = vunpack.c.l.b16 %v338
      %v819 = vunpack.c.l.b16 %v339
      %v820 = vunpack.c.l.b16 %v340
      %v821 = vunpack.c.l.b16 %v341
      %v822 = vunpack.c.l.b16 %v342
      %v823 = vunpack.c.l.b16 %v343
      %v824 = vunpack.c.l.b16 %v344
      %v825 = vunpack.c.l.b16 %v345
      %v826 = vunpack.c.l.b16 %v346
      %v827 = vunpack.c.l.b16 %v347
      %v828 = vunpack.c.l.b16 %v348
      %v829 = vunpack.c.l.b16 %v349
      %v830 = vunpack.c.l.b16 %v350
      %v831 = vunpack.c.l.b16 %v351
      %v832 = vunpack.c.l.b16 %v352
      %v833 = vunpack.c.l.b16 %v353
      %v834 = vunpack.c.l.b16 %v354
      %v835 = vunpack.c.l.b16 %v355
      %v836 = vunpack.c.l.b16 %v356
      %v837 = vunpack.c.l.b16 %v357
      %v838 = vunpack.c.l.b16 %v358
      %v839 = vunpack.c.l.b16 %v359
      %v840 = vunpack.c.l.b16 %v360
      %v841 = vunpack.c.l.b16 %v361
      %v842 = vunpack.c.l.b16 %v362
      %v843 = vunpack.c.l.b16 %v363
      %v844 = vunpack.c.l.b16 %v364
      %v845 = vunpack.c.l.b16 %v365
      %v846 = vunpack.c.l.b16 %v366
      %v847 = vunpack.c.l.b16 %v367
      %v848 = vunpack.c.l.b16 %v368
      %v849 = vunpack.c.l.b16 %v369
      %v850 = vunpack.c.l.b16 %v370
      %v851 = vunpack.c.l.b16 %v371
      %v852 = vunpack.c.l.b16 %v372
      %v853 = vunpack.c.l.b16 %v373
      %v854 = vunpack.c.l.b16 %v374
      %v855 = vunpack.c.l.b16 %v375
      %v856 = vunpack.c.l.b16 %v376
      %v857 = vunpack.c.l.b16 %v377
      %v858 = vunpack.c.l.b16 %v378
      %v859 = vunpack.c.l.b16 %v379
      %v860 = vunpack.c.l.b16 %v380
      %v861 = vunpack.c.l.b16 %v381
      %v862 = vunpack.c.l.b16 %v382
      %v863 = vunpack.c.l.b16 %v383
      %v864 = vunpack.c.l.b16 %v384
      %v865 = vunpack.c.l.b16 %v385
      %v866 = vunpack.c.l.b16 %v386
      %v867 = vunpack.c.l.b16 %v387
      %v868 = vunpack.c.l.b16 %v388
      %v869 = vunpack.c.l.b16 %v389
      %v870 = vunpack.c.l.b16 %v390
      %v871 = vunpack.c.l.b16 %v391
      %v872 = vunpack.c.l.b16 %v392
      %v873 = vunpack.c.l.b16 %v393
      %v874 = vpack.c.b16 %v811, %v810
      %v875 = vpack.c.b16 %v813, %v812
      %v876 = vpack.c.b16 %v815, %v814
      %v877 = vpack.c.b16 %v817, %v816
      %v878 = vpack.c.b16 %v819, %v818
      %v879 = vpack.c.b16 %v821, %v820
      %v880 = vpack.c.b16 %v823, %v822
      %v881 = vpack.c.b16 %v825, %v824
      %v882 = vpack.c.b16 %v827, %v826
      %v883 = vpack.c.b16 %v829, %v828
      %v884 = vpack.c.b16 %v831, %v830
      %v885 = vpack.c.b16 %v833, %v832
      %v886 = vpack.c.b16 %v835, %v834
      %v887 = vpack.c.b16 %v837, %v836
      %v888 = vpack.c.b16 %v839, %v838
      %v889 = vpack.c.b16 %v841, %v840
      %v890 = vpack.c.b16 %v843, %v842
      %v891 = vpack.c.b16 %v845, %v844
      %v892 = vpack.c.b16 %v847, %v846
      %v893 = vpack.c.b16 %v849, %v848
      %v894 = vpack.c.b16 %v851, %v850
      %v895 = vpack.c.b16 %v853, %v852
      %v896 = vpack.c.b16 %v855, %v854
      %v897 = vpack.c.b16 %v857, %v856
      %v898 = vpack.c.b16 %v859, %v858
      %v899 = vpack.c.b16 %v861, %v860
      %v900 = vpack.c.b16 %v863, %v862
      %v901 = vpack.c.b16 %v865, %v864
      %v902 = vpack.c.b16 %v867, %v866
      %v903 = vpack.c.b16 %v869, %v868
      %v904 = vpack.c.b16 %v871, %v870
      %v905 = vpack.c.b16 %v873, %v872
      %938 = vmatpush.bf16.msra.mxu0 %v881
      %939 = vmatpush.bf16.msra.mxu0 %v880
      %940 = vmatpush.bf16.msra.mxu0 %v879
      %941 = vmatpush.bf16.msra.mxu0 %v878
      %942 = vmatpush.bf16.msra.mxu0 %v877
      %943 = vmatpush.bf16.msra.mxu0 %v876
      %944 = vmatpush.bf16.msra.mxu0 %v875
      %945 = vmatpush.bf16.msra.mxu0 %v874
      %946 = vmatmul.bf16.gmra.mxu0 %v682
      %v947 = vpop.f32.mrf.mxu0
      %v948 = vadd.f32 0.0, %v947
      %v949 = vpop.f32.mrf.mxu0
      %v950 = vadd.f32 0.0, %v949
      %951 = vmatmul.bf16.gmra.mxu0 %v686
      %v952 = vpop.f32.mrf.mxu0
      %v953 = vadd.f32 0.0, %v952
      %v954 = vpop.f32.mrf.mxu0
      %v955 = vadd.f32 0.0, %v954
      %956 = vmatmul.bf16.gmra.mxu0 %v690
      %v957 = vpop.f32.mrf.mxu0
      %v958 = vadd.f32 0.0, %v957
      %v959 = vpop.f32.mrf.mxu0
      %v960 = vadd.f32 0.0, %v959
      %961 = vmatmul.bf16.gmra.mxu0 %v694
      %v962 = vpop.f32.mrf.mxu0
      %v963 = vadd.f32 0.0, %v962
      %v964 = vpop.f32.mrf.mxu0
      %v965 = vadd.f32 0.0, %v964
      %966 = vmatmul.bf16.gmra.mxu0 %v698
      %v967 = vpop.f32.mrf.mxu0
      %v968 = vadd.f32 0.0, %v967
      %v969 = vpop.f32.mrf.mxu0
      %v970 = vadd.f32 0.0, %v969
      %971 = vmatmul.bf16.gmra.mxu0 %v702
      %v972 = vpop.f32.mrf.mxu0
      %v973 = vadd.f32 0.0, %v972
      %v974 = vpop.f32.mrf.mxu0
      %v975 = vadd.f32 0.0, %v974
      %976 = vmatmul.bf16.gmra.mxu0 %v706
      %v977 = vpop.f32.mrf.mxu0
      %v978 = vadd.f32 0.0, %v977
      %v979 = vpop.f32.mrf.mxu0
      %v980 = vadd.f32 0.0, %v979
      %981 = vmatmul.bf16.gmra.mxu0 %v710
      %v982 = vpop.f32.mrf.mxu0
      %v983 = vadd.f32 0.0, %v982
      %v984 = vpop.f32.mrf.mxu0
      %v985 = vadd.f32 0.0, %v984
      %986 = vmatmul.bf16.gmra.mxu0 %v714
      %v987 = vpop.f32.mrf.mxu0
      %v988 = vadd.f32 0.0, %v987
      %v989 = vpop.f32.mrf.mxu0
      %v990 = vadd.f32 0.0, %v989
      %991 = vmatmul.bf16.gmra.mxu0 %v718
      %v992 = vpop.f32.mrf.mxu0
      %v993 = vadd.f32 0.0, %v992
      %v994 = vpop.f32.mrf.mxu0
      %v995 = vadd.f32 0.0, %v994
      %996 = vmatmul.bf16.gmra.mxu0 %v722
      %v997 = vpop.f32.mrf.mxu0
      %v998 = vadd.f32 0.0, %v997
      %v999 = vpop.f32.mrf.mxu0
      %v1000 = vadd.f32 0.0, %v999
      %1001 = vmatmul.bf16.gmra.mxu0 %v726
      %v1002 = vpop.f32.mrf.mxu0
      %v1003 = vadd.f32 0.0, %v1002
      %v1004 = vpop.f32.mrf.mxu0
      %v1005 = vadd.f32 0.0, %v1004
      %1006 = vmatmul.bf16.gmra.mxu0 %v730
      %v1007 = vpop.f32.mrf.mxu0
      %v1008 = vadd.f32 0.0, %v1007
      %v1009 = vpop.f32.mrf.mxu0
      %v1010 = vadd.f32 0.0, %v1009
      %1011 = vmatmul.bf16.gmra.mxu0 %v734
      %v1012 = vpop.f32.mrf.mxu0
      %v1013 = vadd.f32 0.0, %v1012
      %v1014 = vpop.f32.mrf.mxu0
      %v1015 = vadd.f32 0.0, %v1014
      %1016 = vmatmul.bf16.gmra.mxu0 %v738
      %v1017 = vpop.f32.mrf.mxu0
      %v1018 = vadd.f32 0.0, %v1017
      %v1019 = vpop.f32.mrf.mxu0
      %v1020 = vadd.f32 0.0, %v1019
      %1021 = vmatmul.bf16.gmra.mxu0 %v742
      %v1022 = vpop.f32.mrf.mxu0
      %v1023 = vadd.f32 0.0, %v1022
      %v1024 = vpop.f32.mrf.mxu0
      %v1025 = vadd.f32 0.0, %v1024
      %1026 = vdwg.mxu0
      %1027 = vmatpush.bf16.msra.mxu0 %v889
      %1028 = vmatpush.bf16.msra.mxu0 %v888
      %1029 = vmatpush.bf16.msra.mxu0 %v887
      %1030 = vmatpush.bf16.msra.mxu0 %v886
      %1031 = vmatpush.bf16.msra.mxu0 %v885
      %1032 = vmatpush.bf16.msra.mxu0 %v884
      %1033 = vmatpush.bf16.msra.mxu0 %v883
      %1034 = vmatpush.bf16.msra.mxu0 %v882
      %1035 = vmatmul.bf16.gmra.mxu0 %v683
      %v1036 = vpop.f32.mrf.mxu0
      %v1037 = vadd.f32 %v948, %v1036
      %v1038 = vpop.f32.mrf.mxu0
      %v1039 = vadd.f32 %v950, %v1038
      %1040 = vmatmul.bf16.gmra.mxu0 %v687
      %v1041 = vpop.f32.mrf.mxu0
      %v1042 = vadd.f32 %v953, %v1041
      %v1043 = vpop.f32.mrf.mxu0
      %v1044 = vadd.f32 %v955, %v1043
      %1045 = vmatmul.bf16.gmra.mxu0 %v691
      %v1046 = vpop.f32.mrf.mxu0
      %v1047 = vadd.f32 %v958, %v1046
      %v1048 = vpop.f32.mrf.mxu0
      %v1049 = vadd.f32 %v960, %v1048
      %1050 = vmatmul.bf16.gmra.mxu0 %v695
      %v1051 = vpop.f32.mrf.mxu0
      %v1052 = vadd.f32 %v963, %v1051
      %v1053 = vpop.f32.mrf.mxu0
      %v1054 = vadd.f32 %v965, %v1053
      %1055 = vmatmul.bf16.gmra.mxu0 %v699
      %v1056 = vpop.f32.mrf.mxu0
      %v1057 = vadd.f32 %v968, %v1056
      %v1058 = vpop.f32.mrf.mxu0
      %v1059 = vadd.f32 %v970, %v1058
      %1060 = vmatmul.bf16.gmra.mxu0 %v703
      %v1061 = vpop.f32.mrf.mxu0
      %v1062 = vadd.f32 %v973, %v1061
      %v1063 = vpop.f32.mrf.mxu0
      %v1064 = vadd.f32 %v975, %v1063
      %1065 = vmatmul.bf16.gmra.mxu0 %v707
      %v1066 = vpop.f32.mrf.mxu0
      %v1067 = vadd.f32 %v978, %v1066
      %v1068 = vpop.f32.mrf.mxu0
      %v1069 = vadd.f32 %v980, %v1068
      %1070 = vmatmul.bf16.gmra.mxu0 %v711
      %v1071 = vpop.f32.mrf.mxu0
      %v1072 = vadd.f32 %v983, %v1071
      %v1073 = vpop.f32.mrf.mxu0
      %v1074 = vadd.f32 %v985, %v1073
      %1075 = vmatmul.bf16.gmra.mxu0 %v715
      %v1076 = vpop.f32.mrf.mxu0
      %v1077 = vadd.f32 %v988, %v1076
      %v1078 = vpop.f32.mrf.mxu0
      %v1079 = vadd.f32 %v990, %v1078
      %1080 = vmatmul.bf16.gmra.mxu0 %v719
      %v1081 = vpop.f32.mrf.mxu0
      %v1082 = vadd.f32 %v993, %v1081
      %v1083 = vpop.f32.mrf.mxu0
      %v1084 = vadd.f32 %v995, %v1083
      %1085 = vmatmul.bf16.gmra.mxu0 %v723
      %v1086 = vpop.f32.mrf.mxu0
      %v1087 = vadd.f32 %v998, %v1086
      %v1088 = vpop.f32.mrf.mxu0
      %v1089 = vadd.f32 %v1000, %v1088
      %1090 = vmatmul.bf16.gmra.mxu0 %v727
      %v1091 = vpop.f32.mrf.mxu0
      %v1092 = vadd.f32 %v1003, %v1091
      %v1093 = vpop.f32.mrf.mxu0
      %v1094 = vadd.f32 %v1005, %v1093
      %1095 = vmatmul.bf16.gmra.mxu0 %v731
      %v1096 = vpop.f32.mrf.mxu0
      %v1097 = vadd.f32 %v1008, %v1096
      %v1098 = vpop.f32.mrf.mxu0
      %v1099 = vadd.f32 %v1010, %v1098
      %1100 = vmatmul.bf16.gmra.mxu0 %v735
      %v1101 = vpop.f32.mrf.mxu0
      %v1102 = vadd.f32 %v1013, %v1101
      %v1103 = vpop.f32.mrf.mxu0
      %v1104 = vadd.f32 %v1015, %v1103
      %1105 = vmatmul.bf16.gmra.mxu0 %v739
      %v1106 = vpop.f32.mrf.mxu0
      %v1107 = vadd.f32 %v1018, %v1106
      %v1108 = vpop.f32.mrf.mxu0
      %v1109 = vadd.f32 %v1020, %v1108
      %1110 = vmatmul.bf16.gmra.mxu0 %v743
      %v1111 = vpop.f32.mrf.mxu0
      %v1112 = vadd.f32 %v1023, %v1111
      %v1113 = vpop.f32.mrf.mxu0
      %v1114 = vadd.f32 %v1025, %v1113
      %1115 = vdwg.mxu0
      %1116 = vmatpush.bf16.msra.mxu0 %v897
      %1117 = vmatpush.bf16.msra.mxu0 %v896
      %1118 = vmatpush.bf16.msra.mxu0 %v895
      %1119 = vmatpush.bf16.msra.mxu0 %v894
      %1120 = vmatpush.bf16.msra.mxu0 %v893
      %1121 = vmatpush.bf16.msra.mxu0 %v892
      %1122 = vmatpush.bf16.msra.mxu0 %v891
      %1123 = vmatpush.bf16.msra.mxu0 %v890
      %1124 = vmatmul.bf16.gmra.mxu0 %v684
      %v1125 = vpop.f32.mrf.mxu0
      %v1126 = vadd.f32 %v1037, %v1125
      %v1127 = vpop.f32.mrf.mxu0
      %v1128 = vadd.f32 %v1039, %v1127
      %1129 = vmatmul.bf16.gmra.mxu0 %v688
      %v1130 = vpop.f32.mrf.mxu0
      %v1131 = vadd.f32 %v1042, %v1130
      %v1132 = vpop.f32.mrf.mxu0
      %v1133 = vadd.f32 %v1044, %v1132
      %1134 = vmatmul.bf16.gmra.mxu0 %v692
      %v1135 = vpop.f32.mrf.mxu0
      %v1136 = vadd.f32 %v1047, %v1135
      %v1137 = vpop.f32.mrf.mxu0
      %v1138 = vadd.f32 %v1049, %v1137
      %1139 = vmatmul.bf16.gmra.mxu0 %v696
      %v1140 = vpop.f32.mrf.mxu0
      %v1141 = vadd.f32 %v1052, %v1140
      %v1142 = vpop.f32.mrf.mxu0
      %v1143 = vadd.f32 %v1054, %v1142
      %1144 = vmatmul.bf16.gmra.mxu0 %v700
      %v1145 = vpop.f32.mrf.mxu0
      %v1146 = vadd.f32 %v1057, %v1145
      %v1147 = vpop.f32.mrf.mxu0
      %v1148 = vadd.f32 %v1059, %v1147
      %1149 = vmatmul.bf16.gmra.mxu0 %v704
      %v1150 = vpop.f32.mrf.mxu0
      %v1151 = vadd.f32 %v1062, %v1150
      %v1152 = vpop.f32.mrf.mxu0
      %v1153 = vadd.f32 %v1064, %v1152
      %1154 = vmatmul.bf16.gmra.mxu0 %v708
      %v1155 = vpop.f32.mrf.mxu0
      %v1156 = vadd.f32 %v1067, %v1155
      %v1157 = vpop.f32.mrf.mxu0
      %v1158 = vadd.f32 %v1069, %v1157
      %1159 = vmatmul.bf16.gmra.mxu0 %v712
      %v1160 = vpop.f32.mrf.mxu0
      %v1161 = vadd.f32 %v1072, %v1160
      %v1162 = vpop.f32.mrf.mxu0
      %v1163 = vadd.f32 %v1074, %v1162
      %1164 = vmatmul.bf16.gmra.mxu0 %v716
      %v1165 = vpop.f32.mrf.mxu0
      %v1166 = vadd.f32 %v1077, %v1165
      %v1167 = vpop.f32.mrf.mxu0
      %v1168 = vadd.f32 %v1079, %v1167
      %1169 = vmatmul.bf16.gmra.mxu0 %v720
      %v1170 = vpop.f32.mrf.mxu0
      %v1171 = vadd.f32 %v1082, %v1170
      %v1172 = vpop.f32.mrf.mxu0
      %v1173 = vadd.f32 %v1084, %v1172
      %1174 = vmatmul.bf16.gmra.mxu0 %v724
      %v1175 = vpop.f32.mrf.mxu0
      %v1176 = vadd.f32 %v1087, %v1175
      %v1177 = vpop.f32.mrf.mxu0
      %v1178 = vadd.f32 %v1089, %v1177
      %1179 = vmatmul.bf16.gmra.mxu0 %v728
      %v1180 = vpop.f32.mrf.mxu0
      %v1181 = vadd.f32 %v1092, %v1180
      %v1182 = vpop.f32.mrf.mxu0
      %v1183 = vadd.f32 %v1094, %v1182
      %1184 = vmatmul.bf16.gmra.mxu0 %v732
      %v1185 = vpop.f32.mrf.mxu0
      %v1186 = vadd.f32 %v1097, %v1185
      %v1187 = vpop.f32.mrf.mxu0
      %v1188 = vadd.f32 %v1099, %v1187
      %1189 = vmatmul.bf16.gmra.mxu0 %v736
      %v1190 = vpop.f32.mrf.mxu0
      %v1191 = vadd.f32 %v1102, %v1190
      %v1192 = vpop.f32.mrf.mxu0
      %v1193 = vadd.f32 %v1104, %v1192
      %1194 = vmatmul.bf16.gmra.mxu0 %v740
      %v1195 = vpop.f32.mrf.mxu0
      %v1196 = vadd.f32 %v1107, %v1195
      %v1197 = vpop.f32.mrf.mxu0
      %v1198 = vadd.f32 %v1109, %v1197
      %1199 = vmatmul.bf16.gmra.mxu0 %v744
      %v1200 = vpop.f32.mrf.mxu0
      %v1201 = vadd.f32 %v1112, %v1200
      %v1202 = vpop.f32.mrf.mxu0
      %v1203 = vadd.f32 %v1114, %v1202
      %1204 = vdwg.mxu0
      %1205 = vmatpush.bf16.msra.mxu0 %v905
      %1206 = vmatpush.bf16.msra.mxu0 %v904
      %1207 = vmatpush.bf16.msra.mxu0 %v903
      %1208 = vmatpush.bf16.msra.mxu0 %v902
      %1209 = vmatpush.bf16.msra.mxu0 %v901
      %1210 = vmatpush.bf16.msra.mxu0 %v900
      %1211 = vmatpush.bf16.msra.mxu0 %v899
      %1212 = vmatpush.bf16.msra.mxu0 %v898
      %1213 = vmatmul.bf16.gmra.mxu0 %v685
      %v1214 = vpop.f32.mrf.mxu0
      %v1215 = vadd.f32 %v1126, %v1214
      %v1216 = vpop.f32.mrf.mxu0
      %v1217 = vadd.f32 %v1128, %v1216
      %1218 = vmatmul.bf16.gmra.mxu0 %v689
      %v1219 = vpop.f32.mrf.mxu0
      %v1220 = vadd.f32 %v1131, %v1219
      %v1221 = vpop.f32.mrf.mxu0
      %v1222 = vadd.f32 %v1133, %v1221
      %1223 = vmatmul.bf16.gmra.mxu0 %v693
      %v1224 = vpop.f32.mrf.mxu0
      %v1225 = vadd.f32 %v1136, %v1224
      %v1226 = vpop.f32.mrf.mxu0
      %v1227 = vadd.f32 %v1138, %v1226
      %1228 = vmatmul.bf16.gmra.mxu0 %v697
      %v1229 = vpop.f32.mrf.mxu0
      %v1230 = vadd.f32 %v1141, %v1229
      %v1231 = vpop.f32.mrf.mxu0
      %v1232 = vadd.f32 %v1143, %v1231
      %1233 = vmatmul.bf16.gmra.mxu0 %v701
      %v1234 = vpop.f32.mrf.mxu0
      %v1235 = vadd.f32 %v1146, %v1234
      %v1236 = vpop.f32.mrf.mxu0
      %v1237 = vadd.f32 %v1148, %v1236
      %1238 = vmatmul.bf16.gmra.mxu0 %v705
      %v1239 = vpop.f32.mrf.mxu0
      %v1240 = vadd.f32 %v1151, %v1239
      %v1241 = vpop.f32.mrf.mxu0
      %v1242 = vadd.f32 %v1153, %v1241
      %1243 = vmatmul.bf16.gmra.mxu0 %v709
      %v1244 = vpop.f32.mrf.mxu0
      %v1245 = vadd.f32 %v1156, %v1244
      %v1246 = vpop.f32.mrf.mxu0
      %v1247 = vadd.f32 %v1158, %v1246
      %1248 = vmatmul.bf16.gmra.mxu0 %v713
      %v1249 = vpop.f32.mrf.mxu0
      %v1250 = vadd.f32 %v1161, %v1249
      %v1251 = vpop.f32.mrf.mxu0
      %v1252 = vadd.f32 %v1163, %v1251
      %1253 = vmatmul.bf16.gmra.mxu0 %v717
      %v1254 = vpop.f32.mrf.mxu0
      %v1255 = vadd.f32 %v1166, %v1254
      %v1256 = vpop.f32.mrf.mxu0
      %v1257 = vadd.f32 %v1168, %v1256
      %1258 = vmatmul.bf16.gmra.mxu0 %v721
      %v1259 = vpop.f32.mrf.mxu0
      %v1260 = vadd.f32 %v1171, %v1259
      %v1261 = vpop.f32.mrf.mxu0
      %v1262 = vadd.f32 %v1173, %v1261
      %1263 = vmatmul.bf16.gmra.mxu0 %v725
      %v1264 = vpop.f32.mrf.mxu0
      %v1265 = vadd.f32 %v1176, %v1264
      %v1266 = vpop.f32.mrf.mxu0
      %v1267 = vadd.f32 %v1178, %v1266
      %1268 = vmatmul.bf16.gmra.mxu0 %v729
      %v1269 = vpop.f32.mrf.mxu0
      %v1270 = vadd.f32 %v1181, %v1269
      %v1271 = vpop.f32.mrf.mxu0
      %v1272 = vadd.f32 %v1183, %v1271
      %1273 = vmatmul.bf16.gmra.mxu0 %v733
      %v1274 = vpop.f32.mrf.mxu0
      %v1275 = vadd.f32 %v1186, %v1274
      %v1276 = vpop.f32.mrf.mxu0
      %v1277 = vadd.f32 %v1188, %v1276
      %1278 = vmatmul.bf16.gmra.mxu0 %v737
      %v1279 = vpop.f32.mrf.mxu0
      %v1280 = vadd.f32 %v1191, %v1279
      %v1281 = vpop.f32.mrf.mxu0
      %v1282 = vadd.f32 %v1193, %v1281
      %1283 = vmatmul.bf16.gmra.mxu0 %v741
      %v1284 = vpop.f32.mrf.mxu0
      %v1285 = vadd.f32 %v1196, %v1284
      %v1286 = vpop.f32.mrf.mxu0
      %v1287 = vadd.f32 %v1198, %v1286
      %1288 = vmatmul.bf16.gmra.mxu0 %v745
      %v1289 = vpop.f32.mrf.mxu0
      %v1290 = vadd.f32 %v1201, %v1289
      %v1291 = vpop.f32.mrf.mxu0
      %v1292 = vadd.f32 %v1203, %v1291
      %1293 = vdwg.mxu0
      %v1294 = vld [vmem:[%s316] sm:$0xff]
      %v1295 = vld [vmem:[%s316 + $0x8] sm:$0xff]
      %v1296 = vld [vmem:[%s316 + $0x10] sm:$0xff]
      %v1297 = vld [vmem:[%s316 + $0x18] sm:$0xff]
      %v1298 = vld [vmem:[%s316 + $0x20] sm:$0xff]
      %v1299 = vld [vmem:[%s316 + $0x28] sm:$0xff]
      %v1300 = vld [vmem:[%s316 + $0x30] sm:$0xff]
      %v1301 = vld [vmem:[%s316 + $0x38] sm:$0xff]
      %v1302 = vld [vmem:[%s316 + $0x40] sm:$0xff]
      %v1303 = vld [vmem:[%s316 + $0x48] sm:$0xff]
      %v1304 = vld [vmem:[%s316 + $0x50] sm:$0xff]
      %v1305 = vld [vmem:[%s316 + $0x58] sm:$0xff]
      %v1306 = vld [vmem:[%s316 + $0x60] sm:$0xff]
      %v1307 = vld [vmem:[%s316 + $0x68] sm:$0xff]
      %v1308 = vld [vmem:[%s316 + $0x70] sm:$0xff]
      %v1309 = vld [vmem:[%s316 + $0x78] sm:$0xff]
      %v1310 = vld [vmem:[%s316 + $0x80] sm:$0xff]
      %v1311 = vld [vmem:[%s316 + $0x88] sm:$0xff]
      %v1312 = vld [vmem:[%s316 + $0x90] sm:$0xff]
      %v1313 = vld [vmem:[%s316 + $0x98] sm:$0xff]
      %v1314 = vld [vmem:[%s316 + $0xa0] sm:$0xff]
      %v1315 = vld [vmem:[%s316 + $0xa8] sm:$0xff]
      %v1316 = vld [vmem:[%s316 + $0xb0] sm:$0xff]
      %v1317 = vld [vmem:[%s316 + $0xb8] sm:$0xff]
      %v1318 = vld [vmem:[%s316 + $0xc0] sm:$0xff]
      %v1319 = vld [vmem:[%s316 + $0xc8] sm:$0xff]
      %v1320 = vld [vmem:[%s316 + $0xd0] sm:$0xff]
      %v1321 = vld [vmem:[%s316 + $0xd8] sm:$0xff]
      %v1322 = vld [vmem:[%s316 + $0xe0] sm:$0xff]
      %v1323 = vld [vmem:[%s316 + $0xe8] sm:$0xff]
      %v1324 = vld [vmem:[%s316 + $0xf0] sm:$0xff]
      %v1325 = vld [vmem:[%s316 + $0xf8] sm:$0xff]
      %1327 = vset.pattern.permute.xlu0 0
      %1328 = vperm.xlu0 %1327, %v1294
      %v1329 = vpop.permute.xlu0 %1328
      %1332 = vset.pattern.permute.xlu0 0
      %1333 = vperm.xlu0 %1332, %v1295
      %v1334 = vpop.permute.xlu0 %1333
      %1337 = vset.pattern.permute.xlu0 0
      %1338 = vperm.xlu0 %1337, %v1296
      %v1339 = vpop.permute.xlu0 %1338
      %1342 = vset.pattern.permute.xlu0 0
      %1343 = vperm.xlu0 %1342, %v1297
      %v1344 = vpop.permute.xlu0 %1343
      %1347 = vset.pattern.permute.xlu0 0
      %1348 = vperm.xlu0 %1347, %v1298
      %v1349 = vpop.permute.xlu0 %1348
      %1352 = vset.pattern.permute.xlu0 0
      %1353 = vperm.xlu0 %1352, %v1299
      %v1354 = vpop.permute.xlu0 %1353
      %1357 = vset.pattern.permute.xlu0 0
      %1358 = vperm.xlu0 %1357, %v1300
      %v1359 = vpop.permute.xlu0 %1358
      %1362 = vset.pattern.permute.xlu0 0
      %1363 = vperm.xlu0 %1362, %v1301
      %v1364 = vpop.permute.xlu0 %1363
      %1367 = vset.pattern.permute.xlu0 0
      %1368 = vperm.xlu0 %1367, %v1302
      %v1369 = vpop.permute.xlu0 %1368
      %1372 = vset.pattern.permute.xlu0 0
      %1373 = vperm.xlu0 %1372, %v1303
      %v1374 = vpop.permute.xlu0 %1373
      %1377 = vset.pattern.permute.xlu0 0
      %1378 = vperm.xlu0 %1377, %v1304
      %v1379 = vpop.permute.xlu0 %1378
      %1382 = vset.pattern.permute.xlu0 0
      %1383 = vperm.xlu0 %1382, %v1305
      %v1384 = vpop.permute.xlu0 %1383
      %1387 = vset.pattern.permute.xlu0 0
      %1388 = vperm.xlu0 %1387, %v1306
      %v1389 = vpop.permute.xlu0 %1388
      %1392 = vset.pattern.permute.xlu0 0
      %1393 = vperm.xlu0 %1392, %v1307
      %v1394 = vpop.permute.xlu0 %1393
      %1397 = vset.pattern.permute.xlu0 0
      %1398 = vperm.xlu0 %1397, %v1308
      %v1399 = vpop.permute.xlu0 %1398
      %1402 = vset.pattern.permute.xlu0 0
      %1403 = vperm.xlu0 %1402, %v1309
      %v1404 = vpop.permute.xlu0 %1403
      %1407 = vset.pattern.permute.xlu0 0
      %1408 = vperm.xlu0 %1407, %v1310
      %v1409 = vpop.permute.xlu0 %1408
      %1412 = vset.pattern.permute.xlu0 0
      %1413 = vperm.xlu0 %1412, %v1311
      %v1414 = vpop.permute.xlu0 %1413
      %1417 = vset.pattern.permute.xlu0 0
      %1418 = vperm.xlu0 %1417, %v1312
      %v1419 = vpop.permute.xlu0 %1418
      %1422 = vset.pattern.permute.xlu0 0
      %1423 = vperm.xlu0 %1422, %v1313
      %v1424 = vpop.permute.xlu0 %1423
      %1427 = vset.pattern.permute.xlu0 0
      %1428 = vperm.xlu0 %1427, %v1314
      %v1429 = vpop.permute.xlu0 %1428
      %1432 = vset.pattern.permute.xlu0 0
      %1433 = vperm.xlu0 %1432, %v1315
      %v1434 = vpop.permute.xlu0 %1433
      %1437 = vset.pattern.permute.xlu0 0
      %1438 = vperm.xlu0 %1437, %v1316
      %v1439 = vpop.permute.xlu0 %1438
      %1442 = vset.pattern.permute.xlu0 0
      %1443 = vperm.xlu0 %1442, %v1317
      %v1444 = vpop.permute.xlu0 %1443
      %1447 = vset.pattern.permute.xlu0 0
      %1448 = vperm.xlu0 %1447, %v1318
      %v1449 = vpop.permute.xlu0 %1448
      %1452 = vset.pattern.permute.xlu0 0
      %1453 = vperm.xlu0 %1452, %v1319
      %v1454 = vpop.permute.xlu0 %1453
      %1457 = vset.pattern.permute.xlu0 0
      %1458 = vperm.xlu0 %1457, %v1320
      %v1459 = vpop.permute.xlu0 %1458
      %1462 = vset.pattern.permute.xlu0 0
      %1463 = vperm.xlu0 %1462, %v1321
      %v1464 = vpop.permute.xlu0 %1463
      %1467 = vset.pattern.permute.xlu0 0
      %1468 = vperm.xlu0 %1467, %v1322
      %v1469 = vpop.permute.xlu0 %1468
      %1472 = vset.pattern.permute.xlu0 0
      %1473 = vperm.xlu0 %1472, %v1323
      %v1474 = vpop.permute.xlu0 %1473
      %1477 = vset.pattern.permute.xlu0 0
      %1478 = vperm.xlu0 %1477, %v1324
      %v1479 = vpop.permute.xlu0 %1478
      %1482 = vset.pattern.permute.xlu0 0
      %1483 = vperm.xlu0 %1482, %v1325
      %v1484 = vpop.permute.xlu0 %1483
      %v1486 = vmul.f32 %v1329, %v1215
      %v1487 = vmul.f32 %v1334, %v1217
      %v1488 = vmul.f32 %v1339, %v1220
      %v1489 = vmul.f32 %v1344, %v1222
      %v1490 = vmul.f32 %v1349, %v1225
      %v1491 = vmul.f32 %v1354, %v1227
      %v1492 = vmul.f32 %v1359, %v1230
      %v1493 = vmul.f32 %v1364, %v1232
      %v1494 = vmul.f32 %v1369, %v1235
      %v1495 = vmul.f32 %v1374, %v1237
      %v1496 = vmul.f32 %v1379, %v1240
      %v1497 = vmul.f32 %v1384, %v1242
      %v1498 = vmul.f32 %v1389, %v1245
      %v1499 = vmul.f32 %v1394, %v1247
      %v1500 = vmul.f32 %v1399, %v1250
      %v1501 = vmul.f32 %v1404, %v1252
      %v1502 = vmul.f32 %v1409, %v1255
      %v1503 = vmul.f32 %v1414, %v1257
      %v1504 = vmul.f32 %v1419, %v1260
      %v1505 = vmul.f32 %v1424, %v1262
      %v1506 = vmul.f32 %v1429, %v1265
      %v1507 = vmul.f32 %v1434, %v1267
      %v1508 = vmul.f32 %v1439, %v1270
      %v1509 = vmul.f32 %v1444, %v1272
      %v1510 = vmul.f32 %v1449, %v1275
      %v1511 = vmul.f32 %v1454, %v1277
      %v1512 = vmul.f32 %v1459, %v1280
      %v1513 = vmul.f32 %v1464, %v1282
      %v1514 = vmul.f32 %v1469, %v1285
      %v1515 = vmul.f32 %v1474, %v1287
      %v1516 = vmul.f32 %v1479, %v1290
      %v1517 = vmul.f32 %v1484, %v1292
      %v1518 = vmul.f32 %v1486, 0.9
      %v1519 = vmul.f32 %v1487, 0.9
      %v1520 = vmul.f32 %v1488, 0.9
      %v1521 = vmul.f32 %v1489, 0.9
      %v1522 = vmul.f32 %v1490, 0.9
      %v1523 = vmul.f32 %v1491, 0.9
      %v1524 = vmul.f32 %v1492, 0.9
      %v1525 = vmul.f32 %v1493, 0.9
      %v1526 = vmul.f32 %v1494, 0.9
      %v1527 = vmul.f32 %v1495, 0.9
      %v1528 = vmul.f32 %v1496, 0.9
      %v1529 = vmul.f32 %v1497, 0.9
      %v1530 = vmul.f32 %v1498, 0.9
      %v1531 = vmul.f32 %v1499, 0.9
      %v1532 = vmul.f32 %v1500, 0.9
      %v1533 = vmul.f32 %v1501, 0.9
      %v1534 = vmul.f32 %v1502, 0.9
      %v1535 = vmul.f32 %v1503, 0.9
      %v1536 = vmul.f32 %v1504, 0.9
      %v1537 = vmul.f32 %v1505, 0.9
      %v1538 = vmul.f32 %v1506, 0.9
      %v1539 = vmul.f32 %v1507, 0.9
      %v1540 = vmul.f32 %v1508, 0.9
      %v1541 = vmul.f32 %v1509, 0.9
      %v1542 = vmul.f32 %v1510, 0.9
      %v1543 = vmul.f32 %v1511, 0.9
      %v1544 = vmul.f32 %v1512, 0.9
      %v1545 = vmul.f32 %v1513, 0.9
      %v1546 = vmul.f32 %v1514, 0.9
      %v1547 = vmul.f32 %v1515, 0.9
      %v1548 = vmul.f32 %v1516, 0.9
      %v1549 = vmul.f32 %v1517, 0.9
      %v1550 = vld [vmem:[%s322] sm:$0xff]
      %v1551 = vld [vmem:[%s322 + $0x8] sm:$0xff]
      %v1552 = vld [vmem:[%s322 + $0x10] sm:$0xff]
      %v1553 = vld [vmem:[%s322 + $0x18] sm:$0xff]
      %v1554 = vld [vmem:[%s322 + $0x20] sm:$0xff]
      %v1555 = vld [vmem:[%s322 + $0x28] sm:$0xff]
      %v1556 = vld [vmem:[%s322 + $0x30] sm:$0xff]
      %v1557 = vld [vmem:[%s322 + $0x38] sm:$0xff]
      %v1558 = vld [vmem:[%s322 + $0x40] sm:$0xff]
      %v1559 = vld [vmem:[%s322 + $0x48] sm:$0xff]
      %v1560 = vld [vmem:[%s322 + $0x50] sm:$0xff]
      %v1561 = vld [vmem:[%s322 + $0x58] sm:$0xff]
      %v1562 = vld [vmem:[%s322 + $0x60] sm:$0xff]
      %v1563 = vld [vmem:[%s322 + $0x68] sm:$0xff]
      %v1564 = vld [vmem:[%s322 + $0x70] sm:$0xff]
      %v1565 = vld [vmem:[%s322 + $0x78] sm:$0xff]
      %v1566 = vld [vmem:[%s322 + $0x80] sm:$0xff]
      %v1567 = vld [vmem:[%s322 + $0x88] sm:$0xff]
      %v1568 = vld [vmem:[%s322 + $0x90] sm:$0xff]
      %v1569 = vld [vmem:[%s322 + $0x98] sm:$0xff]
      %v1570 = vld [vmem:[%s322 + $0xa0] sm:$0xff]
      %v1571 = vld [vmem:[%s322 + $0xa8] sm:$0xff]
      %v1572 = vld [vmem:[%s322 + $0xb0] sm:$0xff]
      %v1573 = vld [vmem:[%s322 + $0xb8] sm:$0xff]
      %v1574 = vld [vmem:[%s322 + $0xc0] sm:$0xff]
      %v1575 = vld [vmem:[%s322 + $0xc8] sm:$0xff]
      %v1576 = vld [vmem:[%s322 + $0xd0] sm:$0xff]
      %v1577 = vld [vmem:[%s322 + $0xd8] sm:$0xff]
      %v1578 = vld [vmem:[%s322 + $0xe0] sm:$0xff]
      %v1579 = vld [vmem:[%s322 + $0xe8] sm:$0xff]
      %v1580 = vld [vmem:[%s322 + $0xf0] sm:$0xff]
      %v1581 = vld [vmem:[%s322 + $0xf8] sm:$0xff]
      %v1582 = vmul.f32 %v1550, 0.1
      %v1583 = vmul.f32 %v1551, 0.1
      %v1584 = vmul.f32 %v1552, 0.1
      %v1585 = vmul.f32 %v1553, 0.1
      %v1586 = vmul.f32 %v1554, 0.1
      %v1587 = vmul.f32 %v1555, 0.1
      %v1588 = vmul.f32 %v1556, 0.1
      %v1589 = vmul.f32 %v1557, 0.1
      %v1590 = vmul.f32 %v1558, 0.1
      %v1591 = vmul.f32 %v1559, 0.1
      %v1592 = vmul.f32 %v1560, 0.1
      %v1593 = vmul.f32 %v1561, 0.1
      %v1594 = vmul.f32 %v1562, 0.1
      %v1595 = vmul.f32 %v1563, 0.1
      %v1596 = vmul.f32 %v1564, 0.1
      %v1597 = vmul.f32 %v1565, 0.1
      %v1598 = vmul.f32 %v1566, 0.1
      %v1599 = vmul.f32 %v1567, 0.1
      %v1600 = vmul.f32 %v1568, 0.1
      %v1601 = vmul.f32 %v1569, 0.1
      %v1602 = vmul.f32 %v1570, 0.1
      %v1603 = vmul.f32 %v1571, 0.1
      %v1604 = vmul.f32 %v1572, 0.1
      %v1605 = vmul.f32 %v1573, 0.1
      %v1606 = vmul.f32 %v1574, 0.1
      %v1607 = vmul.f32 %v1575, 0.1
      %v1608 = vmul.f32 %v1576, 0.1
      %v1609 = vmul.f32 %v1577, 0.1
      %v1610 = vmul.f32 %v1578, 0.1
      %v1611 = vmul.f32 %v1579, 0.1
      %v1612 = vmul.f32 %v1580, 0.1
      %v1613 = vmul.f32 %v1581, 0.1
      %v1614 = vadd.f32 %v1518, %v1582
      %v1615 = vadd.f32 %v1519, %v1583
      %v1616 = vadd.f32 %v1520, %v1584
      %v1617 = vadd.f32 %v1521, %v1585
      %v1618 = vadd.f32 %v1522, %v1586
      %v1619 = vadd.f32 %v1523, %v1587
      %v1620 = vadd.f32 %v1524, %v1588
      %v1621 = vadd.f32 %v1525, %v1589
      %v1622 = vadd.f32 %v1526, %v1590
      %v1623 = vadd.f32 %v1527, %v1591
      %v1624 = vadd.f32 %v1528, %v1592
      %v1625 = vadd.f32 %v1529, %v1593
      %v1626 = vadd.f32 %v1530, %v1594
      %v1627 = vadd.f32 %v1531, %v1595
      %v1628 = vadd.f32 %v1532, %v1596
      %v1629 = vadd.f32 %v1533, %v1597
      %v1630 = vadd.f32 %v1534, %v1598
      %v1631 = vadd.f32 %v1535, %v1599
      %v1632 = vadd.f32 %v1536, %v1600
      %v1633 = vadd.f32 %v1537, %v1601
      %v1634 = vadd.f32 %v1538, %v1602
      %v1635 = vadd.f32 %v1539, %v1603
      %v1636 = vadd.f32 %v1540, %v1604
      %v1637 = vadd.f32 %v1541, %v1605
      %v1638 = vadd.f32 %v1542, %v1606
      %v1639 = vadd.f32 %v1543, %v1607
      %v1640 = vadd.f32 %v1544, %v1608
      %v1641 = vadd.f32 %v1545, %v1609
      %v1642 = vadd.f32 %v1546, %v1610
      %v1643 = vadd.f32 %v1547, %v1611
      %v1644 = vadd.f32 %v1548, %v1612
      %v1645 = vadd.f32 %v1549, %v1613
      %v1646 = vpack.c.bf16 %v1615, %v1614
      %v1647 = vpack.c.bf16 %v1617, %v1616
      %v1648 = vpack.c.bf16 %v1619, %v1618
      %v1649 = vpack.c.bf16 %v1621, %v1620
      %v1650 = vpack.c.bf16 %v1623, %v1622
      %v1651 = vpack.c.bf16 %v1625, %v1624
      %v1652 = vpack.c.bf16 %v1627, %v1626
      %v1653 = vpack.c.bf16 %v1629, %v1628
      %v1654 = vpack.c.bf16 %v1631, %v1630
      %v1655 = vpack.c.bf16 %v1633, %v1632
      %v1656 = vpack.c.bf16 %v1635, %v1634
      %v1657 = vpack.c.bf16 %v1637, %v1636
      %v1658 = vpack.c.bf16 %v1639, %v1638
      %v1659 = vpack.c.bf16 %v1641, %v1640
      %v1660 = vpack.c.bf16 %v1643, %v1642
      %v1661 = vpack.c.bf16 %v1645, %v1644
      %v1662 = vld [vmem:[%s4] sm:$0xf]
      %v1663 = vld [vmem:[%s4 + $0x4] sm:$0xf]
      %v1664 = vld [vmem:[%s4 + $0x8] sm:$0xf]
      %v1665 = vld [vmem:[%s4 + $0xc] sm:$0xf]
      %v1666 = vld [vmem:[%s4 + $0x10] sm:$0xf]
      %v1667 = vld [vmem:[%s4 + $0x14] sm:$0xf]
      %v1668 = vld [vmem:[%s4 + $0x18] sm:$0xf]
      %v1669 = vld [vmem:[%s4 + $0x1c] sm:$0xf]
      %v1670 = vld [vmem:[%s4 + $0x20] sm:$0xf]
      %v1671 = vld [vmem:[%s4 + $0x24] sm:$0xf]
      %v1672 = vld [vmem:[%s4 + $0x28] sm:$0xf]
      %v1673 = vld [vmem:[%s4 + $0x2c] sm:$0xf]
      %v1674 = vld [vmem:[%s4 + $0x30] sm:$0xf]
      %v1675 = vld [vmem:[%s4 + $0x34] sm:$0xf]
      %v1676 = vld [vmem:[%s4 + $0x38] sm:$0xf]
      %v1677 = vld [vmem:[%s4 + $0x3c] sm:$0xf]
      %v1678 = vld [vmem:[%s5] sm:$0x1]
      %v1680 = vperm.slane %v1678, 0
      %v1698 = vunpack.c.l.b16 %v1662
      %v1699 = vunpack.c.l.b16 %v1663
      %v1700 = vunpack.c.l.b16 %v1664
      %v1701 = vunpack.c.l.b16 %v1665
      %v1702 = vunpack.c.l.b16 %v1666
      %v1703 = vunpack.c.l.b16 %v1667
      %v1704 = vunpack.c.l.b16 %v1668
      %v1705 = vunpack.c.l.b16 %v1669
      %v1706 = vunpack.c.l.b16 %v1670
      %v1707 = vunpack.c.l.b16 %v1671
      %v1708 = vunpack.c.l.b16 %v1672
      %v1709 = vunpack.c.l.b16 %v1673
      %v1710 = vunpack.c.l.b16 %v1674
      %v1711 = vunpack.c.l.b16 %v1675
      %v1712 = vunpack.c.l.b16 %v1676
      %v1713 = vunpack.c.l.b16 %v1677
      %v1714 = vpack.c.b16 %v1699, %v1698
      %v1715 = vpack.c.b16 %v1701, %v1700
      %v1716 = vpack.c.b16 %v1703, %v1702
      %v1717 = vpack.c.b16 %v1705, %v1704
      %v1718 = vpack.c.b16 %v1707, %v1706
      %v1719 = vpack.c.b16 %v1709, %v1708
      %v1720 = vpack.c.b16 %v1711, %v1710
      %v1721 = vpack.c.b16 %v1713, %v1712
      %1730 = vmatpush.bf16.msra.mxu0 %v1721
      %1731 = vmatpush.bf16.msra.mxu0 %v1720
      %1732 = vmatpush.bf16.msra.mxu0 %v1719
      %1733 = vmatpush.bf16.msra.mxu0 %v1718
      %1734 = vmatpush.bf16.msra.mxu0 %v1717
      %1735 = vmatpush.bf16.msra.mxu0 %v1716
      %1736 = vmatpush.bf16.msra.mxu0 %v1715
      %1737 = vmatpush.bf16.msra.mxu0 %v1714
      %1738 = vmatmul.bf16.gmra.mxu0 %v1646
      %v1739 = vpop.f32.mrf.mxu0
      %v1740 = vadd.f32 %v1680, %v1739
      %v1741 = vpop.f32.mrf.mxu0
      %v1742 = vadd.f32 %v1680, %v1741
      %1743 = vmatmul.bf16.gmra.mxu0 %v1647
      %v1744 = vpop.f32.mrf.mxu0
      %v1745 = vadd.f32 %v1680, %v1744
      %v1746 = vpop.f32.mrf.mxu0
      %v1747 = vadd.f32 %v1680, %v1746
      %1748 = vmatmul.bf16.gmra.mxu0 %v1648
      %v1749 = vpop.f32.mrf.mxu0
      %v1750 = vadd.f32 %v1680, %v1749
      %v1751 = vpop.f32.mrf.mxu0
      %v1752 = vadd.f32 %v1680, %v1751
      %1753 = vmatmul.bf16.gmra.mxu0 %v1649
      %v1754 = vpop.f32.mrf.mxu0
      %v1755 = vadd.f32 %v1680, %v1754
      %v1756 = vpop.f32.mrf.mxu0
      %v1757 = vadd.f32 %v1680, %v1756
      %1758 = vmatmul.bf16.gmra.mxu0 %v1650
      %v1759 = vpop.f32.mrf.mxu0
      %v1760 = vadd.f32 %v1680, %v1759
      %v1761 = vpop.f32.mrf.mxu0
      %v1762 = vadd.f32 %v1680, %v1761
      %1763 = vmatmul.bf16.gmra.mxu0 %v1651
      %v1764 = vpop.f32.mrf.mxu0
      %v1765 = vadd.f32 %v1680, %v1764
      %v1766 = vpop.f32.mrf.mxu0
      %v1767 = vadd.f32 %v1680, %v1766
      %1768 = vmatmul.bf16.gmra.mxu0 %v1652
      %v1769 = vpop.f32.mrf.mxu0
      %v1770 = vadd.f32 %v1680, %v1769
      %v1771 = vpop.f32.mrf.mxu0
      %v1772 = vadd.f32 %v1680, %v1771
      %1773 = vmatmul.bf16.gmra.mxu0 %v1653
      %v1774 = vpop.f32.mrf.mxu0
      %v1775 = vadd.f32 %v1680, %v1774
      %v1776 = vpop.f32.mrf.mxu0
      %v1777 = vadd.f32 %v1680, %v1776
      %1778 = vmatmul.bf16.gmra.mxu0 %v1654
      %v1779 = vpop.f32.mrf.mxu0
      %v1780 = vadd.f32 %v1680, %v1779
      %v1781 = vpop.f32.mrf.mxu0
      %v1782 = vadd.f32 %v1680, %v1781
      %1783 = vmatmul.bf16.gmra.mxu0 %v1655
      %v1784 = vpop.f32.mrf.mxu0
      %v1785 = vadd.f32 %v1680, %v1784
      %v1786 = vpop.f32.mrf.mxu0
      %v1787 = vadd.f32 %v1680, %v1786
      %1788 = vmatmul.bf16.gmra.mxu0 %v1656
      %v1789 = vpop.f32.mrf.mxu0
      %v1790 = vadd.f32 %v1680, %v1789
      %v1791 = vpop.f32.mrf.mxu0
      %v1792 = vadd.f32 %v1680, %v1791
      %1793 = vmatmul.bf16.gmra.mxu0 %v1657
      %v1794 = vpop.f32.mrf.mxu0
      %v1795 = vadd.f32 %v1680, %v1794
      %v1796 = vpop.f32.mrf.mxu0
      %v1797 = vadd.f32 %v1680, %v1796
      %1798 = vmatmul.bf16.gmra.mxu0 %v1658
      %v1799 = vpop.f32.mrf.mxu0
      %v1800 = vadd.f32 %v1680, %v1799
      %v1801 = vpop.f32.mrf.mxu0
      %v1802 = vadd.f32 %v1680, %v1801
      %1803 = vmatmul.bf16.gmra.mxu0 %v1659
      %v1804 = vpop.f32.mrf.mxu0
      %v1805 = vadd.f32 %v1680, %v1804
      %v1806 = vpop.f32.mrf.mxu0
      %v1807 = vadd.f32 %v1680, %v1806
      %1808 = vmatmul.bf16.gmra.mxu0 %v1660
      %v1809 = vpop.f32.mrf.mxu0
      %v1810 = vadd.f32 %v1680, %v1809
      %v1811 = vpop.f32.mrf.mxu0
      %v1812 = vadd.f32 %v1680, %v1811
      %1813 = vmatmul.bf16.gmra.mxu0 %v1661
      %v1814 = vpop.f32.mrf.mxu0
      %v1815 = vadd.f32 %v1680, %v1814
      %v1816 = vpop.f32.mrf.mxu0
      %v1817 = vadd.f32 %v1680, %v1816
      %1818 = vdwg.mxu0
      %v1819 = vmul.f32 %v1614, 0.7768564
      %v1820 = vmul.f32 %v1615, 0.7768564
      %v1821 = vmul.f32 %v1616, 0.7768564
      %v1822 = vmul.f32 %v1617, 0.7768564
      %v1823 = vmul.f32 %v1618, 0.7768564
      %v1824 = vmul.f32 %v1619, 0.7768564
      %v1825 = vmul.f32 %v1620, 0.7768564
      %v1826 = vmul.f32 %v1621, 0.7768564
      %v1827 = vmul.f32 %v1622, 0.7768564
      %v1828 = vmul.f32 %v1623, 0.7768564
      %v1829 = vmul.f32 %v1624, 0.7768564
      %v1830 = vmul.f32 %v1625, 0.7768564
      %v1831 = vmul.f32 %v1626, 0.7768564
      %v1832 = vmul.f32 %v1627, 0.7768564
      %v1833 = vmul.f32 %v1628, 0.7768564
      %v1834 = vmul.f32 %v1629, 0.7768564
      %v1835 = vmul.f32 %v1630, 0.7768564
      %v1836 = vmul.f32 %v1631, 0.7768564
      %v1837 = vmul.f32 %v1632, 0.7768564
      %v1838 = vmul.f32 %v1633, 0.7768564
      %v1839 = vmul.f32 %v1634, 0.7768564
      %v1840 = vmul.f32 %v1635, 0.7768564
      %v1841 = vmul.f32 %v1636, 0.7768564
      %v1842 = vmul.f32 %v1637, 0.7768564
      %v1843 = vmul.f32 %v1638, 0.7768564
      %v1844 = vmul.f32 %v1639, 0.7768564
      %v1845 = vmul.f32 %v1640, 0.7768564
      %v1846 = vmul.f32 %v1641, 0.7768564
      %v1847 = vmul.f32 %v1642, 0.7768564
      %v1848 = vmul.f32 %v1643, 0.7768564
      %v1849 = vmul.f32 %v1644, 0.7768564
      %v1850 = vmul.f32 %v1645, 0.7768564
      %v1851 = vmul.f32 %v1740, 0.22314355
      %v1852 = vmul.f32 %v1742, 0.22314355
      %v1853 = vmul.f32 %v1745, 0.22314355
      %v1854 = vmul.f32 %v1747, 0.22314355
      %v1855 = vmul.f32 %v1750, 0.22314355
      %v1856 = vmul.f32 %v1752, 0.22314355
      %v1857 = vmul.f32 %v1755, 0.22314355
      %v1858 = vmul.f32 %v1757, 0.22314355
      %v1859 = vmul.f32 %v1760, 0.22314355
      %v1860 = vmul.f32 %v1762, 0.22314355
      %v1861 = vmul.f32 %v1765, 0.22314355
      %v1862 = vmul.f32 %v1767, 0.22314355
      %v1863 = vmul.f32 %v1770, 0.22314355
      %v1864 = vmul.f32 %v1772, 0.22314355
      %v1865 = vmul.f32 %v1775, 0.22314355
      %v1866 = vmul.f32 %v1777, 0.22314355
      %v1867 = vmul.f32 %v1780, 0.22314355
      %v1868 = vmul.f32 %v1782, 0.22314355
      %v1869 = vmul.f32 %v1785, 0.22314355
      %v1870 = vmul.f32 %v1787, 0.22314355
      %v1871 = vmul.f32 %v1790, 0.22314355
      %v1872 = vmul.f32 %v1792, 0.22314355
      %v1873 = vmul.f32 %v1795, 0.22314355
      %v1874 = vmul.f32 %v1797, 0.22314355
      %v1875 = vmul.f32 %v1800, 0.22314355
      %v1876 = vmul.f32 %v1802, 0.22314355
      %v1877 = vmul.f32 %v1805, 0.22314355
      %v1878 = vmul.f32 %v1807, 0.22314355
      %v1879 = vmul.f32 %v1810, 0.22314355
      %v1880 = vmul.f32 %v1812, 0.22314355
      %v1881 = vmul.f32 %v1815, 0.22314355
      %v1882 = vmul.f32 %v1817, 0.22314355
      %v1883 = vadd.f32 %v1819, %v1851
      %v1884 = vadd.f32 %v1820, %v1852
      %v1885 = vadd.f32 %v1821, %v1853
      %v1886 = vadd.f32 %v1822, %v1854
      %v1887 = vadd.f32 %v1823, %v1855
      %v1888 = vadd.f32 %v1824, %v1856
      %v1889 = vadd.f32 %v1825, %v1857
      %v1890 = vadd.f32 %v1826, %v1858
      %v1891 = vadd.f32 %v1827, %v1859
      %v1892 = vadd.f32 %v1828, %v1860
      %v1893 = vadd.f32 %v1829, %v1861
      %v1894 = vadd.f32 %v1830, %v1862
      %v1895 = vadd.f32 %v1831, %v1863
      %v1896 = vadd.f32 %v1832, %v1864
      %v1897 = vadd.f32 %v1833, %v1865
      %v1898 = vadd.f32 %v1834, %v1866
      %v1899 = vadd.f32 %v1835, %v1867
      %v1900 = vadd.f32 %v1836, %v1868
      %v1901 = vadd.f32 %v1837, %v1869
      %v1902 = vadd.f32 %v1838, %v1870
      %v1903 = vadd.f32 %v1839, %v1871
      %v1904 = vadd.f32 %v1840, %v1872
      %v1905 = vadd.f32 %v1841, %v1873
      %v1906 = vadd.f32 %v1842, %v1874
      %v1907 = vadd.f32 %v1843, %v1875
      %v1908 = vadd.f32 %v1844, %v1876
      %v1909 = vadd.f32 %v1845, %v1877
      %v1910 = vadd.f32 %v1846, %v1878
      %v1911 = vadd.f32 %v1847, %v1879
      %v1912 = vadd.f32 %v1848, %v1880
      %v1913 = vadd.f32 %v1849, %v1881
      %v1914 = vadd.f32 %v1850, %v1882
      %v1915 = vpack.c.bf16 %v1883, %v1883
      %v1916 = vpack.c.bf16 %v1884, %v1884
      %v1917 = vpack.c.bf16 %v1885, %v1885
      %v1918 = vpack.c.bf16 %v1886, %v1886
      %v1919 = vpack.c.bf16 %v1887, %v1887
      %v1920 = vpack.c.bf16 %v1888, %v1888
      %v1921 = vpack.c.bf16 %v1889, %v1889
      %v1922 = vpack.c.bf16 %v1890, %v1890
      %v1923 = vpack.c.bf16 %v1891, %v1891
      %v1924 = vpack.c.bf16 %v1892, %v1892
      %v1925 = vpack.c.bf16 %v1893, %v1893
      %v1926 = vpack.c.bf16 %v1894, %v1894
      %v1927 = vpack.c.bf16 %v1895, %v1895
      %v1928 = vpack.c.bf16 %v1896, %v1896
      %v1929 = vpack.c.bf16 %v1897, %v1897
      %v1930 = vpack.c.bf16 %v1898, %v1898
      %v1931 = vpack.c.bf16 %v1899, %v1899
      %v1932 = vpack.c.bf16 %v1900, %v1900
      %v1933 = vpack.c.bf16 %v1901, %v1901
      %v1934 = vpack.c.bf16 %v1902, %v1902
      %v1935 = vpack.c.bf16 %v1903, %v1903
      %v1936 = vpack.c.bf16 %v1904, %v1904
      %v1937 = vpack.c.bf16 %v1905, %v1905
      %v1938 = vpack.c.bf16 %v1906, %v1906
      %v1939 = vpack.c.bf16 %v1907, %v1907
      %v1940 = vpack.c.bf16 %v1908, %v1908
      %v1941 = vpack.c.bf16 %v1909, %v1909
      %v1942 = vpack.c.bf16 %v1910, %v1910
      %v1943 = vpack.c.bf16 %v1911, %v1911
      %v1944 = vpack.c.bf16 %v1912, %v1912
      %v1945 = vpack.c.bf16 %v1913, %v1913
      %v1946 = vpack.c.bf16 %v1914, %v1914
      %1947 = vst [vmem:[%s328] sm:$0xf] %v1915
      %1948 = vst [vmem:[%s328 + $0x4] sm:$0xf] %v1916
      %1949 = vst [vmem:[%s328 + $0x8] sm:$0xf] %v1917
      %1950 = vst [vmem:[%s328 + $0xc] sm:$0xf] %v1918
      %1951 = vst [vmem:[%s328 + $0x10] sm:$0xf] %v1919
      %1952 = vst [vmem:[%s328 + $0x14] sm:$0xf] %v1920
      %1953 = vst [vmem:[%s328 + $0x18] sm:$0xf] %v1921
      %1954 = vst [vmem:[%s328 + $0x1c] sm:$0xf] %v1922
      %1955 = vst [vmem:[%s328 + $0x20] sm:$0xf] %v1923
      %1956 = vst [vmem:[%s328 + $0x24] sm:$0xf] %v1924
      %1957 = vst [vmem:[%s328 + $0x28] sm:$0xf] %v1925
      %1958 = vst [vmem:[%s328 + $0x2c] sm:$0xf] %v1926
      %1959 = vst [vmem:[%s328 + $0x30] sm:$0xf] %v1927
      %1960 = vst [vmem:[%s328 + $0x34] sm:$0xf] %v1928
      %1961 = vst [vmem:[%s328 + $0x38] sm:$0xf] %v1929
      %1962 = vst [vmem:[%s328 + $0x3c] sm:$0xf] %v1930
      %1963 = vst [vmem:[%s328 + $0x40] sm:$0xf] %v1931
      %1964 = vst [vmem:[%s328 + $0x44] sm:$0xf] %v1932
      %1965 = vst [vmem:[%s328 + $0x48] sm:$0xf] %v1933
      %1966 = vst [vmem:[%s328 + $0x4c] sm:$0xf] %v1934
      %1967 = vst [vmem:[%s328 + $0x50] sm:$0xf] %v1935
      %1968 = vst [vmem:[%s328 + $0x54] sm:$0xf] %v1936
      %1969 = vst [vmem:[%s328 + $0x58] sm:$0xf] %v1937
      %1970 = vst [vmem:[%s328 + $0x5c] sm:$0xf] %v1938
      %1971 = vst [vmem:[%s328 + $0x60] sm:$0xf] %v1939
      %1972 = vst [vmem:[%s328 + $0x64] sm:$0xf] %v1940
      %1973 = vst [vmem:[%s328 + $0x68] sm:$0xf] %v1941
      %1974 = vst [vmem:[%s328 + $0x6c] sm:$0xf] %v1942
      %1975 = vst [vmem:[%s328 + $0x70] sm:$0xf] %v1943
      %1976 = vst [vmem:[%s328 + $0x74] sm:$0xf] %v1944
      %1977 = vst [vmem:[%s328 + $0x78] sm:$0xf] %v1945
      %1978 = vst [vmem:[%s328 + $0x7c] sm:$0xf] %v1946
      %s1979 = smul.u32 32, %s21
      %p1980 = scmp.lt.s32.totalorder %s1979, 63
      %s1981 = scalar_select %p1980, %s1979, 63
      %s1982 = smul.addr %s1981, 4
      %s1983 = scalar_lea.vmem %s6, %s1982
      // Predicated region
      $region45: #{hyper_resid_gcn_forward.10} parent=43 // pred_check
        %p1984 = pneg %p190
      $region46: #{hyper_resid_gcn_forward.10} parent=43 // pred_check_branch
        %1986 = sbr.rel (%p1984) target = $region48
      $region47: #{hyper_resid_gcn_forward.10} parent=43 // pred_region
        %s1987 = smul.u32 32, %s21
      $region48: #{hyper_resid_gcn_forward.10} parent=43 // pred_fallthru
        _
    $region44: #{hyper_resid_gcn_forward.10} parent=5 // pred_fallthru
      _
    %p1988 = scmp.le.s32.totalorder 2, %s12
    // Predicated region
    $region49: #{hyper_resid_gcn_forward.10} parent=5 // pred_check
      %p1989 = pneg %p1988
    $region50: #{hyper_resid_gcn_forward.10} parent=5 // pred_check_branch
      %1991 = sbr.rel (%p1989) target = $region52
    $region51: #{hyper_resid_gcn_forward.10} parent=5 // pred_region
      %s1992 = ssub.s32 %s12, 2
      // Predicated region
      $region53: #{hyper_resid_gcn_forward.10} parent=51 // pred_check
        %p1993 = pneg %p196
      $region54: #{hyper_resid_gcn_forward.10} parent=51 // pred_check_branch
        %1995 = sbr.rel (%p1993) target = $region56
      $region55: #{hyper_resid_gcn_forward.10} parent=51 // pred_region
        %s1996 = smul.u32 32, %s23
        %p1997 = scmp.lt.s32.totalorder %s1996, 63
        %s1998 = scalar_select %p1997, %s1996, 63
        %s1999 = smul.addr %s1998, 4
        %s2000 = scalar_lea.vmem %s6, %s1999
      $region56: #{hyper_resid_gcn_forward.10} parent=51 // pred_fallthru
        _
    $region52: #{hyper_resid_gcn_forward.10} parent=5 // pred_fallthru
      _
  $region6: #{hyper_resid_gcn_forward.10} parent=0 // loop_footer
    %s16 = sadd.s32 1, %s12
  $region7: #{hyper_resid_gcn_forward.10} parent=0 // loop_footer_branch
    %11 = sbr.rel target = $region3
  $region8: #{hyper_resid_gcn_forward.10} parent=0 // loop_exit
    _

// kernel: hyper_resid_gcn_forward.8
$region0: #{hyper_resid_gcn_forward.8}
  #allocation0 [shape = 'u32[]', space=smem, size = 0x4, offset = 0x4, fixed_abs, tag = 'smem constant byte address 0x4 - core index']
  #allocation1 [shape = 'u32[72,128]{1,0:T(1,128)}', space=vmem, size = 0x9000, scoped, tag = 'internal scratch']
  %s0 = inlined_call_operand.vmem [shape: s8[512,512], index: 0, kind: input, shape index: {}]
  %s1 = inlined_call_operand.vmem [shape: bf16[512,128], index: 1, kind: input, shape index: {}]
  %s2 = inlined_call_operand.vmem [shape: f32[512,1], index: 2, kind: input, shape index: {}]
  %s3 = inlined_call_operand.vmem [shape: f32[512,128], index: 3, kind: input, shape index: {}]
  %s4 = inlined_call_operand.vmem [shape: bf16[128,128], index: 4, kind: input, shape index: {}]
  %s5 = inlined_call_operand.vmem [shape: f32[1,128], index: 5, kind: input, shape index: {}]
  %s6 = inlined_call_operand.vmem [shape: bf16[512,128], index: 6, kind: output, shape index: {}]
  %s7 = sld [smem:[#allocation0]]
  $region57: #{hyper_resid_gcn_forward.8} parent=0
    _
  %s9 = ssub.s32 1, %s7
  %s10 = scalar_select 0, %s9, %s7
  loop: start=0, step=1, limit=4
  $region2: #{hyper_resid_gcn_forward.8} parent=0 // loop_pre_header
    _
  $region3: #{hyper_resid_gcn_forward.8} parent=0 // loop_header
    %s12 = sphi 0, %s16
    %p13 = scmp.ge.s32.totalorder %s12, 4
    %s19 = sphi 0, %s31
    %s20 = sphi 0, %s27
    %s21 = sphi 0, %s19
    %s22 = sphi 0, %s20
    %s23 = sphi 0, %s21
    %s24 = sphi 0, %s22
    %s36 = sphi 0, %s38
    %s39 = sphi 0, %s36
    %s40 = sphi 0, %s39
    %s56 = sphi 0, %s40
    %s60 = sphi 0, %s60
    %s62 = sphi 0, %s60
    %s63 = sphi 0, %s62
    %s77 = sphi 0, %s63
    %s83 = sphi 0, %s85
    %s86 = sphi 0, %s83
    %s87 = sphi 0, %s86
    %s103 = sphi 0, %s87
    %s109 = sphi 0, %s111
    %s112 = sphi 0, %s109
    %s113 = sphi 0, %s112
    %s129 = sphi 0, %s113
    %s133 = sphi 0, %s133
    %s135 = sphi 0, %s133
    %s136 = sphi 0, %s135
    %s150 = sphi 0, %s136
    %s154 = sphi 0, %s154
    %s156 = sphi 0, %s154
    %s157 = sphi 0, %s156
    %s171 = sphi 0, %s157
    %s177 = sphi 0, %s179
    %s180 = sphi 0, %s177
    %s181 = sphi 0, %s180
    %s197 = sphi 0, %s181
  $region4: #{hyper_resid_gcn_forward.8} parent=0 // loop_header_branch
    %15 = sbr.rel (%p13) target = $region8
  $region5: #{hyper_resid_gcn_forward.8} parent=0 // loop_body
    %s17 = ssub.s32 %s12, 1
    %s18 = ssub.s32 %s12, 2
    %s25 = sadd.s32 1, %s20
    %p26 = scmp.ge.s32.totalorder %s25, 1
    %s27 = scalar_select %p26, 0, %s25
    %s28 = sadd.s32 1, %s19
    %s29 = scalar_select %p26, %s28, %s19
    %p30 = scmp.ge.s32.totalorder %s29, 2
    %s31 = scalar_select %p30, 0, %s29
    %s32 = ssub.s32 %s19, %s31
    %s33 = ssub.s32 %s20, %s27
    %s34 = sor.u32 %s32, %s33
    %p35 = scmp.eq.s32.totalorder %s34, 0
    %s37 = sadd.s32 %s36, 1
    %s38 = scalar_select %p35, %s36, %s37
    %p41 = pneg %p35
    %p42 = scmp.eq.s32.totalorder %s12, 1
    %p43 = por %p41, %p42
    %p44 = scmp.ne.s32.totalorder %s36, %s39
    %p45 = scmp.eq.s32.totalorder %s12, 0
    %p46 = por %p44, %p45
    %p47 = scmp.ne.s32.totalorder %s36, %s39
    %p48 = scmp.eq.s32.totalorder %s17, 1
    %p49 = por %p47, %p48
    %p50 = scmp.ne.s32.totalorder %s39, %s40
    %p51 = scmp.eq.s32.totalorder %s17, 0
    %p52 = por %p50, %p51
    %p53 = scmp.ne.s32.totalorder %s39, %s40
    %p54 = scmp.eq.s32.totalorder %s18, 1
    %p55 = por %p53, %p54
    %p57 = scmp.ne.s32.totalorder %s40, %s56
    %p58 = scmp.eq.s32.totalorder %s18, 0
    %p59 = por %p57, %p58
    %s61 = sadd.s32 %s60, 1
    %p64 = scmp.eq.s32.totalorder %s12, 1
    %p65 = scmp.ne.s32.totalorder %s60, %s62
    %p66 = scmp.eq.s32.totalorder %s12, 0
    %p67 = por %p65, %p66
    %p68 = scmp.ne.s32.totalorder %s60, %s62
    %p69 = scmp.eq.s32.totalorder %s17, 1
    %p70 = por %p68, %p69
    %p71 = scmp.ne.s32.totalorder %s62, %s63
    %p72 = scmp.eq.s32.totalorder %s17, 0
    %p73 = por %p71, %p72
    %p74 = scmp.ne.s32.totalorder %s62, %s63
    %p75 = scmp.eq.s32.totalorder %s18, 1
    %p76 = por %p74, %p75
    %p78 = scmp.ne.s32.totalorder %s63, %s77
    %p79 = scmp.eq.s32.totalorder %s18, 0
    %p80 = por %p78, %p79
    %s81 = ssub.s32 %s19, %s31
    %p82 = scmp.eq.s32.totalorder %s81, 0
    %s84 = sadd.s32 %s83, 1
    %s85 = scalar_select %p82, %s83, %s84
    %p88 = pneg %p82
    %p89 = scmp.eq.s32.totalorder %s12, 1
    %p90 = por %p88, %p89
    %p91 = scmp.ne.s32.totalorder %s83, %s86
    %p92 = scmp.eq.s32.totalorder %s12, 0
    %p93 = por %p91, %p92
    %p94 = scmp.ne.s32.totalorder %s83, %s86
    %p95 = scmp.eq.s32.totalorder %s17, 1
    %p96 = por %p94, %p95
    %p97 = scmp.ne.s32.totalorder %s86, %s87
    %p98 = scmp.eq.s32.totalorder %s17, 0
    %p99 = por %p97, %p98
    %p100 = scmp.ne.s32.totalorder %s86, %s87
    %p101 = scmp.eq.s32.totalorder %s18, 1
    %p102 = por %p100, %p101
    %p104 = scmp.ne.s32.totalorder %s87, %s103
    %p105 = scmp.eq.s32.totalorder %s18, 0
    %p106 = por %p104, %p105
    %s107 = ssub.s32 %s19, %s31
    %p108 = scmp.eq.s32.totalorder %s107, 0
    %s110 = sadd.s32 %s109, 1
    %s111 = scalar_select %p108, %s109, %s110
    %p114 = pneg %p108
    %p115 = scmp.eq.s32.totalorder %s12, 1
    %p116 = por %p114, %p115
    %p117 = scmp.ne.s32.totalorder %s109, %s112
    %p118 = scmp.eq.s32.totalorder %s12, 0
    %p119 = por %p117, %p118
    %p120 = scmp.ne.s32.totalorder %s109, %s112
    %p121 = scmp.eq.s32.totalorder %s17, 1
    %p122 = por %p120, %p121
    %p123 = scmp.ne.s32.totalorder %s112, %s113
    %p124 = scmp.eq.s32.totalorder %s17, 0
    %p125 = por %p123, %p124
    %p126 = scmp.ne.s32.totalorder %s112, %s113
    %p127 = scmp.eq.s32.totalorder %s18, 1
    %p128 = por %p126, %p127
    %p130 = scmp.ne.s32.totalorder %s113, %s129
    %p131 = scmp.eq.s32.totalorder %s18, 0
    %p132 = por %p130, %p131
    %s134 = sadd.s32 %s133, 1
    %p137 = scmp.eq.s32.totalorder %s12, 1
    %p138 = scmp.ne.s32.totalorder %s133, %s135
    %p139 = scmp.eq.s32.totalorder %s12, 0
    %p140 = por %p138, %p139
    %p141 = scmp.ne.s32.totalorder %s133, %s135
    %p142 = scmp.eq.s32.totalorder %s17, 1
    %p143 = por %p141, %p142
    %p144 = scmp.ne.s32.totalorder %s135, %s136
    %p145 = scmp.eq.s32.totalorder %s17, 0
    %p146 = por %p144, %p145
    %p147 = scmp.ne.s32.totalorder %s135, %s136
    %p148 = scmp.eq.s32.totalorder %s18, 1
    %p149 = por %p147, %p148
    %p151 = scmp.ne.s32.totalorder %s136, %s150
    %p152 = scmp.eq.s32.totalorder %s18, 0
    %p153 = por %p151, %p152
    %s155 = sadd.s32 %s154, 1
    %p158 = scmp.eq.s32.totalorder %s12, 1
    %p159 = scmp.ne.s32.totalorder %s154, %s156
    %p160 = scmp.eq.s32.totalorder %s12, 0
    %p161 = por %p159, %p160
    %p162 = scmp.ne.s32.totalorder %s154, %s156
    %p163 = scmp.eq.s32.totalorder %s17, 1
    %p164 = por %p162, %p163
    %p165 = scmp.ne.s32.totalorder %s156, %s157
    %p166 = scmp.eq.s32.totalorder %s17, 0
    %p167 = por %p165, %p166
    %p168 = scmp.ne.s32.totalorder %s156, %s157
    %p169 = scmp.eq.s32.totalorder %s18, 1
    %p170 = por %p168, %p169
    %p172 = scmp.ne.s32.totalorder %s157, %s171
    %p173 = scmp.eq.s32.totalorder %s18, 0
    %p174 = por %p172, %p173
    %s175 = ssub.s32 %s19, %s31
    %p176 = scmp.eq.s32.totalorder %s175, 0
    %s178 = sadd.s32 %s177, 1
    %s179 = scalar_select %p176, %s177, %s178
    %p182 = pneg %p176
    %p183 = scmp.eq.s32.totalorder %s12, 1
    %p184 = por %p182, %p183
    %p185 = scmp.ne.s32.totalorder %s177, %s180
    %p186 = scmp.eq.s32.totalorder %s12, 0
    %p187 = por %p185, %p186
    %p188 = scmp.ne.s32.totalorder %s177, %s180
    %p189 = scmp.eq.s32.totalorder %s17, 1
    %p190 = por %p188, %p189
    %p191 = scmp.ne.s32.totalorder %s180, %s181
    %p192 = scmp.eq.s32.totalorder %s17, 0
    %p193 = por %p191, %p192
    %p194 = scmp.ne.s32.totalorder %s180, %s181
    %p195 = scmp.eq.s32.totalorder %s18, 1
    %p196 = por %p194, %p195
    %p198 = scmp.ne.s32.totalorder %s181, %s197
    %p199 = scmp.eq.s32.totalorder %s18, 0
    %p200 = por %p198, %p199
    %p201 = scmp.le.s32.totalorder 1, %s12
    %p202 = scmp.lt.s32.totalorder %s12, 3
    %p203 = pnand %p201, %p202
    %p204 = pneg %p203
    // Predicated region
    $region9: #{hyper_resid_gcn_forward.8} parent=5 // pred_check
      _
    $region10: #{hyper_resid_gcn_forward.8} parent=5 // pred_check_branch
      %206 = sbr.rel (%p203) target = $region12
    $region11: #{hyper_resid_gcn_forward.8} parent=5 // pred_region
      %s207 = ssub.s32 %s12, 1
      // Predicated region
      $region13: #{hyper_resid_gcn_forward.8} parent=11 // pred_check
        %p208 = pneg %p73
      $region14: #{hyper_resid_gcn_forward.8} parent=11 // pred_check_branch
        %210 = sbr.rel (%p208) target = $region16
      $region15: #{hyper_resid_gcn_forward.8} parent=11 // pred_region
        _
      $region16: #{hyper_resid_gcn_forward.8} parent=11 // pred_fallthru
        _
      // Predicated region
      $region17: #{hyper_resid_gcn_forward.8} parent=11 // pred_check
        %p211 = pneg %p146
      $region18: #{hyper_resid_gcn_forward.8} parent=11 // pred_check_branch
        %213 = sbr.rel (%p211) target = $region20
      $region19: #{hyper_resid_gcn_forward.8} parent=11 // pred_region
        _
      $region20: #{hyper_resid_gcn_forward.8} parent=11 // pred_fallthru
        _
      // Predicated region
      $region21: #{hyper_resid_gcn_forward.8} parent=11 // pred_check
        %p214 = pneg %p167
      $region22: #{hyper_resid_gcn_forward.8} parent=11 // pred_check_branch
        %216 = sbr.rel (%p214) target = $region24
      $region23: #{hyper_resid_gcn_forward.8} parent=11 // pred_region
        _
      $region24: #{hyper_resid_gcn_forward.8} parent=11 // pred_fallthru
        _
    $region12: #{hyper_resid_gcn_forward.8} parent=5 // pred_fallthru
      _
    %p217 = scmp.lt.s32.totalorder %s12, 2
    // Predicated region
    $region25: #{hyper_resid_gcn_forward.8} parent=5 // pred_check
      %p218 = pneg %p217
    $region26: #{hyper_resid_gcn_forward.8} parent=5 // pred_check_branch
      %220 = sbr.rel (%p218) target = $region28
    $region27: #{hyper_resid_gcn_forward.8} parent=5 // pred_region
      // Predicated region
      $region29: #{hyper_resid_gcn_forward.8} parent=27 // pred_check
        %p221 = pneg %p46
      $region30: #{hyper_resid_gcn_forward.8} parent=27 // pred_check_branch
        %223 = sbr.rel (%p221) target = $region32
      $region31: #{hyper_resid_gcn_forward.8} parent=27 // pred_region
        %s224 = smul.u32 8, %s19
        %s225 = smul.u32 4, %s20
        %p226 = scmp.lt.s32.totalorder %s224, 15
        %s227 = scalar_select %p226, %s224, 15
        %p228 = scmp.lt.s32.totalorder %s225, 3
        %s229 = scalar_select %p228, %s225, 3
        %s230 = smul.addr %s227, 4
        %s231 = sadd.s32 %s229, %s230
        %s232 = smul.addr %s231, 8
        %s233 = scalar_lea.vmem %s0, %s232
        %s234 = smul.u32 8, %s19
        %s235 = smul.u32 4, %s20
      $region32: #{hyper_resid_gcn_forward.8} parent=27 // pred_fallthru
        _
      // Predicated region
      $region33: #{hyper_resid_gcn_forward.8} parent=27 // pred_check
        %p236 = pneg %p93
      $region34: #{hyper_resid_gcn_forward.8} parent=27 // pred_check_branch
        %238 = sbr.rel (%p236) target = $region36
      $region35: #{hyper_resid_gcn_forward.8} parent=27 // pred_region
        %s239 = smul.u32 32, %s19
        %p240 = scmp.lt.s32.totalorder %s239, 63
        %s241 = scalar_select %p240, %s239, 63
        %s242 = smul.addr %s241, 8
        %s243 = scalar_lea.vmem %s2, %s242
        %s244 = smul.u32 32, %s19
      $region36: #{hyper_resid_gcn_forward.8} parent=27 // pred_fallthru
        _
      // Predicated region
      $region37: #{hyper_resid_gcn_forward.8} parent=27 // pred_check
        %p245 = pneg %p119
      $region38: #{hyper_resid_gcn_forward.8} parent=27 // pred_check_branch
        %247 = sbr.rel (%p245) target = $region40
      $region39: #{hyper_resid_gcn_forward.8} parent=27 // pred_region
        %s248 = smul.u32 32, %s19
        %p249 = scmp.lt.s32.totalorder %s248, 63
        %s250 = scalar_select %p249, %s248, 63
        %s251 = smul.addr %s250, 8
        %s252 = scalar_lea.vmem %s3, %s251
        %s253 = smul.u32 32, %s19
      $region40: #{hyper_resid_gcn_forward.8} parent=27 // pred_fallthru
        _
    $region28: #{hyper_resid_gcn_forward.8} parent=5 // pred_fallthru
      _
    %p254 = scmp.le.s32.totalorder 1, %s12
    %p255 = scmp.lt.s32.totalorder %s12, 3
    %p256 = pnand %p254, %p255
    %p257 = pneg %p256
    // Predicated region
    $region41: #{hyper_resid_gcn_forward.8} parent=5 // pred_check
      _
    $region42: #{hyper_resid_gcn_forward.8} parent=5 // pred_check_branch
      %259 = sbr.rel (%p256) target = $region44
    $region43: #{hyper_resid_gcn_forward.8} parent=5 // pred_region
      %s260 = ssub.s32 %s12, 1
      %s261 = smul.u32 8, %s21
      %s262 = smul.u32 4, %s22
      %p263 = scmp.lt.s32.totalorder %s261, 15
      %s264 = scalar_select %p263, %s261, 15
      %p265 = scmp.lt.s32.totalorder %s262, 3
      %s266 = scalar_select %p265, %s262, 3
      %s267 = smul.addr %s264, 4
      %s268 = sadd.s32 %s266, %s267
      %s269 = smul.addr %s268, 8
      %s270 = scalar_lea.vmem %s0, %s269
      %p271 = pneg %p52
      %p272 = pneg %p49
      %p273 = pneg %p73
      %p274 = pneg %p70
      %s275 = smul.u32 32, %s21
      %p276 = scmp.lt.s32.totalorder %s275, 63
      %s277 = scalar_select %p276, %s275, 63
      %s278 = smul.addr %s277, 8
      %s279 = scalar_lea.vmem %s2, %s278
      %p280 = pneg %p99
      %p281 = pneg %p96
      %s282 = smul.u32 32, %s21
      %p283 = scmp.lt.s32.totalorder %s282, 63
      %s284 = scalar_select %p283, %s282, 63
      %s285 = smul.addr %s284, 8
      %s286 = scalar_lea.vmem %s3, %s285
      %p287 = pneg %p125
      %p288 = pneg %p122
      %p289 = pneg %p146
      %p290 = pneg %p143
      %p291 = pneg %p167
      %p292 = pneg %p164
      %p293 = pneg %p193
      %p294 = pneg %p190
      %s295 = smul.u32 32, %s21
      %p296 = scmp.lt.s32.totalorder %s295, 63
      %s297 = scalar_select %p296, %s295, 63
      %s298 = smul.addr %s297, 4
      %s299 = scalar_lea.vmem %s6, %s298
      %s300 = smul.u32 8, %s21
      %s301 = smul.u32 4, %s22
      %p302 = scmp.lt.s32.totalorder %s300, 15
      %s303 = scalar_select %p302, %s300, 15
      %p304 = scmp.lt.s32.totalorder %s301, 3
      %s305 = scalar_select %p304, %s301, 3
      %s306 = smul.addr %s303, 4
      %s307 = sadd.s32 %s305, %s306
      %s308 = smul.addr %s307, 8
      %s309 = scalar_lea.vmem %s0, %s308
      %s310 = smul.u32 8, %s21
      %s311 = smul.u32 4, %s22
      %s312 = smul.u32 32, %s21
      %p313 = scmp.lt.s32.totalorder %s312, 63
      %s314 = scalar_select %p313, %s312, 63
      %s315 = smul.addr %s314, 8
      %s316 = scalar_lea.vmem %s2, %s315
      %s317 = smul.u32 32, %s21
      %s318 = smul.u32 32, %s21
      %p319 = scmp.lt.s32.totalorder %s318, 63
      %s320 = scalar_select %p319, %s318, 63
      %s321 = smul.addr %s320, 8
      %s322 = scalar_lea.vmem %s3, %s321
      %s323 = smul.u32 32, %s21
      %s324 = smul.u32 32, %s21
      %p325 = scmp.lt.s32.totalorder %s324, 63
      %s326 = scalar_select %p325, %s324, 63
      %s327 = smul.addr %s326, 4
      %s328 = scalar_lea.vmem %s6, %s327
      %s329 = smul.u32 32, %s21
      %v330 = vld [vmem:[%s1] sm:$0xf]
      %v331 = vld [vmem:[%s1 + $0x4] sm:$0xf]
      %v332 = vld [vmem:[%s1 + $0x8] sm:$0xf]
      %v333 = vld [vmem:[%s1 + $0xc] sm:$0xf]
      %v334 = vld [vmem:[%s1 + $0x10] sm:$0xf]
      %v335 = vld [vmem:[%s1 + $0x14] sm:$0xf]
      %v336 = vld [vmem:[%s1 + $0x18] sm:$0xf]
      %v337 = vld [vmem:[%s1 + $0x1c] sm:$0xf]
      %v338 = vld [vmem:[%s1 + $0x20] sm:$0xf]
      %v339 = vld [vmem:[%s1 + $0x24] sm:$0xf]
      %v340 = vld [vmem:[%s1 + $0x28] sm:$0xf]
      %v341 = vld [vmem:[%s1 + $0x2c] sm:$0xf]
      %v342 = vld [vmem:[%s1 + $0x30] sm:$0xf]
      %v343 = vld [vmem:[%s1 + $0x34] sm:$0xf]
      %v344 = vld [vmem:[%s1 + $0x38] sm:$0xf]
      %v345 = vld [vmem:[%s1 + $0x3c] sm:$0xf]
      %v346 = vld [vmem:[%s1 + $0x40] sm:$0xf]
      %v347 = vld [vmem:[%s1 + $0x44] sm:$0xf]
      %v348 = vld [vmem:[%s1 + $0x48] sm:$0xf]
      %v349 = vld [vmem:[%s1 + $0x4c] sm:$0xf]
      %v350 = vld [vmem:[%s1 + $0x50] sm:$0xf]
      %v351 = vld [vmem:[%s1 + $0x54] sm:$0xf]
      %v352 = vld [vmem:[%s1 + $0x58] sm:$0xf]
      %v353 = vld [vmem:[%s1 + $0x5c] sm:$0xf]
      %v354 = vld [vmem:[%s1 + $0x60] sm:$0xf]
      %v355 = vld [vmem:[%s1 + $0x64] sm:$0xf]
      %v356 = vld [vmem:[%s1 + $0x68] sm:$0xf]
      %v357 = vld [vmem:[%s1 + $0x6c] sm:$0xf]
      %v358 = vld [vmem:[%s1 + $0x70] sm:$0xf]
      %v359 = vld [vmem:[%s1 + $0x74] sm:$0xf]
      %v360 = vld [vmem:[%s1 + $0x78] sm:$0xf]
      %v361 = vld [vmem:[%s1 + $0x7c] sm:$0xf]
      %v362 = vld [vmem:[%s1 + $0x80] sm:$0xf]
      %v363 = vld [vmem:[%s1 + $0x84] sm:$0xf]
      %v364 = vld [vmem:[%s1 + $0x88] sm:$0xf]
      %v365 = vld [vmem:[%s1 + $0x8c] sm:$0xf]
      %v366 = vld [vmem:[%s1 + $0x90] sm:$0xf]
      %v367 = vld [vmem:[%s1 + $0x94] sm:$0xf]
      %v368 = vld [vmem:[%s1 + $0x98] sm:$0xf]
      %v369 = vld [vmem:[%s1 + $0x9c] sm:$0xf]
      %v370 = vld [vmem:[%s1 + $0xa0] sm:$0xf]
      %v371 = vld [vmem:[%s1 + $0xa4] sm:$0xf]
      %v372 = vld [vmem:[%s1 + $0xa8] sm:$0xf]
      %v373 = vld [vmem:[%s1 + $0xac] sm:$0xf]
      %v374 = vld [vmem:[%s1 + $0xb0] sm:$0xf]
      %v375 = vld [vmem:[%s1 + $0xb4] sm:$0xf]
      %v376 = vld [vmem:[%s1 + $0xb8] sm:$0xf]
      %v377 = vld [vmem:[%s1 + $0xbc] sm:$0xf]
      %v378 = vld [vmem:[%s1 + $0xc0] sm:$0xf]
      %v379 = vld [vmem:[%s1 + $0xc4] sm:$0xf]
      %v380 = vld [vmem:[%s1 + $0xc8] sm:$0xf]
      %v381 = vld [vmem:[%s1 + $0xcc] sm:$0xf]
      %v382 = vld [vmem:[%s1 + $0xd0] sm:$0xf]
      %v383 = vld [vmem:[%s1 + $0xd4] sm:$0xf]
      %v384 = vld [vmem:[%s1 + $0xd8] sm:$0xf]
      %v385 = vld [vmem:[%s1 + $0xdc] sm:$0xf]
      %v386 = vld [vmem:[%s1 + $0xe0] sm:$0xf]
      %v387 = vld [vmem:[%s1 + $0xe4] sm:$0xf]
      %v388 = vld [vmem:[%s1 + $0xe8] sm:$0xf]
      %v389 = vld [vmem:[%s1 + $0xec] sm:$0xf]
      %v390 = vld [vmem:[%s1 + $0xf0] sm:$0xf]
      %v391 = vld [vmem:[%s1 + $0xf4] sm:$0xf]
      %v392 = vld [vmem:[%s1 + $0xf8] sm:$0xf]
      %v393 = vld [vmem:[%s1 + $0xfc] sm:$0xf]
      %v394 = vld [vmem:[%s309] sm:$0xff]
      %v395 = vld [vmem:[%s309 + $0x8] sm:$0xff]
      %v396 = vld [vmem:[%s309 + $0x10] sm:$0xff]
      %v397 = vld [vmem:[%s309 + $0x18] sm:$0xff]
      %v398 = vld [vmem:[%s309 + $0x20] sm:$0xff]
      %v399 = vld [vmem:[%s309 + $0x28] sm:$0xff]
      %v400 = vld [vmem:[%s309 + $0x30] sm:$0xff]
      %v401 = vld [vmem:[%s309 + $0x38] sm:$0xff]
      %v402 = vld [vmem:[%s309 + $0x40] sm:$0xff]
      %v403 = vld [vmem:[%s309 + $0x48] sm:$0xff]
      %v404 = vld [vmem:[%s309 + $0x50] sm:$0xff]
      %v405 = vld [vmem:[%s309 + $0x58] sm:$0xff]
      %v406 = vld [vmem:[%s309 + $0x60] sm:$0xff]
      %v407 = vld [vmem:[%s309 + $0x68] sm:$0xff]
      %v408 = vld [vmem:[%s309 + $0x70] sm:$0xff]
      %v409 = vld [vmem:[%s309 + $0x78] sm:$0xff]
      %v410 = vld [vmem:[%s309 + $0x80] sm:$0xff]
      %v411 = vld [vmem:[%s309 + $0x88] sm:$0xff]
      %v412 = vld [vmem:[%s309 + $0x90] sm:$0xff]
      %v413 = vld [vmem:[%s309 + $0x98] sm:$0xff]
      %v414 = vld [vmem:[%s309 + $0xa0] sm:$0xff]
      %v415 = vld [vmem:[%s309 + $0xa8] sm:$0xff]
      %v416 = vld [vmem:[%s309 + $0xb0] sm:$0xff]
      %v417 = vld [vmem:[%s309 + $0xb8] sm:$0xff]
      %v418 = vld [vmem:[%s309 + $0xc0] sm:$0xff]
      %v419 = vld [vmem:[%s309 + $0xc8] sm:$0xff]
      %v420 = vld [vmem:[%s309 + $0xd0] sm:$0xff]
      %v421 = vld [vmem:[%s309 + $0xd8] sm:$0xff]
      %v422 = vld [vmem:[%s309 + $0xe0] sm:$0xff]
      %v423 = vld [vmem:[%s309 + $0xe8] sm:$0xff]
      %v424 = vld [vmem:[%s309 + $0xf0] sm:$0xff]
      %v425 = vld [vmem:[%s309 + $0xf8] sm:$0xff]
      %v426 = vunpack.c.0.s8 %v394
      %v427 = vunpack.c.0.s8 %v395
      %v428 = vunpack.c.0.s8 %v396
      %v429 = vunpack.c.0.s8 %v397
      %v430 = vunpack.c.1.s8 %v394
      %v431 = vunpack.c.1.s8 %v395
      %v432 = vunpack.c.1.s8 %v396
      %v433 = vunpack.c.1.s8 %v397
      %v434 = vunpack.c.2.s8 %v394
      %v435 = vunpack.c.2.s8 %v395
      %v436 = vunpack.c.2.s8 %v396
      %v437 = vunpack.c.2.s8 %v397
      %v438 = vunpack.c.3.s8 %v394
      %v439 = vunpack.c.3.s8 %v395
      %v440 = vunpack.c.3.s8 %v396
      %v441 = vunpack.c.3.s8 %v397
      %v442 = vunpack.c.0.s8 %v398
      %v443 = vunpack.c.0.s8 %v399
      %v444 = vunpack.c.0.s8 %v400
      %v445 = vunpack.c.0.s8 %v401
      %v446 = vunpack.c.1.s8 %v398
      %v447 = vunpack.c.1.s8 %v399
      %v448 = vunpack.c.1.s8 %v400
      %v449 = vunpack.c.1.s8 %v401
      %v450 = vunpack.c.2.s8 %v398
      %v451 = vunpack.c.2.s8 %v399
      %v452 = vunpack.c.2.s8 %v400
      %v453 = vunpack.c.2.s8 %v401
      %v454 = vunpack.c.3.s8 %v398
      %v455 = vunpack.c.3.s8 %v399
      %v456 = vunpack.c.3.s8 %v400
      %v457 = vunpack.c.3.s8 %v401
      %v458 = vunpack.c.0.s8 %v402
      %v459 = vunpack.c.0.s8 %v403
      %v460 = vunpack.c.0.s8 %v404
      %v461 = vunpack.c.0.s8 %v405
      %v462 = vunpack.c.1.s8 %v402
      %v463 = vunpack.c.1.s8 %v403
      %v464 = vunpack.c.1.s8 %v404
      %v465 = vunpack.c.1.s8 %v405
      %v466 = vunpack.c.2.s8 %v402
      %v467 = vunpack.c.2.s8 %v403
      %v468 = vunpack.c.2.s8 %v404
      %v469 = vunpack.c.2.s8 %v405
      %v470 = vunpack.c.3.s8 %v402
      %v471 = vunpack.c.3.s8 %v403
      %v472 = vunpack.c.3.s8 %v404
      %v473 = vunpack.c.3.s8 %v405
      %v474 = vunpack.c.0.s8 %v406
      %v475 = vunpack.c.0.s8 %v407
      %v476 = vunpack.c.0.s8 %v408
      %v477 = vunpack.c.0.s8 %v409
      %v478 = vunpack.c.1.s8 %v406
      %v479 = vunpack.c.1.s8 %v407
      %v480 = vunpack.c.1.s8 %v408
      %v481 = vunpack.c.1.s8 %v409
      %v482 = vunpack.c.2.s8 %v406
      %v483 = vunpack.c.2.s8 %v407
      %v484 = vunpack.c.2.s8 %v408
      %v485 = vunpack.c.2.s8 %v409
      %v486 = vunpack.c.3.s8 %v406
      %v487 = vunpack.c.3.s8 %v407
      %v488 = vunpack.c.3.s8 %v408
      %v489 = vunpack.c.3.s8 %v409
      %v490 = vunpack.c.0.s8 %v410
      %v491 = vunpack.c.0.s8 %v411
      %v492 = vunpack.c.0.s8 %v412
      %v493 = vunpack.c.0.s8 %v413
      %v494 = vunpack.c.1.s8 %v410
      %v495 = vunpack.c.1.s8 %v411
      %v496 = vunpack.c.1.s8 %v412
      %v497 = vunpack.c.1.s8 %v413
      %v498 = vunpack.c.2.s8 %v410
      %v499 = vunpack.c.2.s8 %v411
      %v500 = vunpack.c.2.s8 %v412
      %v501 = vunpack.c.2.s8 %v413
      %v502 = vunpack.c.3.s8 %v410
      %v503 = vunpack.c.3.s8 %v411
      %v504 = vunpack.c.3.s8 %v412
      %v505 = vunpack.c.3.s8 %v413
      %v506 = vunpack.c.0.s8 %v414
      %v507 = vunpack.c.0.s8 %v415
      %v508 = vunpack.c.0.s8 %v416
      %v509 = vunpack.c.0.s8 %v417
      %v510 = vunpack.c.1.s8 %v414
      %v511 = vunpack.c.1.s8 %v415
      %v512 = vunpack.c.1.s8 %v416
      %v513 = vunpack.c.1.s8 %v417
      %v514 = vunpack.c.2.s8 %v414
      %v515 = vunpack.c.2.s8 %v415
      %v516 = vunpack.c.2.s8 %v416
      %v517 = vunpack.c.2.s8 %v417
      %v518 = vunpack.c.3.s8 %v414
      %v519 = vunpack.c.3.s8 %v415
      %v520 = vunpack.c.3.s8 %v416
      %v521 = vunpack.c.3.s8 %v417
      %v522 = vunpack.c.0.s8 %v418
      %v523 = vunpack.c.0.s8 %v419
      %v524 = vunpack.c.0.s8 %v420
      %v525 = vunpack.c.0.s8 %v421
      %v526 = vunpack.c.1.s8 %v418
      %v527 = vunpack.c.1.s8 %v419
      %v528 = vunpack.c.1.s8 %v420
      %v529 = vunpack.c.1.s8 %v421
      %v530 = vunpack.c.2.s8 %v418
      %v531 = vunpack.c.2.s8 %v419
      %v532 = vunpack.c.2.s8 %v420
      %v533 = vunpack.c.2.s8 %v421
      %v534 = vunpack.c.3.s8 %v418
      %v535 = vunpack.c.3.s8 %v419
      %v536 = vunpack.c.3.s8 %v420
      %v537 = vunpack.c.3.s8 %v421
      %v538 = vunpack.c.0.s8 %v422
      %v539 = vunpack.c.0.s8 %v423
      %v540 = vunpack.c.0.s8 %v424
      %v541 = vunpack.c.0.s8 %v425
      %v542 = vunpack.c.1.s8 %v422
      %v543 = vunpack.c.1.s8 %v423
      %v544 = vunpack.c.1.s8 %v424
      %v545 = vunpack.c.1.s8 %v425
      %v546 = vunpack.c.2.s8 %v422
      %v547 = vunpack.c.2.s8 %v423
      %v548 = vunpack.c.2.s8 %v424
      %v549 = vunpack.c.2.s8 %v425
      %v550 = vunpack.c.3.s8 %v422
      %v551 = vunpack.c.3.s8 %v423
      %v552 = vunpack.c.3.s8 %v424
      %v553 = vunpack.c.3.s8 %v425
      %v554 = vcvt.s32.f32 %v426
      %v555 = vcvt.s32.f32 %v427
      %v556 = vcvt.s32.f32 %v428
      %v557 = vcvt.s32.f32 %v429
      %v558 = vcvt.s32.f32 %v430
      %v559 = vcvt.s32.f32 %v431
      %v560 = vcvt.s32.f32 %v432
      %v561 = vcvt.s32.f32 %v433
      %v562 = vcvt.s32.f32 %v434
      %v563 = vcvt.s32.f32 %v435
      %v564 = vcvt.s32.f32 %v436
      %v565 = vcvt.s32.f32 %v437
      %v566 = vcvt.s32.f32 %v438
      %v567 = vcvt.s32.f32 %v439
      %v568 = vcvt.s32.f32 %v440
      %v569 = vcvt.s32.f32 %v441
      %v570 = vcvt.s32.f32 %v442
      %v571 = vcvt.s32.f32 %v443
      %v572 = vcvt.s32.f32 %v444
      %v573 = vcvt.s32.f32 %v445
      %v574 = vcvt.s32.f32 %v446
      %v575 = vcvt.s32.f32 %v447
      %v576 = vcvt.s32.f32 %v448
      %v577 = vcvt.s32.f32 %v449
      %v578 = vcvt.s32.f32 %v450
      %v579 = vcvt.s32.f32 %v451
      %v580 = vcvt.s32.f32 %v452
      %v581 = vcvt.s32.f32 %v453
      %v582 = vcvt.s32.f32 %v454
      %v583 = vcvt.s32.f32 %v455
      %v584 = vcvt.s32.f32 %v456
      %v585 = vcvt.s32.f32 %v457
      %v586 = vcvt.s32.f32 %v458
      %v587 = vcvt.s32.f32 %v459
      %v588 = vcvt.s32.f32 %v460
      %v589 = vcvt.s32.f32 %v461
      %v590 = vcvt.s32.f32 %v462
      %v591 = vcvt.s32.f32 %v463
      %v592 = vcvt.s32.f32 %v464
      %v593 = vcvt.s32.f32 %v465
      %v594 = vcvt.s32.f32 %v466
      %v595 = vcvt.s32.f32 %v467
      %v596 = vcvt.s32.f32 %v468
      %v597 = vcvt.s32.f32 %v469
      %v598 = vcvt.s32.f32 %v470
      %v599 = vcvt.s32.f32 %v471
      %v600 = vcvt.s32.f32 %v472
      %v601 = vcvt.s32.f32 %v473
      %v602 = vcvt.s32.f32 %v474
      %v603 = vcvt.s32.f32 %v475
      %v604 = vcvt.s32.f32 %v476
      %v605 = vcvt.s32.f32 %v477
      %v606 = vcvt.s32.f32 %v478
      %v607 = vcvt.s32.f32 %v479
      %v608 = vcvt.s32.f32 %v480
      %v609 = vcvt.s32.f32 %v481
      %v610 = vcvt.s32.f32 %v482
      %v611 = vcvt.s32.f32 %v483
      %v612 = vcvt.s32.f32 %v484
      %v613 = vcvt.s32.f32 %v485
      %v614 = vcvt.s32.f32 %v486
      %v615 = vcvt.s32.f32 %v487
      %v616 = vcvt.s32.f32 %v488
      %v617 = vcvt.s32.f32 %v489
      %v618 = vcvt.s32.f32 %v490
      %v619 = vcvt.s32.f32 %v491
      %v620 = vcvt.s32.f32 %v492
      %v621 = vcvt.s32.f32 %v493
      %v622 = vcvt.s32.f32 %v494
      %v623 = vcvt.s32.f32 %v495
      %v624 = vcvt.s32.f32 %v496
      %v625 = vcvt.s32.f32 %v497
      %v626 = vcvt.s32.f32 %v498
      %v627 = vcvt.s32.f32 %v499
      %v628 = vcvt.s32.f32 %v500
      %v629 = vcvt.s32.f32 %v501
      %v630 = vcvt.s32.f32 %v502
      %v631 = vcvt.s32.f32 %v503
      %v632 = vcvt.s32.f32 %v504
      %v633 = vcvt.s32.f32 %v505
      %v634 = vcvt.s32.f32 %v506
      %v635 = vcvt.s32.f32 %v507
      %v636 = vcvt.s32.f32 %v508
      %v637 = vcvt.s32.f32 %v509
      %v638 = vcvt.s32.f32 %v510
      %v639 = vcvt.s32.f32 %v511
      %v640 = vcvt.s32.f32 %v512
      %v641 = vcvt.s32.f32 %v513
      %v642 = vcvt.s32.f32 %v514
      %v643 = vcvt.s32.f32 %v515
      %v644 = vcvt.s32.f32 %v516
      %v645 = vcvt.s32.f32 %v517
      %v646 = vcvt.s32.f32 %v518
      %v647 = vcvt.s32.f32 %v519
      %v648 = vcvt.s32.f32 %v520
      %v649 = vcvt.s32.f32 %v521
      %v650 = vcvt.s32.f32 %v522
      %v651 = vcvt.s32.f32 %v523
      %v652 = vcvt.s32.f32 %v524
      %v653 = vcvt.s32.f32 %v525
      %v654 = vcvt.s32.f32 %v526
      %v655 = vcvt.s32.f32 %v527
      %v656 = vcvt.s32.f32 %v528
      %v657 = vcvt.s32.f32 %v529
      %v658 = vcvt.s32.f32 %v530
      %v659 = vcvt.s32.f32 %v531
      %v660 = vcvt.s32.f32 %v532
      %v661 = vcvt.s32.f32 %v533
      %v662 = vcvt.s32.f32 %v534
      %v663 = vcvt.s32.f32 %v535
      %v664 = vcvt.s32.f32 %v536
      %v665 = vcvt.s32.f32 %v537
      %v666 = vcvt.s32.f32 %v538
      %v667 = vcvt.s32.f32 %v539
      %v668 = vcvt.s32.f32 %v540
      %v669 = vcvt.s32.f32 %v541
      %v670 = vcvt.s32.f32 %v542
      %v671 = vcvt.s32.f32 %v543
      %v672 = vcvt.s32.f32 %v544
      %v673 = vcvt.s32.f32 %v545
      %v674 = vcvt.s32.f32 %v546
      %v675 = vcvt.s32.f32 %v547
      %v676 = vcvt.s32.f32 %v548
      %v677 = vcvt.s32.f32 %v549
      %v678 = vcvt.s32.f32 %v550
      %v679 = vcvt.s32.f32 %v551
      %v680 = vcvt.s32.f32 %v552
      %v681 = vcvt.s32.f32 %v553
      %v682 = vpack.c.bf16 %v558, %v554
      %v683 = vpack.c.bf16 %v559, %v555
      %v684 = vpack.c.bf16 %v560, %v556
      %v685 = vpack.c.bf16 %v561, %v557
      %v686 = vpack.c.bf16 %v566, %v562
      %v687 = vpack.c.bf16 %v567, %v563
      %v688 = vpack.c.bf16 %v568, %v564
      %v689 = vpack.c.bf16 %v569, %v565
      %v690 = vpack.c.bf16 %v574, %v570
      %v691 = vpack.c.bf16 %v575, %v571
      %v692 = vpack.c.bf16 %v576, %v572
      %v693 = vpack.c.bf16 %v577, %v573
      %v694 = vpack.c.bf16 %v582, %v578
      %v695 = vpack.c.bf16 %v583, %v579
      %v696 = vpack.c.bf16 %v584, %v580
      %v697 = vpack.c.bf16 %v585, %v581
      %v698 = vpack.c.bf16 %v590, %v586
      %v699 = vpack.c.bf16 %v591, %v587
      %v700 = vpack.c.bf16 %v592, %v588
      %v701 = vpack.c.bf16 %v593, %v589
      %v702 = vpack.c.bf16 %v598, %v594
      %v703 = vpack.c.bf16 %v599, %v595
      %v704 = vpack.c.bf16 %v600, %v596
      %v705 = vpack.c.bf16 %v601, %v597
      %v706 = vpack.c.bf16 %v606, %v602
      %v707 = vpack.c.bf16 %v607, %v603
      %v708 = vpack.c.bf16 %v608, %v604
      %v709 = vpack.c.bf16 %v609, %v605
      %v710 = vpack.c.bf16 %v614, %v610
      %v711 = vpack.c.bf16 %v615, %v611
      %v712 = vpack.c.bf16 %v616, %v612
      %v713 = vpack.c.bf16 %v617, %v613
      %v714 = vpack.c.bf16 %v622, %v618
      %v715 = vpack.c.bf16 %v623, %v619
      %v716 = vpack.c.bf16 %v624, %v620
      %v717 = vpack.c.bf16 %v625, %v621
      %v718 = vpack.c.bf16 %v630, %v626
      %v719 = vpack.c.bf16 %v631, %v627
      %v720 = vpack.c.bf16 %v632, %v628
      %v721 = vpack.c.bf16 %v633, %v629
      %v722 = vpack.c.bf16 %v638, %v634
      %v723 = vpack.c.bf16 %v639, %v635
      %v724 = vpack.c.bf16 %v640, %v636
      %v725 = vpack.c.bf16 %v641, %v637
      %v726 = vpack.c.bf16 %v646, %v642
      %v727 = vpack.c.bf16 %v647, %v643
      %v728 = vpack.c.bf16 %v648, %v644
      %v729 = vpack.c.bf16 %v649, %v645
      %v730 = vpack.c.bf16 %v654, %v650
      %v731 = vpack.c.bf16 %v655, %v651
      %v732 = vpack.c.bf16 %v656, %v652
      %v733 = vpack.c.bf16 %v657, %v653
      %v734 = vpack.c.bf16 %v662, %v658
      %v735 = vpack.c.bf16 %v663, %v659
      %v736 = vpack.c.bf16 %v664, %v660
      %v737 = vpack.c.bf16 %v665, %v661
      %v738 = vpack.c.bf16 %v670, %v666
      %v739 = vpack.c.bf16 %v671, %v667
      %v740 = vpack.c.bf16 %v672, %v668
      %v741 = vpack.c.bf16 %v673, %v669
      %v742 = vpack.c.bf16 %v678, %v674
      %v743 = vpack.c.bf16 %v679, %v675
      %v744 = vpack.c.bf16 %v680, %v676
      %v745 = vpack.c.bf16 %v681, %v677
      %v810 = vunpack.c.l.b16 %v330
      %v811 = vunpack.c.l.b16 %v331
      %v812 = vunpack.c.l.b16 %v332
      %v813 = vunpack.c.l.b16 %v333
      %v814 = vunpack.c.l.b16 %v334
      %v815 = vunpack.c.l.b16 %v335
      %v816 = vunpack.c.l.b16 %v336
      %v817 = vunpack.c.l.b16 %v337
      %v818 = vunpack.c.l.b16 %v338
      %v819 = vunpack.c.l.b16 %v339
      %v820 = vunpack.c.l.b16 %v340
      %v821 = vunpack.c.l.b16 %v341
      %v822 = vunpack.c.l.b16 %v342
      %v823 = vunpack.c.l.b16 %v343
      %v824 = vunpack.c.l.b16 %v344
      %v825 = vunpack.c.l.b16 %v345
      %v826 = vunpack.c.l.b16 %v346
      %v827 = vunpack.c.l.b16 %v347
      %v828 = vunpack.c.l.b16 %v348
      %v829 = vunpack.c.l.b16 %v349
      %v830 = vunpack.c.l.b16 %v350
      %v831 = vunpack.c.l.b16 %v351
      %v832 = vunpack.c.l.b16 %v352
      %v833 = vunpack.c.l.b16 %v353
      %v834 = vunpack.c.l.b16 %v354
      %v835 = vunpack.c.l.b16 %v355
      %v836 = vunpack.c.l.b16 %v356
      %v837 = vunpack.c.l.b16 %v357
      %v838 = vunpack.c.l.b16 %v358
      %v839 = vunpack.c.l.b16 %v359
      %v840 = vunpack.c.l.b16 %v360
      %v841 = vunpack.c.l.b16 %v361
      %v842 = vunpack.c.l.b16 %v362
      %v843 = vunpack.c.l.b16 %v363
      %v844 = vunpack.c.l.b16 %v364
      %v845 = vunpack.c.l.b16 %v365
      %v846 = vunpack.c.l.b16 %v366
      %v847 = vunpack.c.l.b16 %v367
      %v848 = vunpack.c.l.b16 %v368
      %v849 = vunpack.c.l.b16 %v369
      %v850 = vunpack.c.l.b16 %v370
      %v851 = vunpack.c.l.b16 %v371
      %v852 = vunpack.c.l.b16 %v372
      %v853 = vunpack.c.l.b16 %v373
      %v854 = vunpack.c.l.b16 %v374
      %v855 = vunpack.c.l.b16 %v375
      %v856 = vunpack.c.l.b16 %v376
      %v857 = vunpack.c.l.b16 %v377
      %v858 = vunpack.c.l.b16 %v378
      %v859 = vunpack.c.l.b16 %v379
      %v860 = vunpack.c.l.b16 %v380
      %v861 = vunpack.c.l.b16 %v381
      %v862 = vunpack.c.l.b16 %v382
      %v863 = vunpack.c.l.b16 %v383
      %v864 = vunpack.c.l.b16 %v384
      %v865 = vunpack.c.l.b16 %v385
      %v866 = vunpack.c.l.b16 %v386
      %v867 = vunpack.c.l.b16 %v387
      %v868 = vunpack.c.l.b16 %v388
      %v869 = vunpack.c.l.b16 %v389
      %v870 = vunpack.c.l.b16 %v390
      %v871 = vunpack.c.l.b16 %v391
      %v872 = vunpack.c.l.b16 %v392
      %v873 = vunpack.c.l.b16 %v393
      %v874 = vpack.c.b16 %v811, %v810
      %v875 = vpack.c.b16 %v813, %v812
      %v876 = vpack.c.b16 %v815, %v814
      %v877 = vpack.c.b16 %v817, %v816
      %v878 = vpack.c.b16 %v819, %v818
      %v879 = vpack.c.b16 %v821, %v820
      %v880 = vpack.c.b16 %v823, %v822
      %v881 = vpack.c.b16 %v825, %v824
      %v882 = vpack.c.b16 %v827, %v826
      %v883 = vpack.c.b16 %v829, %v828
      %v884 = vpack.c.b16 %v831, %v830
      %v885 = vpack.c.b16 %v833, %v832
      %v886 = vpack.c.b16 %v835, %v834
      %v887 = vpack.c.b16 %v837, %v836
      %v888 = vpack.c.b16 %v839, %v838
      %v889 = vpack.c.b16 %v841, %v840
      %v890 = vpack.c.b16 %v843, %v842
      %v891 = vpack.c.b16 %v845, %v844
      %v892 = vpack.c.b16 %v847, %v846
      %v893 = vpack.c.b16 %v849, %v848
      %v894 = vpack.c.b16 %v851, %v850
      %v895 = vpack.c.b16 %v853, %v852
      %v896 = vpack.c.b16 %v855, %v854
      %v897 = vpack.c.b16 %v857, %v856
      %v898 = vpack.c.b16 %v859, %v858
      %v899 = vpack.c.b16 %v861, %v860
      %v900 = vpack.c.b16 %v863, %v862
      %v901 = vpack.c.b16 %v865, %v864
      %v902 = vpack.c.b16 %v867, %v866
      %v903 = vpack.c.b16 %v869, %v868
      %v904 = vpack.c.b16 %v871, %v870
      %v905 = vpack.c.b16 %v873, %v872
      %938 = vmatpush.bf16.msra.mxu0 %v881
      %939 = vmatpush.bf16.msra.mxu0 %v880
      %940 = vmatpush.bf16.msra.mxu0 %v879
      %941 = vmatpush.bf16.msra.mxu0 %v878
      %942 = vmatpush.bf16.msra.mxu0 %v877
      %943 = vmatpush.bf16.msra.mxu0 %v876
      %944 = vmatpush.bf16.msra.mxu0 %v875
      %945 = vmatpush.bf16.msra.mxu0 %v874
      %946 = vmatmul.bf16.gmra.mxu0 %v682
      %v947 = vpop.f32.mrf.mxu0
      %v948 = vadd.f32 0.0, %v947
      %v949 = vpop.f32.mrf.mxu0
      %v950 = vadd.f32 0.0, %v949
      %951 = vmatmul.bf16.gmra.mxu0 %v686
      %v952 = vpop.f32.mrf.mxu0
      %v953 = vadd.f32 0.0, %v952
      %v954 = vpop.f32.mrf.mxu0
      %v955 = vadd.f32 0.0, %v954
      %956 = vmatmul.bf16.gmra.mxu0 %v690
      %v957 = vpop.f32.mrf.mxu0
      %v958 = vadd.f32 0.0, %v957
      %v959 = vpop.f32.mrf.mxu0
      %v960 = vadd.f32 0.0, %v959
      %961 = vmatmul.bf16.gmra.mxu0 %v694
      %v962 = vpop.f32.mrf.mxu0
      %v963 = vadd.f32 0.0, %v962
      %v964 = vpop.f32.mrf.mxu0
      %v965 = vadd.f32 0.0, %v964
      %966 = vmatmul.bf16.gmra.mxu0 %v698
      %v967 = vpop.f32.mrf.mxu0
      %v968 = vadd.f32 0.0, %v967
      %v969 = vpop.f32.mrf.mxu0
      %v970 = vadd.f32 0.0, %v969
      %971 = vmatmul.bf16.gmra.mxu0 %v702
      %v972 = vpop.f32.mrf.mxu0
      %v973 = vadd.f32 0.0, %v972
      %v974 = vpop.f32.mrf.mxu0
      %v975 = vadd.f32 0.0, %v974
      %976 = vmatmul.bf16.gmra.mxu0 %v706
      %v977 = vpop.f32.mrf.mxu0
      %v978 = vadd.f32 0.0, %v977
      %v979 = vpop.f32.mrf.mxu0
      %v980 = vadd.f32 0.0, %v979
      %981 = vmatmul.bf16.gmra.mxu0 %v710
      %v982 = vpop.f32.mrf.mxu0
      %v983 = vadd.f32 0.0, %v982
      %v984 = vpop.f32.mrf.mxu0
      %v985 = vadd.f32 0.0, %v984
      %986 = vmatmul.bf16.gmra.mxu0 %v714
      %v987 = vpop.f32.mrf.mxu0
      %v988 = vadd.f32 0.0, %v987
      %v989 = vpop.f32.mrf.mxu0
      %v990 = vadd.f32 0.0, %v989
      %991 = vmatmul.bf16.gmra.mxu0 %v718
      %v992 = vpop.f32.mrf.mxu0
      %v993 = vadd.f32 0.0, %v992
      %v994 = vpop.f32.mrf.mxu0
      %v995 = vadd.f32 0.0, %v994
      %996 = vmatmul.bf16.gmra.mxu0 %v722
      %v997 = vpop.f32.mrf.mxu0
      %v998 = vadd.f32 0.0, %v997
      %v999 = vpop.f32.mrf.mxu0
      %v1000 = vadd.f32 0.0, %v999
      %1001 = vmatmul.bf16.gmra.mxu0 %v726
      %v1002 = vpop.f32.mrf.mxu0
      %v1003 = vadd.f32 0.0, %v1002
      %v1004 = vpop.f32.mrf.mxu0
      %v1005 = vadd.f32 0.0, %v1004
      %1006 = vmatmul.bf16.gmra.mxu0 %v730
      %v1007 = vpop.f32.mrf.mxu0
      %v1008 = vadd.f32 0.0, %v1007
      %v1009 = vpop.f32.mrf.mxu0
      %v1010 = vadd.f32 0.0, %v1009
      %1011 = vmatmul.bf16.gmra.mxu0 %v734
      %v1012 = vpop.f32.mrf.mxu0
      %v1013 = vadd.f32 0.0, %v1012
      %v1014 = vpop.f32.mrf.mxu0
      %v1015 = vadd.f32 0.0, %v1014
      %1016 = vmatmul.bf16.gmra.mxu0 %v738
      %v1017 = vpop.f32.mrf.mxu0
      %v1018 = vadd.f32 0.0, %v1017
      %v1019 = vpop.f32.mrf.mxu0
      %v1020 = vadd.f32 0.0, %v1019
      %1021 = vmatmul.bf16.gmra.mxu0 %v742
      %v1022 = vpop.f32.mrf.mxu0
      %v1023 = vadd.f32 0.0, %v1022
      %v1024 = vpop.f32.mrf.mxu0
      %v1025 = vadd.f32 0.0, %v1024
      %1026 = vdwg.mxu0
      %1027 = vmatpush.bf16.msra.mxu0 %v889
      %1028 = vmatpush.bf16.msra.mxu0 %v888
      %1029 = vmatpush.bf16.msra.mxu0 %v887
      %1030 = vmatpush.bf16.msra.mxu0 %v886
      %1031 = vmatpush.bf16.msra.mxu0 %v885
      %1032 = vmatpush.bf16.msra.mxu0 %v884
      %1033 = vmatpush.bf16.msra.mxu0 %v883
      %1034 = vmatpush.bf16.msra.mxu0 %v882
      %1035 = vmatmul.bf16.gmra.mxu0 %v683
      %v1036 = vpop.f32.mrf.mxu0
      %v1037 = vadd.f32 %v948, %v1036
      %v1038 = vpop.f32.mrf.mxu0
      %v1039 = vadd.f32 %v950, %v1038
      %1040 = vmatmul.bf16.gmra.mxu0 %v687
      %v1041 = vpop.f32.mrf.mxu0
      %v1042 = vadd.f32 %v953, %v1041
      %v1043 = vpop.f32.mrf.mxu0
      %v1044 = vadd.f32 %v955, %v1043
      %1045 = vmatmul.bf16.gmra.mxu0 %v691
      %v1046 = vpop.f32.mrf.mxu0
      %v1047 = vadd.f32 %v958, %v1046
      %v1048 = vpop.f32.mrf.mxu0
      %v1049 = vadd.f32 %v960, %v1048
      %1050 = vmatmul.bf16.gmra.mxu0 %v695
      %v1051 = vpop.f32.mrf.mxu0
      %v1052 = vadd.f32 %v963, %v1051
      %v1053 = vpop.f32.mrf.mxu0
      %v1054 = vadd.f32 %v965, %v1053
      %1055 = vmatmul.bf16.gmra.mxu0 %v699
      %v1056 = vpop.f32.mrf.mxu0
      %v1057 = vadd.f32 %v968, %v1056
      %v1058 = vpop.f32.mrf.mxu0
      %v1059 = vadd.f32 %v970, %v1058
      %1060 = vmatmul.bf16.gmra.mxu0 %v703
      %v1061 = vpop.f32.mrf.mxu0
      %v1062 = vadd.f32 %v973, %v1061
      %v1063 = vpop.f32.mrf.mxu0
      %v1064 = vadd.f32 %v975, %v1063
      %1065 = vmatmul.bf16.gmra.mxu0 %v707
      %v1066 = vpop.f32.mrf.mxu0
      %v1067 = vadd.f32 %v978, %v1066
      %v1068 = vpop.f32.mrf.mxu0
      %v1069 = vadd.f32 %v980, %v1068
      %1070 = vmatmul.bf16.gmra.mxu0 %v711
      %v1071 = vpop.f32.mrf.mxu0
      %v1072 = vadd.f32 %v983, %v1071
      %v1073 = vpop.f32.mrf.mxu0
      %v1074 = vadd.f32 %v985, %v1073
      %1075 = vmatmul.bf16.gmra.mxu0 %v715
      %v1076 = vpop.f32.mrf.mxu0
      %v1077 = vadd.f32 %v988, %v1076
      %v1078 = vpop.f32.mrf.mxu0
      %v1079 = vadd.f32 %v990, %v1078
      %1080 = vmatmul.bf16.gmra.mxu0 %v719
      %v1081 = vpop.f32.mrf.mxu0
      %v1082 = vadd.f32 %v993, %v1081
      %v1083 = vpop.f32.mrf.mxu0
      %v1084 = vadd.f32 %v995, %v1083
      %1085 = vmatmul.bf16.gmra.mxu0 %v723
      %v1086 = vpop.f32.mrf.mxu0
      %v1087 = vadd.f32 %v998, %v1086
      %v1088 = vpop.f32.mrf.mxu0
      %v1089 = vadd.f32 %v1000, %v1088
      %1090 = vmatmul.bf16.gmra.mxu0 %v727
      %v1091 = vpop.f32.mrf.mxu0
      %v1092 = vadd.f32 %v1003, %v1091
      %v1093 = vpop.f32.mrf.mxu0
      %v1094 = vadd.f32 %v1005, %v1093
      %1095 = vmatmul.bf16.gmra.mxu0 %v731
      %v1096 = vpop.f32.mrf.mxu0
      %v1097 = vadd.f32 %v1008, %v1096
      %v1098 = vpop.f32.mrf.mxu0
      %v1099 = vadd.f32 %v1010, %v1098
      %1100 = vmatmul.bf16.gmra.mxu0 %v735
      %v1101 = vpop.f32.mrf.mxu0
      %v1102 = vadd.f32 %v1013, %v1101
      %v1103 = vpop.f32.mrf.mxu0
      %v1104 = vadd.f32 %v1015, %v1103
      %1105 = vmatmul.bf16.gmra.mxu0 %v739
      %v1106 = vpop.f32.mrf.mxu0
      %v1107 = vadd.f32 %v1018, %v1106
      %v1108 = vpop.f32.mrf.mxu0
      %v1109 = vadd.f32 %v1020, %v1108
      %1110 = vmatmul.bf16.gmra.mxu0 %v743
      %v1111 = vpop.f32.mrf.mxu0
      %v1112 = vadd.f32 %v1023, %v1111
      %v1113 = vpop.f32.mrf.mxu0
      %v1114 = vadd.f32 %v1025, %v1113
      %1115 = vdwg.mxu0
      %1116 = vmatpush.bf16.msra.mxu0 %v897
      %1117 = vmatpush.bf16.msra.mxu0 %v896
      %1118 = vmatpush.bf16.msra.mxu0 %v895
      %1119 = vmatpush.bf16.msra.mxu0 %v894
      %1120 = vmatpush.bf16.msra.mxu0 %v893
      %1121 = vmatpush.bf16.msra.mxu0 %v892
      %1122 = vmatpush.bf16.msra.mxu0 %v891
      %1123 = vmatpush.bf16.msra.mxu0 %v890
      %1124 = vmatmul.bf16.gmra.mxu0 %v684
      %v1125 = vpop.f32.mrf.mxu0
      %v1126 = vadd.f32 %v1037, %v1125
      %v1127 = vpop.f32.mrf.mxu0
      %v1128 = vadd.f32 %v1039, %v1127
      %1129 = vmatmul.bf16.gmra.mxu0 %v688
      %v1130 = vpop.f32.mrf.mxu0
      %v1131 = vadd.f32 %v1042, %v1130
      %v1132 = vpop.f32.mrf.mxu0
      %v1133 = vadd.f32 %v1044, %v1132
      %1134 = vmatmul.bf16.gmra.mxu0 %v692
      %v1135 = vpop.f32.mrf.mxu0
      %v1136 = vadd.f32 %v1047, %v1135
      %v1137 = vpop.f32.mrf.mxu0
      %v1138 = vadd.f32 %v1049, %v1137
      %1139 = vmatmul.bf16.gmra.mxu0 %v696
      %v1140 = vpop.f32.mrf.mxu0
      %v1141 = vadd.f32 %v1052, %v1140
      %v1142 = vpop.f32.mrf.mxu0
      %v1143 = vadd.f32 %v1054, %v1142
      %1144 = vmatmul.bf16.gmra.mxu0 %v700
      %v1145 = vpop.f32.mrf.mxu0
      %v1146 = vadd.f32 %v1057, %v1145
      %v1147 = vpop.f32.mrf.mxu0
      %v1148 = vadd.f32 %v1059, %v1147
      %1149 = vmatmul.bf16.gmra.mxu0 %v704
      %v1150 = vpop.f32.mrf.mxu0
      %v1151 = vadd.f32 %v1062, %v1150
      %v1152 = vpop.f32.mrf.mxu0
      %v1153 = vadd.f32 %v1064, %v1152
      %1154 = vmatmul.bf16.gmra.mxu0 %v708
      %v1155 = vpop.f32.mrf.mxu0
      %v1156 = vadd.f32 %v1067, %v1155
      %v1157 = vpop.f32.mrf.mxu0
      %v1158 = vadd.f32 %v1069, %v1157
      %1159 = vmatmul.bf16.gmra.mxu0 %v712
      %v1160 = vpop.f32.mrf.mxu0
      %v1161 = vadd.f32 %v1072, %v1160
      %v1162 = vpop.f32.mrf.mxu0
      %v1163 = vadd.f32 %v1074, %v1162
      %1164 = vmatmul.bf16.gmra.mxu0 %v716
      %v1165 = vpop.f32.mrf.mxu0
      %v1166 = vadd.f32 %v1077, %v1165
      %v1167 = vpop.f32.mrf.mxu0
      %v1168 = vadd.f32 %v1079, %v1167
      %1169 = vmatmul.bf16.gmra.mxu0 %v720
      %v1170 = vpop.f32.mrf.mxu0
      %v1171 = vadd.f32 %v1082, %v1170
      %v1172 = vpop.f32.mrf.mxu0
      %v1173 = vadd.f32 %v1084, %v1172
      %1174 = vmatmul.bf16.gmra.mxu0 %v724
      %v1175 = vpop.f32.mrf.mxu0
      %v1176 = vadd.f32 %v1087, %v1175
      %v1177 = vpop.f32.mrf.mxu0
      %v1178 = vadd.f32 %v1089, %v1177
      %1179 = vmatmul.bf16.gmra.mxu0 %v728
      %v1180 = vpop.f32.mrf.mxu0
      %v1181 = vadd.f32 %v1092, %v1180
      %v1182 = vpop.f32.mrf.mxu0
      %v1183 = vadd.f32 %v1094, %v1182
      %1184 = vmatmul.bf16.gmra.mxu0 %v732
      %v1185 = vpop.f32.mrf.mxu0
      %v1186 = vadd.f32 %v1097, %v1185
      %v1187 = vpop.f32.mrf.mxu0
      %v1188 = vadd.f32 %v1099, %v1187
      %1189 = vmatmul.bf16.gmra.mxu0 %v736
      %v1190 = vpop.f32.mrf.mxu0
      %v1191 = vadd.f32 %v1102, %v1190
      %v1192 = vpop.f32.mrf.mxu0
      %v1193 = vadd.f32 %v1104, %v1192
      %1194 = vmatmul.bf16.gmra.mxu0 %v740
      %v1195 = vpop.f32.mrf.mxu0
      %v1196 = vadd.f32 %v1107, %v1195
      %v1197 = vpop.f32.mrf.mxu0
      %v1198 = vadd.f32 %v1109, %v1197
      %1199 = vmatmul.bf16.gmra.mxu0 %v744
      %v1200 = vpop.f32.mrf.mxu0
      %v1201 = vadd.f32 %v1112, %v1200
      %v1202 = vpop.f32.mrf.mxu0
      %v1203 = vadd.f32 %v1114, %v1202
      %1204 = vdwg.mxu0
      %1205 = vmatpush.bf16.msra.mxu0 %v905
      %1206 = vmatpush.bf16.msra.mxu0 %v904
      %1207 = vmatpush.bf16.msra.mxu0 %v903
      %1208 = vmatpush.bf16.msra.mxu0 %v902
      %1209 = vmatpush.bf16.msra.mxu0 %v901
      %1210 = vmatpush.bf16.msra.mxu0 %v900
      %1211 = vmatpush.bf16.msra.mxu0 %v899
      %1212 = vmatpush.bf16.msra.mxu0 %v898
      %1213 = vmatmul.bf16.gmra.mxu0 %v685
      %v1214 = vpop.f32.mrf.mxu0
      %v1215 = vadd.f32 %v1126, %v1214
      %v1216 = vpop.f32.mrf.mxu0
      %v1217 = vadd.f32 %v1128, %v1216
      %1218 = vmatmul.bf16.gmra.mxu0 %v689
      %v1219 = vpop.f32.mrf.mxu0
      %v1220 = vadd.f32 %v1131, %v1219
      %v1221 = vpop.f32.mrf.mxu0
      %v1222 = vadd.f32 %v1133, %v1221
      %1223 = vmatmul.bf16.gmra.mxu0 %v693
      %v1224 = vpop.f32.mrf.mxu0
      %v1225 = vadd.f32 %v1136, %v1224
      %v1226 = vpop.f32.mrf.mxu0
      %v1227 = vadd.f32 %v1138, %v1226
      %1228 = vmatmul.bf16.gmra.mxu0 %v697
      %v1229 = vpop.f32.mrf.mxu0
      %v1230 = vadd.f32 %v1141, %v1229
      %v1231 = vpop.f32.mrf.mxu0
      %v1232 = vadd.f32 %v1143, %v1231
      %1233 = vmatmul.bf16.gmra.mxu0 %v701
      %v1234 = vpop.f32.mrf.mxu0
      %v1235 = vadd.f32 %v1146, %v1234
      %v1236 = vpop.f32.mrf.mxu0
      %v1237 = vadd.f32 %v1148, %v1236
      %1238 = vmatmul.bf16.gmra.mxu0 %v705
      %v1239 = vpop.f32.mrf.mxu0
      %v1240 = vadd.f32 %v1151, %v1239
      %v1241 = vpop.f32.mrf.mxu0
      %v1242 = vadd.f32 %v1153, %v1241
      %1243 = vmatmul.bf16.gmra.mxu0 %v709
      %v1244 = vpop.f32.mrf.mxu0
      %v1245 = vadd.f32 %v1156, %v1244
      %v1246 = vpop.f32.mrf.mxu0
      %v1247 = vadd.f32 %v1158, %v1246
      %1248 = vmatmul.bf16.gmra.mxu0 %v713
      %v1249 = vpop.f32.mrf.mxu0
      %v1250 = vadd.f32 %v1161, %v1249
      %v1251 = vpop.f32.mrf.mxu0
      %v1252 = vadd.f32 %v1163, %v1251
      %1253 = vmatmul.bf16.gmra.mxu0 %v717
      %v1254 = vpop.f32.mrf.mxu0
      %v1255 = vadd.f32 %v1166, %v1254
      %v1256 = vpop.f32.mrf.mxu0
      %v1257 = vadd.f32 %v1168, %v1256
      %1258 = vmatmul.bf16.gmra.mxu0 %v721
      %v1259 = vpop.f32.mrf.mxu0
      %v1260 = vadd.f32 %v1171, %v1259
      %v1261 = vpop.f32.mrf.mxu0
      %v1262 = vadd.f32 %v1173, %v1261
      %1263 = vmatmul.bf16.gmra.mxu0 %v725
      %v1264 = vpop.f32.mrf.mxu0
      %v1265 = vadd.f32 %v1176, %v1264
      %v1266 = vpop.f32.mrf.mxu0
      %v1267 = vadd.f32 %v1178, %v1266
      %1268 = vmatmul.bf16.gmra.mxu0 %v729
      %v1269 = vpop.f32.mrf.mxu0
      %v1270 = vadd.f32 %v1181, %v1269
      %v1271 = vpop.f32.mrf.mxu0
      %v1272 = vadd.f32 %v1183, %v1271
      %1273 = vmatmul.bf16.gmra.mxu0 %v733
      %v1274 = vpop.f32.mrf.mxu0
      %v1275 = vadd.f32 %v1186, %v1274
      %v1276 = vpop.f32.mrf.mxu0
      %v1277 = vadd.f32 %v1188, %v1276
      %1278 = vmatmul.bf16.gmra.mxu0 %v737
      %v1279 = vpop.f32.mrf.mxu0
      %v1280 = vadd.f32 %v1191, %v1279
      %v1281 = vpop.f32.mrf.mxu0
      %v1282 = vadd.f32 %v1193, %v1281
      %1283 = vmatmul.bf16.gmra.mxu0 %v741
      %v1284 = vpop.f32.mrf.mxu0
      %v1285 = vadd.f32 %v1196, %v1284
      %v1286 = vpop.f32.mrf.mxu0
      %v1287 = vadd.f32 %v1198, %v1286
      %1288 = vmatmul.bf16.gmra.mxu0 %v745
      %v1289 = vpop.f32.mrf.mxu0
      %v1290 = vadd.f32 %v1201, %v1289
      %v1291 = vpop.f32.mrf.mxu0
      %v1292 = vadd.f32 %v1203, %v1291
      %1293 = vdwg.mxu0
      %v1294 = vld [vmem:[%s316] sm:$0xff]
      %v1295 = vld [vmem:[%s316 + $0x8] sm:$0xff]
      %v1296 = vld [vmem:[%s316 + $0x10] sm:$0xff]
      %v1297 = vld [vmem:[%s316 + $0x18] sm:$0xff]
      %v1298 = vld [vmem:[%s316 + $0x20] sm:$0xff]
      %v1299 = vld [vmem:[%s316 + $0x28] sm:$0xff]
      %v1300 = vld [vmem:[%s316 + $0x30] sm:$0xff]
      %v1301 = vld [vmem:[%s316 + $0x38] sm:$0xff]
      %v1302 = vld [vmem:[%s316 + $0x40] sm:$0xff]
      %v1303 = vld [vmem:[%s316 + $0x48] sm:$0xff]
      %v1304 = vld [vmem:[%s316 + $0x50] sm:$0xff]
      %v1305 = vld [vmem:[%s316 + $0x58] sm:$0xff]
      %v1306 = vld [vmem:[%s316 + $0x60] sm:$0xff]
      %v1307 = vld [vmem:[%s316 + $0x68] sm:$0xff]
      %v1308 = vld [vmem:[%s316 + $0x70] sm:$0xff]
      %v1309 = vld [vmem:[%s316 + $0x78] sm:$0xff]
      %v1310 = vld [vmem:[%s316 + $0x80] sm:$0xff]
      %v1311 = vld [vmem:[%s316 + $0x88] sm:$0xff]
      %v1312 = vld [vmem:[%s316 + $0x90] sm:$0xff]
      %v1313 = vld [vmem:[%s316 + $0x98] sm:$0xff]
      %v1314 = vld [vmem:[%s316 + $0xa0] sm:$0xff]
      %v1315 = vld [vmem:[%s316 + $0xa8] sm:$0xff]
      %v1316 = vld [vmem:[%s316 + $0xb0] sm:$0xff]
      %v1317 = vld [vmem:[%s316 + $0xb8] sm:$0xff]
      %v1318 = vld [vmem:[%s316 + $0xc0] sm:$0xff]
      %v1319 = vld [vmem:[%s316 + $0xc8] sm:$0xff]
      %v1320 = vld [vmem:[%s316 + $0xd0] sm:$0xff]
      %v1321 = vld [vmem:[%s316 + $0xd8] sm:$0xff]
      %v1322 = vld [vmem:[%s316 + $0xe0] sm:$0xff]
      %v1323 = vld [vmem:[%s316 + $0xe8] sm:$0xff]
      %v1324 = vld [vmem:[%s316 + $0xf0] sm:$0xff]
      %v1325 = vld [vmem:[%s316 + $0xf8] sm:$0xff]
      %1327 = vset.pattern.permute.xlu0 0
      %1328 = vperm.xlu0 %1327, %v1294
      %v1329 = vpop.permute.xlu0 %1328
      %1332 = vset.pattern.permute.xlu0 0
      %1333 = vperm.xlu0 %1332, %v1295
      %v1334 = vpop.permute.xlu0 %1333
      %1337 = vset.pattern.permute.xlu0 0
      %1338 = vperm.xlu0 %1337, %v1296
      %v1339 = vpop.permute.xlu0 %1338
      %1342 = vset.pattern.permute.xlu0 0
      %1343 = vperm.xlu0 %1342, %v1297
      %v1344 = vpop.permute.xlu0 %1343
      %1347 = vset.pattern.permute.xlu0 0
      %1348 = vperm.xlu0 %1347, %v1298
      %v1349 = vpop.permute.xlu0 %1348
      %1352 = vset.pattern.permute.xlu0 0
      %1353 = vperm.xlu0 %1352, %v1299
      %v1354 = vpop.permute.xlu0 %1353
      %1357 = vset.pattern.permute.xlu0 0
      %1358 = vperm.xlu0 %1357, %v1300
      %v1359 = vpop.permute.xlu0 %1358
      %1362 = vset.pattern.permute.xlu0 0
      %1363 = vperm.xlu0 %1362, %v1301
      %v1364 = vpop.permute.xlu0 %1363
      %1367 = vset.pattern.permute.xlu0 0
      %1368 = vperm.xlu0 %1367, %v1302
      %v1369 = vpop.permute.xlu0 %1368
      %1372 = vset.pattern.permute.xlu0 0
      %1373 = vperm.xlu0 %1372, %v1303
      %v1374 = vpop.permute.xlu0 %1373
      %1377 = vset.pattern.permute.xlu0 0
      %1378 = vperm.xlu0 %1377, %v1304
      %v1379 = vpop.permute.xlu0 %1378
      %1382 = vset.pattern.permute.xlu0 0
      %1383 = vperm.xlu0 %1382, %v1305
      %v1384 = vpop.permute.xlu0 %1383
      %1387 = vset.pattern.permute.xlu0 0
      %1388 = vperm.xlu0 %1387, %v1306
      %v1389 = vpop.permute.xlu0 %1388
      %1392 = vset.pattern.permute.xlu0 0
      %1393 = vperm.xlu0 %1392, %v1307
      %v1394 = vpop.permute.xlu0 %1393
      %1397 = vset.pattern.permute.xlu0 0
      %1398 = vperm.xlu0 %1397, %v1308
      %v1399 = vpop.permute.xlu0 %1398
      %1402 = vset.pattern.permute.xlu0 0
      %1403 = vperm.xlu0 %1402, %v1309
      %v1404 = vpop.permute.xlu0 %1403
      %1407 = vset.pattern.permute.xlu0 0
      %1408 = vperm.xlu0 %1407, %v1310
      %v1409 = vpop.permute.xlu0 %1408
      %1412 = vset.pattern.permute.xlu0 0
      %1413 = vperm.xlu0 %1412, %v1311
      %v1414 = vpop.permute.xlu0 %1413
      %1417 = vset.pattern.permute.xlu0 0
      %1418 = vperm.xlu0 %1417, %v1312
      %v1419 = vpop.permute.xlu0 %1418
      %1422 = vset.pattern.permute.xlu0 0
      %1423 = vperm.xlu0 %1422, %v1313
      %v1424 = vpop.permute.xlu0 %1423
      %1427 = vset.pattern.permute.xlu0 0
      %1428 = vperm.xlu0 %1427, %v1314
      %v1429 = vpop.permute.xlu0 %1428
      %1432 = vset.pattern.permute.xlu0 0
      %1433 = vperm.xlu0 %1432, %v1315
      %v1434 = vpop.permute.xlu0 %1433
      %1437 = vset.pattern.permute.xlu0 0
      %1438 = vperm.xlu0 %1437, %v1316
      %v1439 = vpop.permute.xlu0 %1438
      %1442 = vset.pattern.permute.xlu0 0
      %1443 = vperm.xlu0 %1442, %v1317
      %v1444 = vpop.permute.xlu0 %1443
      %1447 = vset.pattern.permute.xlu0 0
      %1448 = vperm.xlu0 %1447, %v1318
      %v1449 = vpop.permute.xlu0 %1448
      %1452 = vset.pattern.permute.xlu0 0
      %1453 = vperm.xlu0 %1452, %v1319
      %v1454 = vpop.permute.xlu0 %1453
      %1457 = vset.pattern.permute.xlu0 0
      %1458 = vperm.xlu0 %1457, %v1320
      %v1459 = vpop.permute.xlu0 %1458
      %1462 = vset.pattern.permute.xlu0 0
      %1463 = vperm.xlu0 %1462, %v1321
      %v1464 = vpop.permute.xlu0 %1463
      %1467 = vset.pattern.permute.xlu0 0
      %1468 = vperm.xlu0 %1467, %v1322
      %v1469 = vpop.permute.xlu0 %1468
      %1472 = vset.pattern.permute.xlu0 0
      %1473 = vperm.xlu0 %1472, %v1323
      %v1474 = vpop.permute.xlu0 %1473
      %1477 = vset.pattern.permute.xlu0 0
      %1478 = vperm.xlu0 %1477, %v1324
      %v1479 = vpop.permute.xlu0 %1478
      %1482 = vset.pattern.permute.xlu0 0
      %1483 = vperm.xlu0 %1482, %v1325
      %v1484 = vpop.permute.xlu0 %1483
      %v1486 = vmul.f32 %v1329, %v1215
      %v1487 = vmul.f32 %v1334, %v1217
      %v1488 = vmul.f32 %v1339, %v1220
      %v1489 = vmul.f32 %v1344, %v1222
      %v1490 = vmul.f32 %v1349, %v1225
      %v1491 = vmul.f32 %v1354, %v1227
      %v1492 = vmul.f32 %v1359, %v1230
      %v1493 = vmul.f32 %v1364, %v1232
      %v1494 = vmul.f32 %v1369, %v1235
      %v1495 = vmul.f32 %v1374, %v1237
      %v1496 = vmul.f32 %v1379, %v1240
      %v1497 = vmul.f32 %v1384, %v1242
      %v1498 = vmul.f32 %v1389, %v1245
      %v1499 = vmul.f32 %v1394, %v1247
      %v1500 = vmul.f32 %v1399, %v1250
      %v1501 = vmul.f32 %v1404, %v1252
      %v1502 = vmul.f32 %v1409, %v1255
      %v1503 = vmul.f32 %v1414, %v1257
      %v1504 = vmul.f32 %v1419, %v1260
      %v1505 = vmul.f32 %v1424, %v1262
      %v1506 = vmul.f32 %v1429, %v1265
      %v1507 = vmul.f32 %v1434, %v1267
      %v1508 = vmul.f32 %v1439, %v1270
      %v1509 = vmul.f32 %v1444, %v1272
      %v1510 = vmul.f32 %v1449, %v1275
      %v1511 = vmul.f32 %v1454, %v1277
      %v1512 = vmul.f32 %v1459, %v1280
      %v1513 = vmul.f32 %v1464, %v1282
      %v1514 = vmul.f32 %v1469, %v1285
      %v1515 = vmul.f32 %v1474, %v1287
      %v1516 = vmul.f32 %v1479, %v1290
      %v1517 = vmul.f32 %v1484, %v1292
      %v1518 = vmul.f32 %v1486, 0.9
      %v1519 = vmul.f32 %v1487, 0.9
      %v1520 = vmul.f32 %v1488, 0.9
      %v1521 = vmul.f32 %v1489, 0.9
      %v1522 = vmul.f32 %v1490, 0.9
      %v1523 = vmul.f32 %v1491, 0.9
      %v1524 = vmul.f32 %v1492, 0.9
      %v1525 = vmul.f32 %v1493, 0.9
      %v1526 = vmul.f32 %v1494, 0.9
      %v1527 = vmul.f32 %v1495, 0.9
      %v1528 = vmul.f32 %v1496, 0.9
      %v1529 = vmul.f32 %v1497, 0.9
      %v1530 = vmul.f32 %v1498, 0.9
      %v1531 = vmul.f32 %v1499, 0.9
      %v1532 = vmul.f32 %v1500, 0.9
      %v1533 = vmul.f32 %v1501, 0.9
      %v1534 = vmul.f32 %v1502, 0.9
      %v1535 = vmul.f32 %v1503, 0.9
      %v1536 = vmul.f32 %v1504, 0.9
      %v1537 = vmul.f32 %v1505, 0.9
      %v1538 = vmul.f32 %v1506, 0.9
      %v1539 = vmul.f32 %v1507, 0.9
      %v1540 = vmul.f32 %v1508, 0.9
      %v1541 = vmul.f32 %v1509, 0.9
      %v1542 = vmul.f32 %v1510, 0.9
      %v1543 = vmul.f32 %v1511, 0.9
      %v1544 = vmul.f32 %v1512, 0.9
      %v1545 = vmul.f32 %v1513, 0.9
      %v1546 = vmul.f32 %v1514, 0.9
      %v1547 = vmul.f32 %v1515, 0.9
      %v1548 = vmul.f32 %v1516, 0.9
      %v1549 = vmul.f32 %v1517, 0.9
      %v1550 = vld [vmem:[%s322] sm:$0xff]
      %v1551 = vld [vmem:[%s322 + $0x8] sm:$0xff]
      %v1552 = vld [vmem:[%s322 + $0x10] sm:$0xff]
      %v1553 = vld [vmem:[%s322 + $0x18] sm:$0xff]
      %v1554 = vld [vmem:[%s322 + $0x20] sm:$0xff]
      %v1555 = vld [vmem:[%s322 + $0x28] sm:$0xff]
      %v1556 = vld [vmem:[%s322 + $0x30] sm:$0xff]
      %v1557 = vld [vmem:[%s322 + $0x38] sm:$0xff]
      %v1558 = vld [vmem:[%s322 + $0x40] sm:$0xff]
      %v1559 = vld [vmem:[%s322 + $0x48] sm:$0xff]
      %v1560 = vld [vmem:[%s322 + $0x50] sm:$0xff]
      %v1561 = vld [vmem:[%s322 + $0x58] sm:$0xff]
      %v1562 = vld [vmem:[%s322 + $0x60] sm:$0xff]
      %v1563 = vld [vmem:[%s322 + $0x68] sm:$0xff]
      %v1564 = vld [vmem:[%s322 + $0x70] sm:$0xff]
      %v1565 = vld [vmem:[%s322 + $0x78] sm:$0xff]
      %v1566 = vld [vmem:[%s322 + $0x80] sm:$0xff]
      %v1567 = vld [vmem:[%s322 + $0x88] sm:$0xff]
      %v1568 = vld [vmem:[%s322 + $0x90] sm:$0xff]
      %v1569 = vld [vmem:[%s322 + $0x98] sm:$0xff]
      %v1570 = vld [vmem:[%s322 + $0xa0] sm:$0xff]
      %v1571 = vld [vmem:[%s322 + $0xa8] sm:$0xff]
      %v1572 = vld [vmem:[%s322 + $0xb0] sm:$0xff]
      %v1573 = vld [vmem:[%s322 + $0xb8] sm:$0xff]
      %v1574 = vld [vmem:[%s322 + $0xc0] sm:$0xff]
      %v1575 = vld [vmem:[%s322 + $0xc8] sm:$0xff]
      %v1576 = vld [vmem:[%s322 + $0xd0] sm:$0xff]
      %v1577 = vld [vmem:[%s322 + $0xd8] sm:$0xff]
      %v1578 = vld [vmem:[%s322 + $0xe0] sm:$0xff]
      %v1579 = vld [vmem:[%s322 + $0xe8] sm:$0xff]
      %v1580 = vld [vmem:[%s322 + $0xf0] sm:$0xff]
      %v1581 = vld [vmem:[%s322 + $0xf8] sm:$0xff]
      %v1582 = vmul.f32 %v1550, 0.1
      %v1583 = vmul.f32 %v1551, 0.1
      %v1584 = vmul.f32 %v1552, 0.1
      %v1585 = vmul.f32 %v1553, 0.1
      %v1586 = vmul.f32 %v1554, 0.1
      %v1587 = vmul.f32 %v1555, 0.1
      %v1588 = vmul.f32 %v1556, 0.1
      %v1589 = vmul.f32 %v1557, 0.1
      %v1590 = vmul.f32 %v1558, 0.1
      %v1591 = vmul.f32 %v1559, 0.1
      %v1592 = vmul.f32 %v1560, 0.1
      %v1593 = vmul.f32 %v1561, 0.1
      %v1594 = vmul.f32 %v1562, 0.1
      %v1595 = vmul.f32 %v1563, 0.1
      %v1596 = vmul.f32 %v1564, 0.1
      %v1597 = vmul.f32 %v1565, 0.1
      %v1598 = vmul.f32 %v1566, 0.1
      %v1599 = vmul.f32 %v1567, 0.1
      %v1600 = vmul.f32 %v1568, 0.1
      %v1601 = vmul.f32 %v1569, 0.1
      %v1602 = vmul.f32 %v1570, 0.1
      %v1603 = vmul.f32 %v1571, 0.1
      %v1604 = vmul.f32 %v1572, 0.1
      %v1605 = vmul.f32 %v1573, 0.1
      %v1606 = vmul.f32 %v1574, 0.1
      %v1607 = vmul.f32 %v1575, 0.1
      %v1608 = vmul.f32 %v1576, 0.1
      %v1609 = vmul.f32 %v1577, 0.1
      %v1610 = vmul.f32 %v1578, 0.1
      %v1611 = vmul.f32 %v1579, 0.1
      %v1612 = vmul.f32 %v1580, 0.1
      %v1613 = vmul.f32 %v1581, 0.1
      %v1614 = vadd.f32 %v1518, %v1582
      %v1615 = vadd.f32 %v1519, %v1583
      %v1616 = vadd.f32 %v1520, %v1584
      %v1617 = vadd.f32 %v1521, %v1585
      %v1618 = vadd.f32 %v1522, %v1586
      %v1619 = vadd.f32 %v1523, %v1587
      %v1620 = vadd.f32 %v1524, %v1588
      %v1621 = vadd.f32 %v1525, %v1589
      %v1622 = vadd.f32 %v1526, %v1590
      %v1623 = vadd.f32 %v1527, %v1591
      %v1624 = vadd.f32 %v1528, %v1592
      %v1625 = vadd.f32 %v1529, %v1593
      %v1626 = vadd.f32 %v1530, %v1594
      %v1627 = vadd.f32 %v1531, %v1595
      %v1628 = vadd.f32 %v1532, %v1596
      %v1629 = vadd.f32 %v1533, %v1597
      %v1630 = vadd.f32 %v1534, %v1598
      %v1631 = vadd.f32 %v1535, %v1599
      %v1632 = vadd.f32 %v1536, %v1600
      %v1633 = vadd.f32 %v1537, %v1601
      %v1634 = vadd.f32 %v1538, %v1602
      %v1635 = vadd.f32 %v1539, %v1603
      %v1636 = vadd.f32 %v1540, %v1604
      %v1637 = vadd.f32 %v1541, %v1605
      %v1638 = vadd.f32 %v1542, %v1606
      %v1639 = vadd.f32 %v1543, %v1607
      %v1640 = vadd.f32 %v1544, %v1608
      %v1641 = vadd.f32 %v1545, %v1609
      %v1642 = vadd.f32 %v1546, %v1610
      %v1643 = vadd.f32 %v1547, %v1611
      %v1644 = vadd.f32 %v1548, %v1612
      %v1645 = vadd.f32 %v1549, %v1613
      %v1646 = vpack.c.bf16 %v1615, %v1614
      %v1647 = vpack.c.bf16 %v1617, %v1616
      %v1648 = vpack.c.bf16 %v1619, %v1618
      %v1649 = vpack.c.bf16 %v1621, %v1620
      %v1650 = vpack.c.bf16 %v1623, %v1622
      %v1651 = vpack.c.bf16 %v1625, %v1624
      %v1652 = vpack.c.bf16 %v1627, %v1626
      %v1653 = vpack.c.bf16 %v1629, %v1628
      %v1654 = vpack.c.bf16 %v1631, %v1630
      %v1655 = vpack.c.bf16 %v1633, %v1632
      %v1656 = vpack.c.bf16 %v1635, %v1634
      %v1657 = vpack.c.bf16 %v1637, %v1636
      %v1658 = vpack.c.bf16 %v1639, %v1638
      %v1659 = vpack.c.bf16 %v1641, %v1640
      %v1660 = vpack.c.bf16 %v1643, %v1642
      %v1661 = vpack.c.bf16 %v1645, %v1644
      %v1662 = vld [vmem:[%s4] sm:$0xf]
      %v1663 = vld [vmem:[%s4 + $0x4] sm:$0xf]
      %v1664 = vld [vmem:[%s4 + $0x8] sm:$0xf]
      %v1665 = vld [vmem:[%s4 + $0xc] sm:$0xf]
      %v1666 = vld [vmem:[%s4 + $0x10] sm:$0xf]
      %v1667 = vld [vmem:[%s4 + $0x14] sm:$0xf]
      %v1668 = vld [vmem:[%s4 + $0x18] sm:$0xf]
      %v1669 = vld [vmem:[%s4 + $0x1c] sm:$0xf]
      %v1670 = vld [vmem:[%s4 + $0x20] sm:$0xf]
      %v1671 = vld [vmem:[%s4 + $0x24] sm:$0xf]
      %v1672 = vld [vmem:[%s4 + $0x28] sm:$0xf]
      %v1673 = vld [vmem:[%s4 + $0x2c] sm:$0xf]
      %v1674 = vld [vmem:[%s4 + $0x30] sm:$0xf]
      %v1675 = vld [vmem:[%s4 + $0x34] sm:$0xf]
      %v1676 = vld [vmem:[%s4 + $0x38] sm:$0xf]
      %v1677 = vld [vmem:[%s4 + $0x3c] sm:$0xf]
      %v1678 = vld [vmem:[%s5] sm:$0x1]
      %v1680 = vperm.slane %v1678, 0
      %v1698 = vunpack.c.l.b16 %v1662
      %v1699 = vunpack.c.l.b16 %v1663
      %v1700 = vunpack.c.l.b16 %v1664
      %v1701 = vunpack.c.l.b16 %v1665
      %v1702 = vunpack.c.l.b16 %v1666
      %v1703 = vunpack.c.l.b16 %v1667
      %v1704 = vunpack.c.l.b16 %v1668
      %v1705 = vunpack.c.l.b16 %v1669
      %v1706 = vunpack.c.l.b16 %v1670
      %v1707 = vunpack.c.l.b16 %v1671
      %v1708 = vunpack.c.l.b16 %v1672
      %v1709 = vunpack.c.l.b16 %v1673
      %v1710 = vunpack.c.l.b16 %v1674
      %v1711 = vunpack.c.l.b16 %v1675
      %v1712 = vunpack.c.l.b16 %v1676
      %v1713 = vunpack.c.l.b16 %v1677
      %v1714 = vpack.c.b16 %v1699, %v1698
      %v1715 = vpack.c.b16 %v1701, %v1700
      %v1716 = vpack.c.b16 %v1703, %v1702
      %v1717 = vpack.c.b16 %v1705, %v1704
      %v1718 = vpack.c.b16 %v1707, %v1706
      %v1719 = vpack.c.b16 %v1709, %v1708
      %v1720 = vpack.c.b16 %v1711, %v1710
      %v1721 = vpack.c.b16 %v1713, %v1712
      %1730 = vmatpush.bf16.msra.mxu0 %v1721
      %1731 = vmatpush.bf16.msra.mxu0 %v1720
      %1732 = vmatpush.bf16.msra.mxu0 %v1719
      %1733 = vmatpush.bf16.msra.mxu0 %v1718
      %1734 = vmatpush.bf16.msra.mxu0 %v1717
      %1735 = vmatpush.bf16.msra.mxu0 %v1716
      %1736 = vmatpush.bf16.msra.mxu0 %v1715
      %1737 = vmatpush.bf16.msra.mxu0 %v1714
      %1738 = vmatmul.bf16.gmra.mxu0 %v1646
      %v1739 = vpop.f32.mrf.mxu0
      %v1740 = vadd.f32 %v1680, %v1739
      %v1741 = vpop.f32.mrf.mxu0
      %v1742 = vadd.f32 %v1680, %v1741
      %1743 = vmatmul.bf16.gmra.mxu0 %v1647
      %v1744 = vpop.f32.mrf.mxu0
      %v1745 = vadd.f32 %v1680, %v1744
      %v1746 = vpop.f32.mrf.mxu0
      %v1747 = vadd.f32 %v1680, %v1746
      %1748 = vmatmul.bf16.gmra.mxu0 %v1648
      %v1749 = vpop.f32.mrf.mxu0
      %v1750 = vadd.f32 %v1680, %v1749
      %v1751 = vpop.f32.mrf.mxu0
      %v1752 = vadd.f32 %v1680, %v1751
      %1753 = vmatmul.bf16.gmra.mxu0 %v1649
      %v1754 = vpop.f32.mrf.mxu0
      %v1755 = vadd.f32 %v1680, %v1754
      %v1756 = vpop.f32.mrf.mxu0
      %v1757 = vadd.f32 %v1680, %v1756
      %1758 = vmatmul.bf16.gmra.mxu0 %v1650
      %v1759 = vpop.f32.mrf.mxu0
      %v1760 = vadd.f32 %v1680, %v1759
      %v1761 = vpop.f32.mrf.mxu0
      %v1762 = vadd.f32 %v1680, %v1761
      %1763 = vmatmul.bf16.gmra.mxu0 %v1651
      %v1764 = vpop.f32.mrf.mxu0
      %v1765 = vadd.f32 %v1680, %v1764
      %v1766 = vpop.f32.mrf.mxu0
      %v1767 = vadd.f32 %v1680, %v1766
      %1768 = vmatmul.bf16.gmra.mxu0 %v1652
      %v1769 = vpop.f32.mrf.mxu0
      %v1770 = vadd.f32 %v1680, %v1769
      %v1771 = vpop.f32.mrf.mxu0
      %v1772 = vadd.f32 %v1680, %v1771
      %1773 = vmatmul.bf16.gmra.mxu0 %v1653
      %v1774 = vpop.f32.mrf.mxu0
      %v1775 = vadd.f32 %v1680, %v1774
      %v1776 = vpop.f32.mrf.mxu0
      %v1777 = vadd.f32 %v1680, %v1776
      %1778 = vmatmul.bf16.gmra.mxu0 %v1654
      %v1779 = vpop.f32.mrf.mxu0
      %v1780 = vadd.f32 %v1680, %v1779
      %v1781 = vpop.f32.mrf.mxu0
      %v1782 = vadd.f32 %v1680, %v1781
      %1783 = vmatmul.bf16.gmra.mxu0 %v1655
      %v1784 = vpop.f32.mrf.mxu0
      %v1785 = vadd.f32 %v1680, %v1784
      %v1786 = vpop.f32.mrf.mxu0
      %v1787 = vadd.f32 %v1680, %v1786
      %1788 = vmatmul.bf16.gmra.mxu0 %v1656
      %v1789 = vpop.f32.mrf.mxu0
      %v1790 = vadd.f32 %v1680, %v1789
      %v1791 = vpop.f32.mrf.mxu0
      %v1792 = vadd.f32 %v1680, %v1791
      %1793 = vmatmul.bf16.gmra.mxu0 %v1657
      %v1794 = vpop.f32.mrf.mxu0
      %v1795 = vadd.f32 %v1680, %v1794
      %v1796 = vpop.f32.mrf.mxu0
      %v1797 = vadd.f32 %v1680, %v1796
      %1798 = vmatmul.bf16.gmra.mxu0 %v1658
      %v1799 = vpop.f32.mrf.mxu0
      %v1800 = vadd.f32 %v1680, %v1799
      %v1801 = vpop.f32.mrf.mxu0
      %v1802 = vadd.f32 %v1680, %v1801
      %1803 = vmatmul.bf16.gmra.mxu0 %v1659
      %v1804 = vpop.f32.mrf.mxu0
      %v1805 = vadd.f32 %v1680, %v1804
      %v1806 = vpop.f32.mrf.mxu0
      %v1807 = vadd.f32 %v1680, %v1806
      %1808 = vmatmul.bf16.gmra.mxu0 %v1660
      %v1809 = vpop.f32.mrf.mxu0
      %v1810 = vadd.f32 %v1680, %v1809
      %v1811 = vpop.f32.mrf.mxu0
      %v1812 = vadd.f32 %v1680, %v1811
      %1813 = vmatmul.bf16.gmra.mxu0 %v1661
      %v1814 = vpop.f32.mrf.mxu0
      %v1815 = vadd.f32 %v1680, %v1814
      %v1816 = vpop.f32.mrf.mxu0
      %v1817 = vadd.f32 %v1680, %v1816
      %1818 = vdwg.mxu0
      %v1819 = vmul.f32 %v1614, 0.5945349
      %v1820 = vmul.f32 %v1615, 0.5945349
      %v1821 = vmul.f32 %v1616, 0.5945349
      %v1822 = vmul.f32 %v1617, 0.5945349
      %v1823 = vmul.f32 %v1618, 0.5945349
      %v1824 = vmul.f32 %v1619, 0.5945349
      %v1825 = vmul.f32 %v1620, 0.5945349
      %v1826 = vmul.f32 %v1621, 0.5945349
      %v1827 = vmul.f32 %v1622, 0.5945349
      %v1828 = vmul.f32 %v1623, 0.5945349
      %v1829 = vmul.f32 %v1624, 0.5945349
      %v1830 = vmul.f32 %v1625, 0.5945349
      %v1831 = vmul.f32 %v1626, 0.5945349
      %v1832 = vmul.f32 %v1627, 0.5945349
      %v1833 = vmul.f32 %v1628, 0.5945349
      %v1834 = vmul.f32 %v1629, 0.5945349
      %v1835 = vmul.f32 %v1630, 0.5945349
      %v1836 = vmul.f32 %v1631, 0.5945349
      %v1837 = vmul.f32 %v1632, 0.5945349
      %v1838 = vmul.f32 %v1633, 0.5945349
      %v1839 = vmul.f32 %v1634, 0.5945349
      %v1840 = vmul.f32 %v1635, 0.5945349
      %v1841 = vmul.f32 %v1636, 0.5945349
      %v1842 = vmul.f32 %v1637, 0.5945349
      %v1843 = vmul.f32 %v1638, 0.5945349
      %v1844 = vmul.f32 %v1639, 0.5945349
      %v1845 = vmul.f32 %v1640, 0.5945349
      %v1846 = vmul.f32 %v1641, 0.5945349
      %v1847 = vmul.f32 %v1642, 0.5945349
      %v1848 = vmul.f32 %v1643, 0.5945349
      %v1849 = vmul.f32 %v1644, 0.5945349
      %v1850 = vmul.f32 %v1645, 0.5945349
      %v1851 = vmul.f32 %v1740, 0.4054651
      %v1852 = vmul.f32 %v1742, 0.4054651
      %v1853 = vmul.f32 %v1745, 0.4054651
      %v1854 = vmul.f32 %v1747, 0.4054651
      %v1855 = vmul.f32 %v1750, 0.4054651
      %v1856 = vmul.f32 %v1752, 0.4054651
      %v1857 = vmul.f32 %v1755, 0.4054651
      %v1858 = vmul.f32 %v1757, 0.4054651
      %v1859 = vmul.f32 %v1760, 0.4054651
      %v1860 = vmul.f32 %v1762, 0.4054651
      %v1861 = vmul.f32 %v1765, 0.4054651
      %v1862 = vmul.f32 %v1767, 0.4054651
      %v1863 = vmul.f32 %v1770, 0.4054651
      %v1864 = vmul.f32 %v1772, 0.4054651
      %v1865 = vmul.f32 %v1775, 0.4054651
      %v1866 = vmul.f32 %v1777, 0.4054651
      %v1867 = vmul.f32 %v1780, 0.4054651
      %v1868 = vmul.f32 %v1782, 0.4054651
      %v1869 = vmul.f32 %v1785, 0.4054651
      %v1870 = vmul.f32 %v1787, 0.4054651
      %v1871 = vmul.f32 %v1790, 0.4054651
      %v1872 = vmul.f32 %v1792, 0.4054651
      %v1873 = vmul.f32 %v1795, 0.4054651
      %v1874 = vmul.f32 %v1797, 0.4054651
      %v1875 = vmul.f32 %v1800, 0.4054651
      %v1876 = vmul.f32 %v1802, 0.4054651
      %v1877 = vmul.f32 %v1805, 0.4054651
      %v1878 = vmul.f32 %v1807, 0.4054651
      %v1879 = vmul.f32 %v1810, 0.4054651
      %v1880 = vmul.f32 %v1812, 0.4054651
      %v1881 = vmul.f32 %v1815, 0.4054651
      %v1882 = vmul.f32 %v1817, 0.4054651
      %v1883 = vadd.f32 %v1819, %v1851
      %v1884 = vadd.f32 %v1820, %v1852
      %v1885 = vadd.f32 %v1821, %v1853
      %v1886 = vadd.f32 %v1822, %v1854
      %v1887 = vadd.f32 %v1823, %v1855
      %v1888 = vadd.f32 %v1824, %v1856
      %v1889 = vadd.f32 %v1825, %v1857
      %v1890 = vadd.f32 %v1826, %v1858
      %v1891 = vadd.f32 %v1827, %v1859
      %v1892 = vadd.f32 %v1828, %v1860
      %v1893 = vadd.f32 %v1829, %v1861
      %v1894 = vadd.f32 %v1830, %v1862
      %v1895 = vadd.f32 %v1831, %v1863
      %v1896 = vadd.f32 %v1832, %v1864
      %v1897 = vadd.f32 %v1833, %v1865
      %v1898 = vadd.f32 %v1834, %v1866
      %v1899 = vadd.f32 %v1835, %v1867
      %v1900 = vadd.f32 %v1836, %v1868
      %v1901 = vadd.f32 %v1837, %v1869
      %v1902 = vadd.f32 %v1838, %v1870
      %v1903 = vadd.f32 %v1839, %v1871
      %v1904 = vadd.f32 %v1840, %v1872
      %v1905 = vadd.f32 %v1841, %v1873
      %v1906 = vadd.f32 %v1842, %v1874
      %v1907 = vadd.f32 %v1843, %v1875
      %v1908 = vadd.f32 %v1844, %v1876
      %v1909 = vadd.f32 %v1845, %v1877
      %v1910 = vadd.f32 %v1846, %v1878
      %v1911 = vadd.f32 %v1847, %v1879
      %v1912 = vadd.f32 %v1848, %v1880
      %v1913 = vadd.f32 %v1849, %v1881
      %v1914 = vadd.f32 %v1850, %v1882
      %v1915 = vmax.f32 %v1883, 0.0
      %v1916 = vmax.f32 %v1884, 0.0
      %v1917 = vmax.f32 %v1885, 0.0
      %v1918 = vmax.f32 %v1886, 0.0
      %v1919 = vmax.f32 %v1887, 0.0
      %v1920 = vmax.f32 %v1888, 0.0
      %v1921 = vmax.f32 %v1889, 0.0
      %v1922 = vmax.f32 %v1890, 0.0
      %v1923 = vmax.f32 %v1891, 0.0
      %v1924 = vmax.f32 %v1892, 0.0
      %v1925 = vmax.f32 %v1893, 0.0
      %v1926 = vmax.f32 %v1894, 0.0
      %v1927 = vmax.f32 %v1895, 0.0
      %v1928 = vmax.f32 %v1896, 0.0
      %v1929 = vmax.f32 %v1897, 0.0
      %v1930 = vmax.f32 %v1898, 0.0
      %v1931 = vmax.f32 %v1899, 0.0
      %v1932 = vmax.f32 %v1900, 0.0
      %v1933 = vmax.f32 %v1901, 0.0
      %v1934 = vmax.f32 %v1902, 0.0
      %v1935 = vmax.f32 %v1903, 0.0
      %v1936 = vmax.f32 %v1904, 0.0
      %v1937 = vmax.f32 %v1905, 0.0
      %v1938 = vmax.f32 %v1906, 0.0
      %v1939 = vmax.f32 %v1907, 0.0
      %v1940 = vmax.f32 %v1908, 0.0
      %v1941 = vmax.f32 %v1909, 0.0
      %v1942 = vmax.f32 %v1910, 0.0
      %v1943 = vmax.f32 %v1911, 0.0
      %v1944 = vmax.f32 %v1912, 0.0
      %v1945 = vmax.f32 %v1913, 0.0
      %v1946 = vmax.f32 %v1914, 0.0
      %v1947 = vmul.f32 %v1329, %v1915
      %v1948 = vmul.f32 %v1334, %v1916
      %v1949 = vmul.f32 %v1339, %v1917
      %v1950 = vmul.f32 %v1344, %v1918
      %v1951 = vmul.f32 %v1349, %v1919
      %v1952 = vmul.f32 %v1354, %v1920
      %v1953 = vmul.f32 %v1359, %v1921
      %v1954 = vmul.f32 %v1364, %v1922
      %v1955 = vmul.f32 %v1369, %v1923
      %v1956 = vmul.f32 %v1374, %v1924
      %v1957 = vmul.f32 %v1379, %v1925
      %v1958 = vmul.f32 %v1384, %v1926
      %v1959 = vmul.f32 %v1389, %v1927
      %v1960 = vmul.f32 %v1394, %v1928
      %v1961 = vmul.f32 %v1399, %v1929
      %v1962 = vmul.f32 %v1404, %v1930
      %v1963 = vmul.f32 %v1409, %v1931
      %v1964 = vmul.f32 %v1414, %v1932
      %v1965 = vmul.f32 %v1419, %v1933
      %v1966 = vmul.f32 %v1424, %v1934
      %v1967 = vmul.f32 %v1429, %v1935
      %v1968 = vmul.f32 %v1434, %v1936
      %v1969 = vmul.f32 %v1439, %v1937
      %v1970 = vmul.f32 %v1444, %v1938
      %v1971 = vmul.f32 %v1449, %v1939
      %v1972 = vmul.f32 %v1454, %v1940
      %v1973 = vmul.f32 %v1459, %v1941
      %v1974 = vmul.f32 %v1464, %v1942
      %v1975 = vmul.f32 %v1469, %v1943
      %v1976 = vmul.f32 %v1474, %v1944
      %v1977 = vmul.f32 %v1479, %v1945
      %v1978 = vmul.f32 %v1484, %v1946
      %v1979 = vpack.c.bf16 %v1947, %v1947
      %v1980 = vpack.c.bf16 %v1948, %v1948
      %v1981 = vpack.c.bf16 %v1949, %v1949
      %v1982 = vpack.c.bf16 %v1950, %v1950
      %v1983 = vpack.c.bf16 %v1951, %v1951
      %v1984 = vpack.c.bf16 %v1952, %v1952
      %v1985 = vpack.c.bf16 %v1953, %v1953
      %v1986 = vpack.c.bf16 %v1954, %v1954
      %v1987 = vpack.c.bf16 %v1955, %v1955
      %v1988 = vpack.c.bf16 %v1956, %v1956
      %v1989 = vpack.c.bf16 %v1957, %v1957
      %v1990 = vpack.c.bf16 %v1958, %v1958
      %v1991 = vpack.c.bf16 %v1959, %v1959
      %v1992 = vpack.c.bf16 %v1960, %v1960
      %v1993 = vpack.c.bf16 %v1961, %v1961
      %v1994 = vpack.c.bf16 %v1962, %v1962
      %v1995 = vpack.c.bf16 %v1963, %v1963
      %v1996 = vpack.c.bf16 %v1964, %v1964
      %v1997 = vpack.c.bf16 %v1965, %v1965
      %v1998 = vpack.c.bf16 %v1966, %v1966
      %v1999 = vpack.c.bf16 %v1967, %v1967
      %v2000 = vpack.c.bf16 %v1968, %v1968
      %v2001 = vpack.c.bf16 %v1969, %v1969
      %v2002 = vpack.c.bf16 %v1970, %v1970
      %v2003 = vpack.c.bf16 %v1971, %v1971
      %v2004 = vpack.c.bf16 %v1972, %v1972
      %v2005 = vpack.c.bf16 %v1973, %v1973
      %v2006 = vpack.c.bf16 %v1974, %v1974
      %v2007 = vpack.c.bf16 %v1975, %v1975
      %v2008 = vpack.c.bf16 %v1976, %v1976
      %v2009 = vpack.c.bf16 %v1977, %v1977
      %v2010 = vpack.c.bf16 %v1978, %v1978
      %2011 = vst [vmem:[%s328] sm:$0xf] %v1979
      %2012 = vst [vmem:[%s328 + $0x4] sm:$0xf] %v1980
      %2013 = vst [vmem:[%s328 + $0x8] sm:$0xf] %v1981
      %2014 = vst [vmem:[%s328 + $0xc] sm:$0xf] %v1982
      %2015 = vst [vmem:[%s328 + $0x10] sm:$0xf] %v1983
      %2016 = vst [vmem:[%s328 + $0x14] sm:$0xf] %v1984
      %2017 = vst [vmem:[%s328 + $0x18] sm:$0xf] %v1985
      %2018 = vst [vmem:[%s328 + $0x1c] sm:$0xf] %v1986
      %2019 = vst [vmem:[%s328 + $0x20] sm:$0xf] %v1987
      %2020 = vst [vmem:[%s328 + $0x24] sm:$0xf] %v1988
      %2021 = vst [vmem:[%s328 + $0x28] sm:$0xf] %v1989
      %2022 = vst [vmem:[%s328 + $0x2c] sm:$0xf] %v1990
      %2023 = vst [vmem:[%s328 + $0x30] sm:$0xf] %v1991
      %2024 = vst [vmem:[%s328 + $0x34] sm:$0xf] %v1992
      %2025 = vst [vmem:[%s328 + $0x38] sm:$0xf] %v1993
      %2026 = vst [vmem:[%s328 + $0x3c] sm:$0xf] %v1994
      %2027 = vst [vmem:[%s328 + $0x40] sm:$0xf] %v1995
      %2028 = vst [vmem:[%s328 + $0x44] sm:$0xf] %v1996
      %2029 = vst [vmem:[%s328 + $0x48] sm:$0xf] %v1997
      %2030 = vst [vmem:[%s328 + $0x4c] sm:$0xf] %v1998
      %2031 = vst [vmem:[%s328 + $0x50] sm:$0xf] %v1999
      %2032 = vst [vmem:[%s328 + $0x54] sm:$0xf] %v2000
      %2033 = vst [vmem:[%s328 + $0x58] sm:$0xf] %v2001
      %2034 = vst [vmem:[%s328 + $0x5c] sm:$0xf] %v2002
      %2035 = vst [vmem:[%s328 + $0x60] sm:$0xf] %v2003
      %2036 = vst [vmem:[%s328 + $0x64] sm:$0xf] %v2004
      %2037 = vst [vmem:[%s328 + $0x68] sm:$0xf] %v2005
      %2038 = vst [vmem:[%s328 + $0x6c] sm:$0xf] %v2006
      %2039 = vst [vmem:[%s328 + $0x70] sm:$0xf] %v2007
      %2040 = vst [vmem:[%s328 + $0x74] sm:$0xf] %v2008
      %2041 = vst [vmem:[%s328 + $0x78] sm:$0xf] %v2009
      %2042 = vst [vmem:[%s328 + $0x7c] sm:$0xf] %v2010
      %s2043 = smul.u32 32, %s21
      %p2044 = scmp.lt.s32.totalorder %s2043, 63
      %s2045 = scalar_select %p2044, %s2043, 63
      %s2046 = smul.addr %s2045, 4
      %s2047 = scalar_lea.vmem %s6, %s2046
      // Predicated region
      $region45: #{hyper_resid_gcn_forward.8} parent=43 // pred_check
        %p2048 = pneg %p190
      $region46: #{hyper_resid_gcn_forward.8} parent=43 // pred_check_branch
        %2050 = sbr.rel (%p2048) target = $region48
      $region47: #{hyper_resid_gcn_forward.8} parent=43 // pred_region
        %s2051 = smul.u32 32, %s21
      $region48: #{hyper_resid_gcn_forward.8} parent=43 // pred_fallthru
        _
    $region44: #{hyper_resid_gcn_forward.8} parent=5 // pred_fallthru
      _
    %p2052 = scmp.le.s32.totalorder 2, %s12
    // Predicated region
    $region49: #{hyper_resid_gcn_forward.8} parent=5 // pred_check
      %p2053 = pneg %p2052
    $region50: #{hyper_resid_gcn_forward.8} parent=5 // pred_check_branch
      %2055 = sbr.rel (%p2053) target = $region52
    $region51: #{hyper_resid_gcn_forward.8} parent=5 // pred_region
      %s2056 = ssub.s32 %s12, 2
      // Predicated region
      $region53: #{hyper_resid_gcn_forward.8} parent=51 // pred_check
        %p2057 = pneg %p196
      $region54: #{hyper_resid_gcn_forward.8} parent=51 // pred_check_branch
        %2059 = sbr.rel (%p2057) target = $region56
      $region55: #{hyper_resid_gcn_forward.8} parent=51 // pred_region
        %s2060 = smul.u32 32, %s23
        %p2061 = scmp.lt.s32.totalorder %s2060, 63
        %s2062 = scalar_select %p2061, %s2060, 63
        %s2063 = smul.addr %s2062, 4
        %s2064 = scalar_lea.vmem %s6, %s2063
      $region56: #{hyper_resid_gcn_forward.8} parent=51 // pred_fallthru
        _
    $region52: #{hyper_resid_gcn_forward.8} parent=5 // pred_fallthru
      _
  $region6: #{hyper_resid_gcn_forward.8} parent=0 // loop_footer
    %s16 = sadd.s32 1, %s12
  $region7: #{hyper_resid_gcn_forward.8} parent=0 // loop_footer_branch
    %11 = sbr.rel target = $region3
  $region8: #{hyper_resid_gcn_forward.8} parent=0 // loop_exit
    _

// kernel: hyper_resid_gcn_forward.11
$region0: #{hyper_resid_gcn_forward.11}
  #allocation0 [shape = 'u32[]', space=smem, size = 0x4, offset = 0x4, fixed_abs, tag = 'smem constant byte address 0x4 - core index']
  #allocation1 [shape = 'u32[72,128]{1,0:T(1,128)}', space=vmem, size = 0x9000, scoped, tag = 'internal scratch']
  %s0 = inlined_call_operand.vmem [shape: bf16[512,128], index: 0, kind: input, shape index: {}]
  %s1 = inlined_call_operand.vmem [shape: bf16[128,128], index: 1, kind: input, shape index: {}]
  %s2 = inlined_call_operand.vmem [shape: f32[1,128], index: 2, kind: input, shape index: {}]
  %s3 = inlined_call_operand.vmem [shape: f32[512,128], index: 3, kind: output, shape index: {}]
  %s4 = sld [smem:[#allocation0]]
  $region45: #{hyper_resid_gcn_forward.11} parent=0
    _
  %s6 = ssub.s32 1, %s4
  %s7 = scalar_select 0, %s6, %s4
  loop: start=0, step=1, limit=4
  $region2: #{hyper_resid_gcn_forward.11} parent=0 // loop_pre_header
    _
  $region3: #{hyper_resid_gcn_forward.11} parent=0 // loop_header
    %s9 = sphi 0, %s13
    %p10 = scmp.ge.s32.totalorder %s9, 4
    %s16 = sphi 0, %s35
    %s17 = sphi 0, %s31
    %s18 = sphi 0, %s27
    %s19 = sphi 0, %s16
    %s20 = sphi 0, %s17
    %s21 = sphi 0, %s18
    %s22 = sphi 0, %s19
    %s23 = sphi 0, %s20
    %s24 = sphi 0, %s21
    %s40 = sphi 0, %s42
    %s43 = sphi 0, %s40
    %s44 = sphi 0, %s43
    %s60 = sphi 0, %s44
    %s68 = sphi 0, %s70
    %s71 = sphi 0, %s68
    %s72 = sphi 0, %s71
    %s88 = sphi 0, %s72
    %s94 = sphi 0, %s96
    %s97 = sphi 0, %s94
    %s98 = sphi 0, %s97
    %s114 = sphi 0, %s98
    %s122 = sphi 0, %s124
    %s125 = sphi 0, %s122
    %s126 = sphi 0, %s125
    %s142 = sphi 0, %s126
  $region4: #{hyper_resid_gcn_forward.11} parent=0 // loop_header_branch
    %12 = sbr.rel (%p10) target = $region8
  $region5: #{hyper_resid_gcn_forward.11} parent=0 // loop_body
    %s14 = ssub.s32 %s9, 1
    %s15 = ssub.s32 %s9, 2
    %s25 = sadd.s32 1, %s18
    %p26 = scmp.ge.s32.totalorder %s25, 1
    %s27 = scalar_select %p26, 0, %s25
    %s28 = sadd.s32 1, %s17
    %s29 = scalar_select %p26, %s28, %s17
    %p30 = scmp.ge.s32.totalorder %s29, 1
    %s31 = scalar_select %p30, 0, %s29
    %s32 = sadd.s32 1, %s16
    %s33 = scalar_select %p30, %s32, %s16
    %p34 = scmp.ge.s32.totalorder %s33, 2
    %s35 = scalar_select %p34, 0, %s33
    %s36 = ssub.s32 %s16, %s35
    %s37 = ssub.s32 %s18, %s27
    %s38 = sor.u32 %s36, %s37
    %p39 = scmp.eq.s32.totalorder %s38, 0
    %s41 = sadd.s32 %s40, 1
    %s42 = scalar_select %p39, %s40, %s41
    %p45 = pneg %p39
    %p46 = scmp.eq.s32.totalorder %s9, 1
    %p47 = por %p45, %p46
    %p48 = scmp.ne.s32.totalorder %s40, %s43
    %p49 = scmp.eq.s32.totalorder %s9, 0
    %p50 = por %p48, %p49
    %p51 = scmp.ne.s32.totalorder %s40, %s43
    %p52 = scmp.eq.s32.totalorder %s14, 1
    %p53 = por %p51, %p52
    %p54 = scmp.ne.s32.totalorder %s43, %s44
    %p55 = scmp.eq.s32.totalorder %s14, 0
    %p56 = por %p54, %p55
    %p57 = scmp.ne.s32.totalorder %s43, %s44
    %p58 = scmp.eq.s32.totalorder %s15, 1
    %p59 = por %p57, %p58
    %p61 = scmp.ne.s32.totalorder %s44, %s60
    %p62 = scmp.eq.s32.totalorder %s15, 0
    %p63 = por %p61, %p62
    %s64 = ssub.s32 %s18, %s27
    %s65 = ssub.s32 %s17, %s31
    %s66 = sor.u32 %s64, %s65
    %p67 = scmp.eq.s32.totalorder %s66, 0
    %s69 = sadd.s32 %s68, 1
    %s70 = scalar_select %p67, %s68, %s69
    %p73 = pneg %p67
    %p74 = scmp.eq.s32.totalorder %s9, 1
    %p75 = por %p73, %p74
    %p76 = scmp.ne.s32.totalorder %s68, %s71
    %p77 = scmp.eq.s32.totalorder %s9, 0
    %p78 = por %p76, %p77
    %p79 = scmp.ne.s32.totalorder %s68, %s71
    %p80 = scmp.eq.s32.totalorder %s14, 1
    %p81 = por %p79, %p80
    %p82 = scmp.ne.s32.totalorder %s71, %s72
    %p83 = scmp.eq.s32.totalorder %s14, 0
    %p84 = por %p82, %p83
    %p85 = scmp.ne.s32.totalorder %s71, %s72
    %p86 = scmp.eq.s32.totalorder %s15, 1
    %p87 = por %p85, %p86
    %p89 = scmp.ne.s32.totalorder %s72, %s88
    %p90 = scmp.eq.s32.totalorder %s15, 0
    %p91 = por %p89, %p90
    %s92 = ssub.s32 %s17, %s31
    %p93 = scmp.eq.s32.totalorder %s92, 0
    %s95 = sadd.s32 %s94, 1
    %s96 = scalar_select %p93, %s94, %s95
    %p99 = pneg %p93
    %p100 = scmp.eq.s32.totalorder %s9, 1
    %p101 = por %p99, %p100
    %p102 = scmp.ne.s32.totalorder %s94, %s97
    %p103 = scmp.eq.s32.totalorder %s9, 0
    %p104 = por %p102, %p103
    %p105 = scmp.ne.s32.totalorder %s94, %s97
    %p106 = scmp.eq.s32.totalorder %s14, 1
    %p107 = por %p105, %p106
    %p108 = scmp.ne.s32.totalorder %s97, %s98
    %p109 = scmp.eq.s32.totalorder %s14, 0
    %p110 = por %p108, %p109
    %p111 = scmp.ne.s32.totalorder %s97, %s98
    %p112 = scmp.eq.s32.totalorder %s15, 1
    %p113 = por %p111, %p112
    %p115 = scmp.ne.s32.totalorder %s98, %s114
    %p116 = scmp.eq.s32.totalorder %s15, 0
    %p117 = por %p115, %p116
    %s118 = ssub.s32 %s16, %s35
    %s119 = ssub.s32 %s17, %s31
    %s120 = sor.u32 %s118, %s119
    %p121 = scmp.eq.s32.totalorder %s120, 0
    %s123 = sadd.s32 %s122, 1
    %s124 = scalar_select %p121, %s122, %s123
    %p127 = pneg %p121
    %p128 = scmp.eq.s32.totalorder %s9, 1
    %p129 = por %p127, %p128
    %p130 = scmp.ne.s32.totalorder %s122, %s125
    %p131 = scmp.eq.s32.totalorder %s9, 0
    %p132 = por %p130, %p131
    %p133 = scmp.ne.s32.totalorder %s122, %s125
    %p134 = scmp.eq.s32.totalorder %s14, 1
    %p135 = por %p133, %p134
    %p136 = scmp.ne.s32.totalorder %s125, %s126
    %p137 = scmp.eq.s32.totalorder %s14, 0
    %p138 = por %p136, %p137
    %p139 = scmp.ne.s32.totalorder %s125, %s126
    %p140 = scmp.eq.s32.totalorder %s15, 1
    %p141 = por %p139, %p140
    %p143 = scmp.ne.s32.totalorder %s126, %s142
    %p144 = scmp.eq.s32.totalorder %s15, 0
    %p145 = por %p143, %p144
    %p146 = scmp.le.s32.totalorder 1, %s9
    %p147 = scmp.lt.s32.totalorder %s9, 3
    %p148 = pnand %p146, %p147
    %p149 = pneg %p148
    // Predicated region
    $region9: #{hyper_resid_gcn_forward.11} parent=5 // pred_check
      _
    $region10: #{hyper_resid_gcn_forward.11} parent=5 // pred_check_branch
      %151 = sbr.rel (%p148) target = $region12
    $region11: #{hyper_resid_gcn_forward.11} parent=5 // pred_region
      %s152 = ssub.s32 %s9, 1
      // Predicated region
      $region13: #{hyper_resid_gcn_forward.11} parent=11 // pred_check
        %p153 = pneg %p84
      $region14: #{hyper_resid_gcn_forward.11} parent=11 // pred_check_branch
        %155 = sbr.rel (%p153) target = $region16
      $region15: #{hyper_resid_gcn_forward.11} parent=11 // pred_region
        %s156 = smul.u32 16, %s21
        %p157 = scmp.lt.s32.totalorder %s156, 15
        %s158 = scalar_select %p157, %s156, 15
        %p159 = scmp.lt.s32.totalorder %s20, 0
        %s160 = scalar_select %p159, %s20, 0
        %s161 = sadd.s32 %s160, %s158
        %s162 = smul.addr %s161, 4
        %s163 = scalar_lea.vmem %s1, %s162
        %s164 = smul.u32 16, %s21
      $region16: #{hyper_resid_gcn_forward.11} parent=11 // pred_fallthru
        _
      // Predicated region
      $region17: #{hyper_resid_gcn_forward.11} parent=11 // pred_check
        %p165 = pneg %p110
      $region18: #{hyper_resid_gcn_forward.11} parent=11 // pred_check_branch
        %167 = sbr.rel (%p165) target = $region20
      $region19: #{hyper_resid_gcn_forward.11} parent=11 // pred_region
        %p168 = scmp.lt.s32.totalorder %s20, 0
        %s169 = scalar_select %p168, %s20, 0
        %s170 = scalar_lea.vmem %s2, %s169
      $region20: #{hyper_resid_gcn_forward.11} parent=11 // pred_fallthru
        _
    $region12: #{hyper_resid_gcn_forward.11} parent=5 // pred_fallthru
      _
    %p171 = scmp.lt.s32.totalorder %s9, 2
    // Predicated region
    $region21: #{hyper_resid_gcn_forward.11} parent=5 // pred_check
      %p172 = pneg %p171
    $region22: #{hyper_resid_gcn_forward.11} parent=5 // pred_check_branch
      %174 = sbr.rel (%p172) target = $region24
    $region23: #{hyper_resid_gcn_forward.11} parent=5 // pred_region
      // Predicated region
      $region25: #{hyper_resid_gcn_forward.11} parent=23 // pred_check
        %p175 = pneg %p50
      $region26: #{hyper_resid_gcn_forward.11} parent=23 // pred_check_branch
        %177 = sbr.rel (%p175) target = $region28
      $region27: #{hyper_resid_gcn_forward.11} parent=23 // pred_region
        %s178 = smul.u32 32, %s16
        %p179 = scmp.lt.s32.totalorder %s178, 63
        %s180 = scalar_select %p179, %s178, 63
        %p181 = scmp.lt.s32.totalorder %s18, 0
        %s182 = scalar_select %p181, %s18, 0
        %s183 = sadd.s32 %s182, %s180
        %s184 = smul.addr %s183, 4
        %s185 = scalar_lea.vmem %s0, %s184
        %s186 = smul.u32 32, %s16
      $region28: #{hyper_resid_gcn_forward.11} parent=23 // pred_fallthru
        _
    $region24: #{hyper_resid_gcn_forward.11} parent=5 // pred_fallthru
      _
    %p187 = scmp.le.s32.totalorder 1, %s9
    %p188 = scmp.lt.s32.totalorder %s9, 3
    %p189 = pnand %p187, %p188
    %p190 = pneg %p189
    // Predicated region
    $region29: #{hyper_resid_gcn_forward.11} parent=5 // pred_check
      _
    $region30: #{hyper_resid_gcn_forward.11} parent=5 // pred_check_branch
      %192 = sbr.rel (%p189) target = $region32
    $region31: #{hyper_resid_gcn_forward.11} parent=5 // pred_region
      %s193 = ssub.s32 %s9, 1
      %s194 = smul.u32 32, %s19
      %p195 = scmp.lt.s32.totalorder %s194, 63
      %s196 = scalar_select %p195, %s194, 63
      %p197 = scmp.lt.s32.totalorder %s21, 0
      %s198 = scalar_select %p197, %s21, 0
      %s199 = sadd.s32 %s198, %s196
      %s200 = smul.addr %s199, 4
      %s201 = scalar_lea.vmem %s0, %s200
      %p202 = pneg %p56
      %p203 = pneg %p53
      %s204 = smul.u32 16, %s21
      %p205 = scmp.lt.s32.totalorder %s204, 15
      %s206 = scalar_select %p205, %s204, 15
      %p207 = scmp.lt.s32.totalorder %s20, 0
      %s208 = scalar_select %p207, %s20, 0
      %s209 = sadd.s32 %s208, %s206
      %s210 = smul.addr %s209, 4
      %s211 = scalar_lea.vmem %s1, %s210
      %p212 = pneg %p84
      %p213 = pneg %p81
      %p214 = scmp.lt.s32.totalorder %s20, 0
      %s215 = scalar_select %p214, %s20, 0
      %s216 = scalar_lea.vmem %s2, %s215
      %p217 = pneg %p110
      %p218 = pneg %p107
      %p219 = pneg %p138
      %p220 = pneg %p135
      %s221 = smul.u32 32, %s19
      %p222 = scmp.lt.s32.totalorder %s221, 63
      %s223 = scalar_select %p222, %s221, 63
      %p224 = scmp.lt.s32.totalorder %s20, 0
      %s225 = scalar_select %p224, %s20, 0
      %s226 = sadd.s32 %s225, %s223
      %s227 = smul.addr %s226, 8
      %s228 = scalar_lea.vmem %s3, %s227
      %s229 = smul.u32 32, %s19
      %p230 = scmp.lt.s32.totalorder %s229, 63
      %s231 = scalar_select %p230, %s229, 63
      %p232 = scmp.lt.s32.totalorder %s21, 0
      %s233 = scalar_select %p232, %s21, 0
      %s234 = sadd.s32 %s233, %s231
      %s235 = smul.addr %s234, 4
      %s236 = scalar_lea.vmem %s0, %s235
      %s237 = smul.u32 32, %s19
      %s238 = smul.u32 16, %s21
      %p239 = scmp.lt.s32.totalorder %s238, 15
      %s240 = scalar_select %p239, %s238, 15
      %p241 = scmp.lt.s32.totalorder %s20, 0
      %s242 = scalar_select %p241, %s20, 0
      %s243 = sadd.s32 %s242, %s240
      %s244 = smul.addr %s243, 4
      %s245 = scalar_lea.vmem %s1, %s244
      %s246 = smul.u32 16, %s21
      %p247 = scmp.lt.s32.totalorder %s20, 0
      %s248 = scalar_select %p247, %s20, 0
      %s249 = scalar_lea.vmem %s2, %s248
      %s250 = smul.u32 32, %s19
      %p251 = scmp.lt.s32.totalorder %s250, 63
      %s252 = scalar_select %p251, %s250, 63
      %p253 = scmp.lt.s32.totalorder %s20, 0
      %s254 = scalar_select %p253, %s20, 0
      %s255 = sadd.s32 %s254, %s252
      %s256 = smul.addr %s255, 8
      %s257 = scalar_lea.vmem %s3, %s256
      %s258 = smul.u32 32, %s19
      %v259 = vld [vmem:[%s236] sm:$0xf]
      %v260 = vld [vmem:[%s236 + $0x4] sm:$0xf]
      %v261 = vld [vmem:[%s236 + $0x8] sm:$0xf]
      %v262 = vld [vmem:[%s236 + $0xc] sm:$0xf]
      %v263 = vld [vmem:[%s236 + $0x10] sm:$0xf]
      %v264 = vld [vmem:[%s236 + $0x14] sm:$0xf]
      %v265 = vld [vmem:[%s236 + $0x18] sm:$0xf]
      %v266 = vld [vmem:[%s236 + $0x1c] sm:$0xf]
      %v267 = vld [vmem:[%s236 + $0x20] sm:$0xf]
      %v268 = vld [vmem:[%s236 + $0x24] sm:$0xf]
      %v269 = vld [vmem:[%s236 + $0x28] sm:$0xf]
      %v270 = vld [vmem:[%s236 + $0x2c] sm:$0xf]
      %v271 = vld [vmem:[%s236 + $0x30] sm:$0xf]
      %v272 = vld [vmem:[%s236 + $0x34] sm:$0xf]
      %v273 = vld [vmem:[%s236 + $0x38] sm:$0xf]
      %v274 = vld [vmem:[%s236 + $0x3c] sm:$0xf]
      %v275 = vld [vmem:[%s236 + $0x40] sm:$0xf]
      %v276 = vld [vmem:[%s236 + $0x44] sm:$0xf]
      %v277 = vld [vmem:[%s236 + $0x48] sm:$0xf]
      %v278 = vld [vmem:[%s236 + $0x4c] sm:$0xf]
      %v279 = vld [vmem:[%s236 + $0x50] sm:$0xf]
      %v280 = vld [vmem:[%s236 + $0x54] sm:$0xf]
      %v281 = vld [vmem:[%s236 + $0x58] sm:$0xf]
      %v282 = vld [vmem:[%s236 + $0x5c] sm:$0xf]
      %v283 = vld [vmem:[%s236 + $0x60] sm:$0xf]
      %v284 = vld [vmem:[%s236 + $0x64] sm:$0xf]
      %v285 = vld [vmem:[%s236 + $0x68] sm:$0xf]
      %v286 = vld [vmem:[%s236 + $0x6c] sm:$0xf]
      %v287 = vld [vmem:[%s236 + $0x70] sm:$0xf]
      %v288 = vld [vmem:[%s236 + $0x74] sm:$0xf]
      %v289 = vld [vmem:[%s236 + $0x78] sm:$0xf]
      %v290 = vld [vmem:[%s236 + $0x7c] sm:$0xf]
      %v291 = vld [vmem:[%s245] sm:$0xf]
      %v292 = vld [vmem:[%s245 + $0x4] sm:$0xf]
      %v293 = vld [vmem:[%s245 + $0x8] sm:$0xf]
      %v294 = vld [vmem:[%s245 + $0xc] sm:$0xf]
      %v295 = vld [vmem:[%s245 + $0x10] sm:$0xf]
      %v296 = vld [vmem:[%s245 + $0x14] sm:$0xf]
      %v297 = vld [vmem:[%s245 + $0x18] sm:$0xf]
      %v298 = vld [vmem:[%s245 + $0x1c] sm:$0xf]
      %v299 = vld [vmem:[%s245 + $0x20] sm:$0xf]
      %v300 = vld [vmem:[%s245 + $0x24] sm:$0xf]
      %v301 = vld [vmem:[%s245 + $0x28] sm:$0xf]
      %v302 = vld [vmem:[%s245 + $0x2c] sm:$0xf]
      %v303 = vld [vmem:[%s245 + $0x30] sm:$0xf]
      %v304 = vld [vmem:[%s245 + $0x34] sm:$0xf]
      %v305 = vld [vmem:[%s245 + $0x38] sm:$0xf]
      %v306 = vld [vmem:[%s245 + $0x3c] sm:$0xf]
      %v307 = vld [vmem:[%s249] sm:$0x1]
      %v309 = vperm.slane %v307, 0
      %v343 = vunpack.c.l.b16 %v259
      %v344 = vunpack.c.l.b16 %v260
      %v345 = vunpack.c.l.b16 %v261
      %v346 = vunpack.c.l.b16 %v262
      %v347 = vunpack.c.l.b16 %v263
      %v348 = vunpack.c.l.b16 %v264
      %v349 = vunpack.c.l.b16 %v265
      %v350 = vunpack.c.l.b16 %v266
      %v351 = vunpack.c.l.b16 %v267
      %v352 = vunpack.c.l.b16 %v268
      %v353 = vunpack.c.l.b16 %v269
      %v354 = vunpack.c.l.b16 %v270
      %v355 = vunpack.c.l.b16 %v271
      %v356 = vunpack.c.l.b16 %v272
      %v357 = vunpack.c.l.b16 %v273
      %v358 = vunpack.c.l.b16 %v274
      %v359 = vunpack.c.l.b16 %v275
      %v360 = vunpack.c.l.b16 %v276
      %v361 = vunpack.c.l.b16 %v277
      %v362 = vunpack.c.l.b16 %v278
      %v363 = vunpack.c.l.b16 %v279
      %v364 = vunpack.c.l.b16 %v280
      %v365 = vunpack.c.l.b16 %v281
      %v366 = vunpack.c.l.b16 %v282
      %v367 = vunpack.c.l.b16 %v283
      %v368 = vunpack.c.l.b16 %v284
      %v369 = vunpack.c.l.b16 %v285
      %v370 = vunpack.c.l.b16 %v286
      %v371 = vunpack.c.l.b16 %v287
      %v372 = vunpack.c.l.b16 %v288
      %v373 = vunpack.c.l.b16 %v289
      %v374 = vunpack.c.l.b16 %v290
      %v375 = vpack.c.b16 %v344, %v343
      %v376 = vpack.c.b16 %v346, %v345
      %v377 = vpack.c.b16 %v348, %v347
      %v378 = vpack.c.b16 %v350, %v349
      %v379 = vpack.c.b16 %v352, %v351
      %v380 = vpack.c.b16 %v354, %v353
      %v381 = vpack.c.b16 %v356, %v355
      %v382 = vpack.c.b16 %v358, %v357
      %v383 = vpack.c.b16 %v360, %v359
      %v384 = vpack.c.b16 %v362, %v361
      %v385 = vpack.c.b16 %v364, %v363
      %v386 = vpack.c.b16 %v366, %v365
      %v387 = vpack.c.b16 %v368, %v367
      %v388 = vpack.c.b16 %v370, %v369
      %v389 = vpack.c.b16 %v372, %v371
      %v390 = vpack.c.b16 %v374, %v373
      %v423 = vunpack.c.l.b16 %v291
      %v424 = vunpack.c.l.b16 %v292
      %v425 = vunpack.c.l.b16 %v293
      %v426 = vunpack.c.l.b16 %v294
      %v427 = vunpack.c.l.b16 %v295
      %v428 = vunpack.c.l.b16 %v296
      %v429 = vunpack.c.l.b16 %v297
      %v430 = vunpack.c.l.b16 %v298
      %v431 = vunpack.c.l.b16 %v299
      %v432 = vunpack.c.l.b16 %v300
      %v433 = vunpack.c.l.b16 %v301
      %v434 = vunpack.c.l.b16 %v302
      %v435 = vunpack.c.l.b16 %v303
      %v436 = vunpack.c.l.b16 %v304
      %v437 = vunpack.c.l.b16 %v305
      %v438 = vunpack.c.l.b16 %v306
      %v439 = vpack.c.b16 %v424, %v423
      %v440 = vpack.c.b16 %v426, %v425
      %v441 = vpack.c.b16 %v428, %v427
      %v442 = vpack.c.b16 %v430, %v429
      %v443 = vpack.c.b16 %v432, %v431
      %v444 = vpack.c.b16 %v434, %v433
      %v445 = vpack.c.b16 %v436, %v435
      %v446 = vpack.c.b16 %v438, %v437
      %455 = vmatpush.bf16.msra.mxu0 %v446
      %456 = vmatpush.bf16.msra.mxu0 %v445
      %457 = vmatpush.bf16.msra.mxu0 %v444
      %458 = vmatpush.bf16.msra.mxu0 %v443
      %459 = vmatpush.bf16.msra.mxu0 %v442
      %460 = vmatpush.bf16.msra.mxu0 %v441
      %461 = vmatpush.bf16.msra.mxu0 %v440
      %462 = vmatpush.bf16.msra.mxu0 %v439
      %463 = vmatmul.bf16.gmra.mxu0 %v375
      %v464 = vpop.f32.mrf.mxu0
      %v465 = vadd.f32 %v309, %v464
      %v466 = vpop.f32.mrf.mxu0
      %v467 = vadd.f32 %v309, %v466
      %468 = vmatmul.bf16.gmra.mxu0 %v376
      %v469 = vpop.f32.mrf.mxu0
      %v470 = vadd.f32 %v309, %v469
      %v471 = vpop.f32.mrf.mxu0
      %v472 = vadd.f32 %v309, %v471
      %473 = vmatmul.bf16.gmra.mxu0 %v377
      %v474 = vpop.f32.mrf.mxu0
      %v475 = vadd.f32 %v309, %v474
      %v476 = vpop.f32.mrf.mxu0
      %v477 = vadd.f32 %v309, %v476
      %478 = vmatmul.bf16.gmra.mxu0 %v378
      %v479 = vpop.f32.mrf.mxu0
      %v480 = vadd.f32 %v309, %v479
      %v481 = vpop.f32.mrf.mxu0
      %v482 = vadd.f32 %v309, %v481
      %483 = vmatmul.bf16.gmra.mxu0 %v379
      %v484 = vpop.f32.mrf.mxu0
      %v485 = vadd.f32 %v309, %v484
      %v486 = vpop.f32.mrf.mxu0
      %v487 = vadd.f32 %v309, %v486
      %488 = vmatmul.bf16.gmra.mxu0 %v380
      %v489 = vpop.f32.mrf.mxu0
      %v490 = vadd.f32 %v309, %v489
      %v491 = vpop.f32.mrf.mxu0
      %v492 = vadd.f32 %v309, %v491
      %493 = vmatmul.bf16.gmra.mxu0 %v381
      %v494 = vpop.f32.mrf.mxu0
      %v495 = vadd.f32 %v309, %v494
      %v496 = vpop.f32.mrf.mxu0
      %v497 = vadd.f32 %v309, %v496
      %498 = vmatmul.bf16.gmra.mxu0 %v382
      %v499 = vpop.f32.mrf.mxu0
      %v500 = vadd.f32 %v309, %v499
      %v501 = vpop.f32.mrf.mxu0
      %v502 = vadd.f32 %v309, %v501
      %503 = vmatmul.bf16.gmra.mxu0 %v383
      %v504 = vpop.f32.mrf.mxu0
      %v505 = vadd.f32 %v309, %v504
      %v506 = vpop.f32.mrf.mxu0
      %v507 = vadd.f32 %v309, %v506
      %508 = vmatmul.bf16.gmra.mxu0 %v384
      %v509 = vpop.f32.mrf.mxu0
      %v510 = vadd.f32 %v309, %v509
      %v511 = vpop.f32.mrf.mxu0
      %v512 = vadd.f32 %v309, %v511
      %513 = vmatmul.bf16.gmra.mxu0 %v385
      %v514 = vpop.f32.mrf.mxu0
      %v515 = vadd.f32 %v309, %v514
      %v516 = vpop.f32.mrf.mxu0
      %v517 = vadd.f32 %v309, %v516
      %518 = vmatmul.bf16.gmra.mxu0 %v386
      %v519 = vpop.f32.mrf.mxu0
      %v520 = vadd.f32 %v309, %v519
      %v521 = vpop.f32.mrf.mxu0
      %v522 = vadd.f32 %v309, %v521
      %523 = vmatmul.bf16.gmra.mxu0 %v387
      %v524 = vpop.f32.mrf.mxu0
      %v525 = vadd.f32 %v309, %v524
      %v526 = vpop.f32.mrf.mxu0
      %v527 = vadd.f32 %v309, %v526
      %528 = vmatmul.bf16.gmra.mxu0 %v388
      %v529 = vpop.f32.mrf.mxu0
      %v530 = vadd.f32 %v309, %v529
      %v531 = vpop.f32.mrf.mxu0
      %v532 = vadd.f32 %v309, %v531
      %533 = vmatmul.bf16.gmra.mxu0 %v389
      %v534 = vpop.f32.mrf.mxu0
      %v535 = vadd.f32 %v309, %v534
      %v536 = vpop.f32.mrf.mxu0
      %v537 = vadd.f32 %v309, %v536
      %538 = vmatmul.bf16.gmra.mxu0 %v390
      %v539 = vpop.f32.mrf.mxu0
      %v540 = vadd.f32 %v309, %v539
      %v541 = vpop.f32.mrf.mxu0
      %v542 = vadd.f32 %v309, %v541
      %543 = vdwg.mxu0
      %544 = vst [vmem:[%s257] sm:$0xff] %v465
      %545 = vst [vmem:[%s257 + $0x8] sm:$0xff] %v467
      %546 = vst [vmem:[%s257 + $0x10] sm:$0xff] %v470
      %547 = vst [vmem:[%s257 + $0x18] sm:$0xff] %v472
      %548 = vst [vmem:[%s257 + $0x20] sm:$0xff] %v475
      %549 = vst [vmem:[%s257 + $0x28] sm:$0xff] %v477
      %550 = vst [vmem:[%s257 + $0x30] sm:$0xff] %v480
      %551 = vst [vmem:[%s257 + $0x38] sm:$0xff] %v482
      %552 = vst [vmem:[%s257 + $0x40] sm:$0xff] %v485
      %553 = vst [vmem:[%s257 + $0x48] sm:$0xff] %v487
      %554 = vst [vmem:[%s257 + $0x50] sm:$0xff] %v490
      %555 = vst [vmem:[%s257 + $0x58] sm:$0xff] %v492
      %556 = vst [vmem:[%s257 + $0x60] sm:$0xff] %v495
      %557 = vst [vmem:[%s257 + $0x68] sm:$0xff] %v497
      %558 = vst [vmem:[%s257 + $0x70] sm:$0xff] %v500
      %559 = vst [vmem:[%s257 + $0x78] sm:$0xff] %v502
      %560 = vst [vmem:[%s257 + $0x80] sm:$0xff] %v505
      %561 = vst [vmem:[%s257 + $0x88] sm:$0xff] %v507
      %562 = vst [vmem:[%s257 + $0x90] sm:$0xff] %v510
      %563 = vst [vmem:[%s257 + $0x98] sm:$0xff] %v512
      %564 = vst [vmem:[%s257 + $0xa0] sm:$0xff] %v515
      %565 = vst [vmem:[%s257 + $0xa8] sm:$0xff] %v517
      %566 = vst [vmem:[%s257 + $0xb0] sm:$0xff] %v520
      %567 = vst [vmem:[%s257 + $0xb8] sm:$0xff] %v522
      %568 = vst [vmem:[%s257 + $0xc0] sm:$0xff] %v525
      %569 = vst [vmem:[%s257 + $0xc8] sm:$0xff] %v527
      %570 = vst [vmem:[%s257 + $0xd0] sm:$0xff] %v530
      %571 = vst [vmem:[%s257 + $0xd8] sm:$0xff] %v532
      %572 = vst [vmem:[%s257 + $0xe0] sm:$0xff] %v535
      %573 = vst [vmem:[%s257 + $0xe8] sm:$0xff] %v537
      %574 = vst [vmem:[%s257 + $0xf0] sm:$0xff] %v540
      %575 = vst [vmem:[%s257 + $0xf8] sm:$0xff] %v542
      %s576 = smul.u32 32, %s19
      %p577 = scmp.lt.s32.totalorder %s576, 63
      %s578 = scalar_select %p577, %s576, 63
      %p579 = scmp.lt.s32.totalorder %s20, 0
      %s580 = scalar_select %p579, %s20, 0
      %s581 = sadd.s32 %s580, %s578
      %s582 = smul.addr %s581, 8
      %s583 = scalar_lea.vmem %s3, %s582
      // Predicated region
      $region33: #{hyper_resid_gcn_forward.11} parent=31 // pred_check
        %p584 = pneg %p135
      $region34: #{hyper_resid_gcn_forward.11} parent=31 // pred_check_branch
        %586 = sbr.rel (%p584) target = $region36
      $region35: #{hyper_resid_gcn_forward.11} parent=31 // pred_region
        %s587 = smul.u32 32, %s19
      $region36: #{hyper_resid_gcn_forward.11} parent=31 // pred_fallthru
        _
    $region32: #{hyper_resid_gcn_forward.11} parent=5 // pred_fallthru
      _
    %p588 = scmp.le.s32.totalorder 2, %s9
    // Predicated region
    $region37: #{hyper_resid_gcn_forward.11} parent=5 // pred_check
      %p589 = pneg %p588
    $region38: #{hyper_resid_gcn_forward.11} parent=5 // pred_check_branch
      %591 = sbr.rel (%p589) target = $region40
    $region39: #{hyper_resid_gcn_forward.11} parent=5 // pred_region
      %s592 = ssub.s32 %s9, 2
      // Predicated region
      $region41: #{hyper_resid_gcn_forward.11} parent=39 // pred_check
        %p593 = pneg %p141
      $region42: #{hyper_resid_gcn_forward.11} parent=39 // pred_check_branch
        %595 = sbr.rel (%p593) target = $region44
      $region43: #{hyper_resid_gcn_forward.11} parent=39 // pred_region
        %s596 = smul.u32 32, %s22
        %p597 = scmp.lt.s32.totalorder %s596, 63
        %s598 = scalar_select %p597, %s596, 63
        %p599 = scmp.lt.s32.totalorder %s23, 0
        %s600 = scalar_select %p599, %s23, 0
        %s601 = sadd.s32 %s600, %s598
        %s602 = smul.addr %s601, 8
        %s603 = scalar_lea.vmem %s3, %s602
      $region44: #{hyper_resid_gcn_forward.11} parent=39 // pred_fallthru
        _
    $region40: #{hyper_resid_gcn_forward.11} parent=5 // pred_fallthru
      _
  $region6: #{hyper_resid_gcn_forward.11} parent=0 // loop_footer
    %s13 = sadd.s32 1, %s9
  $region7: #{hyper_resid_gcn_forward.11} parent=0 // loop_footer_branch
    %8 = sbr.rel target = $region3
  $region8: #{hyper_resid_gcn_forward.11} parent=0 // loop_exit
    _

</llo_original>
